<compile_context>
chip_gen: v6e
topology: v6e:2x2x1
jax: 0.10.0
libtpu: 0.0.40
codegen_flags: <defaults>
</compile_context>

<pallas_src>
import math
from functools import partial

import numpy as np
import jax
import jax.numpy as jnp
from jax import lax
from jax.experimental import pallas as pl
from jax.experimental.pallas import tpu as pltpu


# ----------------------------- fused Pallas kernel ------------------------------

def _fused_transformer_kernel(x_ref, wqkv_ref, wo_ref, bo_ref, wfc_ref, bfc_ref,
                              p_hd_ref, m_ref, o_ref, *, num_layers, nb, seq, dim):
    """`nb` batch elements end-to-end, everything in VMEM.

    Constant selector matrices (built on host, Hd = head_dim):
        P[a, c]   = 1  iff c // Hd == a                (heads, dim)
        M[c1, c2] = 1  iff c1 % Hd == c2 % Hd          (dim, dim)
    With them the quirky attention becomes pure matmuls (no in-kernel reshape/transpose):
        energy   = P @ ((q^T k) * M) @ P^T             # (heads, heads), scale folded into wq
        out_slab = (attn @ P) @ ((v^T P) * M)          # (seq, dim)   [seq == heads]
    which is algebraically identical to the reference einsums + raw C-order reshape.
    """
    f32 = jnp.float32
    bf16 = jnp.bfloat16
    tn_dims = (((0,), (0,)), ((), ()))   # contract dim 0 of both operands:  A^T @ B
    nt_dims = (((1,), (1,)), ((), ()))   # contract dim 1 of both operands:  A @ B^T

    x = x_ref[...].astype(f32)           # (nb*S, D), f32
    P = p_hd_ref[...]                    # (H, D), f32
    M = m_ref[...]                       # (D, D), f32

    for l in range(num_layers):          # static unroll; weights stay resident in VMEM
        xb = x.astype(bf16)
        # Fused QKV projection: one (nb*S, D) @ (D, 3D) matmul (bf16 MXU, f32 accumulate).
        qkv = jnp.dot(xb, wqkv_ref[l], preferred_element_type=f32)      # (nb*S, 3D)
        q_all = qkv[:, :dim]             # 1/sqrt(D) already folded into the wq columns
        k_all = qkv[:, dim:2 * dim]
        v_all = qkv[:, 2 * dim:]

        outs = []
        for b in range(nb):              # per-batch (H,H) attention; static unroll
            sl = slice(b * seq, (b + 1) * seq)
            qb, kb, vb = q_all[sl], k_all[sl], v_all[sl]

            # energy[a, b'] = sum_{s,d} q[s, a*Hd+d] * k[s, b'*Hd+d]
            g = lax.dot_general(qb, kb, tn_dims, preferred_element_type=f32)       # q^T k : (D, D)
            e_pre = jnp.dot(P, g * M, preferred_element_type=f32)                  # (H, D)
            energy = lax.dot_general(e_pre, P, nt_dims, preferred_element_type=f32)  # (H, H)

            # softmax over the key-head axis (torch dim=2), numerically stable, f32
            energy = energy - jnp.max(energy, axis=-1, keepdims=True)
            e = jnp.exp(energy)
            attn = e / jnp.sum(e, axis=-1, keepdims=True)                          # (H, H)

            # out_slab[a, s*Hd+d] = sum_b' attn[a, b'] * v[s, b'*Hd+d]
            attn_exp = jnp.dot(attn, P, preferred_element_type=f32)                # (H, D)
            v_exp = lax.dot_general(vb, P, tn_dims, preferred_element_type=f32) * M  # (D, D)
            outs.append(jnp.dot(attn_exp, v_exp, preferred_element_type=f32))      # (S, D)

        out_all = outs[0] if nb == 1 else jnp.concatenate(outs, axis=0)            # (nb*S, D)

        # layer fc_out (bias in f32)
        x = jnp.dot(out_all.astype(bf16), wo_ref[l],
                    preferred_element_type=f32) + bo_ref[l]

    # final fc_out; vocab padded to 128 lanes for a lane-dense store
    logits = jnp.dot(x.astype(bf16), wfc_ref[...],
                     preferred_element_type=f32) + bfc_ref[...]
    o_ref[...] = logits.astype(o_ref.dtype)


# ----------------------------- wrapper ------------------------------------------

def _default_grid_steps(batch):
    """v7x has 2 TensorCores per chip -> split the batch across them (grid=(N,), parallel).
    v5e/v6e have a single TensorCore -> collapse to one grid step so the projection matmuls
    run over all N*S rows at once."""
    try:
        kind = jax.devices()[0].device_kind.lower()
    except Exception:
        return 1
    if "v7" in kind or "7x" in kind:
        return max(1, min(batch, 2))
    return 1


def transformer_forward_pallas(x, params, *, vocab, grid_steps=None):
    N, S, D = x.shape
    H = params["p_hd"].shape[0]
    L = params["wqkv"].shape[0]
    Vp = params["wfc"].shape[1]
    # TODO(synk): general seq_len != heads would need an in-kernel C-order reshape of the
    # (heads, seq*head_dim) slab; this fused kernel is specialised to seq == heads, where the
    # reference's raw reshape is an identity on that slab.
    assert S == H, "fused kernel specialised to seq_len == heads"
    assert D % H == 0

    if grid_steps is None:
        grid_steps = _default_grid_steps(N)
    if N % grid_steps != 0:
        grid_steps = 1
    nb = N // grid_steps                 # batch elements processed per grid step

    kernel = partial(_fused_transformer_kernel, num_layers=L, nb=nb, seq=S, dim=D)
    c2 = lambda n: (0, 0)                # constant index maps -> weights stay resident
    c3 = lambda n: (0, 0, 0)

    out = pl.pallas_call(
        kernel,
        out_shape=jax.ShapeDtypeStruct((N * S, Vp), x.dtype),
        grid=(grid_steps,),
        in_specs=[
            pl.BlockSpec((nb * S, D), lambda n: (n, 0)),   # x (f32): nb batch elems / step
            pl.BlockSpec((L, D, 3 * D), c3),               # packed wq|wk|wv (bf16, scale folded)
            pl.BlockSpec((L, D, D), c3),                   # wo  (bf16)
            pl.BlockSpec((L, 1, D), c3),                   # bo  (f32)
            pl.BlockSpec((D, Vp), c2),                     # w_fc (bf16, vocab padded to 128)
            pl.BlockSpec((1, Vp), c2),                     # b_fc (f32)
            pl.BlockSpec((H, D), c2),                      # P selector (f32)
            pl.BlockSpec((D, D), c2),                      # M selector (f32)
        ],
        out_specs=pl.BlockSpec((nb * S, Vp), lambda n: (n, 0)),
        compiler_params=pltpu.CompilerParams(dimension_semantics=("parallel",)),
    )(x.reshape(N * S, D), params["wqkv"], params["wo"], params["bo"],
      params["wfc"], params["bfc"], params["p_hd"], params["m"])
    return out[:, :vocab].reshape(N, S, vocab)


# ----------------------------- params -------------------------------------------

def init_params(key, dim, vocab, heads, num_layers, dtype=jnp.float32):
    scale = 0.05
    layer_params = []
    for _ in range(num_layers):
        key, kq, kk, kv, ko, kb = jax.random.split(key, 6)
        layer_params.append({
            "wq": jax.random.normal(kq, (dim, dim), dtype) * scale,
            "wk": jax.random.normal(kk, (dim, dim), dtype) * scale,
            "wv": jax.random.normal(kv, (dim, dim), dtype) * scale,
            "wo": jax.random.normal(ko, (dim, dim), dtype) * scale,
            "bo": jax.random.normal(kb, (dim,), dtype) * scale,
        })
    key, k1, k2 = jax.random.split(key, 3)
    w_fc = jax.random.normal(k1, (dim, vocab), dtype) * scale
    b_fc = jax.random.normal(k2, (vocab,), dtype) * scale
    return layer_params, w_fc, b_fc


def pack_params(layer_params, w_fc, b_fc, heads, *, weight_dtype=jnp.bfloat16):
    """One-time packing (outside jit): fused bf16 QKV weights with the softmax scale folded
    into the wq columns, bf16 wo / w_fc (vocab padded to 128 lanes), f32 biases, and the
    f32 selector constants P / M."""
    dim, vocab = w_fc.shape
    hd = dim // heads
    vpad = max(128, ((vocab + 127) // 128) * 128)
    inv_sqrt_d = 1.0 / math.sqrt(dim)

    c = np.arange(dim)
    p_hd = (c[None, :] // hd == np.arange(heads)[:, None]).astype(np.float32)   # (H, D)
    m = ((c[:, None] % hd) == (c[None, :] % hd)).astype(np.float32)             # (D, D)

    wqkv = jnp.stack([
        jnp.concatenate([p["wq"] * inv_sqrt_d, p["wk"], p["wv"]], axis=1)
        for p in layer_params
    ]).astype(weight_dtype)                                                      # (L, D, 3D)

    return {
        "wqkv": wqkv,
        "wo": jnp.stack([p["wo"] for p in layer_params]).astype(weight_dtype),   # (L, D, D)
        "bo": jnp.stack([p["bo"].reshape(1, dim) for p in layer_params]),        # (L, 1, D) f32
        "wfc": jnp.zeros((dim, vpad), jnp.float32).at[:, :vocab].set(w_fc).astype(weight_dtype),
        "bfc": jnp.zeros((1, vpad), jnp.float32).at[:, :vocab].set(b_fc.reshape(1, vocab)),
        "p_hd": jnp.asarray(p_hd),
        "m": jnp.asarray(m),
    }


# ----------------------------- pure-JAX reference --------------------------------

def reference_forward(x, layer_params, w_fc, b_fc, heads):
    for p in layer_params:
        N, S, D = x.shape
        Hd = D // heads
        v = x @ p["wv"]
        k = x @ p["wk"]
        q = x @ p["wq"]
        v = v.reshape(N, S, heads, Hd).transpose(0, 2, 1, 3)
        k = k.reshape(N, S, heads, Hd).transpose(0, 2, 1, 3)
        q = q.reshape(N, S, heads, Hd).transpose(0, 2, 1, 3)
        energy = jnp.einsum('nqhd,nkhd->nqk', q, k)
        attention = jax.nn.softmax(energy / (D ** 0.5), axis=2)
        out = jnp.einsum('nqk,nkhd->nqhd', attention, v).reshape(N, S, heads * Hd)
        x = out @ p["wo"] + p["bo"]
    return x @ w_fc + b_fc


# ----------------------------- main ----------------------------------------------

if __name__ == "__main__":
    dim, vocab, heads, num_layers = 192, 22, 8, 3   # TransformerModel defaults
    N, S = 2, 8                                      # seq == heads (see TODO note above)

    key = jax.random.PRNGKey(0)
    key, kx = jax.random.split(key)
    x = jax.random.normal(kx, (N, S, dim), jnp.float32)
    layer_params, w_fc, b_fc = init_params(key, dim, vocab, heads, num_layers)
    packed = pack_params(layer_params, w_fc, b_fc, heads)

    fwd = jax.jit(partial(transformer_forward_pallas, vocab=vocab))
    out = jax.block_until_ready(fwd(x, packed))

    assert out.shape == (N, S, vocab), out.shape
    ref = reference_forward(x, layer_params, w_fc, b_fc, heads)
    if not jnp.allclose(out, ref, rtol=1e-2, atol=1e-2):
        raise AssertionError(
            f"Pallas/ref mismatch, max abs err = {float(jnp.max(jnp.abs(out - ref)))}")
    print("KERNEL_OK")
</pallas_src>

<mosaic_0001>
module attributes {stable_mosaic.version = 11 : i64} {
  func.func @_fused_transformer_kernel(%arg0: i32, %arg1: memref<16x192xf32, #tpu.memory_space<vmem>>, %arg2: memref<3x192x576xbf16, #tpu.memory_space<vmem>>, %arg3: memref<3x192x192xbf16, #tpu.memory_space<vmem>>, %arg4: memref<3x1x192xf32, #tpu.memory_space<vmem>>, %arg5: memref<192x128xbf16, #tpu.memory_space<vmem>>, %arg6: memref<1x128xf32, #tpu.memory_space<vmem>>, %arg7: memref<8x192xf32, #tpu.memory_space<vmem>>, %arg8: memref<192x192xf32, #tpu.memory_space<vmem>>, %arg9: memref<16x128xf32, #tpu.memory_space<vmem>>) attributes {dimension_semantics = [#tpu.dimension_semantics<parallel>], iteration_bounds = array<i64: 1>, scalar_prefetch = 0 : i64, scratch_operands = 0 : i64, tpu.core_type = #tpu.core_type<tc>, window_params = [{transform_indices = @transform_0, window_bounds = array<i64: 16, 192>}, {pipeline_mode = #tpu.pipeline_mode<synchronous>, transform_indices = @transform_1, window_bounds = array<i64: 3, 192, 576>}, {pipeline_mode = #tpu.pipeline_mode<synchronous>, transform_indices = @transform_2, window_bounds = array<i64: 3, 192, 192>}, {pipeline_mode = #tpu.pipeline_mode<synchronous>, transform_indices = @transform_3, window_bounds = array<i64: 3, 1, 192>}, {pipeline_mode = #tpu.pipeline_mode<synchronous>, transform_indices = @transform_4, window_bounds = array<i64: 192, 128>}, {pipeline_mode = #tpu.pipeline_mode<synchronous>, transform_indices = @transform_5, window_bounds = array<i64: 1, 128>}, {pipeline_mode = #tpu.pipeline_mode<synchronous>, transform_indices = @transform_6, window_bounds = array<i64: 8, 192>}, {pipeline_mode = #tpu.pipeline_mode<synchronous>, transform_indices = @transform_7, window_bounds = array<i64: 192, 192>}, {transform_indices = @transform_8, window_bounds = array<i64: 16, 128>}]} {
    %c0 = arith.constant 0 : index
    %c0_0 = arith.constant 0 : index
    %0 = vector.load %arg1[%c0, %c0_0] : memref<16x192xf32, #tpu.memory_space<vmem>>, vector<16x192xf32>
    %c0_1 = arith.constant 0 : index
    %c0_2 = arith.constant 0 : index
    %1 = vector.load %arg7[%c0_1, %c0_2] : memref<8x192xf32, #tpu.memory_space<vmem>>, vector<8x192xf32>
    %c0_3 = arith.constant 0 : index
    %c0_4 = arith.constant 0 : index
    %2 = vector.load %arg8[%c0_3, %c0_4] : memref<192x192xf32, #tpu.memory_space<vmem>>, vector<192x192xf32>
    %3 = arith.truncf %0 : vector<16x192xf32> to vector<16x192xbf16>
    %c0_5 = arith.constant 0 : index
    %c0_6 = arith.constant 0 : index
    %c0_7 = arith.constant 0 : index
    %4 = vector.load %arg2[%c0_5, %c0_6, %c0_7] : memref<3x192x576xbf16, #tpu.memory_space<vmem>>, vector<1x192x576xbf16>
    %5 = vector.shape_cast %4 : vector<1x192x576xbf16> to vector<192x576xbf16>
    %cst = arith.constant dense<0.000000e+00> : vector<16x576xf32>
    %6 = tpu.matmul %3, %5, %cst {dimension_numbers = #tpu.dot_dimension_numbers<[1], [0], [0], [1], [0, 0, 1, 1], [], []>} : vector<16x192xbf16>, vector<192x576xbf16>, vector<16x576xf32> -> vector<16x576xf32>
    %7 = vector.extract_strided_slice %6 {offsets = [0, 0], sizes = [16, 192], strides = [1, 1]} : vector<16x576xf32> to vector<16x192xf32>
    %8 = vector.extract_strided_slice %6 {offsets = [0, 192], sizes = [16, 192], strides = [1, 1]} : vector<16x576xf32> to vector<16x192xf32>
    %9 = vector.extract_strided_slice %6 {offsets = [0, 384], sizes = [16, 192], strides = [1, 1]} : vector<16x576xf32> to vector<16x192xf32>
    %10 = vector.extract_strided_slice %7 {offsets = [0, 0], sizes = [8, 192], strides = [1, 1]} : vector<16x192xf32> to vector<8x192xf32>
    %11 = vector.extract_strided_slice %8 {offsets = [0, 0], sizes = [8, 192], strides = [1, 1]} : vector<16x192xf32> to vector<8x192xf32>
    %12 = vector.extract_strided_slice %9 {offsets = [0, 0], sizes = [8, 192], strides = [1, 1]} : vector<16x192xf32> to vector<8x192xf32>
    %cst_8 = arith.constant dense<0.000000e+00> : vector<192x192xf32>
    %13 = tpu.matmul %10, %11, %cst_8 {dimension_numbers = #tpu.dot_dimension_numbers<[0], [0], [1], [1], [0, 1, 1, 1], [], []>} : vector<8x192xf32>, vector<8x192xf32>, vector<192x192xf32> -> vector<192x192xf32>
    %14 = arith.mulf %13, %2 : vector<192x192xf32>
    %cst_9 = arith.constant dense<0.000000e+00> : vector<8x192xf32>
    %15 = tpu.matmul %1, %14, %cst_9 {dimension_numbers = #tpu.dot_dimension_numbers<[1], [0], [0], [1], [0, 0, 1, 1], [], []>} : vector<8x192xf32>, vector<192x192xf32>, vector<8x192xf32> -> vector<8x192xf32>
    %cst_10 = arith.constant dense<0.000000e+00> : vector<8x8xf32>
    %16 = tpu.matmul %15, %1, %cst_10 {dimension_numbers = #tpu.dot_dimension_numbers<[1], [1], [0], [0], [0, 0, 1, 0], [], []>} : vector<8x192xf32>, vector<8x192xf32>, vector<8x8xf32> -> vector<8x8xf32>
    %cst_11 = arith.constant dense<0xFF800000> : vector<8xf32>
    %17 = vector.multi_reduction <maximumf>, %16, %cst_11 [1] : vector<8x8xf32> to vector<8xf32>
    %18 = vector.shape_cast %17 : vector<8xf32> to vector<8x1xf32>
    %19 = vector.broadcast %18 : vector<8x1xf32> to vector<8x8xf32>
    %20 = arith.subf %16, %19 : vector<8x8xf32>
    %21 = math.exp %20 : vector<8x8xf32>
    %cst_12 = arith.constant dense<0.000000e+00> : vector<8xf32>
    %22 = vector.multi_reduction <add>, %21, %cst_12 [1] : vector<8x8xf32> to vector<8xf32>
    %23 = vector.shape_cast %22 : vector<8xf32> to vector<8x1xf32>
    %24 = vector.broadcast %23 : vector<8x1xf32> to vector<8x8xf32>
    %25 = arith.divf %21, %24 : vector<8x8xf32>
    %cst_13 = arith.constant dense<0.000000e+00> : vector<8x192xf32>
    %26 = tpu.matmul %25, %1, %cst_13 {dimension_numbers = #tpu.dot_dimension_numbers<[1], [0], [0], [1], [0, 0, 1, 1], [], []>} : vector<8x8xf32>, vector<8x192xf32>, vector<8x192xf32> -> vector<8x192xf32>
    %cst_14 = arith.constant dense<0.000000e+00> : vector<192x192xf32>
    %27 = tpu.matmul %12, %1, %cst_14 {dimension_numbers = #tpu.dot_dimension_numbers<[0], [0], [1], [1], [0, 1, 1, 1], [], []>} : vector<8x192xf32>, vector<8x192xf32>, vector<192x192xf32> -> vector<192x192xf32>
    %28 = arith.mulf %27, %2 : vector<192x192xf32>
    %cst_15 = arith.constant dense<0.000000e+00> : vector<8x192xf32>
    %29 = tpu.matmul %26, %28, %cst_15 {dimension_numbers = #tpu.dot_dimension_numbers<[1], [0], [0], [1], [0, 0, 1, 1], [], []>} : vector<8x192xf32>, vector<192x192xf32>, vector<8x192xf32> -> vector<8x192xf32>
    %30 = vector.extract_strided_slice %7 {offsets = [8, 0], sizes = [8, 192], strides = [1, 1]} : vector<16x192xf32> to vector<8x192xf32>
    %31 = vector.extract_strided_slice %8 {offsets = [8, 0], sizes = [8, 192], strides = [1, 1]} : vector<16x192xf32> to vector<8x192xf32>
    %32 = vector.extract_strided_slice %9 {offsets = [8, 0], sizes = [8, 192], strides = [1, 1]} : vector<16x192xf32> to vector<8x192xf32>
    %cst_16 = arith.constant dense<0.000000e+00> : vector<192x192xf32>
    %33 = tpu.matmul %30, %31, %cst_16 {dimension_numbers = #tpu.dot_dimension_numbers<[0], [0], [1], [1], [0, 1, 1, 1], [], []>} : vector<8x192xf32>, vector<8x192xf32>, vector<192x192xf32> -> vector<192x192xf32>
    %34 = arith.mulf %33, %2 : vector<192x192xf32>
    %cst_17 = arith.constant dense<0.000000e+00> : vector<8x192xf32>
    %35 = tpu.matmul %1, %34, %cst_17 {dimension_numbers = #tpu.dot_dimension_numbers<[1], [0], [0], [1], [0, 0, 1, 1], [], []>} : vector<8x192xf32>, vector<192x192xf32>, vector<8x192xf32> -> vector<8x192xf32>
    %cst_18 = arith.constant dense<0.000000e+00> : vector<8x8xf32>
    %36 = tpu.matmul %35, %1, %cst_18 {dimension_numbers = #tpu.dot_dimension_numbers<[1], [1], [0], [0], [0, 0, 1, 0], [], []>} : vector<8x192xf32>, vector<8x192xf32>, vector<8x8xf32> -> vector<8x8xf32>
    %cst_19 = arith.constant dense<0xFF800000> : vector<8xf32>
    %37 = vector.multi_reduction <maximumf>, %36, %cst_19 [1] : vector<8x8xf32> to vector<8xf32>
    %38 = vector.shape_cast %37 : vector<8xf32> to vector<8x1xf32>
    %39 = vector.broadcast %38 : vector<8x1xf32> to vector<8x8xf32>
    %40 = arith.subf %36, %39 : vector<8x8xf32>
    %41 = math.exp %40 : vector<8x8xf32>
    %cst_20 = arith.constant dense<0.000000e+00> : vector<8xf32>
    %42 = vector.multi_reduction <add>, %41, %cst_20 [1] : vector<8x8xf32> to vector<8xf32>
    %43 = vector.shape_cast %42 : vector<8xf32> to vector<8x1xf32>
    %44 = vector.broadcast %43 : vector<8x1xf32> to vector<8x8xf32>
    %45 = arith.divf %41, %44 : vector<8x8xf32>
    %cst_21 = arith.constant dense<0.000000e+00> : vector<8x192xf32>
    %46 = tpu.matmul %45, %1, %cst_21 {dimension_numbers = #tpu.dot_dimension_numbers<[1], [0], [0], [1], [0, 0, 1, 1], [], []>} : vector<8x8xf32>, vector<8x192xf32>, vector<8x192xf32> -> vector<8x192xf32>
    %cst_22 = arith.constant dense<0.000000e+00> : vector<192x192xf32>
    %47 = tpu.matmul %32, %1, %cst_22 {dimension_numbers = #tpu.dot_dimension_numbers<[0], [0], [1], [1], [0, 1, 1, 1], [], []>} : vector<8x192xf32>, vector<8x192xf32>, vector<192x192xf32> -> vector<192x192xf32>
    %48 = arith.mulf %47, %2 : vector<192x192xf32>
    %cst_23 = arith.constant dense<0.000000e+00> : vector<8x192xf32>
    %49 = tpu.matmul %46, %48, %cst_23 {dimension_numbers = #tpu.dot_dimension_numbers<[1], [0], [0], [1], [0, 0, 1, 1], [], []>} : vector<8x192xf32>, vector<192x192xf32>, vector<8x192xf32> -> vector<8x192xf32>
    %50 = tpu.concatenate %29, %49 in 0 : vector<8x192xf32>, vector<8x192xf32> -> vector<16x192xf32>
    %51 = arith.truncf %50 : vector<16x192xf32> to vector<16x192xbf16>
    %c0_24 = arith.constant 0 : index
    %c0_25 = arith.constant 0 : index
    %c0_26 = arith.constant 0 : index
    %52 = vector.load %arg3[%c0_24, %c0_25, %c0_26] : memref<3x192x192xbf16, #tpu.memory_space<vmem>>, vector<1x192x192xbf16>
    %53 = vector.shape_cast %52 : vector<1x192x192xbf16> to vector<192x192xbf16>
    %cst_27 = arith.constant dense<0.000000e+00> : vector<16x192xf32>
    %54 = tpu.matmul %51, %53, %cst_27 {dimension_numbers = #tpu.dot_dimension_numbers<[1], [0], [0], [1], [0, 0, 1, 1], [], []>} : vector<16x192xbf16>, vector<192x192xbf16>, vector<16x192xf32> -> vector<16x192xf32>
    %c0_28 = arith.constant 0 : index
    %c0_29 = arith.constant 0 : index
    %c0_30 = arith.constant 0 : index
    %55 = vector.load %arg4[%c0_28, %c0_29, %c0_30] : memref<3x1x192xf32, #tpu.memory_space<vmem>>, vector<1x1x192xf32>
    %56 = vector.shape_cast %55 : vector<1x1x192xf32> to vector<1x192xf32>
    %57 = vector.broadcast %56 : vector<1x192xf32> to vector<16x192xf32>
    %58 = arith.addf %54, %57 : vector<16x192xf32>
    %59 = arith.truncf %58 : vector<16x192xf32> to vector<16x192xbf16>
    %c1 = arith.constant 1 : index
    %c0_31 = arith.constant 0 : index
    %c0_32 = arith.constant 0 : index
    %60 = vector.load %arg2[%c1, %c0_31, %c0_32] : memref<3x192x576xbf16, #tpu.memory_space<vmem>>, vector<1x192x576xbf16>
    %61 = vector.shape_cast %60 : vector<1x192x576xbf16> to vector<192x576xbf16>
    %cst_33 = arith.constant dense<0.000000e+00> : vector<16x576xf32>
    %62 = tpu.matmul %59, %61, %cst_33 {dimension_numbers = #tpu.dot_dimension_numbers<[1], [0], [0], [1], [0, 0, 1, 1], [], []>} : vector<16x192xbf16>, vector<192x576xbf16>, vector<16x576xf32> -> vector<16x576xf32>
    %63 = vector.extract_strided_slice %62 {offsets = [0, 0], sizes = [16, 192], strides = [1, 1]} : vector<16x576xf32> to vector<16x192xf32>
    %64 = vector.extract_strided_slice %62 {offsets = [0, 192], sizes = [16, 192], strides = [1, 1]} : vector<16x576xf32> to vector<16x192xf32>
    %65 = vector.extract_strided_slice %62 {offsets = [0, 384], sizes = [16, 192], strides = [1, 1]} : vector<16x576xf32> to vector<16x192xf32>
    %66 = vector.extract_strided_slice %63 {offsets = [0, 0], sizes = [8, 192], strides = [1, 1]} : vector<16x192xf32> to vector<8x192xf32>
    %67 = vector.extract_strided_slice %64 {offsets = [0, 0], sizes = [8, 192], strides = [1, 1]} : vector<16x192xf32> to vector<8x192xf32>
    %68 = vector.extract_strided_slice %65 {offsets = [0, 0], sizes = [8, 192], strides = [1, 1]} : vector<16x192xf32> to vector<8x192xf32>
    %cst_34 = arith.constant dense<0.000000e+00> : vector<192x192xf32>
    %69 = tpu.matmul %66, %67, %cst_34 {dimension_numbers = #tpu.dot_dimension_numbers<[0], [0], [1], [1], [0, 1, 1, 1], [], []>} : vector<8x192xf32>, vector<8x192xf32>, vector<192x192xf32> -> vector<192x192xf32>
    %70 = arith.mulf %69, %2 : vector<192x192xf32>
    %cst_35 = arith.constant dense<0.000000e+00> : vector<8x192xf32>
    %71 = tpu.matmul %1, %70, %cst_35 {dimension_numbers = #tpu.dot_dimension_numbers<[1], [0], [0], [1], [0, 0, 1, 1], [], []>} : vector<8x192xf32>, vector<192x192xf32>, vector<8x192xf32> -> vector<8x192xf32>
    %cst_36 = arith.constant dense<0.000000e+00> : vector<8x8xf32>
    %72 = tpu.matmul %71, %1, %cst_36 {dimension_numbers = #tpu.dot_dimension_numbers<[1], [1], [0], [0], [0, 0, 1, 0], [], []>} : vector<8x192xf32>, vector<8x192xf32>, vector<8x8xf32> -> vector<8x8xf32>
    %cst_37 = arith.constant dense<0xFF800000> : vector<8xf32>
    %73 = vector.multi_reduction <maximumf>, %72, %cst_37 [1] : vector<8x8xf32> to vector<8xf32>
    %74 = vector.shape_cast %73 : vector<8xf32> to vector<8x1xf32>
    %75 = vector.broadcast %74 : vector<8x1xf32> to vector<8x8xf32>
    %76 = arith.subf %72, %75 : vector<8x8xf32>
    %77 = math.exp %76 : vector<8x8xf32>
    %cst_38 = arith.constant dense<0.000000e+00> : vector<8xf32>
    %78 = vector.multi_reduction <add>, %77, %cst_38 [1] : vector<8x8xf32> to vector<8xf32>
    %79 = vector.shape_cast %78 : vector<8xf32> to vector<8x1xf32>
    %80 = vector.broadcast %79 : vector<8x1xf32> to vector<8x8xf32>
    %81 = arith.divf %77, %80 : vector<8x8xf32>
    %cst_39 = arith.constant dense<0.000000e+00> : vector<8x192xf32>
    %82 = tpu.matmul %81, %1, %cst_39 {dimension_numbers = #tpu.dot_dimension_numbers<[1], [0], [0], [1], [0, 0, 1, 1], [], []>} : vector<8x8xf32>, vector<8x192xf32>, vector<8x192xf32> -> vector<8x192xf32>
    %cst_40 = arith.constant dense<0.000000e+00> : vector<192x192xf32>
    %83 = tpu.matmul %68, %1, %cst_40 {dimension_numbers = #tpu.dot_dimension_numbers<[0], [0], [1], [1], [0, 1, 1, 1], [], []>} : vector<8x192xf32>, vector<8x192xf32>, vector<192x192xf32> -> vector<192x192xf32>
    %84 = arith.mulf %83, %2 : vector<192x192xf32>
    %cst_41 = arith.constant dense<0.000000e+00> : vector<8x192xf32>
    %85 = tpu.matmul %82, %84, %cst_41 {dimension_numbers = #tpu.dot_dimension_numbers<[1], [0], [0], [1], [0, 0, 1, 1], [], []>} : vector<8x192xf32>, vector<192x192xf32>, vector<8x192xf32> -> vector<8x192xf32>
    %86 = vector.extract_strided_slice %63 {offsets = [8, 0], sizes = [8, 192], strides = [1, 1]} : vector<16x192xf32> to vector<8x192xf32>
    %87 = vector.extract_strided_slice %64 {offsets = [8, 0], sizes = [8, 192], strides = [1, 1]} : vector<16x192xf32> to vector<8x192xf32>
    %88 = vector.extract_strided_slice %65 {offsets = [8, 0], sizes = [8, 192], strides = [1, 1]} : vector<16x192xf32> to vector<8x192xf32>
    %cst_42 = arith.constant dense<0.000000e+00> : vector<192x192xf32>
    %89 = tpu.matmul %86, %87, %cst_42 {dimension_numbers = #tpu.dot_dimension_numbers<[0], [0], [1], [1], [0, 1, 1, 1], [], []>} : vector<8x192xf32>, vector<8x192xf32>, vector<192x192xf32> -> vector<192x192xf32>
    %90 = arith.mulf %89, %2 : vector<192x192xf32>
    %cst_43 = arith.constant dense<0.000000e+00> : vector<8x192xf32>
    %91 = tpu.matmul %1, %90, %cst_43 {dimension_numbers = #tpu.dot_dimension_numbers<[1], [0], [0], [1], [0, 0, 1, 1], [], []>} : vector<8x192xf32>, vector<192x192xf32>, vector<8x192xf32> -> vector<8x192xf32>
    %cst_44 = arith.constant dense<0.000000e+00> : vector<8x8xf32>
    %92 = tpu.matmul %91, %1, %cst_44 {dimension_numbers = #tpu.dot_dimension_numbers<[1], [1], [0], [0], [0, 0, 1, 0], [], []>} : vector<8x192xf32>, vector<8x192xf32>, vector<8x8xf32> -> vector<8x8xf32>
    %cst_45 = arith.constant dense<0xFF800000> : vector<8xf32>
    %93 = vector.multi_reduction <maximumf>, %92, %cst_45 [1] : vector<8x8xf32> to vector<8xf32>
    %94 = vector.shape_cast %93 : vector<8xf32> to vector<8x1xf32>
    %95 = vector.broadcast %94 : vector<8x1xf32> to vector<8x8xf32>
    %96 = arith.subf %92, %95 : vector<8x8xf32>
    %97 = math.exp %96 : vector<8x8xf32>
    %cst_46 = arith.constant dense<0.000000e+00> : vector<8xf32>
    %98 = vector.multi_reduction <add>, %97, %cst_46 [1] : vector<8x8xf32> to vector<8xf32>
    %99 = vector.shape_cast %98 : vector<8xf32> to vector<8x1xf32>
    %100 = vector.broadcast %99 : vector<8x1xf32> to vector<8x8xf32>
    %101 = arith.divf %97, %100 : vector<8x8xf32>
    %cst_47 = arith.constant dense<0.000000e+00> : vector<8x192xf32>
    %102 = tpu.matmul %101, %1, %cst_47 {dimension_numbers = #tpu.dot_dimension_numbers<[1], [0], [0], [1], [0, 0, 1, 1], [], []>} : vector<8x8xf32>, vector<8x192xf32>, vector<8x192xf32> -> vector<8x192xf32>
    %cst_48 = arith.constant dense<0.000000e+00> : vector<192x192xf32>
    %103 = tpu.matmul %88, %1, %cst_48 {dimension_numbers = #tpu.dot_dimension_numbers<[0], [0], [1], [1], [0, 1, 1, 1], [], []>} : vector<8x192xf32>, vector<8x192xf32>, vector<192x192xf32> -> vector<192x192xf32>
    %104 = arith.mulf %103, %2 : vector<192x192xf32>
    %cst_49 = arith.constant dense<0.000000e+00> : vector<8x192xf32>
    %105 = tpu.matmul %102, %104, %cst_49 {dimension_numbers = #tpu.dot_dimension_numbers<[1], [0], [0], [1], [0, 0, 1, 1], [], []>} : vector<8x192xf32>, vector<192x192xf32>, vector<8x192xf32> -> vector<8x192xf32>
    %106 = tpu.concatenate %85, %105 in 0 : vector<8x192xf32>, vector<8x192xf32> -> vector<16x192xf32>
    %107 = arith.truncf %106 : vector<16x192xf32> to vector<16x192xbf16>
    %c1_50 = arith.constant 1 : index
    %c0_51 = arith.constant 0 : index
    %c0_52 = arith.constant 0 : index
    %108 = vector.load %arg3[%c1_50, %c0_51, %c0_52] : memref<3x192x192xbf16, #tpu.memory_space<vmem>>, vector<1x192x192xbf16>
    %109 = vector.shape_cast %108 : vector<1x192x192xbf16> to vector<192x192xbf16>
    %cst_53 = arith.constant dense<0.000000e+00> : vector<16x192xf32>
    %110 = tpu.matmul %107, %109, %cst_53 {dimension_numbers = #tpu.dot_dimension_numbers<[1], [0], [0], [1], [0, 0, 1, 1], [], []>} : vector<16x192xbf16>, vector<192x192xbf16>, vector<16x192xf32> -> vector<16x192xf32>
    %c1_54 = arith.constant 1 : index
    %c0_55 = arith.constant 0 : index
    %c0_56 = arith.constant 0 : index
    %111 = vector.load %arg4[%c1_54, %c0_55, %c0_56] : memref<3x1x192xf32, #tpu.memory_space<vmem>>, vector<1x1x192xf32>
    %112 = vector.shape_cast %111 : vector<1x1x192xf32> to vector<1x192xf32>
    %113 = vector.broadcast %112 : vector<1x192xf32> to vector<16x192xf32>
    %114 = arith.addf %110, %113 : vector<16x192xf32>
    %115 = arith.truncf %114 : vector<16x192xf32> to vector<16x192xbf16>
    %c2 = arith.constant 2 : index
    %c0_57 = arith.constant 0 : index
    %c0_58 = arith.constant 0 : index
    %116 = vector.load %arg2[%c2, %c0_57, %c0_58] : memref<3x192x576xbf16, #tpu.memory_space<vmem>>, vector<1x192x576xbf16>
    %117 = vector.shape_cast %116 : vector<1x192x576xbf16> to vector<192x576xbf16>
    %cst_59 = arith.constant dense<0.000000e+00> : vector<16x576xf32>
    %118 = tpu.matmul %115, %117, %cst_59 {dimension_numbers = #tpu.dot_dimension_numbers<[1], [0], [0], [1], [0, 0, 1, 1], [], []>} : vector<16x192xbf16>, vector<192x576xbf16>, vector<16x576xf32> -> vector<16x576xf32>
    %119 = vector.extract_strided_slice %118 {offsets = [0, 0], sizes = [16, 192], strides = [1, 1]} : vector<16x576xf32> to vector<16x192xf32>
    %120 = vector.extract_strided_slice %118 {offsets = [0, 192], sizes = [16, 192], strides = [1, 1]} : vector<16x576xf32> to vector<16x192xf32>
    %121 = vector.extract_strided_slice %118 {offsets = [0, 384], sizes = [16, 192], strides = [1, 1]} : vector<16x576xf32> to vector<16x192xf32>
    %122 = vector.extract_strided_slice %119 {offsets = [0, 0], sizes = [8, 192], strides = [1, 1]} : vector<16x192xf32> to vector<8x192xf32>
    %123 = vector.extract_strided_slice %120 {offsets = [0, 0], sizes = [8, 192], strides = [1, 1]} : vector<16x192xf32> to vector<8x192xf32>
    %124 = vector.extract_strided_slice %121 {offsets = [0, 0], sizes = [8, 192], strides = [1, 1]} : vector<16x192xf32> to vector<8x192xf32>
    %cst_60 = arith.constant dense<0.000000e+00> : vector<192x192xf32>
    %125 = tpu.matmul %122, %123, %cst_60 {dimension_numbers = #tpu.dot_dimension_numbers<[0], [0], [1], [1], [0, 1, 1, 1], [], []>} : vector<8x192xf32>, vector<8x192xf32>, vector<192x192xf32> -> vector<192x192xf32>
    %126 = arith.mulf %125, %2 : vector<192x192xf32>
    %cst_61 = arith.constant dense<0.000000e+00> : vector<8x192xf32>
    %127 = tpu.matmul %1, %126, %cst_61 {dimension_numbers = #tpu.dot_dimension_numbers<[1], [0], [0], [1], [0, 0, 1, 1], [], []>} : vector<8x192xf32>, vector<192x192xf32>, vector<8x192xf32> -> vector<8x192xf32>
    %cst_62 = arith.constant dense<0.000000e+00> : vector<8x8xf32>
    %128 = tpu.matmul %127, %1, %cst_62 {dimension_numbers = #tpu.dot_dimension_numbers<[1], [1], [0], [0], [0, 0, 1, 0], [], []>} : vector<8x192xf32>, vector<8x192xf32>, vector<8x8xf32> -> vector<8x8xf32>
    %cst_63 = arith.constant dense<0xFF800000> : vector<8xf32>
    %129 = vector.multi_reduction <maximumf>, %128, %cst_63 [1] : vector<8x8xf32> to vector<8xf32>
    %130 = vector.shape_cast %129 : vector<8xf32> to vector<8x1xf32>
    %131 = vector.broadcast %130 : vector<8x1xf32> to vector<8x8xf32>
    %132 = arith.subf %128, %131 : vector<8x8xf32>
    %133 = math.exp %132 : vector<8x8xf32>
    %cst_64 = arith.constant dense<0.000000e+00> : vector<8xf32>
    %134 = vector.multi_reduction <add>, %133, %cst_64 [1] : vector<8x8xf32> to vector<8xf32>
    %135 = vector.shape_cast %134 : vector<8xf32> to vector<8x1xf32>
    %136 = vector.broadcast %135 : vector<8x1xf32> to vector<8x8xf32>
    %137 = arith.divf %133, %136 : vector<8x8xf32>
    %cst_65 = arith.constant dense<0.000000e+00> : vector<8x192xf32>
    %138 = tpu.matmul %137, %1, %cst_65 {dimension_numbers = #tpu.dot_dimension_numbers<[1], [0], [0], [1], [0, 0, 1, 1], [], []>} : vector<8x8xf32>, vector<8x192xf32>, vector<8x192xf32> -> vector<8x192xf32>
    %cst_66 = arith.constant dense<0.000000e+00> : vector<192x192xf32>
    %139 = tpu.matmul %124, %1, %cst_66 {dimension_numbers = #tpu.dot_dimension_numbers<[0], [0], [1], [1], [0, 1, 1, 1], [], []>} : vector<8x192xf32>, vector<8x192xf32>, vector<192x192xf32> -> vector<192x192xf32>
    %140 = arith.mulf %139, %2 : vector<192x192xf32>
    %cst_67 = arith.constant dense<0.000000e+00> : vector<8x192xf32>
    %141 = tpu.matmul %138, %140, %cst_67 {dimension_numbers = #tpu.dot_dimension_numbers<[1], [0], [0], [1], [0, 0, 1, 1], [], []>} : vector<8x192xf32>, vector<192x192xf32>, vector<8x192xf32> -> vector<8x192xf32>
    %142 = vector.extract_strided_slice %119 {offsets = [8, 0], sizes = [8, 192], strides = [1, 1]} : vector<16x192xf32> to vector<8x192xf32>
    %143 = vector.extract_strided_slice %120 {offsets = [8, 0], sizes = [8, 192], strides = [1, 1]} : vector<16x192xf32> to vector<8x192xf32>
    %144 = vector.extract_strided_slice %121 {offsets = [8, 0], sizes = [8, 192], strides = [1, 1]} : vector<16x192xf32> to vector<8x192xf32>
    %cst_68 = arith.constant dense<0.000000e+00> : vector<192x192xf32>
    %145 = tpu.matmul %142, %143, %cst_68 {dimension_numbers = #tpu.dot_dimension_numbers<[0], [0], [1], [1], [0, 1, 1, 1], [], []>} : vector<8x192xf32>, vector<8x192xf32>, vector<192x192xf32> -> vector<192x192xf32>
    %146 = arith.mulf %145, %2 : vector<192x192xf32>
    %cst_69 = arith.constant dense<0.000000e+00> : vector<8x192xf32>
    %147 = tpu.matmul %1, %146, %cst_69 {dimension_numbers = #tpu.dot_dimension_numbers<[1], [0], [0], [1], [0, 0, 1, 1], [], []>} : vector<8x192xf32>, vector<192x192xf32>, vector<8x192xf32> -> vector<8x192xf32>
    %cst_70 = arith.constant dense<0.000000e+00> : vector<8x8xf32>
    %148 = tpu.matmul %147, %1, %cst_70 {dimension_numbers = #tpu.dot_dimension_numbers<[1], [1], [0], [0], [0, 0, 1, 0], [], []>} : vector<8x192xf32>, vector<8x192xf32>, vector<8x8xf32> -> vector<8x8xf32>
    %cst_71 = arith.constant dense<0xFF800000> : vector<8xf32>
    %149 = vector.multi_reduction <maximumf>, %148, %cst_71 [1] : vector<8x8xf32> to vector<8xf32>
    %150 = vector.shape_cast %149 : vector<8xf32> to vector<8x1xf32>
    %151 = vector.broadcast %150 : vector<8x1xf32> to vector<8x8xf32>
    %152 = arith.subf %148, %151 : vector<8x8xf32>
    %153 = math.exp %152 : vector<8x8xf32>
    %cst_72 = arith.constant dense<0.000000e+00> : vector<8xf32>
    %154 = vector.multi_reduction <add>, %153, %cst_72 [1] : vector<8x8xf32> to vector<8xf32>
    %155 = vector.shape_cast %154 : vector<8xf32> to vector<8x1xf32>
    %156 = vector.broadcast %155 : vector<8x1xf32> to vector<8x8xf32>
    %157 = arith.divf %153, %156 : vector<8x8xf32>
    %cst_73 = arith.constant dense<0.000000e+00> : vector<8x192xf32>
    %158 = tpu.matmul %157, %1, %cst_73 {dimension_numbers = #tpu.dot_dimension_numbers<[1], [0], [0], [1], [0, 0, 1, 1], [], []>} : vector<8x8xf32>, vector<8x192xf32>, vector<8x192xf32> -> vector<8x192xf32>
    %cst_74 = arith.constant dense<0.000000e+00> : vector<192x192xf32>
    %159 = tpu.matmul %144, %1, %cst_74 {dimension_numbers = #tpu.dot_dimension_numbers<[0], [0], [1], [1], [0, 1, 1, 1], [], []>} : vector<8x192xf32>, vector<8x192xf32>, vector<192x192xf32> -> vector<192x192xf32>
    %160 = arith.mulf %159, %2 : vector<192x192xf32>
    %cst_75 = arith.constant dense<0.000000e+00> : vector<8x192xf32>
    %161 = tpu.matmul %158, %160, %cst_75 {dimension_numbers = #tpu.dot_dimension_numbers<[1], [0], [0], [1], [0, 0, 1, 1], [], []>} : vector<8x192xf32>, vector<192x192xf32>, vector<8x192xf32> -> vector<8x192xf32>
    %162 = tpu.concatenate %141, %161 in 0 : vector<8x192xf32>, vector<8x192xf32> -> vector<16x192xf32>
    %163 = arith.truncf %162 : vector<16x192xf32> to vector<16x192xbf16>
    %c2_76 = arith.constant 2 : index
    %c0_77 = arith.constant 0 : index
    %c0_78 = arith.constant 0 : index
    %164 = vector.load %arg3[%c2_76, %c0_77, %c0_78] : memref<3x192x192xbf16, #tpu.memory_space<vmem>>, vector<1x192x192xbf16>
    %165 = vector.shape_cast %164 : vector<1x192x192xbf16> to vector<192x192xbf16>
    %cst_79 = arith.constant dense<0.000000e+00> : vector<16x192xf32>
    %166 = tpu.matmul %163, %165, %cst_79 {dimension_numbers = #tpu.dot_dimension_numbers<[1], [0], [0], [1], [0, 0, 1, 1], [], []>} : vector<16x192xbf16>, vector<192x192xbf16>, vector<16x192xf32> -> vector<16x192xf32>
    %c2_80 = arith.constant 2 : index
    %c0_81 = arith.constant 0 : index
    %c0_82 = arith.constant 0 : index
    %167 = vector.load %arg4[%c2_80, %c0_81, %c0_82] : memref<3x1x192xf32, #tpu.memory_space<vmem>>, vector<1x1x192xf32>
    %168 = vector.shape_cast %167 : vector<1x1x192xf32> to vector<1x192xf32>
    %169 = vector.broadcast %168 : vector<1x192xf32> to vector<16x192xf32>
    %170 = arith.addf %166, %169 : vector<16x192xf32>
    %171 = arith.truncf %170 : vector<16x192xf32> to vector<16x192xbf16>
    %c0_83 = arith.constant 0 : index
    %c0_84 = arith.constant 0 : index
    %172 = vector.load %arg5[%c0_83, %c0_84] : memref<192x128xbf16, #tpu.memory_space<vmem>>, vector<192x128xbf16>
    %cst_85 = arith.constant dense<0.000000e+00> : vector<16x128xf32>
    %173 = tpu.matmul %171, %172, %cst_85 {dimension_numbers = #tpu.dot_dimension_numbers<[1], [0], [0], [1], [0, 0, 1, 1], [], []>} : vector<16x192xbf16>, vector<192x128xbf16>, vector<16x128xf32> -> vector<16x128xf32>
    %c0_86 = arith.constant 0 : index
    %c0_87 = arith.constant 0 : index
    %174 = vector.load %arg6[%c0_86, %c0_87] : memref<1x128xf32, #tpu.memory_space<vmem>>, vector<1x128xf32>
    %175 = vector.broadcast %174 : vector<1x128xf32> to vector<16x128xf32>
    %176 = arith.addf %173, %175 : vector<16x128xf32>
    %c0_88 = arith.constant 0 : index
    %c0_89 = arith.constant 0 : index
    %177 = vector.load %arg9[%c0_88, %c0_89] : memref<16x128xf32, #tpu.memory_space<vmem>>, vector<16x128xf32>
    tpu.vector_store %arg9[%c0_88, %c0_89], %176 {strides = array<i32>} : memref<16x128xf32, #tpu.memory_space<vmem>>, vector<16x128xf32>,
    return
  }
  func.func @transform_0(%arg0: i32) -> (i32, i32) {
    %c0_i32 = arith.constant 0 : i32
    %c0_i32_0 = arith.constant 0 : i32
    return %arg0, %c0_i32 : i32, i32
  }
  func.func @transform_1(%arg0: i32) -> (i32, i32, i32) {
    %c0_i32 = arith.constant 0 : i32
    %c0_i32_0 = arith.constant 0 : i32
    %c0_i32_1 = arith.constant 0 : i32
    %c0_i32_2 = arith.constant 0 : i32
    return %c0_i32, %c0_i32_0, %c0_i32_1 : i32, i32, i32
  }
  func.func @transform_2(%arg0: i32) -> (i32, i32, i32) {
    %c0_i32 = arith.constant 0 : i32
    %c0_i32_0 = arith.constant 0 : i32
    %c0_i32_1 = arith.constant 0 : i32
    %c0_i32_2 = arith.constant 0 : i32
    return %c0_i32, %c0_i32_0, %c0_i32_1 : i32, i32, i32
  }
  func.func @transform_3(%arg0: i32) -> (i32, i32, i32) {
    %c0_i32 = arith.constant 0 : i32
    %c0_i32_0 = arith.constant 0 : i32
    %c0_i32_1 = arith.constant 0 : i32
    %c0_i32_2 = arith.constant 0 : i32
    return %c0_i32, %c0_i32_0, %c0_i32_1 : i32, i32, i32
  }
  func.func @transform_4(%arg0: i32) -> (i32, i32) {
    %c0_i32 = arith.constant 0 : i32
    %c0_i32_0 = arith.constant 0 : i32
    %c0_i32_1 = arith.constant 0 : i32
    return %c0_i32, %c0_i32_0 : i32, i32
  }
  func.func @transform_5(%arg0: i32) -> (i32, i32) {
    %c0_i32 = arith.constant 0 : i32
    %c0_i32_0 = arith.constant 0 : i32
    %c0_i32_1 = arith.constant 0 : i32
    return %c0_i32, %c0_i32_0 : i32, i32
  }
  func.func @transform_6(%arg0: i32) -> (i32, i32) {
    %c0_i32 = arith.constant 0 : i32
    %c0_i32_0 = arith.constant 0 : i32
    %c0_i32_1 = arith.constant 0 : i32
    return %c0_i32, %c0_i32_0 : i32, i32
  }
  func.func @transform_7(%arg0: i32) -> (i32, i32) {
    %c0_i32 = arith.constant 0 : i32
    %c0_i32_0 = arith.constant 0 : i32
    %c0_i32_1 = arith.constant 0 : i32
    return %c0_i32, %c0_i32_0 : i32, i32
  }
  func.func @transform_8(%arg0: i32) -> (i32, i32) {
    %c0_i32 = arith.constant 0 : i32
    %c0_i32_0 = arith.constant 0 : i32
    return %arg0, %c0_i32 : i32, i32
  }
}

</mosaic_0001>

<llo_original>
// kernel: transformer_forward_pallas.1
$region0: #{transformer_forward_pallas.1}
  #allocation0 [shape = 'u32[]', space=smem, size = 0x4, offset = 0x4, fixed_abs, tag = 'smem constant byte address 0x4 - core index']
  #allocation1 [shape = 'u32[144,128]{1,0:T(1,128)}', space=vmem, size = 0x12000, scoped, tag = 'internal scratch']
  %s0 = inlined_call_operand.hbm [shape: f32[16,192], index: 0, kind: input, shape index: {}]
  %s1 = inlined_call_operand.hbm [shape: bf16[3,192,576], index: 1, kind: input, shape index: {}]
  %s2 = inlined_call_operand.hbm [shape: bf16[3,192,192], index: 2, kind: input, shape index: {}]
  %s3 = inlined_call_operand.hbm [shape: f32[3,1,192], index: 3, kind: input, shape index: {}]
  %s4 = inlined_call_operand.hbm [shape: bf16[192,128], index: 4, kind: input, shape index: {}]
  %s5 = inlined_call_operand.vmem [shape: f32[1,128], index: 5, kind: input, shape index: {}]
  %s6 = inlined_call_operand.hbm [shape: f32[8,192], index: 6, kind: input, shape index: {}]
  %s7 = inlined_call_operand.hbm [shape: f32[192,192], index: 7, kind: input, shape index: {}]
  %s8 = inlined_call_operand.vmem [shape: f32[16,128], index: 8, kind: output, shape index: {}]
  %s9 = sld [smem:[#allocation0]]
  $region70: #{transformer_forward_pallas.1} parent=0
    _
  %s11 = ssub.s32 1, %s9
  %s12 = scalar_select 0, %s11, %s9
  $region1: #{transformer_forward_pallas.1} parent=0
    #allocation2 [shape = 'u8[16384]{0}', space=vmem, size = 0x4000, scoped, tag = 'input window, operand 0, single buffered']
    #allocation3 [shape = 's32[1]{0}', space=sflag, size = 0x4, scoped, tag = 'scoped memory for transformer_forward_pallas.1']
    #allocation4 [shape = 'u8[737280]{0}', space=vmem, size = 0xb4000, scoped, tag = 'input window, operand 1, single buffered']
    #allocation5 [shape = 's32[1]{0}', space=sflag, size = 0x4, scoped, tag = 'scoped memory for transformer_forward_pallas.1']
    #allocation6 [shape = 'u8[294912]{0}', space=vmem, size = 0x48000, scoped, tag = 'input window, operand 2, single buffered']
    #allocation7 [shape = 'u8[3072]{0}', space=vmem, size = 0xc00, scoped, tag = 'input window, operand 3, single buffered']
    #allocation8 [shape = 's32[1]{0}', space=sflag, size = 0x4, scoped, tag = 'scoped memory for transformer_forward_pallas.1']
    #allocation9 [shape = 'u8[49152]{0}', space=vmem, size = 0xc000, scoped, tag = 'input window, operand 4, single buffered']
    #allocation10 [shape = 'u8[8192]{0}', space=vmem, size = 0x2000, scoped, tag = 'input window, operand 6, single buffered']
    #allocation11 [shape = 's32[1]{0}', space=sflag, size = 0x4, scoped, tag = 'scoped memory for transformer_forward_pallas.1']
    #allocation12 [shape = 'u8[196608]{0}', space=vmem, size = 0x30000, scoped, tag = 'input window, operand 7, single buffered']
    %13 = vsyncpa [#allocation3], 0
    %14 = vsyncpa [#allocation5], 0
    %15 = vsyncpa [#allocation8], 0
    %16 = vsyncpa [#allocation11], 0
    // Predicated region
    $region2: #{transformer_forward_pallas.1} parent=1 // pred_check
      _
    $region3: #{transformer_forward_pallas.1} parent=1 // pred_check_branch
      %18 = sbr.rel (0) target = $region5
    $region4: #{transformer_forward_pallas.1} parent=1 // pred_region
      %s20 = ssub.s32 512, 512
      %21 = vsyncadd [#allocation3], %s20
      %s22 = sshll.u32 [#allocation2], 4
      %s23 = int_to_ptr.vmem [resolvable:$true] %s22
      %28 = dma.hbm_to_vmem [thread:$0]  %s0, 512, %s23, [#allocation3], 256, 256, 16
    $region5: #{transformer_forward_pallas.1} parent=1 // pred_fallthru
      _
    // Predicated region
    $region6: #{transformer_forward_pallas.1} parent=1 // pred_check
      _
    $region7: #{transformer_forward_pallas.1} parent=1 // pred_check_branch
      %30 = sbr.rel (0) target = $region9
    $region8: #{transformer_forward_pallas.1} parent=1 // pred_region
      %s32 = ssub.s32 23040, 23040
      %33 = vsyncadd [#allocation5], %s32
      %s34 = sshll.u32 [#allocation4], 4
      %s35 = int_to_ptr.vmem [resolvable:$true] %s34
      %40 = dma.hbm_to_vmem [thread:$0]  %s1, 23040, %s35, [#allocation5], 320, 320, 20
    $region9: #{transformer_forward_pallas.1} parent=1 // pred_fallthru
      _
    // Predicated region
    $region10: #{transformer_forward_pallas.1} parent=1 // pred_check
      _
    $region11: #{transformer_forward_pallas.1} parent=1 // pred_check_branch
      %42 = sbr.rel (0) target = $region13
    $region12: #{transformer_forward_pallas.1} parent=1 // pred_region
      %s44 = ssub.s32 9216, 9216
      %45 = vsyncadd [#allocation5], %s44
      %s46 = sshll.u32 [#allocation6], 4
      %s47 = int_to_ptr.vmem [resolvable:$true] %s46
      %52 = dma.hbm_to_vmem [thread:$0]  %s2, 9216, %s47, [#allocation5], 128, 128, 8
    $region13: #{transformer_forward_pallas.1} parent=1 // pred_fallthru
      _
    // Predicated region
    $region14: #{transformer_forward_pallas.1} parent=1 // pred_check
      _
    $region15: #{transformer_forward_pallas.1} parent=1 // pred_check_branch
      %54 = sbr.rel (0) target = $region17
    $region16: #{transformer_forward_pallas.1} parent=1 // pred_region
      %s56 = ssub.s32 96, 96
      %57 = vsyncadd [#allocation8], %s56
      %s58 = sshll.u32 [#allocation7], 4
      %s59 = int_to_ptr.vmem [resolvable:$true] %s58
      %64 = dma.hbm_to_vmem [thread:$0]  %s3, 96, %s59, [#allocation8], 32, 32, 2
    $region17: #{transformer_forward_pallas.1} parent=1 // pred_fallthru
      _
    // Predicated region
    $region18: #{transformer_forward_pallas.1} parent=1 // pred_check
      _
    $region19: #{transformer_forward_pallas.1} parent=1 // pred_check_branch
      %66 = sbr.rel (0) target = $region21
    $region20: #{transformer_forward_pallas.1} parent=1 // pred_region
      %s68 = ssub.s32 1536, 1536
      %69 = vsyncadd [#allocation8], %s68
      %s70 = sshll.u32 [#allocation9], 4
      %s71 = int_to_ptr.vmem [resolvable:$true] %s70
      %76 = dma.hbm_to_vmem [thread:$0]  %s4, 1536, %s71, [#allocation8], 64, 64, 4
    $region21: #{transformer_forward_pallas.1} parent=1 // pred_fallthru
      _
    // Predicated region
    $region22: #{transformer_forward_pallas.1} parent=1 // pred_check
      _
    $region23: #{transformer_forward_pallas.1} parent=1 // pred_check_branch
      %78 = sbr.rel (0) target = $region25
    $region24: #{transformer_forward_pallas.1} parent=1 // pred_region
      _
    $region25: #{transformer_forward_pallas.1} parent=1 // pred_fallthru
      _
    // Predicated region
    $region26: #{transformer_forward_pallas.1} parent=1 // pred_check
      _
    $region27: #{transformer_forward_pallas.1} parent=1 // pred_check_branch
      %80 = sbr.rel (0) target = $region29
    $region28: #{transformer_forward_pallas.1} parent=1 // pred_region
      %s82 = ssub.s32 256, 256
      %83 = vsyncadd [#allocation11], %s82
      %s85 = sshll.u32 [#allocation10], 4
      %s86 = int_to_ptr.vmem [resolvable:$true] %s85
      %88 = dma.hbm_to_vmem [thread:$0]  %s6, 256, %s86, [#allocation11]
    $region29: #{transformer_forward_pallas.1} parent=1 // pred_fallthru
      _
    // Predicated region
    $region30: #{transformer_forward_pallas.1} parent=1 // pred_check
      _
    $region31: #{transformer_forward_pallas.1} parent=1 // pred_check_branch
      %90 = sbr.rel (0) target = $region33
    $region32: #{transformer_forward_pallas.1} parent=1 // pred_region
      %s92 = ssub.s32 6144, 6144
      %93 = vsyncadd [#allocation11], %s92
      %s94 = sshll.u32 [#allocation12], 4
      %s95 = int_to_ptr.vmem [resolvable:$true] %s94
      %100 = dma.hbm_to_vmem [thread:$0]  %s7, 6144, %s95, [#allocation11], 256, 256, 16
    $region33: #{transformer_forward_pallas.1} parent=1 // pred_fallthru
      _
    // Predicated region
    $region34: #{transformer_forward_pallas.1} parent=1 // pred_check
      _
    $region35: #{transformer_forward_pallas.1} parent=1 // pred_check_branch
      %102 = sbr.rel (0) target = $region37
    $region36: #{transformer_forward_pallas.1} parent=1 // pred_region
      %103 = dma.done [#allocation3], 512
    $region37: #{transformer_forward_pallas.1} parent=1 // pred_fallthru
      _
    // Predicated region
    $region38: #{transformer_forward_pallas.1} parent=1 // pred_check
      _
    $region39: #{transformer_forward_pallas.1} parent=1 // pred_check_branch
      %105 = sbr.rel (0) target = $region41
    $region40: #{transformer_forward_pallas.1} parent=1 // pred_region
      %106 = dma.done [#allocation5], 23040
    $region41: #{transformer_forward_pallas.1} parent=1 // pred_fallthru
      _
    // Predicated region
    $region42: #{transformer_forward_pallas.1} parent=1 // pred_check
      _
    $region43: #{transformer_forward_pallas.1} parent=1 // pred_check_branch
      %108 = sbr.rel (0) target = $region45
    $region44: #{transformer_forward_pallas.1} parent=1 // pred_region
      %109 = dma.done [#allocation5], 9216
    $region45: #{transformer_forward_pallas.1} parent=1 // pred_fallthru
      _
    // Predicated region
    $region46: #{transformer_forward_pallas.1} parent=1 // pred_check
      _
    $region47: #{transformer_forward_pallas.1} parent=1 // pred_check_branch
      %111 = sbr.rel (0) target = $region49
    $region48: #{transformer_forward_pallas.1} parent=1 // pred_region
      %112 = dma.done [#allocation8], 96
    $region49: #{transformer_forward_pallas.1} parent=1 // pred_fallthru
      _
    // Predicated region
    $region50: #{transformer_forward_pallas.1} parent=1 // pred_check
      _
    $region51: #{transformer_forward_pallas.1} parent=1 // pred_check_branch
      %114 = sbr.rel (0) target = $region53
    $region52: #{transformer_forward_pallas.1} parent=1 // pred_region
      %115 = dma.done [#allocation8], 1536
    $region53: #{transformer_forward_pallas.1} parent=1 // pred_fallthru
      _
    // Predicated region
    $region54: #{transformer_forward_pallas.1} parent=1 // pred_check
      _
    $region55: #{transformer_forward_pallas.1} parent=1 // pred_check_branch
      %117 = sbr.rel (0) target = $region57
    $region56: #{transformer_forward_pallas.1} parent=1 // pred_region
      %118 = dma.done [#allocation11], 256
    $region57: #{transformer_forward_pallas.1} parent=1 // pred_fallthru
      _
    // Predicated region
    $region58: #{transformer_forward_pallas.1} parent=1 // pred_check
      _
    $region59: #{transformer_forward_pallas.1} parent=1 // pred_check_branch
      %120 = sbr.rel (0) target = $region61
    $region60: #{transformer_forward_pallas.1} parent=1 // pred_region
      %121 = dma.done [#allocation11], 6144
    $region61: #{transformer_forward_pallas.1} parent=1 // pred_fallthru
      _
    %v123 = vld [vmem:[#allocation2] sm:$0xff]
    %v124 = vld [vmem:[#allocation2 + $0x8] sm:$0xff]
    %v125 = vld [vmem:[#allocation2 + $0x10] sm:$0xff]
    %v126 = vld [vmem:[#allocation2 + $0x18] sm:$0xff]
    %v127 = vld [vmem:[#allocation10] sm:$0xff]
    %v128 = vld [vmem:[#allocation10 + $0x8] sm:$0xff]
    %v129 = vld [vmem:[#allocation12] sm:$0xff]
    %v130 = vld [vmem:[#allocation12 + $0x8] sm:$0xff]
    %v131 = vld [vmem:[#allocation12 + $0x10] sm:$0xff]
    %v132 = vld [vmem:[#allocation12 + $0x18] sm:$0xff]
    %v133 = vld [vmem:[#allocation12 + $0x20] sm:$0xff]
    %v134 = vld [vmem:[#allocation12 + $0x28] sm:$0xff]
    %v135 = vld [vmem:[#allocation12 + $0x30] sm:$0xff]
    %v136 = vld [vmem:[#allocation12 + $0x38] sm:$0xff]
    %v137 = vld [vmem:[#allocation12 + $0x40] sm:$0xff]
    %v138 = vld [vmem:[#allocation12 + $0x48] sm:$0xff]
    %v139 = vld [vmem:[#allocation12 + $0x50] sm:$0xff]
    %v140 = vld [vmem:[#allocation12 + $0x58] sm:$0xff]
    %v141 = vld [vmem:[#allocation12 + $0x60] sm:$0xff]
    %v142 = vld [vmem:[#allocation12 + $0x68] sm:$0xff]
    %v143 = vld [vmem:[#allocation12 + $0x70] sm:$0xff]
    %v144 = vld [vmem:[#allocation12 + $0x78] sm:$0xff]
    %v145 = vld [vmem:[#allocation12 + $0x80] sm:$0xff]
    %v146 = vld [vmem:[#allocation12 + $0x88] sm:$0xff]
    %v147 = vld [vmem:[#allocation12 + $0x90] sm:$0xff]
    %v148 = vld [vmem:[#allocation12 + $0x98] sm:$0xff]
    %v149 = vld [vmem:[#allocation12 + $0xa0] sm:$0xff]
    %v150 = vld [vmem:[#allocation12 + $0xa8] sm:$0xff]
    %v151 = vld [vmem:[#allocation12 + $0xb0] sm:$0xff]
    %v152 = vld [vmem:[#allocation12 + $0xb8] sm:$0xff]
    %v153 = vld [vmem:[#allocation12 + $0xc0] sm:$0xff]
    %v154 = vld [vmem:[#allocation12 + $0xc8] sm:$0xff]
    %v155 = vld [vmem:[#allocation12 + $0xd0] sm:$0xff]
    %v156 = vld [vmem:[#allocation12 + $0xd8] sm:$0xff]
    %v157 = vld [vmem:[#allocation12 + $0xe0] sm:$0xff]
    %v158 = vld [vmem:[#allocation12 + $0xe8] sm:$0xff]
    %v159 = vld [vmem:[#allocation12 + $0xf0] sm:$0xff]
    %v160 = vld [vmem:[#allocation12 + $0xf8] sm:$0xff]
    %v161 = vld [vmem:[#allocation12 + $0x100] sm:$0xff]
    %v162 = vld [vmem:[#allocation12 + $0x108] sm:$0xff]
    %v163 = vld [vmem:[#allocation12 + $0x110] sm:$0xff]
    %v164 = vld [vmem:[#allocation12 + $0x118] sm:$0xff]
    %v165 = vld [vmem:[#allocation12 + $0x120] sm:$0xff]
    %v166 = vld [vmem:[#allocation12 + $0x128] sm:$0xff]
    %v167 = vld [vmem:[#allocation12 + $0x130] sm:$0xff]
    %v168 = vld [vmem:[#allocation12 + $0x138] sm:$0xff]
    %v169 = vld [vmem:[#allocation12 + $0x140] sm:$0xff]
    %v170 = vld [vmem:[#allocation12 + $0x148] sm:$0xff]
    %v171 = vld [vmem:[#allocation12 + $0x150] sm:$0xff]
    %v172 = vld [vmem:[#allocation12 + $0x158] sm:$0xff]
    %v173 = vld [vmem:[#allocation12 + $0x160] sm:$0xff]
    %v174 = vld [vmem:[#allocation12 + $0x168] sm:$0xff]
    %v175 = vld [vmem:[#allocation12 + $0x170] sm:$0xff]
    %v176 = vld [vmem:[#allocation12 + $0x178] sm:$0xff]
    %v177 = vpack.c.bf16 %v125, %v123
    %v178 = vpack.c.bf16 %v126, %v124
    %v179 = vld [vmem:[#allocation4] sm:$0xff]
    %v180 = vld [vmem:[#allocation4 + $0x8] sm:$0xff]
    %v181 = vld [vmem:[#allocation4 + $0x10] sm:$0xf]
    %v182 = vld [vmem:[#allocation4 + $0x14] sm:$0xff]
    %v183 = vld [vmem:[#allocation4 + $0x1c] sm:$0xff]
    %v184 = vld [vmem:[#allocation4 + $0x24] sm:$0xf]
    %v185 = vld [vmem:[#allocation4 + $0x28] sm:$0xff]
    %v186 = vld [vmem:[#allocation4 + $0x30] sm:$0xff]
    %v187 = vld [vmem:[#allocation4 + $0x38] sm:$0xf]
    %v188 = vld [vmem:[#allocation4 + $0x3c] sm:$0xff]
    %v189 = vld [vmem:[#allocation4 + $0x44] sm:$0xff]
    %v190 = vld [vmem:[#allocation4 + $0x4c] sm:$0xf]
    %v191 = vld [vmem:[#allocation4 + $0x50] sm:$0xff]
    %v192 = vld [vmem:[#allocation4 + $0x58] sm:$0xff]
    %v193 = vld [vmem:[#allocation4 + $0x60] sm:$0xf]
    %v194 = vld [vmem:[#allocation4 + $0x64] sm:$0xff]
    %v195 = vld [vmem:[#allocation4 + $0x6c] sm:$0xff]
    %v196 = vld [vmem:[#allocation4 + $0x74] sm:$0xf]
    %v197 = vld [vmem:[#allocation4 + $0x78] sm:$0xff]
    %v198 = vld [vmem:[#allocation4 + $0x80] sm:$0xff]
    %v199 = vld [vmem:[#allocation4 + $0x88] sm:$0xf]
    %v200 = vld [vmem:[#allocation4 + $0x8c] sm:$0xff]
    %v201 = vld [vmem:[#allocation4 + $0x94] sm:$0xff]
    %v202 = vld [vmem:[#allocation4 + $0x9c] sm:$0xf]
    %v203 = vld [vmem:[#allocation4 + $0xa0] sm:$0xff]
    %v204 = vld [vmem:[#allocation4 + $0xa8] sm:$0xff]
    %v205 = vld [vmem:[#allocation4 + $0xb0] sm:$0xf]
    %v206 = vld [vmem:[#allocation4 + $0xb4] sm:$0xff]
    %v207 = vld [vmem:[#allocation4 + $0xbc] sm:$0xff]
    %v208 = vld [vmem:[#allocation4 + $0xc4] sm:$0xf]
    %v209 = vld [vmem:[#allocation4 + $0xc8] sm:$0xff]
    %v210 = vld [vmem:[#allocation4 + $0xd0] sm:$0xff]
    %v211 = vld [vmem:[#allocation4 + $0xd8] sm:$0xf]
    %v212 = vld [vmem:[#allocation4 + $0xdc] sm:$0xff]
    %v213 = vld [vmem:[#allocation4 + $0xe4] sm:$0xff]
    %v214 = vld [vmem:[#allocation4 + $0xec] sm:$0xf]
    %v215 = vld [vmem:[#allocation4 + $0xf0] sm:$0xff]
    %v216 = vld [vmem:[#allocation4 + $0xf8] sm:$0xff]
    %v217 = vld [vmem:[#allocation4 + $0x100] sm:$0xf]
    %v218 = vld [vmem:[#allocation4 + $0x104] sm:$0xff]
    %v219 = vld [vmem:[#allocation4 + $0x10c] sm:$0xff]
    %v220 = vld [vmem:[#allocation4 + $0x114] sm:$0xf]
    %v221 = vld [vmem:[#allocation4 + $0x118] sm:$0xff]
    %v222 = vld [vmem:[#allocation4 + $0x120] sm:$0xff]
    %v223 = vld [vmem:[#allocation4 + $0x128] sm:$0xf]
    %v224 = vld [vmem:[#allocation4 + $0x12c] sm:$0xff]
    %v225 = vld [vmem:[#allocation4 + $0x134] sm:$0xff]
    %v226 = vld [vmem:[#allocation4 + $0x13c] sm:$0xf]
    %v227 = vld [vmem:[#allocation4 + $0x140] sm:$0xff]
    %v228 = vld [vmem:[#allocation4 + $0x148] sm:$0xff]
    %v229 = vld [vmem:[#allocation4 + $0x150] sm:$0xf]
    %v230 = vld [vmem:[#allocation4 + $0x154] sm:$0xff]
    %v231 = vld [vmem:[#allocation4 + $0x15c] sm:$0xff]
    %v232 = vld [vmem:[#allocation4 + $0x164] sm:$0xf]
    %v233 = vld [vmem:[#allocation4 + $0x168] sm:$0xff]
    %v234 = vld [vmem:[#allocation4 + $0x170] sm:$0xff]
    %v235 = vld [vmem:[#allocation4 + $0x178] sm:$0xf]
    %v236 = vld [vmem:[#allocation4 + $0x17c] sm:$0xff]
    %v237 = vld [vmem:[#allocation4 + $0x184] sm:$0xff]
    %v238 = vld [vmem:[#allocation4 + $0x18c] sm:$0xf]
    %v239 = vld [vmem:[#allocation4 + $0x190] sm:$0xff]
    %v240 = vld [vmem:[#allocation4 + $0x198] sm:$0xff]
    %v241 = vld [vmem:[#allocation4 + $0x1a0] sm:$0xf]
    %v242 = vld [vmem:[#allocation4 + $0x1a4] sm:$0xff]
    %v243 = vld [vmem:[#allocation4 + $0x1ac] sm:$0xff]
    %v244 = vld [vmem:[#allocation4 + $0x1b4] sm:$0xf]
    %v245 = vld [vmem:[#allocation4 + $0x1b8] sm:$0xff]
    %v246 = vld [vmem:[#allocation4 + $0x1c0] sm:$0xff]
    %v247 = vld [vmem:[#allocation4 + $0x1c8] sm:$0xf]
    %v248 = vld [vmem:[#allocation4 + $0x1cc] sm:$0xff]
    %v249 = vld [vmem:[#allocation4 + $0x1d4] sm:$0xff]
    %v250 = vld [vmem:[#allocation4 + $0x1dc] sm:$0xf]
    %v323 = vunpack.c.l.b16 %v179
    %v324 = vunpack.c.h.b16 %v179
    %v325 = vunpack.c.l.b16 %v180
    %v326 = vunpack.c.h.b16 %v180
    %v327 = vunpack.c.l.b16 %v181
    %v328 = vunpack.c.l.b16 %v182
    %v329 = vunpack.c.h.b16 %v182
    %v330 = vunpack.c.l.b16 %v183
    %v331 = vunpack.c.h.b16 %v183
    %v332 = vunpack.c.l.b16 %v184
    %v333 = vunpack.c.l.b16 %v185
    %v334 = vunpack.c.h.b16 %v185
    %v335 = vunpack.c.l.b16 %v186
    %v336 = vunpack.c.h.b16 %v186
    %v337 = vunpack.c.l.b16 %v187
    %v338 = vunpack.c.l.b16 %v188
    %v339 = vunpack.c.h.b16 %v188
    %v340 = vunpack.c.l.b16 %v189
    %v341 = vunpack.c.h.b16 %v189
    %v342 = vunpack.c.l.b16 %v190
    %v343 = vunpack.c.l.b16 %v191
    %v344 = vunpack.c.h.b16 %v191
    %v345 = vunpack.c.l.b16 %v192
    %v346 = vunpack.c.h.b16 %v192
    %v347 = vunpack.c.l.b16 %v193
    %v348 = vunpack.c.l.b16 %v194
    %v349 = vunpack.c.h.b16 %v194
    %v350 = vunpack.c.l.b16 %v195
    %v351 = vunpack.c.h.b16 %v195
    %v352 = vunpack.c.l.b16 %v196
    %v353 = vunpack.c.l.b16 %v197
    %v354 = vunpack.c.h.b16 %v197
    %v355 = vunpack.c.l.b16 %v198
    %v356 = vunpack.c.h.b16 %v198
    %v357 = vunpack.c.l.b16 %v199
    %v358 = vunpack.c.l.b16 %v200
    %v359 = vunpack.c.h.b16 %v200
    %v360 = vunpack.c.l.b16 %v201
    %v361 = vunpack.c.h.b16 %v201
    %v362 = vunpack.c.l.b16 %v202
    %v363 = vunpack.c.l.b16 %v203
    %v364 = vunpack.c.h.b16 %v203
    %v365 = vunpack.c.l.b16 %v204
    %v366 = vunpack.c.h.b16 %v204
    %v367 = vunpack.c.l.b16 %v205
    %v368 = vunpack.c.l.b16 %v206
    %v369 = vunpack.c.h.b16 %v206
    %v370 = vunpack.c.l.b16 %v207
    %v371 = vunpack.c.h.b16 %v207
    %v372 = vunpack.c.l.b16 %v208
    %v373 = vunpack.c.l.b16 %v209
    %v374 = vunpack.c.h.b16 %v209
    %v375 = vunpack.c.l.b16 %v210
    %v376 = vunpack.c.h.b16 %v210
    %v377 = vunpack.c.l.b16 %v211
    %v378 = vunpack.c.l.b16 %v212
    %v379 = vunpack.c.h.b16 %v212
    %v380 = vunpack.c.l.b16 %v213
    %v381 = vunpack.c.h.b16 %v213
    %v382 = vunpack.c.l.b16 %v214
    %v383 = vunpack.c.l.b16 %v215
    %v384 = vunpack.c.h.b16 %v215
    %v385 = vunpack.c.l.b16 %v216
    %v386 = vunpack.c.h.b16 %v216
    %v387 = vunpack.c.l.b16 %v217
    %v388 = vunpack.c.l.b16 %v218
    %v389 = vunpack.c.h.b16 %v218
    %v390 = vunpack.c.l.b16 %v219
    %v391 = vunpack.c.h.b16 %v219
    %v392 = vunpack.c.l.b16 %v220
    %v393 = vunpack.c.l.b16 %v221
    %v394 = vunpack.c.h.b16 %v221
    %v395 = vunpack.c.l.b16 %v222
    %v396 = vunpack.c.h.b16 %v222
    %v397 = vunpack.c.l.b16 %v223
    %v398 = vunpack.c.l.b16 %v224
    %v399 = vunpack.c.h.b16 %v224
    %v400 = vunpack.c.l.b16 %v225
    %v401 = vunpack.c.h.b16 %v225
    %v402 = vunpack.c.l.b16 %v226
    %v403 = vunpack.c.l.b16 %v227
    %v404 = vunpack.c.h.b16 %v227
    %v405 = vunpack.c.l.b16 %v228
    %v406 = vunpack.c.h.b16 %v228
    %v407 = vunpack.c.l.b16 %v229
    %v408 = vunpack.c.l.b16 %v230
    %v409 = vunpack.c.h.b16 %v230
    %v410 = vunpack.c.l.b16 %v231
    %v411 = vunpack.c.h.b16 %v231
    %v412 = vunpack.c.l.b16 %v232
    %v413 = vunpack.c.l.b16 %v233
    %v414 = vunpack.c.h.b16 %v233
    %v415 = vunpack.c.l.b16 %v234
    %v416 = vunpack.c.h.b16 %v234
    %v417 = vunpack.c.l.b16 %v235
    %v418 = vunpack.c.l.b16 %v236
    %v419 = vunpack.c.h.b16 %v236
    %v420 = vunpack.c.l.b16 %v237
    %v421 = vunpack.c.h.b16 %v237
    %v422 = vunpack.c.l.b16 %v238
    %v423 = vunpack.c.l.b16 %v239
    %v424 = vunpack.c.h.b16 %v239
    %v425 = vunpack.c.l.b16 %v240
    %v426 = vunpack.c.h.b16 %v240
    %v427 = vunpack.c.l.b16 %v241
    %v428 = vunpack.c.l.b16 %v242
    %v429 = vunpack.c.h.b16 %v242
    %v430 = vunpack.c.l.b16 %v243
    %v431 = vunpack.c.h.b16 %v243
    %v432 = vunpack.c.l.b16 %v244
    %v433 = vunpack.c.l.b16 %v245
    %v434 = vunpack.c.h.b16 %v245
    %v435 = vunpack.c.l.b16 %v246
    %v436 = vunpack.c.h.b16 %v246
    %v437 = vunpack.c.l.b16 %v247
    %v438 = vunpack.c.l.b16 %v248
    %v439 = vunpack.c.h.b16 %v248
    %v440 = vunpack.c.l.b16 %v249
    %v441 = vunpack.c.h.b16 %v249
    %v442 = vunpack.c.l.b16 %v250
    %v443 = vpack.c.b16 %v328, %v323
    %v444 = vpack.c.b16 %v329, %v324
    %v445 = vpack.c.b16 %v330, %v325
    %v446 = vpack.c.b16 %v331, %v326
    %v447 = vpack.c.b16 %v332, %v327
    %v448 = vpack.c.b16 %v338, %v333
    %v449 = vpack.c.b16 %v339, %v334
    %v450 = vpack.c.b16 %v340, %v335
    %v451 = vpack.c.b16 %v341, %v336
    %v452 = vpack.c.b16 %v342, %v337
    %v453 = vpack.c.b16 %v348, %v343
    %v454 = vpack.c.b16 %v349, %v344
    %v455 = vpack.c.b16 %v350, %v345
    %v456 = vpack.c.b16 %v351, %v346
    %v457 = vpack.c.b16 %v352, %v347
    %v458 = vpack.c.b16 %v358, %v353
    %v459 = vpack.c.b16 %v359, %v354
    %v460 = vpack.c.b16 %v360, %v355
    %v461 = vpack.c.b16 %v361, %v356
    %v462 = vpack.c.b16 %v362, %v357
    %v463 = vpack.c.b16 %v368, %v363
    %v464 = vpack.c.b16 %v369, %v364
    %v465 = vpack.c.b16 %v370, %v365
    %v466 = vpack.c.b16 %v371, %v366
    %v467 = vpack.c.b16 %v372, %v367
    %v468 = vpack.c.b16 %v378, %v373
    %v469 = vpack.c.b16 %v379, %v374
    %v470 = vpack.c.b16 %v380, %v375
    %v471 = vpack.c.b16 %v381, %v376
    %v472 = vpack.c.b16 %v382, %v377
    %v473 = vpack.c.b16 %v388, %v383
    %v474 = vpack.c.b16 %v389, %v384
    %v475 = vpack.c.b16 %v390, %v385
    %v476 = vpack.c.b16 %v391, %v386
    %v477 = vpack.c.b16 %v392, %v387
    %v478 = vpack.c.b16 %v398, %v393
    %v479 = vpack.c.b16 %v399, %v394
    %v480 = vpack.c.b16 %v400, %v395
    %v481 = vpack.c.b16 %v401, %v396
    %v482 = vpack.c.b16 %v402, %v397
    %v483 = vpack.c.b16 %v408, %v403
    %v484 = vpack.c.b16 %v409, %v404
    %v485 = vpack.c.b16 %v410, %v405
    %v486 = vpack.c.b16 %v411, %v406
    %v487 = vpack.c.b16 %v412, %v407
    %v488 = vpack.c.b16 %v418, %v413
    %v489 = vpack.c.b16 %v419, %v414
    %v490 = vpack.c.b16 %v420, %v415
    %v491 = vpack.c.b16 %v421, %v416
    %v492 = vpack.c.b16 %v422, %v417
    %v493 = vpack.c.b16 %v428, %v423
    %v494 = vpack.c.b16 %v429, %v424
    %v495 = vpack.c.b16 %v430, %v425
    %v496 = vpack.c.b16 %v431, %v426
    %v497 = vpack.c.b16 %v432, %v427
    %v498 = vpack.c.b16 %v438, %v433
    %v499 = vpack.c.b16 %v439, %v434
    %v500 = vpack.c.b16 %v440, %v435
    %v501 = vpack.c.b16 %v441, %v436
    %v502 = vpack.c.b16 %v442, %v437
    %vm563 = vcmask 523264
    %v565 = vsel %vm563, %v178, 0
    %567 = vmatprep.subr.bf16.mxu0 %v479
    %568 = vmatpush1.bf16.msra.mxu0 %v478
    %569 = vmatprep.subr.bf16.mxu0 %v474
    %570 = vmatpush1.bf16.msra.mxu0 %v473
    %571 = vmatprep.subr.bf16.mxu0 %v469
    %572 = vmatpush1.bf16.msra.mxu0 %v468
    %573 = vmatprep.subr.bf16.mxu0 %v464
    %574 = vmatpush1.bf16.msra.mxu0 %v463
    %575 = vmatprep.subr.bf16.mxu0 %v459
    %576 = vmatpush1.bf16.msra.mxu0 %v458
    %577 = vmatprep.subr.bf16.mxu0 %v454
    %578 = vmatpush1.bf16.msra.mxu0 %v453
    %579 = vmatprep.subr.bf16.mxu0 %v449
    %580 = vmatpush1.bf16.msra.mxu0 %v448
    %581 = vmatprep.subr.bf16.mxu0 %v444
    %582 = vmatpush1.bf16.msra.mxu0 %v443
    %583 = vmatprep.subr.bf16.mxu0 0
    %584 = vmatpush2.bf16.msra.mxu0 0
    %585 = vmatprep.subr.bf16.mxu0 0
    %586 = vmatpush2.bf16.msra.mxu0 0
    %587 = vmatprep.subr.bf16.mxu0 0
    %588 = vmatpush2.bf16.msra.mxu0 0
    %589 = vmatprep.subr.bf16.mxu0 0
    %590 = vmatpush2.bf16.msra.mxu0 0
    %591 = vmatprep.subr.bf16.mxu0 %v499
    %592 = vmatpush2.bf16.msra.mxu0 %v498
    %593 = vmatprep.subr.bf16.mxu0 %v494
    %594 = vmatpush2.bf16.msra.mxu0 %v493
    %595 = vmatprep.subr.bf16.mxu0 %v489
    %596 = vmatpush2.bf16.msra.mxu0 %v488
    %597 = vmatprep.subr.bf16.mxu0 %v484
    %598 = vmatpush2.bf16.msra.mxu0 %v483
    %599 = vmatprep.mubr.bf16.mxu0 %v565
    %600 = vmatmul.mubr.bf16.gmra.mxu0 %v177
    %v601 = vpop.f32.mrf.mxu0
    %v602 = vadd.f32 0.0, %v601
    %v603 = vpop.f32.mrf.mxu0
    %v604 = vadd.f32 0.0, %v603
    %v605 = vpop.f32.mrf.mxu0
    %v606 = vadd.f32 0.0, %v605
    %v607 = vpop.f32.mrf.mxu0
    %v608 = vadd.f32 0.0, %v607
    %609 = vdwg.mxu0
    %610 = vmatprep.subr.bf16.mxu0 %v481
    %611 = vmatpush1.bf16.msra.mxu0 %v480
    %612 = vmatprep.subr.bf16.mxu0 %v476
    %613 = vmatpush1.bf16.msra.mxu0 %v475
    %614 = vmatprep.subr.bf16.mxu0 %v471
    %615 = vmatpush1.bf16.msra.mxu0 %v470
    %616 = vmatprep.subr.bf16.mxu0 %v466
    %617 = vmatpush1.bf16.msra.mxu0 %v465
    %618 = vmatprep.subr.bf16.mxu0 %v461
    %619 = vmatpush1.bf16.msra.mxu0 %v460
    %620 = vmatprep.subr.bf16.mxu0 %v456
    %621 = vmatpush1.bf16.msra.mxu0 %v455
    %622 = vmatprep.subr.bf16.mxu0 %v451
    %623 = vmatpush1.bf16.msra.mxu0 %v450
    %624 = vmatprep.subr.bf16.mxu0 %v446
    %625 = vmatpush1.bf16.msra.mxu0 %v445
    %626 = vmatprep.subr.bf16.mxu0 0
    %627 = vmatpush2.bf16.msra.mxu0 0
    %628 = vmatprep.subr.bf16.mxu0 0
    %629 = vmatpush2.bf16.msra.mxu0 0
    %630 = vmatprep.subr.bf16.mxu0 0
    %631 = vmatpush2.bf16.msra.mxu0 0
    %632 = vmatprep.subr.bf16.mxu0 0
    %633 = vmatpush2.bf16.msra.mxu0 0
    %634 = vmatprep.subr.bf16.mxu0 %v501
    %635 = vmatpush2.bf16.msra.mxu0 %v500
    %636 = vmatprep.subr.bf16.mxu0 %v496
    %637 = vmatpush2.bf16.msra.mxu0 %v495
    %638 = vmatprep.subr.bf16.mxu0 %v491
    %639 = vmatpush2.bf16.msra.mxu0 %v490
    %640 = vmatprep.subr.bf16.mxu0 %v486
    %641 = vmatpush2.bf16.msra.mxu0 %v485
    %642 = vmatprep.mubr.bf16.mxu0 %v565
    %643 = vmatmul.mubr.bf16.gmra.mxu0 %v177
    %v644 = vpop.f32.mrf.mxu0
    %v645 = vadd.f32 0.0, %v644
    %v646 = vpop.f32.mrf.mxu0
    %v647 = vadd.f32 0.0, %v646
    %v648 = vpop.f32.mrf.mxu0
    %v649 = vadd.f32 0.0, %v648
    %v650 = vpop.f32.mrf.mxu0
    %v651 = vadd.f32 0.0, %v650
    %652 = vdwg.mxu0
    %653 = vmatprep.subr.bf16.mxu0 0
    %654 = vmatpush1.bf16.msra.mxu0 %v482
    %655 = vmatprep.subr.bf16.mxu0 0
    %656 = vmatpush1.bf16.msra.mxu0 %v477
    %657 = vmatprep.subr.bf16.mxu0 0
    %658 = vmatpush1.bf16.msra.mxu0 %v472
    %659 = vmatprep.subr.bf16.mxu0 0
    %660 = vmatpush1.bf16.msra.mxu0 %v467
    %661 = vmatprep.subr.bf16.mxu0 0
    %662 = vmatpush1.bf16.msra.mxu0 %v462
    %663 = vmatprep.subr.bf16.mxu0 0
    %664 = vmatpush1.bf16.msra.mxu0 %v457
    %665 = vmatprep.subr.bf16.mxu0 0
    %666 = vmatpush1.bf16.msra.mxu0 %v452
    %667 = vmatprep.subr.bf16.mxu0 0
    %668 = vmatpush1.bf16.msra.mxu0 %v447
    %669 = vmatprep.subr.bf16.mxu0 0
    %670 = vmatpush2.bf16.msra.mxu0 0
    %671 = vmatprep.subr.bf16.mxu0 0
    %672 = vmatpush2.bf16.msra.mxu0 0
    %673 = vmatprep.subr.bf16.mxu0 0
    %674 = vmatpush2.bf16.msra.mxu0 0
    %675 = vmatprep.subr.bf16.mxu0 0
    %676 = vmatpush2.bf16.msra.mxu0 0
    %677 = vmatprep.subr.bf16.mxu0 0
    %678 = vmatpush2.bf16.msra.mxu0 %v502
    %679 = vmatprep.subr.bf16.mxu0 0
    %680 = vmatpush2.bf16.msra.mxu0 %v497
    %681 = vmatprep.subr.bf16.mxu0 0
    %682 = vmatpush2.bf16.msra.mxu0 %v492
    %683 = vmatprep.subr.bf16.mxu0 0
    %684 = vmatpush2.bf16.msra.mxu0 %v487
    %685 = vmatprep.mubr.bf16.mxu0 %v565
    %686 = vmatmul.mubr.bf16.gmra.mxu0 %v177
    %v687 = vpop.f32.mrf.mxu0
    %v688 = vadd.f32 0.0, %v687
    %v689 = vpop.f32.mrf.mxu0
    %v690 = vpop.f32.mrf.mxu0
    %v691 = vadd.f32 0.0, %v690
    %v692 = vpop.f32.mrf.mxu0
    %693 = vdwg.mxu0
    %694 = vxpose.xlu0.b32.start [1/16] %v602, 128
    %695 = vxpose.xlu0.b32.cont [2/16] 0.0, 128
    %696 = vxpose.xlu0.b32.cont [3/16] 0.0, 128
    %697 = vxpose.xlu0.b32.cont [4/16] 0.0, 128
    %698 = vxpose.xlu0.b32.cont [5/16] 0.0, 128
    %699 = vxpose.xlu0.b32.cont [6/16] 0.0, 128
    %700 = vxpose.xlu0.b32.cont [7/16] 0.0, 128
    %701 = vxpose.xlu0.b32.cont [8/16] 0.0, 128
    %702 = vxpose.xlu0.b32.cont [9/16] 0.0, 128
    %703 = vxpose.xlu0.b32.cont [10/16] 0.0, 128
    %704 = vxpose.xlu0.b32.cont [11/16] 0.0, 128
    %705 = vxpose.xlu0.b32.cont [12/16] 0.0, 128
    %706 = vxpose.xlu0.b32.cont [13/16] 0.0, 128
    %707 = vxpose.xlu0.b32.cont [14/16] 0.0, 128
    %708 = vxpose.xlu0.b32.cont [15/16] 0.0, 128
    %709 = vxpose.xlu0.b32.end [16/16] 0.0, 128
    %v710 = vpop.trf.xlu0
    %v711 = vpop.trf.xlu0
    %v712 = vpop.trf.xlu0
    %v713 = vpop.trf.xlu0
    %v714 = vpop.trf.xlu0
    %v715 = vpop.trf.xlu0
    %v716 = vpop.trf.xlu0
    %v717 = vpop.trf.xlu0
    %v718 = vpop.trf.xlu0
    %v719 = vpop.trf.xlu0
    %v720 = vpop.trf.xlu0
    %v721 = vpop.trf.xlu0
    %v722 = vpop.trf.xlu0
    %v723 = vpop.trf.xlu0
    %v724 = vpop.trf.xlu0
    %v725 = vpop.trf.xlu0
    %726 = vxpose.xlu0.b32.start [1/16] %v604, 128
    %727 = vxpose.xlu0.b32.cont [2/16] 0.0, 128
    %728 = vxpose.xlu0.b32.cont [3/16] 0.0, 128
    %729 = vxpose.xlu0.b32.cont [4/16] 0.0, 128
    %730 = vxpose.xlu0.b32.cont [5/16] 0.0, 128
    %731 = vxpose.xlu0.b32.cont [6/16] 0.0, 128
    %732 = vxpose.xlu0.b32.cont [7/16] 0.0, 128
    %733 = vxpose.xlu0.b32.cont [8/16] 0.0, 128
    %734 = vxpose.xlu0.b32.cont [9/16] 0.0, 128
    %735 = vxpose.xlu0.b32.cont [10/16] 0.0, 128
    %736 = vxpose.xlu0.b32.cont [11/16] 0.0, 128
    %737 = vxpose.xlu0.b32.cont [12/16] 0.0, 128
    %738 = vxpose.xlu0.b32.cont [13/16] 0.0, 128
    %739 = vxpose.xlu0.b32.cont [14/16] 0.0, 128
    %740 = vxpose.xlu0.b32.cont [15/16] 0.0, 128
    %741 = vxpose.xlu0.b32.end [16/16] 0.0, 128
    %v742 = vpop.trf.xlu0
    %v743 = vpop.trf.xlu0
    %v744 = vpop.trf.xlu0
    %v745 = vpop.trf.xlu0
    %v746 = vpop.trf.xlu0
    %v747 = vpop.trf.xlu0
    %v748 = vpop.trf.xlu0
    %v749 = vpop.trf.xlu0
    %v750 = vpop.trf.xlu0
    %v751 = vpop.trf.xlu0
    %v752 = vpop.trf.xlu0
    %v753 = vpop.trf.xlu0
    %v754 = vpop.trf.xlu0
    %v755 = vpop.trf.xlu0
    %v756 = vpop.trf.xlu0
    %v757 = vpop.trf.xlu0
    %760 = vrot.lane.b32.xlu0 %v604, 64
    %v761 = vpop.permute.xlu0 %760
    %762 = vrot.lane.b32.xlu0 %v645, 64
    %v763 = vpop.permute.xlu0 %762
    %v764 = vsel %vm563, %v761, %v763
    %vm767 = vcmask 64512
    %v769 = vsel %vm767, %v710, 0
    %v772 = vsel %vm767, %v711, 0
    %v775 = vsel %vm767, %v712, 0
    %v778 = vsel %vm767, %v713, 0
    %v781 = vsel %vm767, %v714, 0
    %v784 = vsel %vm767, %v715, 0
    %v787 = vsel %vm767, %v716, 0
    %v790 = vsel %vm767, %v717, 0
    %v793 = vsel %vm767, %v718, 0
    %v796 = vsel %vm767, %v719, 0
    %v799 = vsel %vm767, %v720, 0
    %v802 = vsel %vm767, %v721, 0
    %v805 = vsel %vm767, %v722, 0
    %v808 = vsel %vm767, %v723, 0
    %v811 = vsel %vm767, %v724, 0
    %v814 = vsel %vm767, %v725, 0
    %v817 = vsel %vm767, %v742, 0
    %v820 = vsel %vm767, %v743, 0
    %v823 = vsel %vm767, %v744, 0
    %v826 = vsel %vm767, %v745, 0
    %v829 = vsel %vm767, %v746, 0
    %v832 = vsel %vm767, %v747, 0
    %v835 = vsel %vm767, %v748, 0
    %v838 = vsel %vm767, %v749, 0
    %840 = vmatprep.subr.mxu0 0.0
    %841 = vmatpush1.msra.mxu0 0.0
    %842 = vmatprep.subr.mxu0 0.0
    %843 = vmatpush1.msra.mxu0 0.0
    %844 = vmatprep.subr.mxu0 0.0
    %845 = vmatpush1.msra.mxu0 0.0
    %846 = vmatprep.subr.mxu0 0.0
    %847 = vmatpush1.msra.mxu0 0.0
    %848 = vmatprep.subr.mxu0 0.0
    %849 = vmatpush1.msra.mxu0 0.0
    %850 = vmatprep.subr.mxu0 0.0
    %851 = vmatpush1.msra.mxu0 0.0
    %852 = vmatprep.subr.mxu0 0.0
    %853 = vmatpush1.msra.mxu0 0.0
    %854 = vmatprep.subr.mxu0 0.0
    %855 = vmatpush1.msra.mxu0 0.0
    %856 = vmatprep.subr.mxu0 0.0
    %857 = vmatpush1.msra.mxu0 0.0
    %858 = vmatprep.subr.mxu0 0.0
    %859 = vmatpush1.msra.mxu0 0.0
    %860 = vmatprep.subr.mxu0 0.0
    %861 = vmatpush1.msra.mxu0 0.0
    %862 = vmatprep.subr.mxu0 0.0
    %863 = vmatpush1.msra.mxu0 0.0
    %864 = vmatprep.subr.mxu0 0.0
    %865 = vmatpush1.msra.mxu0 0.0
    %866 = vmatprep.subr.mxu0 0.0
    %867 = vmatpush1.msra.mxu0 0.0
    %868 = vmatprep.subr.mxu0 0.0
    %869 = vmatpush1.msra.mxu0 0.0
    %870 = vmatprep.subr.mxu0 %v763
    %871 = vmatpush1.msra.mxu0 %v764
    %872 = vmatprep.subr.mxu0 0.0
    %873 = vmatpush2.msra.mxu0 0.0
    %874 = vmatprep.subr.mxu0 0.0
    %875 = vmatpush2.msra.mxu0 0.0
    %876 = vmatprep.subr.mxu0 0.0
    %877 = vmatpush2.msra.mxu0 0.0
    %878 = vmatprep.subr.mxu0 0.0
    %879 = vmatpush2.msra.mxu0 0.0
    %880 = vmatprep.subr.mxu0 0.0
    %881 = vmatpush2.msra.mxu0 0.0
    %882 = vmatprep.subr.mxu0 0.0
    %883 = vmatpush2.msra.mxu0 0.0
    %884 = vmatprep.subr.mxu0 0.0
    %885 = vmatpush2.msra.mxu0 0.0
    %886 = vmatprep.subr.mxu0 0.0
    %887 = vmatpush2.msra.mxu0 0.0
    %888 = vmatprep.subr.mxu0 0.0
    %889 = vmatpush2.msra.mxu0 0.0
    %890 = vmatprep.subr.mxu0 0.0
    %891 = vmatpush2.msra.mxu0 0.0
    %892 = vmatprep.subr.mxu0 0.0
    %893 = vmatpush2.msra.mxu0 0.0
    %894 = vmatprep.subr.mxu0 0.0
    %895 = vmatpush2.msra.mxu0 0.0
    %896 = vmatprep.subr.mxu0 0.0
    %897 = vmatpush2.msra.mxu0 0.0
    %898 = vmatprep.subr.mxu0 0.0
    %899 = vmatpush2.msra.mxu0 0.0
    %900 = vmatprep.subr.mxu0 0.0
    %901 = vmatpush2.msra.mxu0 0.0
    %902 = vmatprep.subr.mxu0 0.0
    %903 = vmatpush2.msra.mxu0 0.0
    %904 = vmatprep.mubr.f32.mxu0 0.0
    %905 = vmatmul.mubr.f32.gmra.mxu0 %v769
    %v906 = vpop.f32.mrf.mxu0
    %v907 = vadd.f32 0.0, %v906
    %v908 = vpop.f32.mrf.mxu0
    %v909 = vadd.f32 0.0, %v908
    %910 = vmatprep.mubr.f32.mxu0 0.0
    %911 = vmatmul.mubr.f32.gmra.mxu0 %v772
    %v912 = vpop.f32.mrf.mxu0
    %v913 = vadd.f32 0.0, %v912
    %v914 = vpop.f32.mrf.mxu0
    %v915 = vadd.f32 0.0, %v914
    %916 = vmatprep.mubr.f32.mxu0 0.0
    %917 = vmatmul.mubr.f32.gmra.mxu0 %v775
    %v918 = vpop.f32.mrf.mxu0
    %v919 = vadd.f32 0.0, %v918
    %v920 = vpop.f32.mrf.mxu0
    %v921 = vadd.f32 0.0, %v920
    %922 = vmatprep.mubr.f32.mxu0 0.0
    %923 = vmatmul.mubr.f32.gmra.mxu0 %v778
    %v924 = vpop.f32.mrf.mxu0
    %v925 = vadd.f32 0.0, %v924
    %v926 = vpop.f32.mrf.mxu0
    %v927 = vadd.f32 0.0, %v926
    %928 = vmatprep.mubr.f32.mxu0 0.0
    %929 = vmatmul.mubr.f32.gmra.mxu0 %v781
    %v930 = vpop.f32.mrf.mxu0
    %v931 = vadd.f32 0.0, %v930
    %v932 = vpop.f32.mrf.mxu0
    %v933 = vadd.f32 0.0, %v932
    %934 = vmatprep.mubr.f32.mxu0 0.0
    %935 = vmatmul.mubr.f32.gmra.mxu0 %v784
    %v936 = vpop.f32.mrf.mxu0
    %v937 = vadd.f32 0.0, %v936
    %v938 = vpop.f32.mrf.mxu0
    %v939 = vadd.f32 0.0, %v938
    %940 = vmatprep.mubr.f32.mxu0 0.0
    %941 = vmatmul.mubr.f32.gmra.mxu0 %v787
    %v942 = vpop.f32.mrf.mxu0
    %v943 = vadd.f32 0.0, %v942
    %v944 = vpop.f32.mrf.mxu0
    %v945 = vadd.f32 0.0, %v944
    %946 = vmatprep.mubr.f32.mxu0 0.0
    %947 = vmatmul.mubr.f32.gmra.mxu0 %v790
    %v948 = vpop.f32.mrf.mxu0
    %v949 = vadd.f32 0.0, %v948
    %v950 = vpop.f32.mrf.mxu0
    %v951 = vadd.f32 0.0, %v950
    %952 = vmatprep.mubr.f32.mxu0 0.0
    %953 = vmatmul.mubr.f32.gmra.mxu0 %v793
    %v954 = vpop.f32.mrf.mxu0
    %v955 = vadd.f32 0.0, %v954
    %v956 = vpop.f32.mrf.mxu0
    %v957 = vadd.f32 0.0, %v956
    %958 = vmatprep.mubr.f32.mxu0 0.0
    %959 = vmatmul.mubr.f32.gmra.mxu0 %v796
    %v960 = vpop.f32.mrf.mxu0
    %v961 = vadd.f32 0.0, %v960
    %v962 = vpop.f32.mrf.mxu0
    %v963 = vadd.f32 0.0, %v962
    %964 = vmatprep.mubr.f32.mxu0 0.0
    %965 = vmatmul.mubr.f32.gmra.mxu0 %v799
    %v966 = vpop.f32.mrf.mxu0
    %v967 = vadd.f32 0.0, %v966
    %v968 = vpop.f32.mrf.mxu0
    %v969 = vadd.f32 0.0, %v968
    %970 = vmatprep.mubr.f32.mxu0 0.0
    %971 = vmatmul.mubr.f32.gmra.mxu0 %v802
    %v972 = vpop.f32.mrf.mxu0
    %v973 = vadd.f32 0.0, %v972
    %v974 = vpop.f32.mrf.mxu0
    %v975 = vadd.f32 0.0, %v974
    %976 = vmatprep.mubr.f32.mxu0 0.0
    %977 = vmatmul.mubr.f32.gmra.mxu0 %v805
    %v978 = vpop.f32.mrf.mxu0
    %v979 = vadd.f32 0.0, %v978
    %v980 = vpop.f32.mrf.mxu0
    %v981 = vadd.f32 0.0, %v980
    %982 = vmatprep.mubr.f32.mxu0 0.0
    %983 = vmatmul.mubr.f32.gmra.mxu0 %v808
    %v984 = vpop.f32.mrf.mxu0
    %v985 = vadd.f32 0.0, %v984
    %v986 = vpop.f32.mrf.mxu0
    %v987 = vadd.f32 0.0, %v986
    %988 = vmatprep.mubr.f32.mxu0 0.0
    %989 = vmatmul.mubr.f32.gmra.mxu0 %v811
    %v990 = vpop.f32.mrf.mxu0
    %v991 = vadd.f32 0.0, %v990
    %v992 = vpop.f32.mrf.mxu0
    %v993 = vadd.f32 0.0, %v992
    %994 = vmatprep.mubr.f32.mxu0 0.0
    %995 = vmatmul.mubr.f32.gmra.mxu0 %v814
    %v996 = vpop.f32.mrf.mxu0
    %v997 = vadd.f32 0.0, %v996
    %v998 = vpop.f32.mrf.mxu0
    %v999 = vadd.f32 0.0, %v998
    %1000 = vmatprep.mubr.f32.mxu0 0.0
    %1001 = vmatmul.mubr.f32.gmra.mxu0 %v817
    %v1002 = vpop.f32.mrf.mxu0
    %v1003 = vadd.f32 0.0, %v1002
    %v1004 = vpop.f32.mrf.mxu0
    %v1005 = vadd.f32 0.0, %v1004
    %1006 = vmatprep.mubr.f32.mxu0 0.0
    %1007 = vmatmul.mubr.f32.gmra.mxu0 %v820
    %v1008 = vpop.f32.mrf.mxu0
    %v1009 = vadd.f32 0.0, %v1008
    %v1010 = vpop.f32.mrf.mxu0
    %v1011 = vadd.f32 0.0, %v1010
    %1012 = vmatprep.mubr.f32.mxu0 0.0
    %1013 = vmatmul.mubr.f32.gmra.mxu0 %v823
    %v1014 = vpop.f32.mrf.mxu0
    %v1015 = vadd.f32 0.0, %v1014
    %v1016 = vpop.f32.mrf.mxu0
    %v1017 = vadd.f32 0.0, %v1016
    %1018 = vmatprep.mubr.f32.mxu0 0.0
    %1019 = vmatmul.mubr.f32.gmra.mxu0 %v826
    %v1020 = vpop.f32.mrf.mxu0
    %v1021 = vadd.f32 0.0, %v1020
    %v1022 = vpop.f32.mrf.mxu0
    %v1023 = vadd.f32 0.0, %v1022
    %1024 = vmatprep.mubr.f32.mxu0 0.0
    %1025 = vmatmul.mubr.f32.gmra.mxu0 %v829
    %v1026 = vpop.f32.mrf.mxu0
    %v1027 = vadd.f32 0.0, %v1026
    %v1028 = vpop.f32.mrf.mxu0
    %v1029 = vadd.f32 0.0, %v1028
    %1030 = vmatprep.mubr.f32.mxu0 0.0
    %1031 = vmatmul.mubr.f32.gmra.mxu0 %v832
    %v1032 = vpop.f32.mrf.mxu0
    %v1033 = vadd.f32 0.0, %v1032
    %v1034 = vpop.f32.mrf.mxu0
    %v1035 = vadd.f32 0.0, %v1034
    %1036 = vmatprep.mubr.f32.mxu0 0.0
    %1037 = vmatmul.mubr.f32.gmra.mxu0 %v835
    %v1038 = vpop.f32.mrf.mxu0
    %v1039 = vadd.f32 0.0, %v1038
    %v1040 = vpop.f32.mrf.mxu0
    %v1041 = vadd.f32 0.0, %v1040
    %1042 = vmatprep.mubr.f32.mxu0 0.0
    %1043 = vmatmul.mubr.f32.gmra.mxu0 %v838
    %v1044 = vpop.f32.mrf.mxu0
    %v1045 = vadd.f32 0.0, %v1044
    %v1046 = vpop.f32.mrf.mxu0
    %v1047 = vadd.f32 0.0, %v1046
    %1048 = vdwg.mxu0
    %v1049 = vmul.f32 %v907, %v129
    %v1050 = vmul.f32 %v909, %v130
    %v1051 = vmul.f32 %v913, %v131
    %v1052 = vmul.f32 %v915, %v132
    %v1053 = vmul.f32 %v919, %v133
    %v1054 = vmul.f32 %v921, %v134
    %v1055 = vmul.f32 %v925, %v135
    %v1056 = vmul.f32 %v927, %v136
    %v1057 = vmul.f32 %v931, %v137
    %v1058 = vmul.f32 %v933, %v138
    %v1059 = vmul.f32 %v937, %v139
    %v1060 = vmul.f32 %v939, %v140
    %v1061 = vmul.f32 %v943, %v141
    %v1062 = vmul.f32 %v945, %v142
    %v1063 = vmul.f32 %v949, %v143
    %v1064 = vmul.f32 %v951, %v144
    %v1065 = vmul.f32 %v955, %v145
    %v1066 = vmul.f32 %v957, %v146
    %v1067 = vmul.f32 %v961, %v147
    %v1068 = vmul.f32 %v963, %v148
    %v1069 = vmul.f32 %v967, %v149
    %v1070 = vmul.f32 %v969, %v150
    %v1071 = vmul.f32 %v973, %v151
    %v1072 = vmul.f32 %v975, %v152
    %v1073 = vmul.f32 %v979, %v153
    %v1074 = vmul.f32 %v981, %v154
    %v1075 = vmul.f32 %v985, %v155
    %v1076 = vmul.f32 %v987, %v156
    %v1077 = vmul.f32 %v991, %v157
    %v1078 = vmul.f32 %v993, %v158
    %v1079 = vmul.f32 %v997, %v159
    %v1080 = vmul.f32 %v999, %v160
    %v1081 = vmul.f32 %v1003, %v161
    %v1082 = vmul.f32 %v1005, %v162
    %v1083 = vmul.f32 %v1009, %v163
    %v1084 = vmul.f32 %v1011, %v164
    %v1085 = vmul.f32 %v1015, %v165
    %v1086 = vmul.f32 %v1017, %v166
    %v1087 = vmul.f32 %v1021, %v167
    %v1088 = vmul.f32 %v1023, %v168
    %v1089 = vmul.f32 %v1027, %v169
    %v1090 = vmul.f32 %v1029, %v170
    %v1091 = vmul.f32 %v1033, %v171
    %v1092 = vmul.f32 %v1035, %v172
    %v1093 = vmul.f32 %v1039, %v173
    %v1094 = vmul.f32 %v1041, %v174
    %v1095 = vmul.f32 %v1045, %v175
    %v1096 = vmul.f32 %v1047, %v176
    %v1098 = vsel %vm563, %v128, 0
    %1100 = vmatprep.subr.mxu0 %v1080
    %1101 = vmatpush1.msra.mxu0 %v1079
    %1102 = vmatprep.subr.mxu0 %v1078
    %1103 = vmatpush1.msra.mxu0 %v1077
    %1104 = vmatprep.subr.mxu0 %v1076
    %1105 = vmatpush1.msra.mxu0 %v1075
    %1106 = vmatprep.subr.mxu0 %v1074
    %1107 = vmatpush1.msra.mxu0 %v1073
    %1108 = vmatprep.subr.mxu0 %v1072
    %1109 = vmatpush1.msra.mxu0 %v1071
    %1110 = vmatprep.subr.mxu0 %v1070
    %1111 = vmatpush1.msra.mxu0 %v1069
    %1112 = vmatprep.subr.mxu0 %v1068
    %1113 = vmatpush1.msra.mxu0 %v1067
    %1114 = vmatprep.subr.mxu0 %v1066
    %1115 = vmatpush1.msra.mxu0 %v1065
    %1116 = vmatprep.subr.mxu0 %v1064
    %1117 = vmatpush1.msra.mxu0 %v1063
    %1118 = vmatprep.subr.mxu0 %v1062
    %1119 = vmatpush1.msra.mxu0 %v1061
    %1120 = vmatprep.subr.mxu0 %v1060
    %1121 = vmatpush1.msra.mxu0 %v1059
    %1122 = vmatprep.subr.mxu0 %v1058
    %1123 = vmatpush1.msra.mxu0 %v1057
    %1124 = vmatprep.subr.mxu0 %v1056
    %1125 = vmatpush1.msra.mxu0 %v1055
    %1126 = vmatprep.subr.mxu0 %v1054
    %1127 = vmatpush1.msra.mxu0 %v1053
    %1128 = vmatprep.subr.mxu0 %v1052
    %1129 = vmatpush1.msra.mxu0 %v1051
    %1130 = vmatprep.subr.mxu0 %v1050
    %1131 = vmatpush1.msra.mxu0 %v1049
    %1132 = vmatprep.subr.mxu0 0.0
    %1133 = vmatpush2.msra.mxu0 0.0
    %1134 = vmatprep.subr.mxu0 0.0
    %1135 = vmatpush2.msra.mxu0 0.0
    %1136 = vmatprep.subr.mxu0 0.0
    %1137 = vmatpush2.msra.mxu0 0.0
    %1138 = vmatprep.subr.mxu0 0.0
    %1139 = vmatpush2.msra.mxu0 0.0
    %1140 = vmatprep.subr.mxu0 0.0
    %1141 = vmatpush2.msra.mxu0 0.0
    %1142 = vmatprep.subr.mxu0 0.0
    %1143 = vmatpush2.msra.mxu0 0.0
    %1144 = vmatprep.subr.mxu0 0.0
    %1145 = vmatpush2.msra.mxu0 0.0
    %1146 = vmatprep.subr.mxu0 0.0
    %1147 = vmatpush2.msra.mxu0 0.0
    %1148 = vmatprep.subr.mxu0 %v1096
    %1149 = vmatpush2.msra.mxu0 %v1095
    %1150 = vmatprep.subr.mxu0 %v1094
    %1151 = vmatpush2.msra.mxu0 %v1093
    %1152 = vmatprep.subr.mxu0 %v1092
    %1153 = vmatpush2.msra.mxu0 %v1091
    %1154 = vmatprep.subr.mxu0 %v1090
    %1155 = vmatpush2.msra.mxu0 %v1089
    %1156 = vmatprep.subr.mxu0 %v1088
    %1157 = vmatpush2.msra.mxu0 %v1087
    %1158 = vmatprep.subr.mxu0 %v1086
    %1159 = vmatpush2.msra.mxu0 %v1085
    %1160 = vmatprep.subr.mxu0 %v1084
    %1161 = vmatpush2.msra.mxu0 %v1083
    %1162 = vmatprep.subr.mxu0 %v1082
    %1163 = vmatpush2.msra.mxu0 %v1081
    %1164 = vmatprep.mubr.f32.mxu0 %v1098
    %1165 = vmatmul.mubr.f32.gmra.mxu0 %v127
    %v1166 = vpop.f32.mrf.mxu0
    %v1167 = vadd.f32 0.0, %v1166
    %v1168 = vpop.f32.mrf.mxu0
    %v1169 = vadd.f32 0.0, %v1168
    %1170 = vdwg.mxu0
    %v1172 = vsel %vm563, %v1169, 0
    %1174 = vmatprep.subr.mxu0 0.0
    %1175 = vmatpush1.xpose.msra.mxu0 0.0
    %1176 = vmatprep.subr.mxu0 0.0
    %1177 = vmatpush1.xpose.msra.mxu0 0.0
    %1178 = vmatprep.subr.mxu0 0.0
    %1179 = vmatpush1.xpose.msra.mxu0 0.0
    %1180 = vmatprep.subr.mxu0 0.0
    %1181 = vmatpush1.xpose.msra.mxu0 0.0
    %1182 = vmatprep.subr.mxu0 0.0
    %1183 = vmatpush1.xpose.msra.mxu0 0.0
    %1184 = vmatprep.subr.mxu0 0.0
    %1185 = vmatpush1.xpose.msra.mxu0 0.0
    %1186 = vmatprep.subr.mxu0 0.0
    %1187 = vmatpush1.xpose.msra.mxu0 0.0
    %1188 = vmatprep.subr.mxu0 0.0
    %1189 = vmatpush1.xpose.msra.mxu0 0.0
    %1190 = vmatprep.subr.mxu0 0.0
    %1191 = vmatpush1.xpose.msra.mxu0 0.0
    %1192 = vmatprep.subr.mxu0 0.0
    %1193 = vmatpush1.xpose.msra.mxu0 0.0
    %1194 = vmatprep.subr.mxu0 0.0
    %1195 = vmatpush1.xpose.msra.mxu0 0.0
    %1196 = vmatprep.subr.mxu0 0.0
    %1197 = vmatpush1.xpose.msra.mxu0 0.0
    %1198 = vmatprep.subr.mxu0 0.0
    %1199 = vmatpush1.xpose.msra.mxu0 0.0
    %1200 = vmatprep.subr.mxu0 0.0
    %1201 = vmatpush1.xpose.msra.mxu0 0.0
    %1202 = vmatprep.subr.mxu0 0.0
    %1203 = vmatpush1.xpose.msra.mxu0 0.0
    %1204 = vmatprep.subr.mxu0 %v1098
    %1205 = vmatpush1.xpose.msra.mxu0 %v127
    %1206 = vmatprep.subr.mxu0 0.0
    %1207 = vmatpush2.xpose.msra.mxu0 0.0
    %1208 = vmatprep.subr.mxu0 0.0
    %1209 = vmatpush2.xpose.msra.mxu0 0.0
    %1210 = vmatprep.subr.mxu0 0.0
    %1211 = vmatpush2.xpose.msra.mxu0 0.0
    %1212 = vmatprep.subr.mxu0 0.0
    %1213 = vmatpush2.xpose.msra.mxu0 0.0
    %1214 = vmatprep.subr.mxu0 0.0
    %1215 = vmatpush2.xpose.msra.mxu0 0.0
    %1216 = vmatprep.subr.mxu0 0.0
    %1217 = vmatpush2.xpose.msra.mxu0 0.0
    %1218 = vmatprep.subr.mxu0 0.0
    %1219 = vmatpush2.xpose.msra.mxu0 0.0
    %1220 = vmatprep.subr.mxu0 0.0
    %1221 = vmatpush2.xpose.msra.mxu0 0.0
    %1222 = vmatprep.subr.mxu0 0.0
    %1223 = vmatpush2.xpose.msra.mxu0 0.0
    %1224 = vmatprep.subr.mxu0 0.0
    %1225 = vmatpush2.xpose.msra.mxu0 0.0
    %1226 = vmatprep.subr.mxu0 0.0
    %1227 = vmatpush2.xpose.msra.mxu0 0.0
    %1228 = vmatprep.subr.mxu0 0.0
    %1229 = vmatpush2.xpose.msra.mxu0 0.0
    %1230 = vmatprep.subr.mxu0 0.0
    %1231 = vmatpush2.xpose.msra.mxu0 0.0
    %1232 = vmatprep.subr.mxu0 0.0
    %1233 = vmatpush2.xpose.msra.mxu0 0.0
    %1234 = vmatprep.subr.mxu0 0.0
    %1235 = vmatpush2.xpose.msra.mxu0 0.0
    %1236 = vmatprep.subr.mxu0 0.0
    %1237 = vmatpush2.xpose.msra.mxu0 0.0
    %1238 = vmatprep.mubr.f32.mxu0 %v1172
    %1239 = vmatmul.mubr.f32.gmra.mxu0 %v1167
    %v1240 = vpop.f32.mrf.mxu0
    %v1241 = vadd.f32 0.0, %v1240
    %v1242 = vpop.f32.mrf.mxu0
    %1243 = vdwg.mxu0
    %v1244 = vsel %vm767, %v1241, -inf
    %1245 = vmax.xlane.f32.xlu0 %v1244
    %v1246 = vpop.xlane.xlu0 %1245
    %v1247 = vsub.f32 %v1241, %v1246
    %v1248 = vmul.f32 %v1247, 1.442695
    %v1249 = vpow.pop %v1248
    %v1250 = vsel %vm767, %v1249, 0.0
    %1251 = vadd.xlane.f32.xlu0 %v1250
    %v1252 = vpop.xlane.xlu0 %1251
    %v1253 = vrcp.pop %v1252
    %v1254 = vmul.f32 %v1249, %v1253
    %v1256 = vsel %vm767, %v1254, 0
    %1258 = vmatprep.subr.mxu0 0.0
    %1259 = vmatpush1.msra.mxu0 0.0
    %1260 = vmatprep.subr.mxu0 0.0
    %1261 = vmatpush1.msra.mxu0 0.0
    %1262 = vmatprep.subr.mxu0 0.0
    %1263 = vmatpush1.msra.mxu0 0.0
    %1264 = vmatprep.subr.mxu0 0.0
    %1265 = vmatpush1.msra.mxu0 0.0
    %1266 = vmatprep.subr.mxu0 0.0
    %1267 = vmatpush1.msra.mxu0 0.0
    %1268 = vmatprep.subr.mxu0 0.0
    %1269 = vmatpush1.msra.mxu0 0.0
    %1270 = vmatprep.subr.mxu0 0.0
    %1271 = vmatpush1.msra.mxu0 0.0
    %1272 = vmatprep.subr.mxu0 0.0
    %1273 = vmatpush1.msra.mxu0 0.0
    %1274 = vmatprep.subr.mxu0 0.0
    %1275 = vmatpush1.msra.mxu0 0.0
    %1276 = vmatprep.subr.mxu0 0.0
    %1277 = vmatpush1.msra.mxu0 0.0
    %1278 = vmatprep.subr.mxu0 0.0
    %1279 = vmatpush1.msra.mxu0 0.0
    %1280 = vmatprep.subr.mxu0 0.0
    %1281 = vmatpush1.msra.mxu0 0.0
    %1282 = vmatprep.subr.mxu0 0.0
    %1283 = vmatpush1.msra.mxu0 0.0
    %1284 = vmatprep.subr.mxu0 0.0
    %1285 = vmatpush1.msra.mxu0 0.0
    %1286 = vmatprep.subr.mxu0 0.0
    %1287 = vmatpush1.msra.mxu0 0.0
    %1288 = vmatprep.subr.mxu0 %v128
    %1289 = vmatpush1.msra.mxu0 %v127
    %1290 = vmatprep.subr.mxu0 0.0
    %1291 = vmatpush2.msra.mxu0 0.0
    %1292 = vmatprep.subr.mxu0 0.0
    %1293 = vmatpush2.msra.mxu0 0.0
    %1294 = vmatprep.subr.mxu0 0.0
    %1295 = vmatpush2.msra.mxu0 0.0
    %1296 = vmatprep.subr.mxu0 0.0
    %1297 = vmatpush2.msra.mxu0 0.0
    %1298 = vmatprep.subr.mxu0 0.0
    %1299 = vmatpush2.msra.mxu0 0.0
    %1300 = vmatprep.subr.mxu0 0.0
    %1301 = vmatpush2.msra.mxu0 0.0
    %1302 = vmatprep.subr.mxu0 0.0
    %1303 = vmatpush2.msra.mxu0 0.0
    %1304 = vmatprep.subr.mxu0 0.0
    %1305 = vmatpush2.msra.mxu0 0.0
    %1306 = vmatprep.subr.mxu0 0.0
    %1307 = vmatpush2.msra.mxu0 0.0
    %1308 = vmatprep.subr.mxu0 0.0
    %1309 = vmatpush2.msra.mxu0 0.0
    %1310 = vmatprep.subr.mxu0 0.0
    %1311 = vmatpush2.msra.mxu0 0.0
    %1312 = vmatprep.subr.mxu0 0.0
    %1313 = vmatpush2.msra.mxu0 0.0
    %1314 = vmatprep.subr.mxu0 0.0
    %1315 = vmatpush2.msra.mxu0 0.0
    %1316 = vmatprep.subr.mxu0 0.0
    %1317 = vmatpush2.msra.mxu0 0.0
    %1318 = vmatprep.subr.mxu0 0.0
    %1319 = vmatpush2.msra.mxu0 0.0
    %1320 = vmatprep.subr.mxu0 0.0
    %1321 = vmatpush2.msra.mxu0 0.0
    %1322 = vmatprep.mubr.f32.mxu0 0.0
    %1323 = vmatmul.mubr.f32.gmra.mxu0 %v1256
    %v1324 = vpop.f32.mrf.mxu0
    %v1325 = vadd.f32 0.0, %v1324
    %v1326 = vpop.f32.mrf.mxu0
    %v1327 = vadd.f32 0.0, %v1326
    %1328 = vdwg.mxu0
    %1329 = vxpose.xlu0.b32.start [1/16] %v647, 128
    %1330 = vxpose.xlu0.b32.cont [2/16] 0.0, 128
    %1331 = vxpose.xlu0.b32.cont [3/16] 0.0, 128
    %1332 = vxpose.xlu0.b32.cont [4/16] 0.0, 128
    %1333 = vxpose.xlu0.b32.cont [5/16] 0.0, 128
    %1334 = vxpose.xlu0.b32.cont [6/16] 0.0, 128
    %1335 = vxpose.xlu0.b32.cont [7/16] 0.0, 128
    %1336 = vxpose.xlu0.b32.cont [8/16] 0.0, 128
    %1337 = vxpose.xlu0.b32.cont [9/16] 0.0, 128
    %1338 = vxpose.xlu0.b32.cont [10/16] 0.0, 128
    %1339 = vxpose.xlu0.b32.cont [11/16] 0.0, 128
    %1340 = vxpose.xlu0.b32.cont [12/16] 0.0, 128
    %1341 = vxpose.xlu0.b32.cont [13/16] 0.0, 128
    %1342 = vxpose.xlu0.b32.cont [14/16] 0.0, 128
    %1343 = vxpose.xlu0.b32.cont [15/16] 0.0, 128
    %1344 = vxpose.xlu0.b32.end [16/16] 0.0, 128
    %v1345 = vpop.trf.xlu0
    %v1346 = vpop.trf.xlu0
    %v1347 = vpop.trf.xlu0
    %v1348 = vpop.trf.xlu0
    %v1349 = vpop.trf.xlu0
    %v1350 = vpop.trf.xlu0
    %v1351 = vpop.trf.xlu0
    %v1352 = vpop.trf.xlu0
    %v1353 = vpop.trf.xlu0
    %v1354 = vpop.trf.xlu0
    %v1355 = vpop.trf.xlu0
    %v1356 = vpop.trf.xlu0
    %v1357 = vpop.trf.xlu0
    %v1358 = vpop.trf.xlu0
    %v1359 = vpop.trf.xlu0
    %v1360 = vpop.trf.xlu0
    %1361 = vxpose.xlu0.b32.start [1/16] %v688, 128
    %1362 = vxpose.xlu0.b32.cont [2/16] 0.0, 128
    %1363 = vxpose.xlu0.b32.cont [3/16] 0.0, 128
    %1364 = vxpose.xlu0.b32.cont [4/16] 0.0, 128
    %1365 = vxpose.xlu0.b32.cont [5/16] 0.0, 128
    %1366 = vxpose.xlu0.b32.cont [6/16] 0.0, 128
    %1367 = vxpose.xlu0.b32.cont [7/16] 0.0, 128
    %1368 = vxpose.xlu0.b32.cont [8/16] 0.0, 128
    %1369 = vxpose.xlu0.b32.cont [9/16] 0.0, 128
    %1370 = vxpose.xlu0.b32.cont [10/16] 0.0, 128
    %1371 = vxpose.xlu0.b32.cont [11/16] 0.0, 128
    %1372 = vxpose.xlu0.b32.cont [12/16] 0.0, 128
    %1373 = vxpose.xlu0.b32.cont [13/16] 0.0, 128
    %1374 = vxpose.xlu0.b32.cont [14/16] 0.0, 128
    %1375 = vxpose.xlu0.b32.cont [15/16] 0.0, 128
    %1376 = vxpose.xlu0.b32.end [16/16] 0.0, 128
    %v1377 = vpop.trf.xlu0
    %v1378 = vpop.trf.xlu0
    %v1379 = vpop.trf.xlu0
    %v1380 = vpop.trf.xlu0
    %v1381 = vpop.trf.xlu0
    %v1382 = vpop.trf.xlu0
    %v1383 = vpop.trf.xlu0
    %v1384 = vpop.trf.xlu0
    %v1385 = vpop.trf.xlu0
    %v1386 = vpop.trf.xlu0
    %v1387 = vpop.trf.xlu0
    %v1388 = vpop.trf.xlu0
    %v1389 = vpop.trf.xlu0
    %v1390 = vpop.trf.xlu0
    %v1391 = vpop.trf.xlu0
    %v1392 = vpop.trf.xlu0
    %v1394 = vsel %vm767, %v1345, 0
    %v1397 = vsel %vm767, %v1346, 0
    %v1400 = vsel %vm767, %v1347, 0
    %v1403 = vsel %vm767, %v1348, 0
    %v1406 = vsel %vm767, %v1349, 0
    %v1409 = vsel %vm767, %v1350, 0
    %v1412 = vsel %vm767, %v1351, 0
    %v1415 = vsel %vm767, %v1352, 0
    %v1418 = vsel %vm767, %v1353, 0
    %v1421 = vsel %vm767, %v1354, 0
    %v1424 = vsel %vm767, %v1355, 0
    %v1427 = vsel %vm767, %v1356, 0
    %v1430 = vsel %vm767, %v1357, 0
    %v1433 = vsel %vm767, %v1358, 0
    %v1436 = vsel %vm767, %v1359, 0
    %v1439 = vsel %vm767, %v1360, 0
    %v1442 = vsel %vm767, %v1377, 0
    %v1445 = vsel %vm767, %v1378, 0
    %v1448 = vsel %vm767, %v1379, 0
    %v1451 = vsel %vm767, %v1380, 0
    %v1454 = vsel %vm767, %v1381, 0
    %v1457 = vsel %vm767, %v1382, 0
    %v1460 = vsel %vm767, %v1383, 0
    %v1463 = vsel %vm767, %v1384, 0
    %1465 = vmatprep.subr.mxu0 0.0
    %1466 = vmatpush1.msra.mxu0 0.0
    %1467 = vmatprep.subr.mxu0 0.0
    %1468 = vmatpush1.msra.mxu0 0.0
    %1469 = vmatprep.subr.mxu0 0.0
    %1470 = vmatpush1.msra.mxu0 0.0
    %1471 = vmatprep.subr.mxu0 0.0
    %1472 = vmatpush1.msra.mxu0 0.0
    %1473 = vmatprep.subr.mxu0 0.0
    %1474 = vmatpush1.msra.mxu0 0.0
    %1475 = vmatprep.subr.mxu0 0.0
    %1476 = vmatpush1.msra.mxu0 0.0
    %1477 = vmatprep.subr.mxu0 0.0
    %1478 = vmatpush1.msra.mxu0 0.0
    %1479 = vmatprep.subr.mxu0 0.0
    %1480 = vmatpush1.msra.mxu0 0.0
    %1481 = vmatprep.subr.mxu0 0.0
    %1482 = vmatpush1.msra.mxu0 0.0
    %1483 = vmatprep.subr.mxu0 0.0
    %1484 = vmatpush1.msra.mxu0 0.0
    %1485 = vmatprep.subr.mxu0 0.0
    %1486 = vmatpush1.msra.mxu0 0.0
    %1487 = vmatprep.subr.mxu0 0.0
    %1488 = vmatpush1.msra.mxu0 0.0
    %1489 = vmatprep.subr.mxu0 0.0
    %1490 = vmatpush1.msra.mxu0 0.0
    %1491 = vmatprep.subr.mxu0 0.0
    %1492 = vmatpush1.msra.mxu0 0.0
    %1493 = vmatprep.subr.mxu0 0.0
    %1494 = vmatpush1.msra.mxu0 0.0
    %1495 = vmatprep.subr.mxu0 %v128
    %1496 = vmatpush1.msra.mxu0 %v127
    %1497 = vmatprep.subr.mxu0 0.0
    %1498 = vmatpush2.msra.mxu0 0.0
    %1499 = vmatprep.subr.mxu0 0.0
    %1500 = vmatpush2.msra.mxu0 0.0
    %1501 = vmatprep.subr.mxu0 0.0
    %1502 = vmatpush2.msra.mxu0 0.0
    %1503 = vmatprep.subr.mxu0 0.0
    %1504 = vmatpush2.msra.mxu0 0.0
    %1505 = vmatprep.subr.mxu0 0.0
    %1506 = vmatpush2.msra.mxu0 0.0
    %1507 = vmatprep.subr.mxu0 0.0
    %1508 = vmatpush2.msra.mxu0 0.0
    %1509 = vmatprep.subr.mxu0 0.0
    %1510 = vmatpush2.msra.mxu0 0.0
    %1511 = vmatprep.subr.mxu0 0.0
    %1512 = vmatpush2.msra.mxu0 0.0
    %1513 = vmatprep.subr.mxu0 0.0
    %1514 = vmatpush2.msra.mxu0 0.0
    %1515 = vmatprep.subr.mxu0 0.0
    %1516 = vmatpush2.msra.mxu0 0.0
    %1517 = vmatprep.subr.mxu0 0.0
    %1518 = vmatpush2.msra.mxu0 0.0
    %1519 = vmatprep.subr.mxu0 0.0
    %1520 = vmatpush2.msra.mxu0 0.0
    %1521 = vmatprep.subr.mxu0 0.0
    %1522 = vmatpush2.msra.mxu0 0.0
    %1523 = vmatprep.subr.mxu0 0.0
    %1524 = vmatpush2.msra.mxu0 0.0
    %1525 = vmatprep.subr.mxu0 0.0
    %1526 = vmatpush2.msra.mxu0 0.0
    %1527 = vmatprep.subr.mxu0 0.0
    %1528 = vmatpush2.msra.mxu0 0.0
    %1529 = vmatprep.mubr.f32.mxu0 0.0
    %1530 = vmatmul.mubr.f32.gmra.mxu0 %v1394
    %v1531 = vpop.f32.mrf.mxu0
    %v1532 = vadd.f32 0.0, %v1531
    %v1533 = vpop.f32.mrf.mxu0
    %v1534 = vadd.f32 0.0, %v1533
    %1535 = vmatprep.mubr.f32.mxu0 0.0
    %1536 = vmatmul.mubr.f32.gmra.mxu0 %v1397
    %v1537 = vpop.f32.mrf.mxu0
    %v1538 = vadd.f32 0.0, %v1537
    %v1539 = vpop.f32.mrf.mxu0
    %v1540 = vadd.f32 0.0, %v1539
    %1541 = vmatprep.mubr.f32.mxu0 0.0
    %1542 = vmatmul.mubr.f32.gmra.mxu0 %v1400
    %v1543 = vpop.f32.mrf.mxu0
    %v1544 = vadd.f32 0.0, %v1543
    %v1545 = vpop.f32.mrf.mxu0
    %v1546 = vadd.f32 0.0, %v1545
    %1547 = vmatprep.mubr.f32.mxu0 0.0
    %1548 = vmatmul.mubr.f32.gmra.mxu0 %v1403
    %v1549 = vpop.f32.mrf.mxu0
    %v1550 = vadd.f32 0.0, %v1549
    %v1551 = vpop.f32.mrf.mxu0
    %v1552 = vadd.f32 0.0, %v1551
    %1553 = vmatprep.mubr.f32.mxu0 0.0
    %1554 = vmatmul.mubr.f32.gmra.mxu0 %v1406
    %v1555 = vpop.f32.mrf.mxu0
    %v1556 = vadd.f32 0.0, %v1555
    %v1557 = vpop.f32.mrf.mxu0
    %v1558 = vadd.f32 0.0, %v1557
    %1559 = vmatprep.mubr.f32.mxu0 0.0
    %1560 = vmatmul.mubr.f32.gmra.mxu0 %v1409
    %v1561 = vpop.f32.mrf.mxu0
    %v1562 = vadd.f32 0.0, %v1561
    %v1563 = vpop.f32.mrf.mxu0
    %v1564 = vadd.f32 0.0, %v1563
    %1565 = vmatprep.mubr.f32.mxu0 0.0
    %1566 = vmatmul.mubr.f32.gmra.mxu0 %v1412
    %v1567 = vpop.f32.mrf.mxu0
    %v1568 = vadd.f32 0.0, %v1567
    %v1569 = vpop.f32.mrf.mxu0
    %v1570 = vadd.f32 0.0, %v1569
    %1571 = vmatprep.mubr.f32.mxu0 0.0
    %1572 = vmatmul.mubr.f32.gmra.mxu0 %v1415
    %v1573 = vpop.f32.mrf.mxu0
    %v1574 = vadd.f32 0.0, %v1573
    %v1575 = vpop.f32.mrf.mxu0
    %v1576 = vadd.f32 0.0, %v1575
    %1577 = vmatprep.mubr.f32.mxu0 0.0
    %1578 = vmatmul.mubr.f32.gmra.mxu0 %v1418
    %v1579 = vpop.f32.mrf.mxu0
    %v1580 = vadd.f32 0.0, %v1579
    %v1581 = vpop.f32.mrf.mxu0
    %v1582 = vadd.f32 0.0, %v1581
    %1583 = vmatprep.mubr.f32.mxu0 0.0
    %1584 = vmatmul.mubr.f32.gmra.mxu0 %v1421
    %v1585 = vpop.f32.mrf.mxu0
    %v1586 = vadd.f32 0.0, %v1585
    %v1587 = vpop.f32.mrf.mxu0
    %v1588 = vadd.f32 0.0, %v1587
    %1589 = vmatprep.mubr.f32.mxu0 0.0
    %1590 = vmatmul.mubr.f32.gmra.mxu0 %v1424
    %v1591 = vpop.f32.mrf.mxu0
    %v1592 = vadd.f32 0.0, %v1591
    %v1593 = vpop.f32.mrf.mxu0
    %v1594 = vadd.f32 0.0, %v1593
    %1595 = vmatprep.mubr.f32.mxu0 0.0
    %1596 = vmatmul.mubr.f32.gmra.mxu0 %v1427
    %v1597 = vpop.f32.mrf.mxu0
    %v1598 = vadd.f32 0.0, %v1597
    %v1599 = vpop.f32.mrf.mxu0
    %v1600 = vadd.f32 0.0, %v1599
    %1601 = vmatprep.mubr.f32.mxu0 0.0
    %1602 = vmatmul.mubr.f32.gmra.mxu0 %v1430
    %v1603 = vpop.f32.mrf.mxu0
    %v1604 = vadd.f32 0.0, %v1603
    %v1605 = vpop.f32.mrf.mxu0
    %v1606 = vadd.f32 0.0, %v1605
    %1607 = vmatprep.mubr.f32.mxu0 0.0
    %1608 = vmatmul.mubr.f32.gmra.mxu0 %v1433
    %v1609 = vpop.f32.mrf.mxu0
    %v1610 = vadd.f32 0.0, %v1609
    %v1611 = vpop.f32.mrf.mxu0
    %v1612 = vadd.f32 0.0, %v1611
    %1613 = vmatprep.mubr.f32.mxu0 0.0
    %1614 = vmatmul.mubr.f32.gmra.mxu0 %v1436
    %v1615 = vpop.f32.mrf.mxu0
    %v1616 = vadd.f32 0.0, %v1615
    %v1617 = vpop.f32.mrf.mxu0
    %v1618 = vadd.f32 0.0, %v1617
    %1619 = vmatprep.mubr.f32.mxu0 0.0
    %1620 = vmatmul.mubr.f32.gmra.mxu0 %v1439
    %v1621 = vpop.f32.mrf.mxu0
    %v1622 = vadd.f32 0.0, %v1621
    %v1623 = vpop.f32.mrf.mxu0
    %v1624 = vadd.f32 0.0, %v1623
    %1625 = vmatprep.mubr.f32.mxu0 0.0
    %1626 = vmatmul.mubr.f32.gmra.mxu0 %v1442
    %v1627 = vpop.f32.mrf.mxu0
    %v1628 = vadd.f32 0.0, %v1627
    %v1629 = vpop.f32.mrf.mxu0
    %v1630 = vadd.f32 0.0, %v1629
    %1631 = vmatprep.mubr.f32.mxu0 0.0
    %1632 = vmatmul.mubr.f32.gmra.mxu0 %v1445
    %v1633 = vpop.f32.mrf.mxu0
    %v1634 = vadd.f32 0.0, %v1633
    %v1635 = vpop.f32.mrf.mxu0
    %v1636 = vadd.f32 0.0, %v1635
    %1637 = vmatprep.mubr.f32.mxu0 0.0
    %1638 = vmatmul.mubr.f32.gmra.mxu0 %v1448
    %v1639 = vpop.f32.mrf.mxu0
    %v1640 = vadd.f32 0.0, %v1639
    %v1641 = vpop.f32.mrf.mxu0
    %v1642 = vadd.f32 0.0, %v1641
    %1643 = vmatprep.mubr.f32.mxu0 0.0
    %1644 = vmatmul.mubr.f32.gmra.mxu0 %v1451
    %v1645 = vpop.f32.mrf.mxu0
    %v1646 = vadd.f32 0.0, %v1645
    %v1647 = vpop.f32.mrf.mxu0
    %v1648 = vadd.f32 0.0, %v1647
    %1649 = vmatprep.mubr.f32.mxu0 0.0
    %1650 = vmatmul.mubr.f32.gmra.mxu0 %v1454
    %v1651 = vpop.f32.mrf.mxu0
    %v1652 = vadd.f32 0.0, %v1651
    %v1653 = vpop.f32.mrf.mxu0
    %v1654 = vadd.f32 0.0, %v1653
    %1655 = vmatprep.mubr.f32.mxu0 0.0
    %1656 = vmatmul.mubr.f32.gmra.mxu0 %v1457
    %v1657 = vpop.f32.mrf.mxu0
    %v1658 = vadd.f32 0.0, %v1657
    %v1659 = vpop.f32.mrf.mxu0
    %v1660 = vadd.f32 0.0, %v1659
    %1661 = vmatprep.mubr.f32.mxu0 0.0
    %1662 = vmatmul.mubr.f32.gmra.mxu0 %v1460
    %v1663 = vpop.f32.mrf.mxu0
    %v1664 = vadd.f32 0.0, %v1663
    %v1665 = vpop.f32.mrf.mxu0
    %v1666 = vadd.f32 0.0, %v1665
    %1667 = vmatprep.mubr.f32.mxu0 0.0
    %1668 = vmatmul.mubr.f32.gmra.mxu0 %v1463
    %v1669 = vpop.f32.mrf.mxu0
    %v1670 = vadd.f32 0.0, %v1669
    %v1671 = vpop.f32.mrf.mxu0
    %v1672 = vadd.f32 0.0, %v1671
    %1673 = vdwg.mxu0
    %v1674 = vmul.f32 %v1532, %v129
    %v1675 = vmul.f32 %v1534, %v130
    %v1676 = vmul.f32 %v1538, %v131
    %v1677 = vmul.f32 %v1540, %v132
    %v1678 = vmul.f32 %v1544, %v133
    %v1679 = vmul.f32 %v1546, %v134
    %v1680 = vmul.f32 %v1550, %v135
    %v1681 = vmul.f32 %v1552, %v136
    %v1682 = vmul.f32 %v1556, %v137
    %v1683 = vmul.f32 %v1558, %v138
    %v1684 = vmul.f32 %v1562, %v139
    %v1685 = vmul.f32 %v1564, %v140
    %v1686 = vmul.f32 %v1568, %v141
    %v1687 = vmul.f32 %v1570, %v142
    %v1688 = vmul.f32 %v1574, %v143
    %v1689 = vmul.f32 %v1576, %v144
    %v1690 = vmul.f32 %v1580, %v145
    %v1691 = vmul.f32 %v1582, %v146
    %v1692 = vmul.f32 %v1586, %v147
    %v1693 = vmul.f32 %v1588, %v148
    %v1694 = vmul.f32 %v1592, %v149
    %v1695 = vmul.f32 %v1594, %v150
    %v1696 = vmul.f32 %v1598, %v151
    %v1697 = vmul.f32 %v1600, %v152
    %v1698 = vmul.f32 %v1604, %v153
    %v1699 = vmul.f32 %v1606, %v154
    %v1700 = vmul.f32 %v1610, %v155
    %v1701 = vmul.f32 %v1612, %v156
    %v1702 = vmul.f32 %v1616, %v157
    %v1703 = vmul.f32 %v1618, %v158
    %v1704 = vmul.f32 %v1622, %v159
    %v1705 = vmul.f32 %v1624, %v160
    %v1706 = vmul.f32 %v1628, %v161
    %v1707 = vmul.f32 %v1630, %v162
    %v1708 = vmul.f32 %v1634, %v163
    %v1709 = vmul.f32 %v1636, %v164
    %v1710 = vmul.f32 %v1640, %v165
    %v1711 = vmul.f32 %v1642, %v166
    %v1712 = vmul.f32 %v1646, %v167
    %v1713 = vmul.f32 %v1648, %v168
    %v1714 = vmul.f32 %v1652, %v169
    %v1715 = vmul.f32 %v1654, %v170
    %v1716 = vmul.f32 %v1658, %v171
    %v1717 = vmul.f32 %v1660, %v172
    %v1718 = vmul.f32 %v1664, %v173
    %v1719 = vmul.f32 %v1666, %v174
    %v1720 = vmul.f32 %v1670, %v175
    %v1721 = vmul.f32 %v1672, %v176
    %v1723 = vsel %vm563, %v1327, 0
    %1725 = vmatprep.subr.mxu0 %v1705
    %1726 = vmatpush1.msra.mxu0 %v1704
    %1727 = vmatprep.subr.mxu0 %v1703
    %1728 = vmatpush1.msra.mxu0 %v1702
    %1729 = vmatprep.subr.mxu0 %v1701
    %1730 = vmatpush1.msra.mxu0 %v1700
    %1731 = vmatprep.subr.mxu0 %v1699
    %1732 = vmatpush1.msra.mxu0 %v1698
    %1733 = vmatprep.subr.mxu0 %v1697
    %1734 = vmatpush1.msra.mxu0 %v1696
    %1735 = vmatprep.subr.mxu0 %v1695
    %1736 = vmatpush1.msra.mxu0 %v1694
    %1737 = vmatprep.subr.mxu0 %v1693
    %1738 = vmatpush1.msra.mxu0 %v1692
    %1739 = vmatprep.subr.mxu0 %v1691
    %1740 = vmatpush1.msra.mxu0 %v1690
    %1741 = vmatprep.subr.mxu0 %v1689
    %1742 = vmatpush1.msra.mxu0 %v1688
    %1743 = vmatprep.subr.mxu0 %v1687
    %1744 = vmatpush1.msra.mxu0 %v1686
    %1745 = vmatprep.subr.mxu0 %v1685
    %1746 = vmatpush1.msra.mxu0 %v1684
    %1747 = vmatprep.subr.mxu0 %v1683
    %1748 = vmatpush1.msra.mxu0 %v1682
    %1749 = vmatprep.subr.mxu0 %v1681
    %1750 = vmatpush1.msra.mxu0 %v1680
    %1751 = vmatprep.subr.mxu0 %v1679
    %1752 = vmatpush1.msra.mxu0 %v1678
    %1753 = vmatprep.subr.mxu0 %v1677
    %1754 = vmatpush1.msra.mxu0 %v1676
    %1755 = vmatprep.subr.mxu0 %v1675
    %1756 = vmatpush1.msra.mxu0 %v1674
    %1757 = vmatprep.subr.mxu0 0.0
    %1758 = vmatpush2.msra.mxu0 0.0
    %1759 = vmatprep.subr.mxu0 0.0
    %1760 = vmatpush2.msra.mxu0 0.0
    %1761 = vmatprep.subr.mxu0 0.0
    %1762 = vmatpush2.msra.mxu0 0.0
    %1763 = vmatprep.subr.mxu0 0.0
    %1764 = vmatpush2.msra.mxu0 0.0
    %1765 = vmatprep.subr.mxu0 0.0
    %1766 = vmatpush2.msra.mxu0 0.0
    %1767 = vmatprep.subr.mxu0 0.0
    %1768 = vmatpush2.msra.mxu0 0.0
    %1769 = vmatprep.subr.mxu0 0.0
    %1770 = vmatpush2.msra.mxu0 0.0
    %1771 = vmatprep.subr.mxu0 0.0
    %1772 = vmatpush2.msra.mxu0 0.0
    %1773 = vmatprep.subr.mxu0 %v1721
    %1774 = vmatpush2.msra.mxu0 %v1720
    %1775 = vmatprep.subr.mxu0 %v1719
    %1776 = vmatpush2.msra.mxu0 %v1718
    %1777 = vmatprep.subr.mxu0 %v1717
    %1778 = vmatpush2.msra.mxu0 %v1716
    %1779 = vmatprep.subr.mxu0 %v1715
    %1780 = vmatpush2.msra.mxu0 %v1714
    %1781 = vmatprep.subr.mxu0 %v1713
    %1782 = vmatpush2.msra.mxu0 %v1712
    %1783 = vmatprep.subr.mxu0 %v1711
    %1784 = vmatpush2.msra.mxu0 %v1710
    %1785 = vmatprep.subr.mxu0 %v1709
    %1786 = vmatpush2.msra.mxu0 %v1708
    %1787 = vmatprep.subr.mxu0 %v1707
    %1788 = vmatpush2.msra.mxu0 %v1706
    %1789 = vmatprep.mubr.f32.mxu0 %v1723
    %1790 = vmatmul.mubr.f32.gmra.mxu0 %v1325
    %v1791 = vpop.f32.mrf.mxu0
    %v1792 = vadd.f32 0.0, %v1791
    %v1793 = vpop.f32.mrf.mxu0
    %v1794 = vadd.f32 0.0, %v1793
    %1795 = vdwg.mxu0
    %1796 = vxpose.xlu0.b32.start [1/16] %v606, 128
    %1797 = vxpose.xlu0.b32.cont [2/16] 0.0, 128
    %1798 = vxpose.xlu0.b32.cont [3/16] 0.0, 128
    %1799 = vxpose.xlu0.b32.cont [4/16] 0.0, 128
    %1800 = vxpose.xlu0.b32.cont [5/16] 0.0, 128
    %1801 = vxpose.xlu0.b32.cont [6/16] 0.0, 128
    %1802 = vxpose.xlu0.b32.cont [7/16] 0.0, 128
    %1803 = vxpose.xlu0.b32.cont [8/16] 0.0, 128
    %1804 = vxpose.xlu0.b32.cont [9/16] 0.0, 128
    %1805 = vxpose.xlu0.b32.cont [10/16] 0.0, 128
    %1806 = vxpose.xlu0.b32.cont [11/16] 0.0, 128
    %1807 = vxpose.xlu0.b32.cont [12/16] 0.0, 128
    %1808 = vxpose.xlu0.b32.cont [13/16] 0.0, 128
    %1809 = vxpose.xlu0.b32.cont [14/16] 0.0, 128
    %1810 = vxpose.xlu0.b32.cont [15/16] 0.0, 128
    %1811 = vxpose.xlu0.b32.end [16/16] 0.0, 128
    %v1812 = vpop.trf.xlu0
    %v1813 = vpop.trf.xlu0
    %v1814 = vpop.trf.xlu0
    %v1815 = vpop.trf.xlu0
    %v1816 = vpop.trf.xlu0
    %v1817 = vpop.trf.xlu0
    %v1818 = vpop.trf.xlu0
    %v1819 = vpop.trf.xlu0
    %v1820 = vpop.trf.xlu0
    %v1821 = vpop.trf.xlu0
    %v1822 = vpop.trf.xlu0
    %v1823 = vpop.trf.xlu0
    %v1824 = vpop.trf.xlu0
    %v1825 = vpop.trf.xlu0
    %v1826 = vpop.trf.xlu0
    %v1827 = vpop.trf.xlu0
    %1828 = vxpose.xlu0.b32.start [1/16] %v608, 128
    %1829 = vxpose.xlu0.b32.cont [2/16] 0.0, 128
    %1830 = vxpose.xlu0.b32.cont [3/16] 0.0, 128
    %1831 = vxpose.xlu0.b32.cont [4/16] 0.0, 128
    %1832 = vxpose.xlu0.b32.cont [5/16] 0.0, 128
    %1833 = vxpose.xlu0.b32.cont [6/16] 0.0, 128
    %1834 = vxpose.xlu0.b32.cont [7/16] 0.0, 128
    %1835 = vxpose.xlu0.b32.cont [8/16] 0.0, 128
    %1836 = vxpose.xlu0.b32.cont [9/16] 0.0, 128
    %1837 = vxpose.xlu0.b32.cont [10/16] 0.0, 128
    %1838 = vxpose.xlu0.b32.cont [11/16] 0.0, 128
    %1839 = vxpose.xlu0.b32.cont [12/16] 0.0, 128
    %1840 = vxpose.xlu0.b32.cont [13/16] 0.0, 128
    %1841 = vxpose.xlu0.b32.cont [14/16] 0.0, 128
    %1842 = vxpose.xlu0.b32.cont [15/16] 0.0, 128
    %1843 = vxpose.xlu0.b32.end [16/16] 0.0, 128
    %v1844 = vpop.trf.xlu0
    %v1845 = vpop.trf.xlu0
    %v1846 = vpop.trf.xlu0
    %v1847 = vpop.trf.xlu0
    %v1848 = vpop.trf.xlu0
    %v1849 = vpop.trf.xlu0
    %v1850 = vpop.trf.xlu0
    %v1851 = vpop.trf.xlu0
    %v1852 = vpop.trf.xlu0
    %v1853 = vpop.trf.xlu0
    %v1854 = vpop.trf.xlu0
    %v1855 = vpop.trf.xlu0
    %v1856 = vpop.trf.xlu0
    %v1857 = vpop.trf.xlu0
    %v1858 = vpop.trf.xlu0
    %v1859 = vpop.trf.xlu0
    %1862 = vrot.lane.b32.xlu0 %v608, 64
    %v1863 = vpop.permute.xlu0 %1862
    %1864 = vrot.lane.b32.xlu0 %v649, 64
    %v1865 = vpop.permute.xlu0 %1864
    %v1866 = vsel %vm563, %v1863, %v1865
    %v1870 = vsel %vm767, %v1812, 0
    %v1873 = vsel %vm767, %v1813, 0
    %v1876 = vsel %vm767, %v1814, 0
    %v1879 = vsel %vm767, %v1815, 0
    %v1882 = vsel %vm767, %v1816, 0
    %v1885 = vsel %vm767, %v1817, 0
    %v1888 = vsel %vm767, %v1818, 0
    %v1891 = vsel %vm767, %v1819, 0
    %v1894 = vsel %vm767, %v1820, 0
    %v1897 = vsel %vm767, %v1821, 0
    %v1900 = vsel %vm767, %v1822, 0
    %v1903 = vsel %vm767, %v1823, 0
    %v1906 = vsel %vm767, %v1824, 0
    %v1909 = vsel %vm767, %v1825, 0
    %v1912 = vsel %vm767, %v1826, 0
    %v1915 = vsel %vm767, %v1827, 0
    %v1918 = vsel %vm767, %v1844, 0
    %v1921 = vsel %vm767, %v1845, 0
    %v1924 = vsel %vm767, %v1846, 0
    %v1927 = vsel %vm767, %v1847, 0
    %v1930 = vsel %vm767, %v1848, 0
    %v1933 = vsel %vm767, %v1849, 0
    %v1936 = vsel %vm767, %v1850, 0
    %v1939 = vsel %vm767, %v1851, 0
    %1941 = vmatprep.subr.mxu0 0.0
    %1942 = vmatpush1.msra.mxu0 0.0
    %1943 = vmatprep.subr.mxu0 0.0
    %1944 = vmatpush1.msra.mxu0 0.0
    %1945 = vmatprep.subr.mxu0 0.0
    %1946 = vmatpush1.msra.mxu0 0.0
    %1947 = vmatprep.subr.mxu0 0.0
    %1948 = vmatpush1.msra.mxu0 0.0
    %1949 = vmatprep.subr.mxu0 0.0
    %1950 = vmatpush1.msra.mxu0 0.0
    %1951 = vmatprep.subr.mxu0 0.0
    %1952 = vmatpush1.msra.mxu0 0.0
    %1953 = vmatprep.subr.mxu0 0.0
    %1954 = vmatpush1.msra.mxu0 0.0
    %1955 = vmatprep.subr.mxu0 0.0
    %1956 = vmatpush1.msra.mxu0 0.0
    %1957 = vmatprep.subr.mxu0 0.0
    %1958 = vmatpush1.msra.mxu0 0.0
    %1959 = vmatprep.subr.mxu0 0.0
    %1960 = vmatpush1.msra.mxu0 0.0
    %1961 = vmatprep.subr.mxu0 0.0
    %1962 = vmatpush1.msra.mxu0 0.0
    %1963 = vmatprep.subr.mxu0 0.0
    %1964 = vmatpush1.msra.mxu0 0.0
    %1965 = vmatprep.subr.mxu0 0.0
    %1966 = vmatpush1.msra.mxu0 0.0
    %1967 = vmatprep.subr.mxu0 0.0
    %1968 = vmatpush1.msra.mxu0 0.0
    %1969 = vmatprep.subr.mxu0 0.0
    %1970 = vmatpush1.msra.mxu0 0.0
    %1971 = vmatprep.subr.mxu0 %v1865
    %1972 = vmatpush1.msra.mxu0 %v1866
    %1973 = vmatprep.subr.mxu0 0.0
    %1974 = vmatpush2.msra.mxu0 0.0
    %1975 = vmatprep.subr.mxu0 0.0
    %1976 = vmatpush2.msra.mxu0 0.0
    %1977 = vmatprep.subr.mxu0 0.0
    %1978 = vmatpush2.msra.mxu0 0.0
    %1979 = vmatprep.subr.mxu0 0.0
    %1980 = vmatpush2.msra.mxu0 0.0
    %1981 = vmatprep.subr.mxu0 0.0
    %1982 = vmatpush2.msra.mxu0 0.0
    %1983 = vmatprep.subr.mxu0 0.0
    %1984 = vmatpush2.msra.mxu0 0.0
    %1985 = vmatprep.subr.mxu0 0.0
    %1986 = vmatpush2.msra.mxu0 0.0
    %1987 = vmatprep.subr.mxu0 0.0
    %1988 = vmatpush2.msra.mxu0 0.0
    %1989 = vmatprep.subr.mxu0 0.0
    %1990 = vmatpush2.msra.mxu0 0.0
    %1991 = vmatprep.subr.mxu0 0.0
    %1992 = vmatpush2.msra.mxu0 0.0
    %1993 = vmatprep.subr.mxu0 0.0
    %1994 = vmatpush2.msra.mxu0 0.0
    %1995 = vmatprep.subr.mxu0 0.0
    %1996 = vmatpush2.msra.mxu0 0.0
    %1997 = vmatprep.subr.mxu0 0.0
    %1998 = vmatpush2.msra.mxu0 0.0
    %1999 = vmatprep.subr.mxu0 0.0
    %2000 = vmatpush2.msra.mxu0 0.0
    %2001 = vmatprep.subr.mxu0 0.0
    %2002 = vmatpush2.msra.mxu0 0.0
    %2003 = vmatprep.subr.mxu0 0.0
    %2004 = vmatpush2.msra.mxu0 0.0
    %2005 = vmatprep.mubr.f32.mxu0 0.0
    %2006 = vmatmul.mubr.f32.gmra.mxu0 %v1870
    %v2007 = vpop.f32.mrf.mxu0
    %v2008 = vadd.f32 0.0, %v2007
    %v2009 = vpop.f32.mrf.mxu0
    %v2010 = vadd.f32 0.0, %v2009
    %2011 = vmatprep.mubr.f32.mxu0 0.0
    %2012 = vmatmul.mubr.f32.gmra.mxu0 %v1873
    %v2013 = vpop.f32.mrf.mxu0
    %v2014 = vadd.f32 0.0, %v2013
    %v2015 = vpop.f32.mrf.mxu0
    %v2016 = vadd.f32 0.0, %v2015
    %2017 = vmatprep.mubr.f32.mxu0 0.0
    %2018 = vmatmul.mubr.f32.gmra.mxu0 %v1876
    %v2019 = vpop.f32.mrf.mxu0
    %v2020 = vadd.f32 0.0, %v2019
    %v2021 = vpop.f32.mrf.mxu0
    %v2022 = vadd.f32 0.0, %v2021
    %2023 = vmatprep.mubr.f32.mxu0 0.0
    %2024 = vmatmul.mubr.f32.gmra.mxu0 %v1879
    %v2025 = vpop.f32.mrf.mxu0
    %v2026 = vadd.f32 0.0, %v2025
    %v2027 = vpop.f32.mrf.mxu0
    %v2028 = vadd.f32 0.0, %v2027
    %2029 = vmatprep.mubr.f32.mxu0 0.0
    %2030 = vmatmul.mubr.f32.gmra.mxu0 %v1882
    %v2031 = vpop.f32.mrf.mxu0
    %v2032 = vadd.f32 0.0, %v2031
    %v2033 = vpop.f32.mrf.mxu0
    %v2034 = vadd.f32 0.0, %v2033
    %2035 = vmatprep.mubr.f32.mxu0 0.0
    %2036 = vmatmul.mubr.f32.gmra.mxu0 %v1885
    %v2037 = vpop.f32.mrf.mxu0
    %v2038 = vadd.f32 0.0, %v2037
    %v2039 = vpop.f32.mrf.mxu0
    %v2040 = vadd.f32 0.0, %v2039
    %2041 = vmatprep.mubr.f32.mxu0 0.0
    %2042 = vmatmul.mubr.f32.gmra.mxu0 %v1888
    %v2043 = vpop.f32.mrf.mxu0
    %v2044 = vadd.f32 0.0, %v2043
    %v2045 = vpop.f32.mrf.mxu0
    %v2046 = vadd.f32 0.0, %v2045
    %2047 = vmatprep.mubr.f32.mxu0 0.0
    %2048 = vmatmul.mubr.f32.gmra.mxu0 %v1891
    %v2049 = vpop.f32.mrf.mxu0
    %v2050 = vadd.f32 0.0, %v2049
    %v2051 = vpop.f32.mrf.mxu0
    %v2052 = vadd.f32 0.0, %v2051
    %2053 = vmatprep.mubr.f32.mxu0 0.0
    %2054 = vmatmul.mubr.f32.gmra.mxu0 %v1894
    %v2055 = vpop.f32.mrf.mxu0
    %v2056 = vadd.f32 0.0, %v2055
    %v2057 = vpop.f32.mrf.mxu0
    %v2058 = vadd.f32 0.0, %v2057
    %2059 = vmatprep.mubr.f32.mxu0 0.0
    %2060 = vmatmul.mubr.f32.gmra.mxu0 %v1897
    %v2061 = vpop.f32.mrf.mxu0
    %v2062 = vadd.f32 0.0, %v2061
    %v2063 = vpop.f32.mrf.mxu0
    %v2064 = vadd.f32 0.0, %v2063
    %2065 = vmatprep.mubr.f32.mxu0 0.0
    %2066 = vmatmul.mubr.f32.gmra.mxu0 %v1900
    %v2067 = vpop.f32.mrf.mxu0
    %v2068 = vadd.f32 0.0, %v2067
    %v2069 = vpop.f32.mrf.mxu0
    %v2070 = vadd.f32 0.0, %v2069
    %2071 = vmatprep.mubr.f32.mxu0 0.0
    %2072 = vmatmul.mubr.f32.gmra.mxu0 %v1903
    %v2073 = vpop.f32.mrf.mxu0
    %v2074 = vadd.f32 0.0, %v2073
    %v2075 = vpop.f32.mrf.mxu0
    %v2076 = vadd.f32 0.0, %v2075
    %2077 = vmatprep.mubr.f32.mxu0 0.0
    %2078 = vmatmul.mubr.f32.gmra.mxu0 %v1906
    %v2079 = vpop.f32.mrf.mxu0
    %v2080 = vadd.f32 0.0, %v2079
    %v2081 = vpop.f32.mrf.mxu0
    %v2082 = vadd.f32 0.0, %v2081
    %2083 = vmatprep.mubr.f32.mxu0 0.0
    %2084 = vmatmul.mubr.f32.gmra.mxu0 %v1909
    %v2085 = vpop.f32.mrf.mxu0
    %v2086 = vadd.f32 0.0, %v2085
    %v2087 = vpop.f32.mrf.mxu0
    %v2088 = vadd.f32 0.0, %v2087
    %2089 = vmatprep.mubr.f32.mxu0 0.0
    %2090 = vmatmul.mubr.f32.gmra.mxu0 %v1912
    %v2091 = vpop.f32.mrf.mxu0
    %v2092 = vadd.f32 0.0, %v2091
    %v2093 = vpop.f32.mrf.mxu0
    %v2094 = vadd.f32 0.0, %v2093
    %2095 = vmatprep.mubr.f32.mxu0 0.0
    %2096 = vmatmul.mubr.f32.gmra.mxu0 %v1915
    %v2097 = vpop.f32.mrf.mxu0
    %v2098 = vadd.f32 0.0, %v2097
    %v2099 = vpop.f32.mrf.mxu0
    %v2100 = vadd.f32 0.0, %v2099
    %2101 = vmatprep.mubr.f32.mxu0 0.0
    %2102 = vmatmul.mubr.f32.gmra.mxu0 %v1918
    %v2103 = vpop.f32.mrf.mxu0
    %v2104 = vadd.f32 0.0, %v2103
    %v2105 = vpop.f32.mrf.mxu0
    %v2106 = vadd.f32 0.0, %v2105
    %2107 = vmatprep.mubr.f32.mxu0 0.0
    %2108 = vmatmul.mubr.f32.gmra.mxu0 %v1921
    %v2109 = vpop.f32.mrf.mxu0
    %v2110 = vadd.f32 0.0, %v2109
    %v2111 = vpop.f32.mrf.mxu0
    %v2112 = vadd.f32 0.0, %v2111
    %2113 = vmatprep.mubr.f32.mxu0 0.0
    %2114 = vmatmul.mubr.f32.gmra.mxu0 %v1924
    %v2115 = vpop.f32.mrf.mxu0
    %v2116 = vadd.f32 0.0, %v2115
    %v2117 = vpop.f32.mrf.mxu0
    %v2118 = vadd.f32 0.0, %v2117
    %2119 = vmatprep.mubr.f32.mxu0 0.0
    %2120 = vmatmul.mubr.f32.gmra.mxu0 %v1927
    %v2121 = vpop.f32.mrf.mxu0
    %v2122 = vadd.f32 0.0, %v2121
    %v2123 = vpop.f32.mrf.mxu0
    %v2124 = vadd.f32 0.0, %v2123
    %2125 = vmatprep.mubr.f32.mxu0 0.0
    %2126 = vmatmul.mubr.f32.gmra.mxu0 %v1930
    %v2127 = vpop.f32.mrf.mxu0
    %v2128 = vadd.f32 0.0, %v2127
    %v2129 = vpop.f32.mrf.mxu0
    %v2130 = vadd.f32 0.0, %v2129
    %2131 = vmatprep.mubr.f32.mxu0 0.0
    %2132 = vmatmul.mubr.f32.gmra.mxu0 %v1933
    %v2133 = vpop.f32.mrf.mxu0
    %v2134 = vadd.f32 0.0, %v2133
    %v2135 = vpop.f32.mrf.mxu0
    %v2136 = vadd.f32 0.0, %v2135
    %2137 = vmatprep.mubr.f32.mxu0 0.0
    %2138 = vmatmul.mubr.f32.gmra.mxu0 %v1936
    %v2139 = vpop.f32.mrf.mxu0
    %v2140 = vadd.f32 0.0, %v2139
    %v2141 = vpop.f32.mrf.mxu0
    %v2142 = vadd.f32 0.0, %v2141
    %2143 = vmatprep.mubr.f32.mxu0 0.0
    %2144 = vmatmul.mubr.f32.gmra.mxu0 %v1939
    %v2145 = vpop.f32.mrf.mxu0
    %v2146 = vadd.f32 0.0, %v2145
    %v2147 = vpop.f32.mrf.mxu0
    %v2148 = vadd.f32 0.0, %v2147
    %2149 = vdwg.mxu0
    %v2150 = vmul.f32 %v2008, %v129
    %v2151 = vmul.f32 %v2010, %v130
    %v2152 = vmul.f32 %v2014, %v131
    %v2153 = vmul.f32 %v2016, %v132
    %v2154 = vmul.f32 %v2020, %v133
    %v2155 = vmul.f32 %v2022, %v134
    %v2156 = vmul.f32 %v2026, %v135
    %v2157 = vmul.f32 %v2028, %v136
    %v2158 = vmul.f32 %v2032, %v137
    %v2159 = vmul.f32 %v2034, %v138
    %v2160 = vmul.f32 %v2038, %v139
    %v2161 = vmul.f32 %v2040, %v140
    %v2162 = vmul.f32 %v2044, %v141
    %v2163 = vmul.f32 %v2046, %v142
    %v2164 = vmul.f32 %v2050, %v143
    %v2165 = vmul.f32 %v2052, %v144
    %v2166 = vmul.f32 %v2056, %v145
    %v2167 = vmul.f32 %v2058, %v146
    %v2168 = vmul.f32 %v2062, %v147
    %v2169 = vmul.f32 %v2064, %v148
    %v2170 = vmul.f32 %v2068, %v149
    %v2171 = vmul.f32 %v2070, %v150
    %v2172 = vmul.f32 %v2074, %v151
    %v2173 = vmul.f32 %v2076, %v152
    %v2174 = vmul.f32 %v2080, %v153
    %v2175 = vmul.f32 %v2082, %v154
    %v2176 = vmul.f32 %v2086, %v155
    %v2177 = vmul.f32 %v2088, %v156
    %v2178 = vmul.f32 %v2092, %v157
    %v2179 = vmul.f32 %v2094, %v158
    %v2180 = vmul.f32 %v2098, %v159
    %v2181 = vmul.f32 %v2100, %v160
    %v2182 = vmul.f32 %v2104, %v161
    %v2183 = vmul.f32 %v2106, %v162
    %v2184 = vmul.f32 %v2110, %v163
    %v2185 = vmul.f32 %v2112, %v164
    %v2186 = vmul.f32 %v2116, %v165
    %v2187 = vmul.f32 %v2118, %v166
    %v2188 = vmul.f32 %v2122, %v167
    %v2189 = vmul.f32 %v2124, %v168
    %v2190 = vmul.f32 %v2128, %v169
    %v2191 = vmul.f32 %v2130, %v170
    %v2192 = vmul.f32 %v2134, %v171
    %v2193 = vmul.f32 %v2136, %v172
    %v2194 = vmul.f32 %v2140, %v173
    %v2195 = vmul.f32 %v2142, %v174
    %v2196 = vmul.f32 %v2146, %v175
    %v2197 = vmul.f32 %v2148, %v176
    %2198 = vmatprep.subr.mxu0 %v2181
    %2199 = vmatpush1.msra.mxu0 %v2180
    %2200 = vmatprep.subr.mxu0 %v2179
    %2201 = vmatpush1.msra.mxu0 %v2178
    %2202 = vmatprep.subr.mxu0 %v2177
    %2203 = vmatpush1.msra.mxu0 %v2176
    %2204 = vmatprep.subr.mxu0 %v2175
    %2205 = vmatpush1.msra.mxu0 %v2174
    %2206 = vmatprep.subr.mxu0 %v2173
    %2207 = vmatpush1.msra.mxu0 %v2172
    %2208 = vmatprep.subr.mxu0 %v2171
    %2209 = vmatpush1.msra.mxu0 %v2170
    %2210 = vmatprep.subr.mxu0 %v2169
    %2211 = vmatpush1.msra.mxu0 %v2168
    %2212 = vmatprep.subr.mxu0 %v2167
    %2213 = vmatpush1.msra.mxu0 %v2166
    %2214 = vmatprep.subr.mxu0 %v2165
    %2215 = vmatpush1.msra.mxu0 %v2164
    %2216 = vmatprep.subr.mxu0 %v2163
    %2217 = vmatpush1.msra.mxu0 %v2162
    %2218 = vmatprep.subr.mxu0 %v2161
    %2219 = vmatpush1.msra.mxu0 %v2160
    %2220 = vmatprep.subr.mxu0 %v2159
    %2221 = vmatpush1.msra.mxu0 %v2158
    %2222 = vmatprep.subr.mxu0 %v2157
    %2223 = vmatpush1.msra.mxu0 %v2156
    %2224 = vmatprep.subr.mxu0 %v2155
    %2225 = vmatpush1.msra.mxu0 %v2154
    %2226 = vmatprep.subr.mxu0 %v2153
    %2227 = vmatpush1.msra.mxu0 %v2152
    %2228 = vmatprep.subr.mxu0 %v2151
    %2229 = vmatpush1.msra.mxu0 %v2150
    %2230 = vmatprep.subr.mxu0 0.0
    %2231 = vmatpush2.msra.mxu0 0.0
    %2232 = vmatprep.subr.mxu0 0.0
    %2233 = vmatpush2.msra.mxu0 0.0
    %2234 = vmatprep.subr.mxu0 0.0
    %2235 = vmatpush2.msra.mxu0 0.0
    %2236 = vmatprep.subr.mxu0 0.0
    %2237 = vmatpush2.msra.mxu0 0.0
    %2238 = vmatprep.subr.mxu0 0.0
    %2239 = vmatpush2.msra.mxu0 0.0
    %2240 = vmatprep.subr.mxu0 0.0
    %2241 = vmatpush2.msra.mxu0 0.0
    %2242 = vmatprep.subr.mxu0 0.0
    %2243 = vmatpush2.msra.mxu0 0.0
    %2244 = vmatprep.subr.mxu0 0.0
    %2245 = vmatpush2.msra.mxu0 0.0
    %2246 = vmatprep.subr.mxu0 %v2197
    %2247 = vmatpush2.msra.mxu0 %v2196
    %2248 = vmatprep.subr.mxu0 %v2195
    %2249 = vmatpush2.msra.mxu0 %v2194
    %2250 = vmatprep.subr.mxu0 %v2193
    %2251 = vmatpush2.msra.mxu0 %v2192
    %2252 = vmatprep.subr.mxu0 %v2191
    %2253 = vmatpush2.msra.mxu0 %v2190
    %2254 = vmatprep.subr.mxu0 %v2189
    %2255 = vmatpush2.msra.mxu0 %v2188
    %2256 = vmatprep.subr.mxu0 %v2187
    %2257 = vmatpush2.msra.mxu0 %v2186
    %2258 = vmatprep.subr.mxu0 %v2185
    %2259 = vmatpush2.msra.mxu0 %v2184
    %2260 = vmatprep.subr.mxu0 %v2183
    %2261 = vmatpush2.msra.mxu0 %v2182
    %2262 = vmatprep.mubr.f32.mxu0 %v1098
    %2263 = vmatmul.mubr.f32.gmra.mxu0 %v127
    %v2264 = vpop.f32.mrf.mxu0
    %v2265 = vadd.f32 0.0, %v2264
    %v2266 = vpop.f32.mrf.mxu0
    %v2267 = vadd.f32 0.0, %v2266
    %2268 = vdwg.mxu0
    %v2270 = vsel %vm563, %v2267, 0
    %2272 = vmatprep.subr.mxu0 0.0
    %2273 = vmatpush1.xpose.msra.mxu0 0.0
    %2274 = vmatprep.subr.mxu0 0.0
    %2275 = vmatpush1.xpose.msra.mxu0 0.0
    %2276 = vmatprep.subr.mxu0 0.0
    %2277 = vmatpush1.xpose.msra.mxu0 0.0
    %2278 = vmatprep.subr.mxu0 0.0
    %2279 = vmatpush1.xpose.msra.mxu0 0.0
    %2280 = vmatprep.subr.mxu0 0.0
    %2281 = vmatpush1.xpose.msra.mxu0 0.0
    %2282 = vmatprep.subr.mxu0 0.0
    %2283 = vmatpush1.xpose.msra.mxu0 0.0
    %2284 = vmatprep.subr.mxu0 0.0
    %2285 = vmatpush1.xpose.msra.mxu0 0.0
    %2286 = vmatprep.subr.mxu0 0.0
    %2287 = vmatpush1.xpose.msra.mxu0 0.0
    %2288 = vmatprep.subr.mxu0 0.0
    %2289 = vmatpush1.xpose.msra.mxu0 0.0
    %2290 = vmatprep.subr.mxu0 0.0
    %2291 = vmatpush1.xpose.msra.mxu0 0.0
    %2292 = vmatprep.subr.mxu0 0.0
    %2293 = vmatpush1.xpose.msra.mxu0 0.0
    %2294 = vmatprep.subr.mxu0 0.0
    %2295 = vmatpush1.xpose.msra.mxu0 0.0
    %2296 = vmatprep.subr.mxu0 0.0
    %2297 = vmatpush1.xpose.msra.mxu0 0.0
    %2298 = vmatprep.subr.mxu0 0.0
    %2299 = vmatpush1.xpose.msra.mxu0 0.0
    %2300 = vmatprep.subr.mxu0 0.0
    %2301 = vmatpush1.xpose.msra.mxu0 0.0
    %2302 = vmatprep.subr.mxu0 %v1098
    %2303 = vmatpush1.xpose.msra.mxu0 %v127
    %2304 = vmatprep.subr.mxu0 0.0
    %2305 = vmatpush2.xpose.msra.mxu0 0.0
    %2306 = vmatprep.subr.mxu0 0.0
    %2307 = vmatpush2.xpose.msra.mxu0 0.0
    %2308 = vmatprep.subr.mxu0 0.0
    %2309 = vmatpush2.xpose.msra.mxu0 0.0
    %2310 = vmatprep.subr.mxu0 0.0
    %2311 = vmatpush2.xpose.msra.mxu0 0.0
    %2312 = vmatprep.subr.mxu0 0.0
    %2313 = vmatpush2.xpose.msra.mxu0 0.0
    %2314 = vmatprep.subr.mxu0 0.0
    %2315 = vmatpush2.xpose.msra.mxu0 0.0
    %2316 = vmatprep.subr.mxu0 0.0
    %2317 = vmatpush2.xpose.msra.mxu0 0.0
    %2318 = vmatprep.subr.mxu0 0.0
    %2319 = vmatpush2.xpose.msra.mxu0 0.0
    %2320 = vmatprep.subr.mxu0 0.0
    %2321 = vmatpush2.xpose.msra.mxu0 0.0
    %2322 = vmatprep.subr.mxu0 0.0
    %2323 = vmatpush2.xpose.msra.mxu0 0.0
    %2324 = vmatprep.subr.mxu0 0.0
    %2325 = vmatpush2.xpose.msra.mxu0 0.0
    %2326 = vmatprep.subr.mxu0 0.0
    %2327 = vmatpush2.xpose.msra.mxu0 0.0
    %2328 = vmatprep.subr.mxu0 0.0
    %2329 = vmatpush2.xpose.msra.mxu0 0.0
    %2330 = vmatprep.subr.mxu0 0.0
    %2331 = vmatpush2.xpose.msra.mxu0 0.0
    %2332 = vmatprep.subr.mxu0 0.0
    %2333 = vmatpush2.xpose.msra.mxu0 0.0
    %2334 = vmatprep.subr.mxu0 0.0
    %2335 = vmatpush2.xpose.msra.mxu0 0.0
    %2336 = vmatprep.mubr.f32.mxu0 %v2270
    %2337 = vmatmul.mubr.f32.gmra.mxu0 %v2265
    %v2338 = vpop.f32.mrf.mxu0
    %v2339 = vadd.f32 0.0, %v2338
    %v2340 = vpop.f32.mrf.mxu0
    %2341 = vdwg.mxu0
    %v2342 = vsel %vm767, %v2339, -inf
    %2343 = vmax.xlane.f32.xlu0 %v2342
    %v2344 = vpop.xlane.xlu0 %2343
    %v2345 = vsub.f32 %v2339, %v2344
    %v2346 = vmul.f32 %v2345, 1.442695
    %v2347 = vpow.pop %v2346
    %v2348 = vsel %vm767, %v2347, 0.0
    %2349 = vadd.xlane.f32.xlu0 %v2348
    %v2350 = vpop.xlane.xlu0 %2349
    %v2351 = vrcp.pop %v2350
    %v2352 = vmul.f32 %v2347, %v2351
    %v2354 = vsel %vm767, %v2352, 0
    %2356 = vmatprep.subr.mxu0 0.0
    %2357 = vmatpush1.msra.mxu0 0.0
    %2358 = vmatprep.subr.mxu0 0.0
    %2359 = vmatpush1.msra.mxu0 0.0
    %2360 = vmatprep.subr.mxu0 0.0
    %2361 = vmatpush1.msra.mxu0 0.0
    %2362 = vmatprep.subr.mxu0 0.0
    %2363 = vmatpush1.msra.mxu0 0.0
    %2364 = vmatprep.subr.mxu0 0.0
    %2365 = vmatpush1.msra.mxu0 0.0
    %2366 = vmatprep.subr.mxu0 0.0
    %2367 = vmatpush1.msra.mxu0 0.0
    %2368 = vmatprep.subr.mxu0 0.0
    %2369 = vmatpush1.msra.mxu0 0.0
    %2370 = vmatprep.subr.mxu0 0.0
    %2371 = vmatpush1.msra.mxu0 0.0
    %2372 = vmatprep.subr.mxu0 0.0
    %2373 = vmatpush1.msra.mxu0 0.0
    %2374 = vmatprep.subr.mxu0 0.0
    %2375 = vmatpush1.msra.mxu0 0.0
    %2376 = vmatprep.subr.mxu0 0.0
    %2377 = vmatpush1.msra.mxu0 0.0
    %2378 = vmatprep.subr.mxu0 0.0
    %2379 = vmatpush1.msra.mxu0 0.0
    %2380 = vmatprep.subr.mxu0 0.0
    %2381 = vmatpush1.msra.mxu0 0.0
    %2382 = vmatprep.subr.mxu0 0.0
    %2383 = vmatpush1.msra.mxu0 0.0
    %2384 = vmatprep.subr.mxu0 0.0
    %2385 = vmatpush1.msra.mxu0 0.0
    %2386 = vmatprep.subr.mxu0 %v128
    %2387 = vmatpush1.msra.mxu0 %v127
    %2388 = vmatprep.subr.mxu0 0.0
    %2389 = vmatpush2.msra.mxu0 0.0
    %2390 = vmatprep.subr.mxu0 0.0
    %2391 = vmatpush2.msra.mxu0 0.0
    %2392 = vmatprep.subr.mxu0 0.0
    %2393 = vmatpush2.msra.mxu0 0.0
    %2394 = vmatprep.subr.mxu0 0.0
    %2395 = vmatpush2.msra.mxu0 0.0
    %2396 = vmatprep.subr.mxu0 0.0
    %2397 = vmatpush2.msra.mxu0 0.0
    %2398 = vmatprep.subr.mxu0 0.0
    %2399 = vmatpush2.msra.mxu0 0.0
    %2400 = vmatprep.subr.mxu0 0.0
    %2401 = vmatpush2.msra.mxu0 0.0
    %2402 = vmatprep.subr.mxu0 0.0
    %2403 = vmatpush2.msra.mxu0 0.0
    %2404 = vmatprep.subr.mxu0 0.0
    %2405 = vmatpush2.msra.mxu0 0.0
    %2406 = vmatprep.subr.mxu0 0.0
    %2407 = vmatpush2.msra.mxu0 0.0
    %2408 = vmatprep.subr.mxu0 0.0
    %2409 = vmatpush2.msra.mxu0 0.0
    %2410 = vmatprep.subr.mxu0 0.0
    %2411 = vmatpush2.msra.mxu0 0.0
    %2412 = vmatprep.subr.mxu0 0.0
    %2413 = vmatpush2.msra.mxu0 0.0
    %2414 = vmatprep.subr.mxu0 0.0
    %2415 = vmatpush2.msra.mxu0 0.0
    %2416 = vmatprep.subr.mxu0 0.0
    %2417 = vmatpush2.msra.mxu0 0.0
    %2418 = vmatprep.subr.mxu0 0.0
    %2419 = vmatpush2.msra.mxu0 0.0
    %2420 = vmatprep.mubr.f32.mxu0 0.0
    %2421 = vmatmul.mubr.f32.gmra.mxu0 %v2354
    %v2422 = vpop.f32.mrf.mxu0
    %v2423 = vadd.f32 0.0, %v2422
    %v2424 = vpop.f32.mrf.mxu0
    %v2425 = vadd.f32 0.0, %v2424
    %2426 = vdwg.mxu0
    %2427 = vxpose.xlu0.b32.start [1/16] %v651, 128
    %2428 = vxpose.xlu0.b32.cont [2/16] 0.0, 128
    %2429 = vxpose.xlu0.b32.cont [3/16] 0.0, 128
    %2430 = vxpose.xlu0.b32.cont [4/16] 0.0, 128
    %2431 = vxpose.xlu0.b32.cont [5/16] 0.0, 128
    %2432 = vxpose.xlu0.b32.cont [6/16] 0.0, 128
    %2433 = vxpose.xlu0.b32.cont [7/16] 0.0, 128
    %2434 = vxpose.xlu0.b32.cont [8/16] 0.0, 128
    %2435 = vxpose.xlu0.b32.cont [9/16] 0.0, 128
    %2436 = vxpose.xlu0.b32.cont [10/16] 0.0, 128
    %2437 = vxpose.xlu0.b32.cont [11/16] 0.0, 128
    %2438 = vxpose.xlu0.b32.cont [12/16] 0.0, 128
    %2439 = vxpose.xlu0.b32.cont [13/16] 0.0, 128
    %2440 = vxpose.xlu0.b32.cont [14/16] 0.0, 128
    %2441 = vxpose.xlu0.b32.cont [15/16] 0.0, 128
    %2442 = vxpose.xlu0.b32.end [16/16] 0.0, 128
    %v2443 = vpop.trf.xlu0
    %v2444 = vpop.trf.xlu0
    %v2445 = vpop.trf.xlu0
    %v2446 = vpop.trf.xlu0
    %v2447 = vpop.trf.xlu0
    %v2448 = vpop.trf.xlu0
    %v2449 = vpop.trf.xlu0
    %v2450 = vpop.trf.xlu0
    %v2451 = vpop.trf.xlu0
    %v2452 = vpop.trf.xlu0
    %v2453 = vpop.trf.xlu0
    %v2454 = vpop.trf.xlu0
    %v2455 = vpop.trf.xlu0
    %v2456 = vpop.trf.xlu0
    %v2457 = vpop.trf.xlu0
    %v2458 = vpop.trf.xlu0
    %2459 = vxpose.xlu0.b32.start [1/16] %v691, 128
    %2460 = vxpose.xlu0.b32.cont [2/16] 0.0, 128
    %2461 = vxpose.xlu0.b32.cont [3/16] 0.0, 128
    %2462 = vxpose.xlu0.b32.cont [4/16] 0.0, 128
    %2463 = vxpose.xlu0.b32.cont [5/16] 0.0, 128
    %2464 = vxpose.xlu0.b32.cont [6/16] 0.0, 128
    %2465 = vxpose.xlu0.b32.cont [7/16] 0.0, 128
    %2466 = vxpose.xlu0.b32.cont [8/16] 0.0, 128
    %2467 = vxpose.xlu0.b32.cont [9/16] 0.0, 128
    %2468 = vxpose.xlu0.b32.cont [10/16] 0.0, 128
    %2469 = vxpose.xlu0.b32.cont [11/16] 0.0, 128
    %2470 = vxpose.xlu0.b32.cont [12/16] 0.0, 128
    %2471 = vxpose.xlu0.b32.cont [13/16] 0.0, 128
    %2472 = vxpose.xlu0.b32.cont [14/16] 0.0, 128
    %2473 = vxpose.xlu0.b32.cont [15/16] 0.0, 128
    %2474 = vxpose.xlu0.b32.end [16/16] 0.0, 128
    %v2475 = vpop.trf.xlu0
    %v2476 = vpop.trf.xlu0
    %v2477 = vpop.trf.xlu0
    %v2478 = vpop.trf.xlu0
    %v2479 = vpop.trf.xlu0
    %v2480 = vpop.trf.xlu0
    %v2481 = vpop.trf.xlu0
    %v2482 = vpop.trf.xlu0
    %v2483 = vpop.trf.xlu0
    %v2484 = vpop.trf.xlu0
    %v2485 = vpop.trf.xlu0
    %v2486 = vpop.trf.xlu0
    %v2487 = vpop.trf.xlu0
    %v2488 = vpop.trf.xlu0
    %v2489 = vpop.trf.xlu0
    %v2490 = vpop.trf.xlu0
    %v2492 = vsel %vm767, %v2443, 0
    %v2495 = vsel %vm767, %v2444, 0
    %v2498 = vsel %vm767, %v2445, 0
    %v2501 = vsel %vm767, %v2446, 0
    %v2504 = vsel %vm767, %v2447, 0
    %v2507 = vsel %vm767, %v2448, 0
    %v2510 = vsel %vm767, %v2449, 0
    %v2513 = vsel %vm767, %v2450, 0
    %v2516 = vsel %vm767, %v2451, 0
    %v2519 = vsel %vm767, %v2452, 0
    %v2522 = vsel %vm767, %v2453, 0
    %v2525 = vsel %vm767, %v2454, 0
    %v2528 = vsel %vm767, %v2455, 0
    %v2531 = vsel %vm767, %v2456, 0
    %v2534 = vsel %vm767, %v2457, 0
    %v2537 = vsel %vm767, %v2458, 0
    %v2540 = vsel %vm767, %v2475, 0
    %v2543 = vsel %vm767, %v2476, 0
    %v2546 = vsel %vm767, %v2477, 0
    %v2549 = vsel %vm767, %v2478, 0
    %v2552 = vsel %vm767, %v2479, 0
    %v2555 = vsel %vm767, %v2480, 0
    %v2558 = vsel %vm767, %v2481, 0
    %v2561 = vsel %vm767, %v2482, 0
    %2563 = vmatprep.subr.mxu0 0.0
    %2564 = vmatpush1.msra.mxu0 0.0
    %2565 = vmatprep.subr.mxu0 0.0
    %2566 = vmatpush1.msra.mxu0 0.0
    %2567 = vmatprep.subr.mxu0 0.0
    %2568 = vmatpush1.msra.mxu0 0.0
    %2569 = vmatprep.subr.mxu0 0.0
    %2570 = vmatpush1.msra.mxu0 0.0
    %2571 = vmatprep.subr.mxu0 0.0
    %2572 = vmatpush1.msra.mxu0 0.0
    %2573 = vmatprep.subr.mxu0 0.0
    %2574 = vmatpush1.msra.mxu0 0.0
    %2575 = vmatprep.subr.mxu0 0.0
    %2576 = vmatpush1.msra.mxu0 0.0
    %2577 = vmatprep.subr.mxu0 0.0
    %2578 = vmatpush1.msra.mxu0 0.0
    %2579 = vmatprep.subr.mxu0 0.0
    %2580 = vmatpush1.msra.mxu0 0.0
    %2581 = vmatprep.subr.mxu0 0.0
    %2582 = vmatpush1.msra.mxu0 0.0
    %2583 = vmatprep.subr.mxu0 0.0
    %2584 = vmatpush1.msra.mxu0 0.0
    %2585 = vmatprep.subr.mxu0 0.0
    %2586 = vmatpush1.msra.mxu0 0.0
    %2587 = vmatprep.subr.mxu0 0.0
    %2588 = vmatpush1.msra.mxu0 0.0
    %2589 = vmatprep.subr.mxu0 0.0
    %2590 = vmatpush1.msra.mxu0 0.0
    %2591 = vmatprep.subr.mxu0 0.0
    %2592 = vmatpush1.msra.mxu0 0.0
    %2593 = vmatprep.subr.mxu0 %v128
    %2594 = vmatpush1.msra.mxu0 %v127
    %2595 = vmatprep.subr.mxu0 0.0
    %2596 = vmatpush2.msra.mxu0 0.0
    %2597 = vmatprep.subr.mxu0 0.0
    %2598 = vmatpush2.msra.mxu0 0.0
    %2599 = vmatprep.subr.mxu0 0.0
    %2600 = vmatpush2.msra.mxu0 0.0
    %2601 = vmatprep.subr.mxu0 0.0
    %2602 = vmatpush2.msra.mxu0 0.0
    %2603 = vmatprep.subr.mxu0 0.0
    %2604 = vmatpush2.msra.mxu0 0.0
    %2605 = vmatprep.subr.mxu0 0.0
    %2606 = vmatpush2.msra.mxu0 0.0
    %2607 = vmatprep.subr.mxu0 0.0
    %2608 = vmatpush2.msra.mxu0 0.0
    %2609 = vmatprep.subr.mxu0 0.0
    %2610 = vmatpush2.msra.mxu0 0.0
    %2611 = vmatprep.subr.mxu0 0.0
    %2612 = vmatpush2.msra.mxu0 0.0
    %2613 = vmatprep.subr.mxu0 0.0
    %2614 = vmatpush2.msra.mxu0 0.0
    %2615 = vmatprep.subr.mxu0 0.0
    %2616 = vmatpush2.msra.mxu0 0.0
    %2617 = vmatprep.subr.mxu0 0.0
    %2618 = vmatpush2.msra.mxu0 0.0
    %2619 = vmatprep.subr.mxu0 0.0
    %2620 = vmatpush2.msra.mxu0 0.0
    %2621 = vmatprep.subr.mxu0 0.0
    %2622 = vmatpush2.msra.mxu0 0.0
    %2623 = vmatprep.subr.mxu0 0.0
    %2624 = vmatpush2.msra.mxu0 0.0
    %2625 = vmatprep.subr.mxu0 0.0
    %2626 = vmatpush2.msra.mxu0 0.0
    %2627 = vmatprep.mubr.f32.mxu0 0.0
    %2628 = vmatmul.mubr.f32.gmra.mxu0 %v2492
    %v2629 = vpop.f32.mrf.mxu0
    %v2630 = vadd.f32 0.0, %v2629
    %v2631 = vpop.f32.mrf.mxu0
    %v2632 = vadd.f32 0.0, %v2631
    %2633 = vmatprep.mubr.f32.mxu0 0.0
    %2634 = vmatmul.mubr.f32.gmra.mxu0 %v2495
    %v2635 = vpop.f32.mrf.mxu0
    %v2636 = vadd.f32 0.0, %v2635
    %v2637 = vpop.f32.mrf.mxu0
    %v2638 = vadd.f32 0.0, %v2637
    %2639 = vmatprep.mubr.f32.mxu0 0.0
    %2640 = vmatmul.mubr.f32.gmra.mxu0 %v2498
    %v2641 = vpop.f32.mrf.mxu0
    %v2642 = vadd.f32 0.0, %v2641
    %v2643 = vpop.f32.mrf.mxu0
    %v2644 = vadd.f32 0.0, %v2643
    %2645 = vmatprep.mubr.f32.mxu0 0.0
    %2646 = vmatmul.mubr.f32.gmra.mxu0 %v2501
    %v2647 = vpop.f32.mrf.mxu0
    %v2648 = vadd.f32 0.0, %v2647
    %v2649 = vpop.f32.mrf.mxu0
    %v2650 = vadd.f32 0.0, %v2649
    %2651 = vmatprep.mubr.f32.mxu0 0.0
    %2652 = vmatmul.mubr.f32.gmra.mxu0 %v2504
    %v2653 = vpop.f32.mrf.mxu0
    %v2654 = vadd.f32 0.0, %v2653
    %v2655 = vpop.f32.mrf.mxu0
    %v2656 = vadd.f32 0.0, %v2655
    %2657 = vmatprep.mubr.f32.mxu0 0.0
    %2658 = vmatmul.mubr.f32.gmra.mxu0 %v2507
    %v2659 = vpop.f32.mrf.mxu0
    %v2660 = vadd.f32 0.0, %v2659
    %v2661 = vpop.f32.mrf.mxu0
    %v2662 = vadd.f32 0.0, %v2661
    %2663 = vmatprep.mubr.f32.mxu0 0.0
    %2664 = vmatmul.mubr.f32.gmra.mxu0 %v2510
    %v2665 = vpop.f32.mrf.mxu0
    %v2666 = vadd.f32 0.0, %v2665
    %v2667 = vpop.f32.mrf.mxu0
    %v2668 = vadd.f32 0.0, %v2667
    %2669 = vmatprep.mubr.f32.mxu0 0.0
    %2670 = vmatmul.mubr.f32.gmra.mxu0 %v2513
    %v2671 = vpop.f32.mrf.mxu0
    %v2672 = vadd.f32 0.0, %v2671
    %v2673 = vpop.f32.mrf.mxu0
    %v2674 = vadd.f32 0.0, %v2673
    %2675 = vmatprep.mubr.f32.mxu0 0.0
    %2676 = vmatmul.mubr.f32.gmra.mxu0 %v2516
    %v2677 = vpop.f32.mrf.mxu0
    %v2678 = vadd.f32 0.0, %v2677
    %v2679 = vpop.f32.mrf.mxu0
    %v2680 = vadd.f32 0.0, %v2679
    %2681 = vmatprep.mubr.f32.mxu0 0.0
    %2682 = vmatmul.mubr.f32.gmra.mxu0 %v2519
    %v2683 = vpop.f32.mrf.mxu0
    %v2684 = vadd.f32 0.0, %v2683
    %v2685 = vpop.f32.mrf.mxu0
    %v2686 = vadd.f32 0.0, %v2685
    %2687 = vmatprep.mubr.f32.mxu0 0.0
    %2688 = vmatmul.mubr.f32.gmra.mxu0 %v2522
    %v2689 = vpop.f32.mrf.mxu0
    %v2690 = vadd.f32 0.0, %v2689
    %v2691 = vpop.f32.mrf.mxu0
    %v2692 = vadd.f32 0.0, %v2691
    %2693 = vmatprep.mubr.f32.mxu0 0.0
    %2694 = vmatmul.mubr.f32.gmra.mxu0 %v2525
    %v2695 = vpop.f32.mrf.mxu0
    %v2696 = vadd.f32 0.0, %v2695
    %v2697 = vpop.f32.mrf.mxu0
    %v2698 = vadd.f32 0.0, %v2697
    %2699 = vmatprep.mubr.f32.mxu0 0.0
    %2700 = vmatmul.mubr.f32.gmra.mxu0 %v2528
    %v2701 = vpop.f32.mrf.mxu0
    %v2702 = vadd.f32 0.0, %v2701
    %v2703 = vpop.f32.mrf.mxu0
    %v2704 = vadd.f32 0.0, %v2703
    %2705 = vmatprep.mubr.f32.mxu0 0.0
    %2706 = vmatmul.mubr.f32.gmra.mxu0 %v2531
    %v2707 = vpop.f32.mrf.mxu0
    %v2708 = vadd.f32 0.0, %v2707
    %v2709 = vpop.f32.mrf.mxu0
    %v2710 = vadd.f32 0.0, %v2709
    %2711 = vmatprep.mubr.f32.mxu0 0.0
    %2712 = vmatmul.mubr.f32.gmra.mxu0 %v2534
    %v2713 = vpop.f32.mrf.mxu0
    %v2714 = vadd.f32 0.0, %v2713
    %v2715 = vpop.f32.mrf.mxu0
    %v2716 = vadd.f32 0.0, %v2715
    %2717 = vmatprep.mubr.f32.mxu0 0.0
    %2718 = vmatmul.mubr.f32.gmra.mxu0 %v2537
    %v2719 = vpop.f32.mrf.mxu0
    %v2720 = vadd.f32 0.0, %v2719
    %v2721 = vpop.f32.mrf.mxu0
    %v2722 = vadd.f32 0.0, %v2721
    %2723 = vmatprep.mubr.f32.mxu0 0.0
    %2724 = vmatmul.mubr.f32.gmra.mxu0 %v2540
    %v2725 = vpop.f32.mrf.mxu0
    %v2726 = vadd.f32 0.0, %v2725
    %v2727 = vpop.f32.mrf.mxu0
    %v2728 = vadd.f32 0.0, %v2727
    %2729 = vmatprep.mubr.f32.mxu0 0.0
    %2730 = vmatmul.mubr.f32.gmra.mxu0 %v2543
    %v2731 = vpop.f32.mrf.mxu0
    %v2732 = vadd.f32 0.0, %v2731
    %v2733 = vpop.f32.mrf.mxu0
    %v2734 = vadd.f32 0.0, %v2733
    %2735 = vmatprep.mubr.f32.mxu0 0.0
    %2736 = vmatmul.mubr.f32.gmra.mxu0 %v2546
    %v2737 = vpop.f32.mrf.mxu0
    %v2738 = vadd.f32 0.0, %v2737
    %v2739 = vpop.f32.mrf.mxu0
    %v2740 = vadd.f32 0.0, %v2739
    %2741 = vmatprep.mubr.f32.mxu0 0.0
    %2742 = vmatmul.mubr.f32.gmra.mxu0 %v2549
    %v2743 = vpop.f32.mrf.mxu0
    %v2744 = vadd.f32 0.0, %v2743
    %v2745 = vpop.f32.mrf.mxu0
    %v2746 = vadd.f32 0.0, %v2745
    %2747 = vmatprep.mubr.f32.mxu0 0.0
    %2748 = vmatmul.mubr.f32.gmra.mxu0 %v2552
    %v2749 = vpop.f32.mrf.mxu0
    %v2750 = vadd.f32 0.0, %v2749
    %v2751 = vpop.f32.mrf.mxu0
    %v2752 = vadd.f32 0.0, %v2751
    %2753 = vmatprep.mubr.f32.mxu0 0.0
    %2754 = vmatmul.mubr.f32.gmra.mxu0 %v2555
    %v2755 = vpop.f32.mrf.mxu0
    %v2756 = vadd.f32 0.0, %v2755
    %v2757 = vpop.f32.mrf.mxu0
    %v2758 = vadd.f32 0.0, %v2757
    %2759 = vmatprep.mubr.f32.mxu0 0.0
    %2760 = vmatmul.mubr.f32.gmra.mxu0 %v2558
    %v2761 = vpop.f32.mrf.mxu0
    %v2762 = vadd.f32 0.0, %v2761
    %v2763 = vpop.f32.mrf.mxu0
    %v2764 = vadd.f32 0.0, %v2763
    %2765 = vmatprep.mubr.f32.mxu0 0.0
    %2766 = vmatmul.mubr.f32.gmra.mxu0 %v2561
    %v2767 = vpop.f32.mrf.mxu0
    %v2768 = vadd.f32 0.0, %v2767
    %v2769 = vpop.f32.mrf.mxu0
    %v2770 = vadd.f32 0.0, %v2769
    %2771 = vdwg.mxu0
    %v2772 = vmul.f32 %v2630, %v129
    %v2773 = vmul.f32 %v2632, %v130
    %v2774 = vmul.f32 %v2636, %v131
    %v2775 = vmul.f32 %v2638, %v132
    %v2776 = vmul.f32 %v2642, %v133
    %v2777 = vmul.f32 %v2644, %v134
    %v2778 = vmul.f32 %v2648, %v135
    %v2779 = vmul.f32 %v2650, %v136
    %v2780 = vmul.f32 %v2654, %v137
    %v2781 = vmul.f32 %v2656, %v138
    %v2782 = vmul.f32 %v2660, %v139
    %v2783 = vmul.f32 %v2662, %v140
    %v2784 = vmul.f32 %v2666, %v141
    %v2785 = vmul.f32 %v2668, %v142
    %v2786 = vmul.f32 %v2672, %v143
    %v2787 = vmul.f32 %v2674, %v144
    %v2788 = vmul.f32 %v2678, %v145
    %v2789 = vmul.f32 %v2680, %v146
    %v2790 = vmul.f32 %v2684, %v147
    %v2791 = vmul.f32 %v2686, %v148
    %v2792 = vmul.f32 %v2690, %v149
    %v2793 = vmul.f32 %v2692, %v150
    %v2794 = vmul.f32 %v2696, %v151
    %v2795 = vmul.f32 %v2698, %v152
    %v2796 = vmul.f32 %v2702, %v153
    %v2797 = vmul.f32 %v2704, %v154
    %v2798 = vmul.f32 %v2708, %v155
    %v2799 = vmul.f32 %v2710, %v156
    %v2800 = vmul.f32 %v2714, %v157
    %v2801 = vmul.f32 %v2716, %v158
    %v2802 = vmul.f32 %v2720, %v159
    %v2803 = vmul.f32 %v2722, %v160
    %v2804 = vmul.f32 %v2726, %v161
    %v2805 = vmul.f32 %v2728, %v162
    %v2806 = vmul.f32 %v2732, %v163
    %v2807 = vmul.f32 %v2734, %v164
    %v2808 = vmul.f32 %v2738, %v165
    %v2809 = vmul.f32 %v2740, %v166
    %v2810 = vmul.f32 %v2744, %v167
    %v2811 = vmul.f32 %v2746, %v168
    %v2812 = vmul.f32 %v2750, %v169
    %v2813 = vmul.f32 %v2752, %v170
    %v2814 = vmul.f32 %v2756, %v171
    %v2815 = vmul.f32 %v2758, %v172
    %v2816 = vmul.f32 %v2762, %v173
    %v2817 = vmul.f32 %v2764, %v174
    %v2818 = vmul.f32 %v2768, %v175
    %v2819 = vmul.f32 %v2770, %v176
    %v2821 = vsel %vm563, %v2425, 0
    %2823 = vmatprep.subr.mxu0 %v2803
    %2824 = vmatpush1.msra.mxu0 %v2802
    %2825 = vmatprep.subr.mxu0 %v2801
    %2826 = vmatpush1.msra.mxu0 %v2800
    %2827 = vmatprep.subr.mxu0 %v2799
    %2828 = vmatpush1.msra.mxu0 %v2798
    %2829 = vmatprep.subr.mxu0 %v2797
    %2830 = vmatpush1.msra.mxu0 %v2796
    %2831 = vmatprep.subr.mxu0 %v2795
    %2832 = vmatpush1.msra.mxu0 %v2794
    %2833 = vmatprep.subr.mxu0 %v2793
    %2834 = vmatpush1.msra.mxu0 %v2792
    %2835 = vmatprep.subr.mxu0 %v2791
    %2836 = vmatpush1.msra.mxu0 %v2790
    %2837 = vmatprep.subr.mxu0 %v2789
    %2838 = vmatpush1.msra.mxu0 %v2788
    %2839 = vmatprep.subr.mxu0 %v2787
    %2840 = vmatpush1.msra.mxu0 %v2786
    %2841 = vmatprep.subr.mxu0 %v2785
    %2842 = vmatpush1.msra.mxu0 %v2784
    %2843 = vmatprep.subr.mxu0 %v2783
    %2844 = vmatpush1.msra.mxu0 %v2782
    %2845 = vmatprep.subr.mxu0 %v2781
    %2846 = vmatpush1.msra.mxu0 %v2780
    %2847 = vmatprep.subr.mxu0 %v2779
    %2848 = vmatpush1.msra.mxu0 %v2778
    %2849 = vmatprep.subr.mxu0 %v2777
    %2850 = vmatpush1.msra.mxu0 %v2776
    %2851 = vmatprep.subr.mxu0 %v2775
    %2852 = vmatpush1.msra.mxu0 %v2774
    %2853 = vmatprep.subr.mxu0 %v2773
    %2854 = vmatpush1.msra.mxu0 %v2772
    %2855 = vmatprep.subr.mxu0 0.0
    %2856 = vmatpush2.msra.mxu0 0.0
    %2857 = vmatprep.subr.mxu0 0.0
    %2858 = vmatpush2.msra.mxu0 0.0
    %2859 = vmatprep.subr.mxu0 0.0
    %2860 = vmatpush2.msra.mxu0 0.0
    %2861 = vmatprep.subr.mxu0 0.0
    %2862 = vmatpush2.msra.mxu0 0.0
    %2863 = vmatprep.subr.mxu0 0.0
    %2864 = vmatpush2.msra.mxu0 0.0
    %2865 = vmatprep.subr.mxu0 0.0
    %2866 = vmatpush2.msra.mxu0 0.0
    %2867 = vmatprep.subr.mxu0 0.0
    %2868 = vmatpush2.msra.mxu0 0.0
    %2869 = vmatprep.subr.mxu0 0.0
    %2870 = vmatpush2.msra.mxu0 0.0
    %2871 = vmatprep.subr.mxu0 %v2819
    %2872 = vmatpush2.msra.mxu0 %v2818
    %2873 = vmatprep.subr.mxu0 %v2817
    %2874 = vmatpush2.msra.mxu0 %v2816
    %2875 = vmatprep.subr.mxu0 %v2815
    %2876 = vmatpush2.msra.mxu0 %v2814
    %2877 = vmatprep.subr.mxu0 %v2813
    %2878 = vmatpush2.msra.mxu0 %v2812
    %2879 = vmatprep.subr.mxu0 %v2811
    %2880 = vmatpush2.msra.mxu0 %v2810
    %2881 = vmatprep.subr.mxu0 %v2809
    %2882 = vmatpush2.msra.mxu0 %v2808
    %2883 = vmatprep.subr.mxu0 %v2807
    %2884 = vmatpush2.msra.mxu0 %v2806
    %2885 = vmatprep.subr.mxu0 %v2805
    %2886 = vmatpush2.msra.mxu0 %v2804
    %2887 = vmatprep.mubr.f32.mxu0 %v2821
    %2888 = vmatmul.mubr.f32.gmra.mxu0 %v2423
    %v2889 = vpop.f32.mrf.mxu0
    %v2890 = vadd.f32 0.0, %v2889
    %v2891 = vpop.f32.mrf.mxu0
    %v2892 = vadd.f32 0.0, %v2891
    %2893 = vdwg.mxu0
    %v2894 = vpack.c.bf16 %v2890, %v1792
    %v2895 = vpack.c.bf16 %v2892, %v1794
    %v2896 = vld [vmem:[#allocation6] sm:$0xff]
    %v2897 = vld [vmem:[#allocation6 + $0x8] sm:$0xff]
    %v2898 = vld [vmem:[#allocation6 + $0x10] sm:$0xff]
    %v2899 = vld [vmem:[#allocation6 + $0x18] sm:$0xff]
    %v2900 = vld [vmem:[#allocation6 + $0x20] sm:$0xff]
    %v2901 = vld [vmem:[#allocation6 + $0x28] sm:$0xff]
    %v2902 = vld [vmem:[#allocation6 + $0x30] sm:$0xff]
    %v2903 = vld [vmem:[#allocation6 + $0x38] sm:$0xff]
    %v2904 = vld [vmem:[#allocation6 + $0x40] sm:$0xff]
    %v2905 = vld [vmem:[#allocation6 + $0x48] sm:$0xff]
    %v2906 = vld [vmem:[#allocation6 + $0x50] sm:$0xff]
    %v2907 = vld [vmem:[#allocation6 + $0x58] sm:$0xff]
    %v2908 = vld [vmem:[#allocation6 + $0x60] sm:$0xff]
    %v2909 = vld [vmem:[#allocation6 + $0x68] sm:$0xff]
    %v2910 = vld [vmem:[#allocation6 + $0x70] sm:$0xff]
    %v2911 = vld [vmem:[#allocation6 + $0x78] sm:$0xff]
    %v2912 = vld [vmem:[#allocation6 + $0x80] sm:$0xff]
    %v2913 = vld [vmem:[#allocation6 + $0x88] sm:$0xff]
    %v2914 = vld [vmem:[#allocation6 + $0x90] sm:$0xff]
    %v2915 = vld [vmem:[#allocation6 + $0x98] sm:$0xff]
    %v2916 = vld [vmem:[#allocation6 + $0xa0] sm:$0xff]
    %v2917 = vld [vmem:[#allocation6 + $0xa8] sm:$0xff]
    %v2918 = vld [vmem:[#allocation6 + $0xb0] sm:$0xff]
    %v2919 = vld [vmem:[#allocation6 + $0xb8] sm:$0xff]
    %v2920 = vld [vmem:[#allocation7] sm:$0x3]
    %v2922 = vlaneseq
    %v2923 = vshrl.u32 %v2922, 7
    %v2924 = vsub.s32 0, %v2923
    %v2925 = vrot.slane %v2920, %v2924
    %v2926 = vlaneseq
    %v2927 = vshrl.u32 %v2926, 7
    %v2928 = vsub.s32 1, %v2927
    %v2929 = vrot.slane %v2920, %v2928
    %v2956 = vunpack.c.l.b16 %v2896
    %v2957 = vunpack.c.h.b16 %v2896
    %v2958 = vunpack.c.l.b16 %v2897
    %v2959 = vunpack.c.h.b16 %v2897
    %v2960 = vunpack.c.l.b16 %v2898
    %v2961 = vunpack.c.h.b16 %v2898
    %v2962 = vunpack.c.l.b16 %v2899
    %v2963 = vunpack.c.h.b16 %v2899
    %v2964 = vunpack.c.l.b16 %v2900
    %v2965 = vunpack.c.h.b16 %v2900
    %v2966 = vunpack.c.l.b16 %v2901
    %v2967 = vunpack.c.h.b16 %v2901
    %v2968 = vunpack.c.l.b16 %v2902
    %v2969 = vunpack.c.h.b16 %v2902
    %v2970 = vunpack.c.l.b16 %v2903
    %v2971 = vunpack.c.h.b16 %v2903
    %v2972 = vunpack.c.l.b16 %v2904
    %v2973 = vunpack.c.h.b16 %v2904
    %v2974 = vunpack.c.l.b16 %v2905
    %v2975 = vunpack.c.h.b16 %v2905
    %v2976 = vunpack.c.l.b16 %v2906
    %v2977 = vunpack.c.h.b16 %v2906
    %v2978 = vunpack.c.l.b16 %v2907
    %v2979 = vunpack.c.h.b16 %v2907
    %v2980 = vunpack.c.l.b16 %v2908
    %v2981 = vunpack.c.h.b16 %v2908
    %v2982 = vunpack.c.l.b16 %v2909
    %v2983 = vunpack.c.h.b16 %v2909
    %v2984 = vunpack.c.l.b16 %v2910
    %v2985 = vunpack.c.h.b16 %v2910
    %v2986 = vunpack.c.l.b16 %v2911
    %v2987 = vunpack.c.h.b16 %v2911
    %v2988 = vunpack.c.l.b16 %v2912
    %v2989 = vunpack.c.h.b16 %v2912
    %v2990 = vunpack.c.l.b16 %v2913
    %v2991 = vunpack.c.h.b16 %v2913
    %v2992 = vunpack.c.l.b16 %v2914
    %v2993 = vunpack.c.h.b16 %v2914
    %v2994 = vunpack.c.l.b16 %v2915
    %v2995 = vunpack.c.h.b16 %v2915
    %v2996 = vunpack.c.l.b16 %v2916
    %v2997 = vunpack.c.h.b16 %v2916
    %v2998 = vunpack.c.l.b16 %v2917
    %v2999 = vunpack.c.h.b16 %v2917
    %v3000 = vunpack.c.l.b16 %v2918
    %v3001 = vunpack.c.h.b16 %v2918
    %v3002 = vunpack.c.l.b16 %v2919
    %v3003 = vunpack.c.h.b16 %v2919
    %v3004 = vpack.c.b16 %v2958, %v2956
    %v3005 = vpack.c.b16 %v2959, %v2957
    %v3006 = vpack.c.b16 %v2962, %v2960
    %v3007 = vpack.c.b16 %v2963, %v2961
    %v3008 = vpack.c.b16 %v2966, %v2964
    %v3009 = vpack.c.b16 %v2967, %v2965
    %v3010 = vpack.c.b16 %v2970, %v2968
    %v3011 = vpack.c.b16 %v2971, %v2969
    %v3012 = vpack.c.b16 %v2974, %v2972
    %v3013 = vpack.c.b16 %v2975, %v2973
    %v3014 = vpack.c.b16 %v2978, %v2976
    %v3015 = vpack.c.b16 %v2979, %v2977
    %v3016 = vpack.c.b16 %v2982, %v2980
    %v3017 = vpack.c.b16 %v2983, %v2981
    %v3018 = vpack.c.b16 %v2986, %v2984
    %v3019 = vpack.c.b16 %v2987, %v2985
    %v3020 = vpack.c.b16 %v2990, %v2988
    %v3021 = vpack.c.b16 %v2991, %v2989
    %v3022 = vpack.c.b16 %v2994, %v2992
    %v3023 = vpack.c.b16 %v2995, %v2993
    %v3024 = vpack.c.b16 %v2998, %v2996
    %v3025 = vpack.c.b16 %v2999, %v2997
    %v3026 = vpack.c.b16 %v3002, %v3000
    %v3027 = vpack.c.b16 %v3003, %v3001
    %v3053 = vsel %vm563, %v2895, 0
    %3055 = vmatprep.subr.bf16.mxu0 %v3019
    %3056 = vmatpush1.bf16.msra.mxu0 %v3018
    %3057 = vmatprep.subr.bf16.mxu0 %v3017
    %3058 = vmatpush1.bf16.msra.mxu0 %v3016
    %3059 = vmatprep.subr.bf16.mxu0 %v3015
    %3060 = vmatpush1.bf16.msra.mxu0 %v3014
    %3061 = vmatprep.subr.bf16.mxu0 %v3013
    %3062 = vmatpush1.bf16.msra.mxu0 %v3012
    %3063 = vmatprep.subr.bf16.mxu0 %v3011
    %3064 = vmatpush1.bf16.msra.mxu0 %v3010
    %3065 = vmatprep.subr.bf16.mxu0 %v3009
    %3066 = vmatpush1.bf16.msra.mxu0 %v3008
    %3067 = vmatprep.subr.bf16.mxu0 %v3007
    %3068 = vmatpush1.bf16.msra.mxu0 %v3006
    %3069 = vmatprep.subr.bf16.mxu0 %v3005
    %3070 = vmatpush1.bf16.msra.mxu0 %v3004
    %3071 = vmatprep.subr.bf16.mxu0 0
    %3072 = vmatpush2.bf16.msra.mxu0 0
    %3073 = vmatprep.subr.bf16.mxu0 0
    %3074 = vmatpush2.bf16.msra.mxu0 0
    %3075 = vmatprep.subr.bf16.mxu0 0
    %3076 = vmatpush2.bf16.msra.mxu0 0
    %3077 = vmatprep.subr.bf16.mxu0 0
    %3078 = vmatpush2.bf16.msra.mxu0 0
    %3079 = vmatprep.subr.bf16.mxu0 %v3027
    %3080 = vmatpush2.bf16.msra.mxu0 %v3026
    %3081 = vmatprep.subr.bf16.mxu0 %v3025
    %3082 = vmatpush2.bf16.msra.mxu0 %v3024
    %3083 = vmatprep.subr.bf16.mxu0 %v3023
    %3084 = vmatpush2.bf16.msra.mxu0 %v3022
    %3085 = vmatprep.subr.bf16.mxu0 %v3021
    %3086 = vmatpush2.bf16.msra.mxu0 %v3020
    %3087 = vmatprep.mubr.bf16.mxu0 %v3053
    %3088 = vmatmul.mubr.bf16.gmra.mxu0 %v2894
    %v3089 = vpop.f32.mrf.mxu0
    %v3090 = vadd.f32 %v2925, %v3089
    %v3091 = vpop.f32.mrf.mxu0
    %v3092 = vadd.f32 %v2929, %v3091
    %v3093 = vpop.f32.mrf.mxu0
    %v3094 = vadd.f32 %v2925, %v3093
    %v3095 = vpop.f32.mrf.mxu0
    %v3096 = vadd.f32 %v2929, %v3095
    %3097 = vdwg.mxu0
    %v3098 = vpack.c.bf16 %v3094, %v3090
    %v3099 = vpack.c.bf16 %v3096, %v3092
    %s3100 = scalar_lea.vmem [#allocation4], 480
    %v3101 = vld [vmem:[%s3100] sm:$0xff]
    %v3102 = vld [vmem:[%s3100 + $0x8] sm:$0xff]
    %v3103 = vld [vmem:[%s3100 + $0x10] sm:$0xf]
    %v3104 = vld [vmem:[%s3100 + $0x14] sm:$0xff]
    %v3105 = vld [vmem:[%s3100 + $0x1c] sm:$0xff]
    %v3106 = vld [vmem:[%s3100 + $0x24] sm:$0xf]
    %v3107 = vld [vmem:[%s3100 + $0x28] sm:$0xff]
    %v3108 = vld [vmem:[%s3100 + $0x30] sm:$0xff]
    %v3109 = vld [vmem:[%s3100 + $0x38] sm:$0xf]
    %v3110 = vld [vmem:[%s3100 + $0x3c] sm:$0xff]
    %v3111 = vld [vmem:[%s3100 + $0x44] sm:$0xff]
    %v3112 = vld [vmem:[%s3100 + $0x4c] sm:$0xf]
    %v3113 = vld [vmem:[%s3100 + $0x50] sm:$0xff]
    %v3114 = vld [vmem:[%s3100 + $0x58] sm:$0xff]
    %v3115 = vld [vmem:[%s3100 + $0x60] sm:$0xf]
    %v3116 = vld [vmem:[%s3100 + $0x64] sm:$0xff]
    %v3117 = vld [vmem:[%s3100 + $0x6c] sm:$0xff]
    %v3118 = vld [vmem:[%s3100 + $0x74] sm:$0xf]
    %v3119 = vld [vmem:[%s3100 + $0x78] sm:$0xff]
    %v3120 = vld [vmem:[%s3100 + $0x80] sm:$0xff]
    %v3121 = vld [vmem:[%s3100 + $0x88] sm:$0xf]
    %v3122 = vld [vmem:[%s3100 + $0x8c] sm:$0xff]
    %v3123 = vld [vmem:[%s3100 + $0x94] sm:$0xff]
    %v3124 = vld [vmem:[%s3100 + $0x9c] sm:$0xf]
    %v3125 = vld [vmem:[%s3100 + $0xa0] sm:$0xff]
    %v3126 = vld [vmem:[%s3100 + $0xa8] sm:$0xff]
    %v3127 = vld [vmem:[%s3100 + $0xb0] sm:$0xf]
    %v3128 = vld [vmem:[%s3100 + $0xb4] sm:$0xff]
    %v3129 = vld [vmem:[%s3100 + $0xbc] sm:$0xff]
    %v3130 = vld [vmem:[%s3100 + $0xc4] sm:$0xf]
    %v3131 = vld [vmem:[%s3100 + $0xc8] sm:$0xff]
    %v3132 = vld [vmem:[%s3100 + $0xd0] sm:$0xff]
    %v3133 = vld [vmem:[%s3100 + $0xd8] sm:$0xf]
    %v3134 = vld [vmem:[%s3100 + $0xdc] sm:$0xff]
    %v3135 = vld [vmem:[%s3100 + $0xe4] sm:$0xff]
    %v3136 = vld [vmem:[%s3100 + $0xec] sm:$0xf]
    %v3137 = vld [vmem:[%s3100 + $0xf0] sm:$0xff]
    %v3138 = vld [vmem:[%s3100 + $0xf8] sm:$0xff]
    %v3139 = vld [vmem:[%s3100 + $0x100] sm:$0xf]
    %v3140 = vld [vmem:[%s3100 + $0x104] sm:$0xff]
    %v3141 = vld [vmem:[%s3100 + $0x10c] sm:$0xff]
    %v3142 = vld [vmem:[%s3100 + $0x114] sm:$0xf]
    %v3143 = vld [vmem:[%s3100 + $0x118] sm:$0xff]
    %v3144 = vld [vmem:[%s3100 + $0x120] sm:$0xff]
    %v3145 = vld [vmem:[%s3100 + $0x128] sm:$0xf]
    %v3146 = vld [vmem:[%s3100 + $0x12c] sm:$0xff]
    %v3147 = vld [vmem:[%s3100 + $0x134] sm:$0xff]
    %v3148 = vld [vmem:[%s3100 + $0x13c] sm:$0xf]
    %v3149 = vld [vmem:[%s3100 + $0x140] sm:$0xff]
    %v3150 = vld [vmem:[%s3100 + $0x148] sm:$0xff]
    %v3151 = vld [vmem:[%s3100 + $0x150] sm:$0xf]
    %v3152 = vld [vmem:[%s3100 + $0x154] sm:$0xff]
    %v3153 = vld [vmem:[%s3100 + $0x15c] sm:$0xff]
    %v3154 = vld [vmem:[%s3100 + $0x164] sm:$0xf]
    %v3155 = vld [vmem:[%s3100 + $0x168] sm:$0xff]
    %v3156 = vld [vmem:[%s3100 + $0x170] sm:$0xff]
    %v3157 = vld [vmem:[%s3100 + $0x178] sm:$0xf]
    %v3158 = vld [vmem:[%s3100 + $0x17c] sm:$0xff]
    %v3159 = vld [vmem:[%s3100 + $0x184] sm:$0xff]
    %v3160 = vld [vmem:[%s3100 + $0x18c] sm:$0xf]
    %v3161 = vld [vmem:[%s3100 + $0x190] sm:$0xff]
    %v3162 = vld [vmem:[%s3100 + $0x198] sm:$0xff]
    %v3163 = vld [vmem:[%s3100 + $0x1a0] sm:$0xf]
    %v3164 = vld [vmem:[%s3100 + $0x1a4] sm:$0xff]
    %v3165 = vld [vmem:[%s3100 + $0x1ac] sm:$0xff]
    %v3166 = vld [vmem:[%s3100 + $0x1b4] sm:$0xf]
    %v3167 = vld [vmem:[%s3100 + $0x1b8] sm:$0xff]
    %v3168 = vld [vmem:[%s3100 + $0x1c0] sm:$0xff]
    %v3169 = vld [vmem:[%s3100 + $0x1c8] sm:$0xf]
    %v3170 = vld [vmem:[%s3100 + $0x1cc] sm:$0xff]
    %v3171 = vld [vmem:[%s3100 + $0x1d4] sm:$0xff]
    %v3172 = vld [vmem:[%s3100 + $0x1dc] sm:$0xf]
    %v3245 = vunpack.c.l.b16 %v3101
    %v3246 = vunpack.c.h.b16 %v3101
    %v3247 = vunpack.c.l.b16 %v3102
    %v3248 = vunpack.c.h.b16 %v3102
    %v3249 = vunpack.c.l.b16 %v3103
    %v3250 = vunpack.c.l.b16 %v3104
    %v3251 = vunpack.c.h.b16 %v3104
    %v3252 = vunpack.c.l.b16 %v3105
    %v3253 = vunpack.c.h.b16 %v3105
    %v3254 = vunpack.c.l.b16 %v3106
    %v3255 = vunpack.c.l.b16 %v3107
    %v3256 = vunpack.c.h.b16 %v3107
    %v3257 = vunpack.c.l.b16 %v3108
    %v3258 = vunpack.c.h.b16 %v3108
    %v3259 = vunpack.c.l.b16 %v3109
    %v3260 = vunpack.c.l.b16 %v3110
    %v3261 = vunpack.c.h.b16 %v3110
    %v3262 = vunpack.c.l.b16 %v3111
    %v3263 = vunpack.c.h.b16 %v3111
    %v3264 = vunpack.c.l.b16 %v3112
    %v3265 = vunpack.c.l.b16 %v3113
    %v3266 = vunpack.c.h.b16 %v3113
    %v3267 = vunpack.c.l.b16 %v3114
    %v3268 = vunpack.c.h.b16 %v3114
    %v3269 = vunpack.c.l.b16 %v3115
    %v3270 = vunpack.c.l.b16 %v3116
    %v3271 = vunpack.c.h.b16 %v3116
    %v3272 = vunpack.c.l.b16 %v3117
    %v3273 = vunpack.c.h.b16 %v3117
    %v3274 = vunpack.c.l.b16 %v3118
    %v3275 = vunpack.c.l.b16 %v3119
    %v3276 = vunpack.c.h.b16 %v3119
    %v3277 = vunpack.c.l.b16 %v3120
    %v3278 = vunpack.c.h.b16 %v3120
    %v3279 = vunpack.c.l.b16 %v3121
    %v3280 = vunpack.c.l.b16 %v3122
    %v3281 = vunpack.c.h.b16 %v3122
    %v3282 = vunpack.c.l.b16 %v3123
    %v3283 = vunpack.c.h.b16 %v3123
    %v3284 = vunpack.c.l.b16 %v3124
    %v3285 = vunpack.c.l.b16 %v3125
    %v3286 = vunpack.c.h.b16 %v3125
    %v3287 = vunpack.c.l.b16 %v3126
    %v3288 = vunpack.c.h.b16 %v3126
    %v3289 = vunpack.c.l.b16 %v3127
    %v3290 = vunpack.c.l.b16 %v3128
    %v3291 = vunpack.c.h.b16 %v3128
    %v3292 = vunpack.c.l.b16 %v3129
    %v3293 = vunpack.c.h.b16 %v3129
    %v3294 = vunpack.c.l.b16 %v3130
    %v3295 = vunpack.c.l.b16 %v3131
    %v3296 = vunpack.c.h.b16 %v3131
    %v3297 = vunpack.c.l.b16 %v3132
    %v3298 = vunpack.c.h.b16 %v3132
    %v3299 = vunpack.c.l.b16 %v3133
    %v3300 = vunpack.c.l.b16 %v3134
    %v3301 = vunpack.c.h.b16 %v3134
    %v3302 = vunpack.c.l.b16 %v3135
    %v3303 = vunpack.c.h.b16 %v3135
    %v3304 = vunpack.c.l.b16 %v3136
    %v3305 = vunpack.c.l.b16 %v3137
    %v3306 = vunpack.c.h.b16 %v3137
    %v3307 = vunpack.c.l.b16 %v3138
    %v3308 = vunpack.c.h.b16 %v3138
    %v3309 = vunpack.c.l.b16 %v3139
    %v3310 = vunpack.c.l.b16 %v3140
    %v3311 = vunpack.c.h.b16 %v3140
    %v3312 = vunpack.c.l.b16 %v3141
    %v3313 = vunpack.c.h.b16 %v3141
    %v3314 = vunpack.c.l.b16 %v3142
    %v3315 = vunpack.c.l.b16 %v3143
    %v3316 = vunpack.c.h.b16 %v3143
    %v3317 = vunpack.c.l.b16 %v3144
    %v3318 = vunpack.c.h.b16 %v3144
    %v3319 = vunpack.c.l.b16 %v3145
    %v3320 = vunpack.c.l.b16 %v3146
    %v3321 = vunpack.c.h.b16 %v3146
    %v3322 = vunpack.c.l.b16 %v3147
    %v3323 = vunpack.c.h.b16 %v3147
    %v3324 = vunpack.c.l.b16 %v3148
    %v3325 = vunpack.c.l.b16 %v3149
    %v3326 = vunpack.c.h.b16 %v3149
    %v3327 = vunpack.c.l.b16 %v3150
    %v3328 = vunpack.c.h.b16 %v3150
    %v3329 = vunpack.c.l.b16 %v3151
    %v3330 = vunpack.c.l.b16 %v3152
    %v3331 = vunpack.c.h.b16 %v3152
    %v3332 = vunpack.c.l.b16 %v3153
    %v3333 = vunpack.c.h.b16 %v3153
    %v3334 = vunpack.c.l.b16 %v3154
    %v3335 = vunpack.c.l.b16 %v3155
    %v3336 = vunpack.c.h.b16 %v3155
    %v3337 = vunpack.c.l.b16 %v3156
    %v3338 = vunpack.c.h.b16 %v3156
    %v3339 = vunpack.c.l.b16 %v3157
    %v3340 = vunpack.c.l.b16 %v3158
    %v3341 = vunpack.c.h.b16 %v3158
    %v3342 = vunpack.c.l.b16 %v3159
    %v3343 = vunpack.c.h.b16 %v3159
    %v3344 = vunpack.c.l.b16 %v3160
    %v3345 = vunpack.c.l.b16 %v3161
    %v3346 = vunpack.c.h.b16 %v3161
    %v3347 = vunpack.c.l.b16 %v3162
    %v3348 = vunpack.c.h.b16 %v3162
    %v3349 = vunpack.c.l.b16 %v3163
    %v3350 = vunpack.c.l.b16 %v3164
    %v3351 = vunpack.c.h.b16 %v3164
    %v3352 = vunpack.c.l.b16 %v3165
    %v3353 = vunpack.c.h.b16 %v3165
    %v3354 = vunpack.c.l.b16 %v3166
    %v3355 = vunpack.c.l.b16 %v3167
    %v3356 = vunpack.c.h.b16 %v3167
    %v3357 = vunpack.c.l.b16 %v3168
    %v3358 = vunpack.c.h.b16 %v3168
    %v3359 = vunpack.c.l.b16 %v3169
    %v3360 = vunpack.c.l.b16 %v3170
    %v3361 = vunpack.c.h.b16 %v3170
    %v3362 = vunpack.c.l.b16 %v3171
    %v3363 = vunpack.c.h.b16 %v3171
    %v3364 = vunpack.c.l.b16 %v3172
    %v3365 = vpack.c.b16 %v3250, %v3245
    %v3366 = vpack.c.b16 %v3251, %v3246
    %v3367 = vpack.c.b16 %v3252, %v3247
    %v3368 = vpack.c.b16 %v3253, %v3248
    %v3369 = vpack.c.b16 %v3254, %v3249
    %v3370 = vpack.c.b16 %v3260, %v3255
    %v3371 = vpack.c.b16 %v3261, %v3256
    %v3372 = vpack.c.b16 %v3262, %v3257
    %v3373 = vpack.c.b16 %v3263, %v3258
    %v3374 = vpack.c.b16 %v3264, %v3259
    %v3375 = vpack.c.b16 %v3270, %v3265
    %v3376 = vpack.c.b16 %v3271, %v3266
    %v3377 = vpack.c.b16 %v3272, %v3267
    %v3378 = vpack.c.b16 %v3273, %v3268
    %v3379 = vpack.c.b16 %v3274, %v3269
    %v3380 = vpack.c.b16 %v3280, %v3275
    %v3381 = vpack.c.b16 %v3281, %v3276
    %v3382 = vpack.c.b16 %v3282, %v3277
    %v3383 = vpack.c.b16 %v3283, %v3278
    %v3384 = vpack.c.b16 %v3284, %v3279
    %v3385 = vpack.c.b16 %v3290, %v3285
    %v3386 = vpack.c.b16 %v3291, %v3286
    %v3387 = vpack.c.b16 %v3292, %v3287
    %v3388 = vpack.c.b16 %v3293, %v3288
    %v3389 = vpack.c.b16 %v3294, %v3289
    %v3390 = vpack.c.b16 %v3300, %v3295
    %v3391 = vpack.c.b16 %v3301, %v3296
    %v3392 = vpack.c.b16 %v3302, %v3297
    %v3393 = vpack.c.b16 %v3303, %v3298
    %v3394 = vpack.c.b16 %v3304, %v3299
    %v3395 = vpack.c.b16 %v3310, %v3305
    %v3396 = vpack.c.b16 %v3311, %v3306
    %v3397 = vpack.c.b16 %v3312, %v3307
    %v3398 = vpack.c.b16 %v3313, %v3308
    %v3399 = vpack.c.b16 %v3314, %v3309
    %v3400 = vpack.c.b16 %v3320, %v3315
    %v3401 = vpack.c.b16 %v3321, %v3316
    %v3402 = vpack.c.b16 %v3322, %v3317
    %v3403 = vpack.c.b16 %v3323, %v3318
    %v3404 = vpack.c.b16 %v3324, %v3319
    %v3405 = vpack.c.b16 %v3330, %v3325
    %v3406 = vpack.c.b16 %v3331, %v3326
    %v3407 = vpack.c.b16 %v3332, %v3327
    %v3408 = vpack.c.b16 %v3333, %v3328
    %v3409 = vpack.c.b16 %v3334, %v3329
    %v3410 = vpack.c.b16 %v3340, %v3335
    %v3411 = vpack.c.b16 %v3341, %v3336
    %v3412 = vpack.c.b16 %v3342, %v3337
    %v3413 = vpack.c.b16 %v3343, %v3338
    %v3414 = vpack.c.b16 %v3344, %v3339
    %v3415 = vpack.c.b16 %v3350, %v3345
    %v3416 = vpack.c.b16 %v3351, %v3346
    %v3417 = vpack.c.b16 %v3352, %v3347
    %v3418 = vpack.c.b16 %v3353, %v3348
    %v3419 = vpack.c.b16 %v3354, %v3349
    %v3420 = vpack.c.b16 %v3360, %v3355
    %v3421 = vpack.c.b16 %v3361, %v3356
    %v3422 = vpack.c.b16 %v3362, %v3357
    %v3423 = vpack.c.b16 %v3363, %v3358
    %v3424 = vpack.c.b16 %v3364, %v3359
    %v3486 = vsel %vm563, %v3099, 0
    %3488 = vmatprep.subr.bf16.mxu0 %v3401
    %3489 = vmatpush1.bf16.msra.mxu0 %v3400
    %3490 = vmatprep.subr.bf16.mxu0 %v3396
    %3491 = vmatpush1.bf16.msra.mxu0 %v3395
    %3492 = vmatprep.subr.bf16.mxu0 %v3391
    %3493 = vmatpush1.bf16.msra.mxu0 %v3390
    %3494 = vmatprep.subr.bf16.mxu0 %v3386
    %3495 = vmatpush1.bf16.msra.mxu0 %v3385
    %3496 = vmatprep.subr.bf16.mxu0 %v3381
    %3497 = vmatpush1.bf16.msra.mxu0 %v3380
    %3498 = vmatprep.subr.bf16.mxu0 %v3376
    %3499 = vmatpush1.bf16.msra.mxu0 %v3375
    %3500 = vmatprep.subr.bf16.mxu0 %v3371
    %3501 = vmatpush1.bf16.msra.mxu0 %v3370
    %3502 = vmatprep.subr.bf16.mxu0 %v3366
    %3503 = vmatpush1.bf16.msra.mxu0 %v3365
    %3504 = vmatprep.subr.bf16.mxu0 0
    %3505 = vmatpush2.bf16.msra.mxu0 0
    %3506 = vmatprep.subr.bf16.mxu0 0
    %3507 = vmatpush2.bf16.msra.mxu0 0
    %3508 = vmatprep.subr.bf16.mxu0 0
    %3509 = vmatpush2.bf16.msra.mxu0 0
    %3510 = vmatprep.subr.bf16.mxu0 0
    %3511 = vmatpush2.bf16.msra.mxu0 0
    %3512 = vmatprep.subr.bf16.mxu0 %v3421
    %3513 = vmatpush2.bf16.msra.mxu0 %v3420
    %3514 = vmatprep.subr.bf16.mxu0 %v3416
    %3515 = vmatpush2.bf16.msra.mxu0 %v3415
    %3516 = vmatprep.subr.bf16.mxu0 %v3411
    %3517 = vmatpush2.bf16.msra.mxu0 %v3410
    %3518 = vmatprep.subr.bf16.mxu0 %v3406
    %3519 = vmatpush2.bf16.msra.mxu0 %v3405
    %3520 = vmatprep.mubr.bf16.mxu0 %v3486
    %3521 = vmatmul.mubr.bf16.gmra.mxu0 %v3098
    %v3522 = vpop.f32.mrf.mxu0
    %v3523 = vadd.f32 0.0, %v3522
    %v3524 = vpop.f32.mrf.mxu0
    %v3525 = vadd.f32 0.0, %v3524
    %v3526 = vpop.f32.mrf.mxu0
    %v3527 = vadd.f32 0.0, %v3526
    %v3528 = vpop.f32.mrf.mxu0
    %v3529 = vadd.f32 0.0, %v3528
    %3530 = vdwg.mxu0
    %3531 = vmatprep.subr.bf16.mxu0 %v3403
    %3532 = vmatpush1.bf16.msra.mxu0 %v3402
    %3533 = vmatprep.subr.bf16.mxu0 %v3398
    %3534 = vmatpush1.bf16.msra.mxu0 %v3397
    %3535 = vmatprep.subr.bf16.mxu0 %v3393
    %3536 = vmatpush1.bf16.msra.mxu0 %v3392
    %3537 = vmatprep.subr.bf16.mxu0 %v3388
    %3538 = vmatpush1.bf16.msra.mxu0 %v3387
    %3539 = vmatprep.subr.bf16.mxu0 %v3383
    %3540 = vmatpush1.bf16.msra.mxu0 %v3382
    %3541 = vmatprep.subr.bf16.mxu0 %v3378
    %3542 = vmatpush1.bf16.msra.mxu0 %v3377
    %3543 = vmatprep.subr.bf16.mxu0 %v3373
    %3544 = vmatpush1.bf16.msra.mxu0 %v3372
    %3545 = vmatprep.subr.bf16.mxu0 %v3368
    %3546 = vmatpush1.bf16.msra.mxu0 %v3367
    %3547 = vmatprep.subr.bf16.mxu0 0
    %3548 = vmatpush2.bf16.msra.mxu0 0
    %3549 = vmatprep.subr.bf16.mxu0 0
    %3550 = vmatpush2.bf16.msra.mxu0 0
    %3551 = vmatprep.subr.bf16.mxu0 0
    %3552 = vmatpush2.bf16.msra.mxu0 0
    %3553 = vmatprep.subr.bf16.mxu0 0
    %3554 = vmatpush2.bf16.msra.mxu0 0
    %3555 = vmatprep.subr.bf16.mxu0 %v3423
    %3556 = vmatpush2.bf16.msra.mxu0 %v3422
    %3557 = vmatprep.subr.bf16.mxu0 %v3418
    %3558 = vmatpush2.bf16.msra.mxu0 %v3417
    %3559 = vmatprep.subr.bf16.mxu0 %v3413
    %3560 = vmatpush2.bf16.msra.mxu0 %v3412
    %3561 = vmatprep.subr.bf16.mxu0 %v3408
    %3562 = vmatpush2.bf16.msra.mxu0 %v3407
    %3563 = vmatprep.mubr.bf16.mxu0 %v3486
    %3564 = vmatmul.mubr.bf16.gmra.mxu0 %v3098
    %v3565 = vpop.f32.mrf.mxu0
    %v3566 = vadd.f32 0.0, %v3565
    %v3567 = vpop.f32.mrf.mxu0
    %v3568 = vadd.f32 0.0, %v3567
    %v3569 = vpop.f32.mrf.mxu0
    %v3570 = vadd.f32 0.0, %v3569
    %v3571 = vpop.f32.mrf.mxu0
    %v3572 = vadd.f32 0.0, %v3571
    %3573 = vdwg.mxu0
    %3574 = vmatprep.subr.bf16.mxu0 0
    %3575 = vmatpush1.bf16.msra.mxu0 %v3404
    %3576 = vmatprep.subr.bf16.mxu0 0
    %3577 = vmatpush1.bf16.msra.mxu0 %v3399
    %3578 = vmatprep.subr.bf16.mxu0 0
    %3579 = vmatpush1.bf16.msra.mxu0 %v3394
    %3580 = vmatprep.subr.bf16.mxu0 0
    %3581 = vmatpush1.bf16.msra.mxu0 %v3389
    %3582 = vmatprep.subr.bf16.mxu0 0
    %3583 = vmatpush1.bf16.msra.mxu0 %v3384
    %3584 = vmatprep.subr.bf16.mxu0 0
    %3585 = vmatpush1.bf16.msra.mxu0 %v3379
    %3586 = vmatprep.subr.bf16.mxu0 0
    %3587 = vmatpush1.bf16.msra.mxu0 %v3374
    %3588 = vmatprep.subr.bf16.mxu0 0
    %3589 = vmatpush1.bf16.msra.mxu0 %v3369
    %3590 = vmatprep.subr.bf16.mxu0 0
    %3591 = vmatpush2.bf16.msra.mxu0 0
    %3592 = vmatprep.subr.bf16.mxu0 0
    %3593 = vmatpush2.bf16.msra.mxu0 0
    %3594 = vmatprep.subr.bf16.mxu0 0
    %3595 = vmatpush2.bf16.msra.mxu0 0
    %3596 = vmatprep.subr.bf16.mxu0 0
    %3597 = vmatpush2.bf16.msra.mxu0 0
    %3598 = vmatprep.subr.bf16.mxu0 0
    %3599 = vmatpush2.bf16.msra.mxu0 %v3424
    %3600 = vmatprep.subr.bf16.mxu0 0
    %3601 = vmatpush2.bf16.msra.mxu0 %v3419
    %3602 = vmatprep.subr.bf16.mxu0 0
    %3603 = vmatpush2.bf16.msra.mxu0 %v3414
    %3604 = vmatprep.subr.bf16.mxu0 0
    %3605 = vmatpush2.bf16.msra.mxu0 %v3409
    %3606 = vmatprep.mubr.bf16.mxu0 %v3486
    %3607 = vmatmul.mubr.bf16.gmra.mxu0 %v3098
    %v3608 = vpop.f32.mrf.mxu0
    %v3609 = vadd.f32 0.0, %v3608
    %v3610 = vpop.f32.mrf.mxu0
    %v3611 = vpop.f32.mrf.mxu0
    %v3612 = vadd.f32 0.0, %v3611
    %v3613 = vpop.f32.mrf.mxu0
    %3614 = vdwg.mxu0
    %3615 = vxpose.xlu0.b32.start [1/16] %v3523, 128
    %3616 = vxpose.xlu0.b32.cont [2/16] 0.0, 128
    %3617 = vxpose.xlu0.b32.cont [3/16] 0.0, 128
    %3618 = vxpose.xlu0.b32.cont [4/16] 0.0, 128
    %3619 = vxpose.xlu0.b32.cont [5/16] 0.0, 128
    %3620 = vxpose.xlu0.b32.cont [6/16] 0.0, 128
    %3621 = vxpose.xlu0.b32.cont [7/16] 0.0, 128
    %3622 = vxpose.xlu0.b32.cont [8/16] 0.0, 128
    %3623 = vxpose.xlu0.b32.cont [9/16] 0.0, 128
    %3624 = vxpose.xlu0.b32.cont [10/16] 0.0, 128
    %3625 = vxpose.xlu0.b32.cont [11/16] 0.0, 128
    %3626 = vxpose.xlu0.b32.cont [12/16] 0.0, 128
    %3627 = vxpose.xlu0.b32.cont [13/16] 0.0, 128
    %3628 = vxpose.xlu0.b32.cont [14/16] 0.0, 128
    %3629 = vxpose.xlu0.b32.cont [15/16] 0.0, 128
    %3630 = vxpose.xlu0.b32.end [16/16] 0.0, 128
    %v3631 = vpop.trf.xlu0
    %v3632 = vpop.trf.xlu0
    %v3633 = vpop.trf.xlu0
    %v3634 = vpop.trf.xlu0
    %v3635 = vpop.trf.xlu0
    %v3636 = vpop.trf.xlu0
    %v3637 = vpop.trf.xlu0
    %v3638 = vpop.trf.xlu0
    %v3639 = vpop.trf.xlu0
    %v3640 = vpop.trf.xlu0
    %v3641 = vpop.trf.xlu0
    %v3642 = vpop.trf.xlu0
    %v3643 = vpop.trf.xlu0
    %v3644 = vpop.trf.xlu0
    %v3645 = vpop.trf.xlu0
    %v3646 = vpop.trf.xlu0
    %3647 = vxpose.xlu0.b32.start [1/16] %v3525, 128
    %3648 = vxpose.xlu0.b32.cont [2/16] 0.0, 128
    %3649 = vxpose.xlu0.b32.cont [3/16] 0.0, 128
    %3650 = vxpose.xlu0.b32.cont [4/16] 0.0, 128
    %3651 = vxpose.xlu0.b32.cont [5/16] 0.0, 128
    %3652 = vxpose.xlu0.b32.cont [6/16] 0.0, 128
    %3653 = vxpose.xlu0.b32.cont [7/16] 0.0, 128
    %3654 = vxpose.xlu0.b32.cont [8/16] 0.0, 128
    %3655 = vxpose.xlu0.b32.cont [9/16] 0.0, 128
    %3656 = vxpose.xlu0.b32.cont [10/16] 0.0, 128
    %3657 = vxpose.xlu0.b32.cont [11/16] 0.0, 128
    %3658 = vxpose.xlu0.b32.cont [12/16] 0.0, 128
    %3659 = vxpose.xlu0.b32.cont [13/16] 0.0, 128
    %3660 = vxpose.xlu0.b32.cont [14/16] 0.0, 128
    %3661 = vxpose.xlu0.b32.cont [15/16] 0.0, 128
    %3662 = vxpose.xlu0.b32.end [16/16] 0.0, 128
    %v3663 = vpop.trf.xlu0
    %v3664 = vpop.trf.xlu0
    %v3665 = vpop.trf.xlu0
    %v3666 = vpop.trf.xlu0
    %v3667 = vpop.trf.xlu0
    %v3668 = vpop.trf.xlu0
    %v3669 = vpop.trf.xlu0
    %v3670 = vpop.trf.xlu0
    %v3671 = vpop.trf.xlu0
    %v3672 = vpop.trf.xlu0
    %v3673 = vpop.trf.xlu0
    %v3674 = vpop.trf.xlu0
    %v3675 = vpop.trf.xlu0
    %v3676 = vpop.trf.xlu0
    %v3677 = vpop.trf.xlu0
    %v3678 = vpop.trf.xlu0
    %3681 = vrot.lane.b32.xlu0 %v3525, 64
    %v3682 = vpop.permute.xlu0 %3681
    %3683 = vrot.lane.b32.xlu0 %v3566, 64
    %v3684 = vpop.permute.xlu0 %3683
    %v3685 = vsel %vm563, %v3682, %v3684
    %v3689 = vsel %vm767, %v3631, 0
    %v3692 = vsel %vm767, %v3632, 0
    %v3695 = vsel %vm767, %v3633, 0
    %v3698 = vsel %vm767, %v3634, 0
    %v3701 = vsel %vm767, %v3635, 0
    %v3704 = vsel %vm767, %v3636, 0
    %v3707 = vsel %vm767, %v3637, 0
    %v3710 = vsel %vm767, %v3638, 0
    %v3713 = vsel %vm767, %v3639, 0
    %v3716 = vsel %vm767, %v3640, 0
    %v3719 = vsel %vm767, %v3641, 0
    %v3722 = vsel %vm767, %v3642, 0
    %v3725 = vsel %vm767, %v3643, 0
    %v3728 = vsel %vm767, %v3644, 0
    %v3731 = vsel %vm767, %v3645, 0
    %v3734 = vsel %vm767, %v3646, 0
    %v3737 = vsel %vm767, %v3663, 0
    %v3740 = vsel %vm767, %v3664, 0
    %v3743 = vsel %vm767, %v3665, 0
    %v3746 = vsel %vm767, %v3666, 0
    %v3749 = vsel %vm767, %v3667, 0
    %v3752 = vsel %vm767, %v3668, 0
    %v3755 = vsel %vm767, %v3669, 0
    %v3758 = vsel %vm767, %v3670, 0
    %3760 = vmatprep.subr.mxu0 0.0
    %3761 = vmatpush1.msra.mxu0 0.0
    %3762 = vmatprep.subr.mxu0 0.0
    %3763 = vmatpush1.msra.mxu0 0.0
    %3764 = vmatprep.subr.mxu0 0.0
    %3765 = vmatpush1.msra.mxu0 0.0
    %3766 = vmatprep.subr.mxu0 0.0
    %3767 = vmatpush1.msra.mxu0 0.0
    %3768 = vmatprep.subr.mxu0 0.0
    %3769 = vmatpush1.msra.mxu0 0.0
    %3770 = vmatprep.subr.mxu0 0.0
    %3771 = vmatpush1.msra.mxu0 0.0
    %3772 = vmatprep.subr.mxu0 0.0
    %3773 = vmatpush1.msra.mxu0 0.0
    %3774 = vmatprep.subr.mxu0 0.0
    %3775 = vmatpush1.msra.mxu0 0.0
    %3776 = vmatprep.subr.mxu0 0.0
    %3777 = vmatpush1.msra.mxu0 0.0
    %3778 = vmatprep.subr.mxu0 0.0
    %3779 = vmatpush1.msra.mxu0 0.0
    %3780 = vmatprep.subr.mxu0 0.0
    %3781 = vmatpush1.msra.mxu0 0.0
    %3782 = vmatprep.subr.mxu0 0.0
    %3783 = vmatpush1.msra.mxu0 0.0
    %3784 = vmatprep.subr.mxu0 0.0
    %3785 = vmatpush1.msra.mxu0 0.0
    %3786 = vmatprep.subr.mxu0 0.0
    %3787 = vmatpush1.msra.mxu0 0.0
    %3788 = vmatprep.subr.mxu0 0.0
    %3789 = vmatpush1.msra.mxu0 0.0
    %3790 = vmatprep.subr.mxu0 %v3684
    %3791 = vmatpush1.msra.mxu0 %v3685
    %3792 = vmatprep.subr.mxu0 0.0
    %3793 = vmatpush2.msra.mxu0 0.0
    %3794 = vmatprep.subr.mxu0 0.0
    %3795 = vmatpush2.msra.mxu0 0.0
    %3796 = vmatprep.subr.mxu0 0.0
    %3797 = vmatpush2.msra.mxu0 0.0
    %3798 = vmatprep.subr.mxu0 0.0
    %3799 = vmatpush2.msra.mxu0 0.0
    %3800 = vmatprep.subr.mxu0 0.0
    %3801 = vmatpush2.msra.mxu0 0.0
    %3802 = vmatprep.subr.mxu0 0.0
    %3803 = vmatpush2.msra.mxu0 0.0
    %3804 = vmatprep.subr.mxu0 0.0
    %3805 = vmatpush2.msra.mxu0 0.0
    %3806 = vmatprep.subr.mxu0 0.0
    %3807 = vmatpush2.msra.mxu0 0.0
    %3808 = vmatprep.subr.mxu0 0.0
    %3809 = vmatpush2.msra.mxu0 0.0
    %3810 = vmatprep.subr.mxu0 0.0
    %3811 = vmatpush2.msra.mxu0 0.0
    %3812 = vmatprep.subr.mxu0 0.0
    %3813 = vmatpush2.msra.mxu0 0.0
    %3814 = vmatprep.subr.mxu0 0.0
    %3815 = vmatpush2.msra.mxu0 0.0
    %3816 = vmatprep.subr.mxu0 0.0
    %3817 = vmatpush2.msra.mxu0 0.0
    %3818 = vmatprep.subr.mxu0 0.0
    %3819 = vmatpush2.msra.mxu0 0.0
    %3820 = vmatprep.subr.mxu0 0.0
    %3821 = vmatpush2.msra.mxu0 0.0
    %3822 = vmatprep.subr.mxu0 0.0
    %3823 = vmatpush2.msra.mxu0 0.0
    %3824 = vmatprep.mubr.f32.mxu0 0.0
    %3825 = vmatmul.mubr.f32.gmra.mxu0 %v3689
    %v3826 = vpop.f32.mrf.mxu0
    %v3827 = vadd.f32 0.0, %v3826
    %v3828 = vpop.f32.mrf.mxu0
    %v3829 = vadd.f32 0.0, %v3828
    %3830 = vmatprep.mubr.f32.mxu0 0.0
    %3831 = vmatmul.mubr.f32.gmra.mxu0 %v3692
    %v3832 = vpop.f32.mrf.mxu0
    %v3833 = vadd.f32 0.0, %v3832
    %v3834 = vpop.f32.mrf.mxu0
    %v3835 = vadd.f32 0.0, %v3834
    %3836 = vmatprep.mubr.f32.mxu0 0.0
    %3837 = vmatmul.mubr.f32.gmra.mxu0 %v3695
    %v3838 = vpop.f32.mrf.mxu0
    %v3839 = vadd.f32 0.0, %v3838
    %v3840 = vpop.f32.mrf.mxu0
    %v3841 = vadd.f32 0.0, %v3840
    %3842 = vmatprep.mubr.f32.mxu0 0.0
    %3843 = vmatmul.mubr.f32.gmra.mxu0 %v3698
    %v3844 = vpop.f32.mrf.mxu0
    %v3845 = vadd.f32 0.0, %v3844
    %v3846 = vpop.f32.mrf.mxu0
    %v3847 = vadd.f32 0.0, %v3846
    %3848 = vmatprep.mubr.f32.mxu0 0.0
    %3849 = vmatmul.mubr.f32.gmra.mxu0 %v3701
    %v3850 = vpop.f32.mrf.mxu0
    %v3851 = vadd.f32 0.0, %v3850
    %v3852 = vpop.f32.mrf.mxu0
    %v3853 = vadd.f32 0.0, %v3852
    %3854 = vmatprep.mubr.f32.mxu0 0.0
    %3855 = vmatmul.mubr.f32.gmra.mxu0 %v3704
    %v3856 = vpop.f32.mrf.mxu0
    %v3857 = vadd.f32 0.0, %v3856
    %v3858 = vpop.f32.mrf.mxu0
    %v3859 = vadd.f32 0.0, %v3858
    %3860 = vmatprep.mubr.f32.mxu0 0.0
    %3861 = vmatmul.mubr.f32.gmra.mxu0 %v3707
    %v3862 = vpop.f32.mrf.mxu0
    %v3863 = vadd.f32 0.0, %v3862
    %v3864 = vpop.f32.mrf.mxu0
    %v3865 = vadd.f32 0.0, %v3864
    %3866 = vmatprep.mubr.f32.mxu0 0.0
    %3867 = vmatmul.mubr.f32.gmra.mxu0 %v3710
    %v3868 = vpop.f32.mrf.mxu0
    %v3869 = vadd.f32 0.0, %v3868
    %v3870 = vpop.f32.mrf.mxu0
    %v3871 = vadd.f32 0.0, %v3870
    %3872 = vmatprep.mubr.f32.mxu0 0.0
    %3873 = vmatmul.mubr.f32.gmra.mxu0 %v3713
    %v3874 = vpop.f32.mrf.mxu0
    %v3875 = vadd.f32 0.0, %v3874
    %v3876 = vpop.f32.mrf.mxu0
    %v3877 = vadd.f32 0.0, %v3876
    %3878 = vmatprep.mubr.f32.mxu0 0.0
    %3879 = vmatmul.mubr.f32.gmra.mxu0 %v3716
    %v3880 = vpop.f32.mrf.mxu0
    %v3881 = vadd.f32 0.0, %v3880
    %v3882 = vpop.f32.mrf.mxu0
    %v3883 = vadd.f32 0.0, %v3882
    %3884 = vmatprep.mubr.f32.mxu0 0.0
    %3885 = vmatmul.mubr.f32.gmra.mxu0 %v3719
    %v3886 = vpop.f32.mrf.mxu0
    %v3887 = vadd.f32 0.0, %v3886
    %v3888 = vpop.f32.mrf.mxu0
    %v3889 = vadd.f32 0.0, %v3888
    %3890 = vmatprep.mubr.f32.mxu0 0.0
    %3891 = vmatmul.mubr.f32.gmra.mxu0 %v3722
    %v3892 = vpop.f32.mrf.mxu0
    %v3893 = vadd.f32 0.0, %v3892
    %v3894 = vpop.f32.mrf.mxu0
    %v3895 = vadd.f32 0.0, %v3894
    %3896 = vmatprep.mubr.f32.mxu0 0.0
    %3897 = vmatmul.mubr.f32.gmra.mxu0 %v3725
    %v3898 = vpop.f32.mrf.mxu0
    %v3899 = vadd.f32 0.0, %v3898
    %v3900 = vpop.f32.mrf.mxu0
    %v3901 = vadd.f32 0.0, %v3900
    %3902 = vmatprep.mubr.f32.mxu0 0.0
    %3903 = vmatmul.mubr.f32.gmra.mxu0 %v3728
    %v3904 = vpop.f32.mrf.mxu0
    %v3905 = vadd.f32 0.0, %v3904
    %v3906 = vpop.f32.mrf.mxu0
    %v3907 = vadd.f32 0.0, %v3906
    %3908 = vmatprep.mubr.f32.mxu0 0.0
    %3909 = vmatmul.mubr.f32.gmra.mxu0 %v3731
    %v3910 = vpop.f32.mrf.mxu0
    %v3911 = vadd.f32 0.0, %v3910
    %v3912 = vpop.f32.mrf.mxu0
    %v3913 = vadd.f32 0.0, %v3912
    %3914 = vmatprep.mubr.f32.mxu0 0.0
    %3915 = vmatmul.mubr.f32.gmra.mxu0 %v3734
    %v3916 = vpop.f32.mrf.mxu0
    %v3917 = vadd.f32 0.0, %v3916
    %v3918 = vpop.f32.mrf.mxu0
    %v3919 = vadd.f32 0.0, %v3918
    %3920 = vmatprep.mubr.f32.mxu0 0.0
    %3921 = vmatmul.mubr.f32.gmra.mxu0 %v3737
    %v3922 = vpop.f32.mrf.mxu0
    %v3923 = vadd.f32 0.0, %v3922
    %v3924 = vpop.f32.mrf.mxu0
    %v3925 = vadd.f32 0.0, %v3924
    %3926 = vmatprep.mubr.f32.mxu0 0.0
    %3927 = vmatmul.mubr.f32.gmra.mxu0 %v3740
    %v3928 = vpop.f32.mrf.mxu0
    %v3929 = vadd.f32 0.0, %v3928
    %v3930 = vpop.f32.mrf.mxu0
    %v3931 = vadd.f32 0.0, %v3930
    %3932 = vmatprep.mubr.f32.mxu0 0.0
    %3933 = vmatmul.mubr.f32.gmra.mxu0 %v3743
    %v3934 = vpop.f32.mrf.mxu0
    %v3935 = vadd.f32 0.0, %v3934
    %v3936 = vpop.f32.mrf.mxu0
    %v3937 = vadd.f32 0.0, %v3936
    %3938 = vmatprep.mubr.f32.mxu0 0.0
    %3939 = vmatmul.mubr.f32.gmra.mxu0 %v3746
    %v3940 = vpop.f32.mrf.mxu0
    %v3941 = vadd.f32 0.0, %v3940
    %v3942 = vpop.f32.mrf.mxu0
    %v3943 = vadd.f32 0.0, %v3942
    %3944 = vmatprep.mubr.f32.mxu0 0.0
    %3945 = vmatmul.mubr.f32.gmra.mxu0 %v3749
    %v3946 = vpop.f32.mrf.mxu0
    %v3947 = vadd.f32 0.0, %v3946
    %v3948 = vpop.f32.mrf.mxu0
    %v3949 = vadd.f32 0.0, %v3948
    %3950 = vmatprep.mubr.f32.mxu0 0.0
    %3951 = vmatmul.mubr.f32.gmra.mxu0 %v3752
    %v3952 = vpop.f32.mrf.mxu0
    %v3953 = vadd.f32 0.0, %v3952
    %v3954 = vpop.f32.mrf.mxu0
    %v3955 = vadd.f32 0.0, %v3954
    %3956 = vmatprep.mubr.f32.mxu0 0.0
    %3957 = vmatmul.mubr.f32.gmra.mxu0 %v3755
    %v3958 = vpop.f32.mrf.mxu0
    %v3959 = vadd.f32 0.0, %v3958
    %v3960 = vpop.f32.mrf.mxu0
    %v3961 = vadd.f32 0.0, %v3960
    %3962 = vmatprep.mubr.f32.mxu0 0.0
    %3963 = vmatmul.mubr.f32.gmra.mxu0 %v3758
    %v3964 = vpop.f32.mrf.mxu0
    %v3965 = vadd.f32 0.0, %v3964
    %v3966 = vpop.f32.mrf.mxu0
    %v3967 = vadd.f32 0.0, %v3966
    %3968 = vdwg.mxu0
    %v3969 = vmul.f32 %v3827, %v129
    %v3970 = vmul.f32 %v3829, %v130
    %v3971 = vmul.f32 %v3833, %v131
    %v3972 = vmul.f32 %v3835, %v132
    %v3973 = vmul.f32 %v3839, %v133
    %v3974 = vmul.f32 %v3841, %v134
    %v3975 = vmul.f32 %v3845, %v135
    %v3976 = vmul.f32 %v3847, %v136
    %v3977 = vmul.f32 %v3851, %v137
    %v3978 = vmul.f32 %v3853, %v138
    %v3979 = vmul.f32 %v3857, %v139
    %v3980 = vmul.f32 %v3859, %v140
    %v3981 = vmul.f32 %v3863, %v141
    %v3982 = vmul.f32 %v3865, %v142
    %v3983 = vmul.f32 %v3869, %v143
    %v3984 = vmul.f32 %v3871, %v144
    %v3985 = vmul.f32 %v3875, %v145
    %v3986 = vmul.f32 %v3877, %v146
    %v3987 = vmul.f32 %v3881, %v147
    %v3988 = vmul.f32 %v3883, %v148
    %v3989 = vmul.f32 %v3887, %v149
    %v3990 = vmul.f32 %v3889, %v150
    %v3991 = vmul.f32 %v3893, %v151
    %v3992 = vmul.f32 %v3895, %v152
    %v3993 = vmul.f32 %v3899, %v153
    %v3994 = vmul.f32 %v3901, %v154
    %v3995 = vmul.f32 %v3905, %v155
    %v3996 = vmul.f32 %v3907, %v156
    %v3997 = vmul.f32 %v3911, %v157
    %v3998 = vmul.f32 %v3913, %v158
    %v3999 = vmul.f32 %v3917, %v159
    %v4000 = vmul.f32 %v3919, %v160
    %v4001 = vmul.f32 %v3923, %v161
    %v4002 = vmul.f32 %v3925, %v162
    %v4003 = vmul.f32 %v3929, %v163
    %v4004 = vmul.f32 %v3931, %v164
    %v4005 = vmul.f32 %v3935, %v165
    %v4006 = vmul.f32 %v3937, %v166
    %v4007 = vmul.f32 %v3941, %v167
    %v4008 = vmul.f32 %v3943, %v168
    %v4009 = vmul.f32 %v3947, %v169
    %v4010 = vmul.f32 %v3949, %v170
    %v4011 = vmul.f32 %v3953, %v171
    %v4012 = vmul.f32 %v3955, %v172
    %v4013 = vmul.f32 %v3959, %v173
    %v4014 = vmul.f32 %v3961, %v174
    %v4015 = vmul.f32 %v3965, %v175
    %v4016 = vmul.f32 %v3967, %v176
    %4017 = vmatprep.subr.mxu0 %v4000
    %4018 = vmatpush1.msra.mxu0 %v3999
    %4019 = vmatprep.subr.mxu0 %v3998
    %4020 = vmatpush1.msra.mxu0 %v3997
    %4021 = vmatprep.subr.mxu0 %v3996
    %4022 = vmatpush1.msra.mxu0 %v3995
    %4023 = vmatprep.subr.mxu0 %v3994
    %4024 = vmatpush1.msra.mxu0 %v3993
    %4025 = vmatprep.subr.mxu0 %v3992
    %4026 = vmatpush1.msra.mxu0 %v3991
    %4027 = vmatprep.subr.mxu0 %v3990
    %4028 = vmatpush1.msra.mxu0 %v3989
    %4029 = vmatprep.subr.mxu0 %v3988
    %4030 = vmatpush1.msra.mxu0 %v3987
    %4031 = vmatprep.subr.mxu0 %v3986
    %4032 = vmatpush1.msra.mxu0 %v3985
    %4033 = vmatprep.subr.mxu0 %v3984
    %4034 = vmatpush1.msra.mxu0 %v3983
    %4035 = vmatprep.subr.mxu0 %v3982
    %4036 = vmatpush1.msra.mxu0 %v3981
    %4037 = vmatprep.subr.mxu0 %v3980
    %4038 = vmatpush1.msra.mxu0 %v3979
    %4039 = vmatprep.subr.mxu0 %v3978
    %4040 = vmatpush1.msra.mxu0 %v3977
    %4041 = vmatprep.subr.mxu0 %v3976
    %4042 = vmatpush1.msra.mxu0 %v3975
    %4043 = vmatprep.subr.mxu0 %v3974
    %4044 = vmatpush1.msra.mxu0 %v3973
    %4045 = vmatprep.subr.mxu0 %v3972
    %4046 = vmatpush1.msra.mxu0 %v3971
    %4047 = vmatprep.subr.mxu0 %v3970
    %4048 = vmatpush1.msra.mxu0 %v3969
    %4049 = vmatprep.subr.mxu0 0.0
    %4050 = vmatpush2.msra.mxu0 0.0
    %4051 = vmatprep.subr.mxu0 0.0
    %4052 = vmatpush2.msra.mxu0 0.0
    %4053 = vmatprep.subr.mxu0 0.0
    %4054 = vmatpush2.msra.mxu0 0.0
    %4055 = vmatprep.subr.mxu0 0.0
    %4056 = vmatpush2.msra.mxu0 0.0
    %4057 = vmatprep.subr.mxu0 0.0
    %4058 = vmatpush2.msra.mxu0 0.0
    %4059 = vmatprep.subr.mxu0 0.0
    %4060 = vmatpush2.msra.mxu0 0.0
    %4061 = vmatprep.subr.mxu0 0.0
    %4062 = vmatpush2.msra.mxu0 0.0
    %4063 = vmatprep.subr.mxu0 0.0
    %4064 = vmatpush2.msra.mxu0 0.0
    %4065 = vmatprep.subr.mxu0 %v4016
    %4066 = vmatpush2.msra.mxu0 %v4015
    %4067 = vmatprep.subr.mxu0 %v4014
    %4068 = vmatpush2.msra.mxu0 %v4013
    %4069 = vmatprep.subr.mxu0 %v4012
    %4070 = vmatpush2.msra.mxu0 %v4011
    %4071 = vmatprep.subr.mxu0 %v4010
    %4072 = vmatpush2.msra.mxu0 %v4009
    %4073 = vmatprep.subr.mxu0 %v4008
    %4074 = vmatpush2.msra.mxu0 %v4007
    %4075 = vmatprep.subr.mxu0 %v4006
    %4076 = vmatpush2.msra.mxu0 %v4005
    %4077 = vmatprep.subr.mxu0 %v4004
    %4078 = vmatpush2.msra.mxu0 %v4003
    %4079 = vmatprep.subr.mxu0 %v4002
    %4080 = vmatpush2.msra.mxu0 %v4001
    %4081 = vmatprep.mubr.f32.mxu0 %v1098
    %4082 = vmatmul.mubr.f32.gmra.mxu0 %v127
    %v4083 = vpop.f32.mrf.mxu0
    %v4084 = vadd.f32 0.0, %v4083
    %v4085 = vpop.f32.mrf.mxu0
    %v4086 = vadd.f32 0.0, %v4085
    %4087 = vdwg.mxu0
    %v4089 = vsel %vm563, %v4086, 0
    %4091 = vmatprep.subr.mxu0 0.0
    %4092 = vmatpush1.xpose.msra.mxu0 0.0
    %4093 = vmatprep.subr.mxu0 0.0
    %4094 = vmatpush1.xpose.msra.mxu0 0.0
    %4095 = vmatprep.subr.mxu0 0.0
    %4096 = vmatpush1.xpose.msra.mxu0 0.0
    %4097 = vmatprep.subr.mxu0 0.0
    %4098 = vmatpush1.xpose.msra.mxu0 0.0
    %4099 = vmatprep.subr.mxu0 0.0
    %4100 = vmatpush1.xpose.msra.mxu0 0.0
    %4101 = vmatprep.subr.mxu0 0.0
    %4102 = vmatpush1.xpose.msra.mxu0 0.0
    %4103 = vmatprep.subr.mxu0 0.0
    %4104 = vmatpush1.xpose.msra.mxu0 0.0
    %4105 = vmatprep.subr.mxu0 0.0
    %4106 = vmatpush1.xpose.msra.mxu0 0.0
    %4107 = vmatprep.subr.mxu0 0.0
    %4108 = vmatpush1.xpose.msra.mxu0 0.0
    %4109 = vmatprep.subr.mxu0 0.0
    %4110 = vmatpush1.xpose.msra.mxu0 0.0
    %4111 = vmatprep.subr.mxu0 0.0
    %4112 = vmatpush1.xpose.msra.mxu0 0.0
    %4113 = vmatprep.subr.mxu0 0.0
    %4114 = vmatpush1.xpose.msra.mxu0 0.0
    %4115 = vmatprep.subr.mxu0 0.0
    %4116 = vmatpush1.xpose.msra.mxu0 0.0
    %4117 = vmatprep.subr.mxu0 0.0
    %4118 = vmatpush1.xpose.msra.mxu0 0.0
    %4119 = vmatprep.subr.mxu0 0.0
    %4120 = vmatpush1.xpose.msra.mxu0 0.0
    %4121 = vmatprep.subr.mxu0 %v1098
    %4122 = vmatpush1.xpose.msra.mxu0 %v127
    %4123 = vmatprep.subr.mxu0 0.0
    %4124 = vmatpush2.xpose.msra.mxu0 0.0
    %4125 = vmatprep.subr.mxu0 0.0
    %4126 = vmatpush2.xpose.msra.mxu0 0.0
    %4127 = vmatprep.subr.mxu0 0.0
    %4128 = vmatpush2.xpose.msra.mxu0 0.0
    %4129 = vmatprep.subr.mxu0 0.0
    %4130 = vmatpush2.xpose.msra.mxu0 0.0
    %4131 = vmatprep.subr.mxu0 0.0
    %4132 = vmatpush2.xpose.msra.mxu0 0.0
    %4133 = vmatprep.subr.mxu0 0.0
    %4134 = vmatpush2.xpose.msra.mxu0 0.0
    %4135 = vmatprep.subr.mxu0 0.0
    %4136 = vmatpush2.xpose.msra.mxu0 0.0
    %4137 = vmatprep.subr.mxu0 0.0
    %4138 = vmatpush2.xpose.msra.mxu0 0.0
    %4139 = vmatprep.subr.mxu0 0.0
    %4140 = vmatpush2.xpose.msra.mxu0 0.0
    %4141 = vmatprep.subr.mxu0 0.0
    %4142 = vmatpush2.xpose.msra.mxu0 0.0
    %4143 = vmatprep.subr.mxu0 0.0
    %4144 = vmatpush2.xpose.msra.mxu0 0.0
    %4145 = vmatprep.subr.mxu0 0.0
    %4146 = vmatpush2.xpose.msra.mxu0 0.0
    %4147 = vmatprep.subr.mxu0 0.0
    %4148 = vmatpush2.xpose.msra.mxu0 0.0
    %4149 = vmatprep.subr.mxu0 0.0
    %4150 = vmatpush2.xpose.msra.mxu0 0.0
    %4151 = vmatprep.subr.mxu0 0.0
    %4152 = vmatpush2.xpose.msra.mxu0 0.0
    %4153 = vmatprep.subr.mxu0 0.0
    %4154 = vmatpush2.xpose.msra.mxu0 0.0
    %4155 = vmatprep.mubr.f32.mxu0 %v4089
    %4156 = vmatmul.mubr.f32.gmra.mxu0 %v4084
    %v4157 = vpop.f32.mrf.mxu0
    %v4158 = vadd.f32 0.0, %v4157
    %v4159 = vpop.f32.mrf.mxu0
    %4160 = vdwg.mxu0
    %v4161 = vsel %vm767, %v4158, -inf
    %4162 = vmax.xlane.f32.xlu0 %v4161
    %v4163 = vpop.xlane.xlu0 %4162
    %v4164 = vsub.f32 %v4158, %v4163
    %v4165 = vmul.f32 %v4164, 1.442695
    %v4166 = vpow.pop %v4165
    %v4167 = vsel %vm767, %v4166, 0.0
    %4168 = vadd.xlane.f32.xlu0 %v4167
    %v4169 = vpop.xlane.xlu0 %4168
    %v4170 = vrcp.pop %v4169
    %v4171 = vmul.f32 %v4166, %v4170
    %v4173 = vsel %vm767, %v4171, 0
    %4175 = vmatprep.subr.mxu0 0.0
    %4176 = vmatpush1.msra.mxu0 0.0
    %4177 = vmatprep.subr.mxu0 0.0
    %4178 = vmatpush1.msra.mxu0 0.0
    %4179 = vmatprep.subr.mxu0 0.0
    %4180 = vmatpush1.msra.mxu0 0.0
    %4181 = vmatprep.subr.mxu0 0.0
    %4182 = vmatpush1.msra.mxu0 0.0
    %4183 = vmatprep.subr.mxu0 0.0
    %4184 = vmatpush1.msra.mxu0 0.0
    %4185 = vmatprep.subr.mxu0 0.0
    %4186 = vmatpush1.msra.mxu0 0.0
    %4187 = vmatprep.subr.mxu0 0.0
    %4188 = vmatpush1.msra.mxu0 0.0
    %4189 = vmatprep.subr.mxu0 0.0
    %4190 = vmatpush1.msra.mxu0 0.0
    %4191 = vmatprep.subr.mxu0 0.0
    %4192 = vmatpush1.msra.mxu0 0.0
    %4193 = vmatprep.subr.mxu0 0.0
    %4194 = vmatpush1.msra.mxu0 0.0
    %4195 = vmatprep.subr.mxu0 0.0
    %4196 = vmatpush1.msra.mxu0 0.0
    %4197 = vmatprep.subr.mxu0 0.0
    %4198 = vmatpush1.msra.mxu0 0.0
    %4199 = vmatprep.subr.mxu0 0.0
    %4200 = vmatpush1.msra.mxu0 0.0
    %4201 = vmatprep.subr.mxu0 0.0
    %4202 = vmatpush1.msra.mxu0 0.0
    %4203 = vmatprep.subr.mxu0 0.0
    %4204 = vmatpush1.msra.mxu0 0.0
    %4205 = vmatprep.subr.mxu0 %v128
    %4206 = vmatpush1.msra.mxu0 %v127
    %4207 = vmatprep.subr.mxu0 0.0
    %4208 = vmatpush2.msra.mxu0 0.0
    %4209 = vmatprep.subr.mxu0 0.0
    %4210 = vmatpush2.msra.mxu0 0.0
    %4211 = vmatprep.subr.mxu0 0.0
    %4212 = vmatpush2.msra.mxu0 0.0
    %4213 = vmatprep.subr.mxu0 0.0
    %4214 = vmatpush2.msra.mxu0 0.0
    %4215 = vmatprep.subr.mxu0 0.0
    %4216 = vmatpush2.msra.mxu0 0.0
    %4217 = vmatprep.subr.mxu0 0.0
    %4218 = vmatpush2.msra.mxu0 0.0
    %4219 = vmatprep.subr.mxu0 0.0
    %4220 = vmatpush2.msra.mxu0 0.0
    %4221 = vmatprep.subr.mxu0 0.0
    %4222 = vmatpush2.msra.mxu0 0.0
    %4223 = vmatprep.subr.mxu0 0.0
    %4224 = vmatpush2.msra.mxu0 0.0
    %4225 = vmatprep.subr.mxu0 0.0
    %4226 = vmatpush2.msra.mxu0 0.0
    %4227 = vmatprep.subr.mxu0 0.0
    %4228 = vmatpush2.msra.mxu0 0.0
    %4229 = vmatprep.subr.mxu0 0.0
    %4230 = vmatpush2.msra.mxu0 0.0
    %4231 = vmatprep.subr.mxu0 0.0
    %4232 = vmatpush2.msra.mxu0 0.0
    %4233 = vmatprep.subr.mxu0 0.0
    %4234 = vmatpush2.msra.mxu0 0.0
    %4235 = vmatprep.subr.mxu0 0.0
    %4236 = vmatpush2.msra.mxu0 0.0
    %4237 = vmatprep.subr.mxu0 0.0
    %4238 = vmatpush2.msra.mxu0 0.0
    %4239 = vmatprep.mubr.f32.mxu0 0.0
    %4240 = vmatmul.mubr.f32.gmra.mxu0 %v4173
    %v4241 = vpop.f32.mrf.mxu0
    %v4242 = vadd.f32 0.0, %v4241
    %v4243 = vpop.f32.mrf.mxu0
    %v4244 = vadd.f32 0.0, %v4243
    %4245 = vdwg.mxu0
    %4246 = vxpose.xlu0.b32.start [1/16] %v3568, 128
    %4247 = vxpose.xlu0.b32.cont [2/16] 0.0, 128
    %4248 = vxpose.xlu0.b32.cont [3/16] 0.0, 128
    %4249 = vxpose.xlu0.b32.cont [4/16] 0.0, 128
    %4250 = vxpose.xlu0.b32.cont [5/16] 0.0, 128
    %4251 = vxpose.xlu0.b32.cont [6/16] 0.0, 128
    %4252 = vxpose.xlu0.b32.cont [7/16] 0.0, 128
    %4253 = vxpose.xlu0.b32.cont [8/16] 0.0, 128
    %4254 = vxpose.xlu0.b32.cont [9/16] 0.0, 128
    %4255 = vxpose.xlu0.b32.cont [10/16] 0.0, 128
    %4256 = vxpose.xlu0.b32.cont [11/16] 0.0, 128
    %4257 = vxpose.xlu0.b32.cont [12/16] 0.0, 128
    %4258 = vxpose.xlu0.b32.cont [13/16] 0.0, 128
    %4259 = vxpose.xlu0.b32.cont [14/16] 0.0, 128
    %4260 = vxpose.xlu0.b32.cont [15/16] 0.0, 128
    %4261 = vxpose.xlu0.b32.end [16/16] 0.0, 128
    %v4262 = vpop.trf.xlu0
    %v4263 = vpop.trf.xlu0
    %v4264 = vpop.trf.xlu0
    %v4265 = vpop.trf.xlu0
    %v4266 = vpop.trf.xlu0
    %v4267 = vpop.trf.xlu0
    %v4268 = vpop.trf.xlu0
    %v4269 = vpop.trf.xlu0
    %v4270 = vpop.trf.xlu0
    %v4271 = vpop.trf.xlu0
    %v4272 = vpop.trf.xlu0
    %v4273 = vpop.trf.xlu0
    %v4274 = vpop.trf.xlu0
    %v4275 = vpop.trf.xlu0
    %v4276 = vpop.trf.xlu0
    %v4277 = vpop.trf.xlu0
    %4278 = vxpose.xlu0.b32.start [1/16] %v3609, 128
    %4279 = vxpose.xlu0.b32.cont [2/16] 0.0, 128
    %4280 = vxpose.xlu0.b32.cont [3/16] 0.0, 128
    %4281 = vxpose.xlu0.b32.cont [4/16] 0.0, 128
    %4282 = vxpose.xlu0.b32.cont [5/16] 0.0, 128
    %4283 = vxpose.xlu0.b32.cont [6/16] 0.0, 128
    %4284 = vxpose.xlu0.b32.cont [7/16] 0.0, 128
    %4285 = vxpose.xlu0.b32.cont [8/16] 0.0, 128
    %4286 = vxpose.xlu0.b32.cont [9/16] 0.0, 128
    %4287 = vxpose.xlu0.b32.cont [10/16] 0.0, 128
    %4288 = vxpose.xlu0.b32.cont [11/16] 0.0, 128
    %4289 = vxpose.xlu0.b32.cont [12/16] 0.0, 128
    %4290 = vxpose.xlu0.b32.cont [13/16] 0.0, 128
    %4291 = vxpose.xlu0.b32.cont [14/16] 0.0, 128
    %4292 = vxpose.xlu0.b32.cont [15/16] 0.0, 128
    %4293 = vxpose.xlu0.b32.end [16/16] 0.0, 128
    %v4294 = vpop.trf.xlu0
    %v4295 = vpop.trf.xlu0
    %v4296 = vpop.trf.xlu0
    %v4297 = vpop.trf.xlu0
    %v4298 = vpop.trf.xlu0
    %v4299 = vpop.trf.xlu0
    %v4300 = vpop.trf.xlu0
    %v4301 = vpop.trf.xlu0
    %v4302 = vpop.trf.xlu0
    %v4303 = vpop.trf.xlu0
    %v4304 = vpop.trf.xlu0
    %v4305 = vpop.trf.xlu0
    %v4306 = vpop.trf.xlu0
    %v4307 = vpop.trf.xlu0
    %v4308 = vpop.trf.xlu0
    %v4309 = vpop.trf.xlu0
    %v4311 = vsel %vm767, %v4262, 0
    %v4314 = vsel %vm767, %v4263, 0
    %v4317 = vsel %vm767, %v4264, 0
    %v4320 = vsel %vm767, %v4265, 0
    %v4323 = vsel %vm767, %v4266, 0
    %v4326 = vsel %vm767, %v4267, 0
    %v4329 = vsel %vm767, %v4268, 0
    %v4332 = vsel %vm767, %v4269, 0
    %v4335 = vsel %vm767, %v4270, 0
    %v4338 = vsel %vm767, %v4271, 0
    %v4341 = vsel %vm767, %v4272, 0
    %v4344 = vsel %vm767, %v4273, 0
    %v4347 = vsel %vm767, %v4274, 0
    %v4350 = vsel %vm767, %v4275, 0
    %v4353 = vsel %vm767, %v4276, 0
    %v4356 = vsel %vm767, %v4277, 0
    %v4359 = vsel %vm767, %v4294, 0
    %v4362 = vsel %vm767, %v4295, 0
    %v4365 = vsel %vm767, %v4296, 0
    %v4368 = vsel %vm767, %v4297, 0
    %v4371 = vsel %vm767, %v4298, 0
    %v4374 = vsel %vm767, %v4299, 0
    %v4377 = vsel %vm767, %v4300, 0
    %v4380 = vsel %vm767, %v4301, 0
    %4382 = vmatprep.subr.mxu0 0.0
    %4383 = vmatpush1.msra.mxu0 0.0
    %4384 = vmatprep.subr.mxu0 0.0
    %4385 = vmatpush1.msra.mxu0 0.0
    %4386 = vmatprep.subr.mxu0 0.0
    %4387 = vmatpush1.msra.mxu0 0.0
    %4388 = vmatprep.subr.mxu0 0.0
    %4389 = vmatpush1.msra.mxu0 0.0
    %4390 = vmatprep.subr.mxu0 0.0
    %4391 = vmatpush1.msra.mxu0 0.0
    %4392 = vmatprep.subr.mxu0 0.0
    %4393 = vmatpush1.msra.mxu0 0.0
    %4394 = vmatprep.subr.mxu0 0.0
    %4395 = vmatpush1.msra.mxu0 0.0
    %4396 = vmatprep.subr.mxu0 0.0
    %4397 = vmatpush1.msra.mxu0 0.0
    %4398 = vmatprep.subr.mxu0 0.0
    %4399 = vmatpush1.msra.mxu0 0.0
    %4400 = vmatprep.subr.mxu0 0.0
    %4401 = vmatpush1.msra.mxu0 0.0
    %4402 = vmatprep.subr.mxu0 0.0
    %4403 = vmatpush1.msra.mxu0 0.0
    %4404 = vmatprep.subr.mxu0 0.0
    %4405 = vmatpush1.msra.mxu0 0.0
    %4406 = vmatprep.subr.mxu0 0.0
    %4407 = vmatpush1.msra.mxu0 0.0
    %4408 = vmatprep.subr.mxu0 0.0
    %4409 = vmatpush1.msra.mxu0 0.0
    %4410 = vmatprep.subr.mxu0 0.0
    %4411 = vmatpush1.msra.mxu0 0.0
    %4412 = vmatprep.subr.mxu0 %v128
    %4413 = vmatpush1.msra.mxu0 %v127
    %4414 = vmatprep.subr.mxu0 0.0
    %4415 = vmatpush2.msra.mxu0 0.0
    %4416 = vmatprep.subr.mxu0 0.0
    %4417 = vmatpush2.msra.mxu0 0.0
    %4418 = vmatprep.subr.mxu0 0.0
    %4419 = vmatpush2.msra.mxu0 0.0
    %4420 = vmatprep.subr.mxu0 0.0
    %4421 = vmatpush2.msra.mxu0 0.0
    %4422 = vmatprep.subr.mxu0 0.0
    %4423 = vmatpush2.msra.mxu0 0.0
    %4424 = vmatprep.subr.mxu0 0.0
    %4425 = vmatpush2.msra.mxu0 0.0
    %4426 = vmatprep.subr.mxu0 0.0
    %4427 = vmatpush2.msra.mxu0 0.0
    %4428 = vmatprep.subr.mxu0 0.0
    %4429 = vmatpush2.msra.mxu0 0.0
    %4430 = vmatprep.subr.mxu0 0.0
    %4431 = vmatpush2.msra.mxu0 0.0
    %4432 = vmatprep.subr.mxu0 0.0
    %4433 = vmatpush2.msra.mxu0 0.0
    %4434 = vmatprep.subr.mxu0 0.0
    %4435 = vmatpush2.msra.mxu0 0.0
    %4436 = vmatprep.subr.mxu0 0.0
    %4437 = vmatpush2.msra.mxu0 0.0
    %4438 = vmatprep.subr.mxu0 0.0
    %4439 = vmatpush2.msra.mxu0 0.0
    %4440 = vmatprep.subr.mxu0 0.0
    %4441 = vmatpush2.msra.mxu0 0.0
    %4442 = vmatprep.subr.mxu0 0.0
    %4443 = vmatpush2.msra.mxu0 0.0
    %4444 = vmatprep.subr.mxu0 0.0
    %4445 = vmatpush2.msra.mxu0 0.0
    %4446 = vmatprep.mubr.f32.mxu0 0.0
    %4447 = vmatmul.mubr.f32.gmra.mxu0 %v4311
    %v4448 = vpop.f32.mrf.mxu0
    %v4449 = vadd.f32 0.0, %v4448
    %v4450 = vpop.f32.mrf.mxu0
    %v4451 = vadd.f32 0.0, %v4450
    %4452 = vmatprep.mubr.f32.mxu0 0.0
    %4453 = vmatmul.mubr.f32.gmra.mxu0 %v4314
    %v4454 = vpop.f32.mrf.mxu0
    %v4455 = vadd.f32 0.0, %v4454
    %v4456 = vpop.f32.mrf.mxu0
    %v4457 = vadd.f32 0.0, %v4456
    %4458 = vmatprep.mubr.f32.mxu0 0.0
    %4459 = vmatmul.mubr.f32.gmra.mxu0 %v4317
    %v4460 = vpop.f32.mrf.mxu0
    %v4461 = vadd.f32 0.0, %v4460
    %v4462 = vpop.f32.mrf.mxu0
    %v4463 = vadd.f32 0.0, %v4462
    %4464 = vmatprep.mubr.f32.mxu0 0.0
    %4465 = vmatmul.mubr.f32.gmra.mxu0 %v4320
    %v4466 = vpop.f32.mrf.mxu0
    %v4467 = vadd.f32 0.0, %v4466
    %v4468 = vpop.f32.mrf.mxu0
    %v4469 = vadd.f32 0.0, %v4468
    %4470 = vmatprep.mubr.f32.mxu0 0.0
    %4471 = vmatmul.mubr.f32.gmra.mxu0 %v4323
    %v4472 = vpop.f32.mrf.mxu0
    %v4473 = vadd.f32 0.0, %v4472
    %v4474 = vpop.f32.mrf.mxu0
    %v4475 = vadd.f32 0.0, %v4474
    %4476 = vmatprep.mubr.f32.mxu0 0.0
    %4477 = vmatmul.mubr.f32.gmra.mxu0 %v4326
    %v4478 = vpop.f32.mrf.mxu0
    %v4479 = vadd.f32 0.0, %v4478
    %v4480 = vpop.f32.mrf.mxu0
    %v4481 = vadd.f32 0.0, %v4480
    %4482 = vmatprep.mubr.f32.mxu0 0.0
    %4483 = vmatmul.mubr.f32.gmra.mxu0 %v4329
    %v4484 = vpop.f32.mrf.mxu0
    %v4485 = vadd.f32 0.0, %v4484
    %v4486 = vpop.f32.mrf.mxu0
    %v4487 = vadd.f32 0.0, %v4486
    %4488 = vmatprep.mubr.f32.mxu0 0.0
    %4489 = vmatmul.mubr.f32.gmra.mxu0 %v4332
    %v4490 = vpop.f32.mrf.mxu0
    %v4491 = vadd.f32 0.0, %v4490
    %v4492 = vpop.f32.mrf.mxu0
    %v4493 = vadd.f32 0.0, %v4492
    %4494 = vmatprep.mubr.f32.mxu0 0.0
    %4495 = vmatmul.mubr.f32.gmra.mxu0 %v4335
    %v4496 = vpop.f32.mrf.mxu0
    %v4497 = vadd.f32 0.0, %v4496
    %v4498 = vpop.f32.mrf.mxu0
    %v4499 = vadd.f32 0.0, %v4498
    %4500 = vmatprep.mubr.f32.mxu0 0.0
    %4501 = vmatmul.mubr.f32.gmra.mxu0 %v4338
    %v4502 = vpop.f32.mrf.mxu0
    %v4503 = vadd.f32 0.0, %v4502
    %v4504 = vpop.f32.mrf.mxu0
    %v4505 = vadd.f32 0.0, %v4504
    %4506 = vmatprep.mubr.f32.mxu0 0.0
    %4507 = vmatmul.mubr.f32.gmra.mxu0 %v4341
    %v4508 = vpop.f32.mrf.mxu0
    %v4509 = vadd.f32 0.0, %v4508
    %v4510 = vpop.f32.mrf.mxu0
    %v4511 = vadd.f32 0.0, %v4510
    %4512 = vmatprep.mubr.f32.mxu0 0.0
    %4513 = vmatmul.mubr.f32.gmra.mxu0 %v4344
    %v4514 = vpop.f32.mrf.mxu0
    %v4515 = vadd.f32 0.0, %v4514
    %v4516 = vpop.f32.mrf.mxu0
    %v4517 = vadd.f32 0.0, %v4516
    %4518 = vmatprep.mubr.f32.mxu0 0.0
    %4519 = vmatmul.mubr.f32.gmra.mxu0 %v4347
    %v4520 = vpop.f32.mrf.mxu0
    %v4521 = vadd.f32 0.0, %v4520
    %v4522 = vpop.f32.mrf.mxu0
    %v4523 = vadd.f32 0.0, %v4522
    %4524 = vmatprep.mubr.f32.mxu0 0.0
    %4525 = vmatmul.mubr.f32.gmra.mxu0 %v4350
    %v4526 = vpop.f32.mrf.mxu0
    %v4527 = vadd.f32 0.0, %v4526
    %v4528 = vpop.f32.mrf.mxu0
    %v4529 = vadd.f32 0.0, %v4528
    %4530 = vmatprep.mubr.f32.mxu0 0.0
    %4531 = vmatmul.mubr.f32.gmra.mxu0 %v4353
    %v4532 = vpop.f32.mrf.mxu0
    %v4533 = vadd.f32 0.0, %v4532
    %v4534 = vpop.f32.mrf.mxu0
    %v4535 = vadd.f32 0.0, %v4534
    %4536 = vmatprep.mubr.f32.mxu0 0.0
    %4537 = vmatmul.mubr.f32.gmra.mxu0 %v4356
    %v4538 = vpop.f32.mrf.mxu0
    %v4539 = vadd.f32 0.0, %v4538
    %v4540 = vpop.f32.mrf.mxu0
    %v4541 = vadd.f32 0.0, %v4540
    %4542 = vmatprep.mubr.f32.mxu0 0.0
    %4543 = vmatmul.mubr.f32.gmra.mxu0 %v4359
    %v4544 = vpop.f32.mrf.mxu0
    %v4545 = vadd.f32 0.0, %v4544
    %v4546 = vpop.f32.mrf.mxu0
    %v4547 = vadd.f32 0.0, %v4546
    %4548 = vmatprep.mubr.f32.mxu0 0.0
    %4549 = vmatmul.mubr.f32.gmra.mxu0 %v4362
    %v4550 = vpop.f32.mrf.mxu0
    %v4551 = vadd.f32 0.0, %v4550
    %v4552 = vpop.f32.mrf.mxu0
    %v4553 = vadd.f32 0.0, %v4552
    %4554 = vmatprep.mubr.f32.mxu0 0.0
    %4555 = vmatmul.mubr.f32.gmra.mxu0 %v4365
    %v4556 = vpop.f32.mrf.mxu0
    %v4557 = vadd.f32 0.0, %v4556
    %v4558 = vpop.f32.mrf.mxu0
    %v4559 = vadd.f32 0.0, %v4558
    %4560 = vmatprep.mubr.f32.mxu0 0.0
    %4561 = vmatmul.mubr.f32.gmra.mxu0 %v4368
    %v4562 = vpop.f32.mrf.mxu0
    %v4563 = vadd.f32 0.0, %v4562
    %v4564 = vpop.f32.mrf.mxu0
    %v4565 = vadd.f32 0.0, %v4564
    %4566 = vmatprep.mubr.f32.mxu0 0.0
    %4567 = vmatmul.mubr.f32.gmra.mxu0 %v4371
    %v4568 = vpop.f32.mrf.mxu0
    %v4569 = vadd.f32 0.0, %v4568
    %v4570 = vpop.f32.mrf.mxu0
    %v4571 = vadd.f32 0.0, %v4570
    %4572 = vmatprep.mubr.f32.mxu0 0.0
    %4573 = vmatmul.mubr.f32.gmra.mxu0 %v4374
    %v4574 = vpop.f32.mrf.mxu0
    %v4575 = vadd.f32 0.0, %v4574
    %v4576 = vpop.f32.mrf.mxu0
    %v4577 = vadd.f32 0.0, %v4576
    %4578 = vmatprep.mubr.f32.mxu0 0.0
    %4579 = vmatmul.mubr.f32.gmra.mxu0 %v4377
    %v4580 = vpop.f32.mrf.mxu0
    %v4581 = vadd.f32 0.0, %v4580
    %v4582 = vpop.f32.mrf.mxu0
    %v4583 = vadd.f32 0.0, %v4582
    %4584 = vmatprep.mubr.f32.mxu0 0.0
    %4585 = vmatmul.mubr.f32.gmra.mxu0 %v4380
    %v4586 = vpop.f32.mrf.mxu0
    %v4587 = vadd.f32 0.0, %v4586
    %v4588 = vpop.f32.mrf.mxu0
    %v4589 = vadd.f32 0.0, %v4588
    %4590 = vdwg.mxu0
    %v4591 = vmul.f32 %v4449, %v129
    %v4592 = vmul.f32 %v4451, %v130
    %v4593 = vmul.f32 %v4455, %v131
    %v4594 = vmul.f32 %v4457, %v132
    %v4595 = vmul.f32 %v4461, %v133
    %v4596 = vmul.f32 %v4463, %v134
    %v4597 = vmul.f32 %v4467, %v135
    %v4598 = vmul.f32 %v4469, %v136
    %v4599 = vmul.f32 %v4473, %v137
    %v4600 = vmul.f32 %v4475, %v138
    %v4601 = vmul.f32 %v4479, %v139
    %v4602 = vmul.f32 %v4481, %v140
    %v4603 = vmul.f32 %v4485, %v141
    %v4604 = vmul.f32 %v4487, %v142
    %v4605 = vmul.f32 %v4491, %v143
    %v4606 = vmul.f32 %v4493, %v144
    %v4607 = vmul.f32 %v4497, %v145
    %v4608 = vmul.f32 %v4499, %v146
    %v4609 = vmul.f32 %v4503, %v147
    %v4610 = vmul.f32 %v4505, %v148
    %v4611 = vmul.f32 %v4509, %v149
    %v4612 = vmul.f32 %v4511, %v150
    %v4613 = vmul.f32 %v4515, %v151
    %v4614 = vmul.f32 %v4517, %v152
    %v4615 = vmul.f32 %v4521, %v153
    %v4616 = vmul.f32 %v4523, %v154
    %v4617 = vmul.f32 %v4527, %v155
    %v4618 = vmul.f32 %v4529, %v156
    %v4619 = vmul.f32 %v4533, %v157
    %v4620 = vmul.f32 %v4535, %v158
    %v4621 = vmul.f32 %v4539, %v159
    %v4622 = vmul.f32 %v4541, %v160
    %v4623 = vmul.f32 %v4545, %v161
    %v4624 = vmul.f32 %v4547, %v162
    %v4625 = vmul.f32 %v4551, %v163
    %v4626 = vmul.f32 %v4553, %v164
    %v4627 = vmul.f32 %v4557, %v165
    %v4628 = vmul.f32 %v4559, %v166
    %v4629 = vmul.f32 %v4563, %v167
    %v4630 = vmul.f32 %v4565, %v168
    %v4631 = vmul.f32 %v4569, %v169
    %v4632 = vmul.f32 %v4571, %v170
    %v4633 = vmul.f32 %v4575, %v171
    %v4634 = vmul.f32 %v4577, %v172
    %v4635 = vmul.f32 %v4581, %v173
    %v4636 = vmul.f32 %v4583, %v174
    %v4637 = vmul.f32 %v4587, %v175
    %v4638 = vmul.f32 %v4589, %v176
    %v4640 = vsel %vm563, %v4244, 0
    %4642 = vmatprep.subr.mxu0 %v4622
    %4643 = vmatpush1.msra.mxu0 %v4621
    %4644 = vmatprep.subr.mxu0 %v4620
    %4645 = vmatpush1.msra.mxu0 %v4619
    %4646 = vmatprep.subr.mxu0 %v4618
    %4647 = vmatpush1.msra.mxu0 %v4617
    %4648 = vmatprep.subr.mxu0 %v4616
    %4649 = vmatpush1.msra.mxu0 %v4615
    %4650 = vmatprep.subr.mxu0 %v4614
    %4651 = vmatpush1.msra.mxu0 %v4613
    %4652 = vmatprep.subr.mxu0 %v4612
    %4653 = vmatpush1.msra.mxu0 %v4611
    %4654 = vmatprep.subr.mxu0 %v4610
    %4655 = vmatpush1.msra.mxu0 %v4609
    %4656 = vmatprep.subr.mxu0 %v4608
    %4657 = vmatpush1.msra.mxu0 %v4607
    %4658 = vmatprep.subr.mxu0 %v4606
    %4659 = vmatpush1.msra.mxu0 %v4605
    %4660 = vmatprep.subr.mxu0 %v4604
    %4661 = vmatpush1.msra.mxu0 %v4603
    %4662 = vmatprep.subr.mxu0 %v4602
    %4663 = vmatpush1.msra.mxu0 %v4601
    %4664 = vmatprep.subr.mxu0 %v4600
    %4665 = vmatpush1.msra.mxu0 %v4599
    %4666 = vmatprep.subr.mxu0 %v4598
    %4667 = vmatpush1.msra.mxu0 %v4597
    %4668 = vmatprep.subr.mxu0 %v4596
    %4669 = vmatpush1.msra.mxu0 %v4595
    %4670 = vmatprep.subr.mxu0 %v4594
    %4671 = vmatpush1.msra.mxu0 %v4593
    %4672 = vmatprep.subr.mxu0 %v4592
    %4673 = vmatpush1.msra.mxu0 %v4591
    %4674 = vmatprep.subr.mxu0 0.0
    %4675 = vmatpush2.msra.mxu0 0.0
    %4676 = vmatprep.subr.mxu0 0.0
    %4677 = vmatpush2.msra.mxu0 0.0
    %4678 = vmatprep.subr.mxu0 0.0
    %4679 = vmatpush2.msra.mxu0 0.0
    %4680 = vmatprep.subr.mxu0 0.0
    %4681 = vmatpush2.msra.mxu0 0.0
    %4682 = vmatprep.subr.mxu0 0.0
    %4683 = vmatpush2.msra.mxu0 0.0
    %4684 = vmatprep.subr.mxu0 0.0
    %4685 = vmatpush2.msra.mxu0 0.0
    %4686 = vmatprep.subr.mxu0 0.0
    %4687 = vmatpush2.msra.mxu0 0.0
    %4688 = vmatprep.subr.mxu0 0.0
    %4689 = vmatpush2.msra.mxu0 0.0
    %4690 = vmatprep.subr.mxu0 %v4638
    %4691 = vmatpush2.msra.mxu0 %v4637
    %4692 = vmatprep.subr.mxu0 %v4636
    %4693 = vmatpush2.msra.mxu0 %v4635
    %4694 = vmatprep.subr.mxu0 %v4634
    %4695 = vmatpush2.msra.mxu0 %v4633
    %4696 = vmatprep.subr.mxu0 %v4632
    %4697 = vmatpush2.msra.mxu0 %v4631
    %4698 = vmatprep.subr.mxu0 %v4630
    %4699 = vmatpush2.msra.mxu0 %v4629
    %4700 = vmatprep.subr.mxu0 %v4628
    %4701 = vmatpush2.msra.mxu0 %v4627
    %4702 = vmatprep.subr.mxu0 %v4626
    %4703 = vmatpush2.msra.mxu0 %v4625
    %4704 = vmatprep.subr.mxu0 %v4624
    %4705 = vmatpush2.msra.mxu0 %v4623
    %4706 = vmatprep.mubr.f32.mxu0 %v4640
    %4707 = vmatmul.mubr.f32.gmra.mxu0 %v4242
    %v4708 = vpop.f32.mrf.mxu0
    %v4709 = vadd.f32 0.0, %v4708
    %v4710 = vpop.f32.mrf.mxu0
    %v4711 = vadd.f32 0.0, %v4710
    %4712 = vdwg.mxu0
    %4713 = vxpose.xlu0.b32.start [1/16] %v3527, 128
    %4714 = vxpose.xlu0.b32.cont [2/16] 0.0, 128
    %4715 = vxpose.xlu0.b32.cont [3/16] 0.0, 128
    %4716 = vxpose.xlu0.b32.cont [4/16] 0.0, 128
    %4717 = vxpose.xlu0.b32.cont [5/16] 0.0, 128
    %4718 = vxpose.xlu0.b32.cont [6/16] 0.0, 128
    %4719 = vxpose.xlu0.b32.cont [7/16] 0.0, 128
    %4720 = vxpose.xlu0.b32.cont [8/16] 0.0, 128
    %4721 = vxpose.xlu0.b32.cont [9/16] 0.0, 128
    %4722 = vxpose.xlu0.b32.cont [10/16] 0.0, 128
    %4723 = vxpose.xlu0.b32.cont [11/16] 0.0, 128
    %4724 = vxpose.xlu0.b32.cont [12/16] 0.0, 128
    %4725 = vxpose.xlu0.b32.cont [13/16] 0.0, 128
    %4726 = vxpose.xlu0.b32.cont [14/16] 0.0, 128
    %4727 = vxpose.xlu0.b32.cont [15/16] 0.0, 128
    %4728 = vxpose.xlu0.b32.end [16/16] 0.0, 128
    %v4729 = vpop.trf.xlu0
    %v4730 = vpop.trf.xlu0
    %v4731 = vpop.trf.xlu0
    %v4732 = vpop.trf.xlu0
    %v4733 = vpop.trf.xlu0
    %v4734 = vpop.trf.xlu0
    %v4735 = vpop.trf.xlu0
    %v4736 = vpop.trf.xlu0
    %v4737 = vpop.trf.xlu0
    %v4738 = vpop.trf.xlu0
    %v4739 = vpop.trf.xlu0
    %v4740 = vpop.trf.xlu0
    %v4741 = vpop.trf.xlu0
    %v4742 = vpop.trf.xlu0
    %v4743 = vpop.trf.xlu0
    %v4744 = vpop.trf.xlu0
    %4745 = vxpose.xlu0.b32.start [1/16] %v3529, 128
    %4746 = vxpose.xlu0.b32.cont [2/16] 0.0, 128
    %4747 = vxpose.xlu0.b32.cont [3/16] 0.0, 128
    %4748 = vxpose.xlu0.b32.cont [4/16] 0.0, 128
    %4749 = vxpose.xlu0.b32.cont [5/16] 0.0, 128
    %4750 = vxpose.xlu0.b32.cont [6/16] 0.0, 128
    %4751 = vxpose.xlu0.b32.cont [7/16] 0.0, 128
    %4752 = vxpose.xlu0.b32.cont [8/16] 0.0, 128
    %4753 = vxpose.xlu0.b32.cont [9/16] 0.0, 128
    %4754 = vxpose.xlu0.b32.cont [10/16] 0.0, 128
    %4755 = vxpose.xlu0.b32.cont [11/16] 0.0, 128
    %4756 = vxpose.xlu0.b32.cont [12/16] 0.0, 128
    %4757 = vxpose.xlu0.b32.cont [13/16] 0.0, 128
    %4758 = vxpose.xlu0.b32.cont [14/16] 0.0, 128
    %4759 = vxpose.xlu0.b32.cont [15/16] 0.0, 128
    %4760 = vxpose.xlu0.b32.end [16/16] 0.0, 128
    %v4761 = vpop.trf.xlu0
    %v4762 = vpop.trf.xlu0
    %v4763 = vpop.trf.xlu0
    %v4764 = vpop.trf.xlu0
    %v4765 = vpop.trf.xlu0
    %v4766 = vpop.trf.xlu0
    %v4767 = vpop.trf.xlu0
    %v4768 = vpop.trf.xlu0
    %v4769 = vpop.trf.xlu0
    %v4770 = vpop.trf.xlu0
    %v4771 = vpop.trf.xlu0
    %v4772 = vpop.trf.xlu0
    %v4773 = vpop.trf.xlu0
    %v4774 = vpop.trf.xlu0
    %v4775 = vpop.trf.xlu0
    %v4776 = vpop.trf.xlu0
    %4779 = vrot.lane.b32.xlu0 %v3529, 64
    %v4780 = vpop.permute.xlu0 %4779
    %4781 = vrot.lane.b32.xlu0 %v3570, 64
    %v4782 = vpop.permute.xlu0 %4781
    %v4783 = vsel %vm563, %v4780, %v4782
    %v4787 = vsel %vm767, %v4729, 0
    %v4790 = vsel %vm767, %v4730, 0
    %v4793 = vsel %vm767, %v4731, 0
    %v4796 = vsel %vm767, %v4732, 0
    %v4799 = vsel %vm767, %v4733, 0
    %v4802 = vsel %vm767, %v4734, 0
    %v4805 = vsel %vm767, %v4735, 0
    %v4808 = vsel %vm767, %v4736, 0
    %v4811 = vsel %vm767, %v4737, 0
    %v4814 = vsel %vm767, %v4738, 0
    %v4817 = vsel %vm767, %v4739, 0
    %v4820 = vsel %vm767, %v4740, 0
    %v4823 = vsel %vm767, %v4741, 0
    %v4826 = vsel %vm767, %v4742, 0
    %v4829 = vsel %vm767, %v4743, 0
    %v4832 = vsel %vm767, %v4744, 0
    %v4835 = vsel %vm767, %v4761, 0
    %v4838 = vsel %vm767, %v4762, 0
    %v4841 = vsel %vm767, %v4763, 0
    %v4844 = vsel %vm767, %v4764, 0
    %v4847 = vsel %vm767, %v4765, 0
    %v4850 = vsel %vm767, %v4766, 0
    %v4853 = vsel %vm767, %v4767, 0
    %v4856 = vsel %vm767, %v4768, 0
    %4858 = vmatprep.subr.mxu0 0.0
    %4859 = vmatpush1.msra.mxu0 0.0
    %4860 = vmatprep.subr.mxu0 0.0
    %4861 = vmatpush1.msra.mxu0 0.0
    %4862 = vmatprep.subr.mxu0 0.0
    %4863 = vmatpush1.msra.mxu0 0.0
    %4864 = vmatprep.subr.mxu0 0.0
    %4865 = vmatpush1.msra.mxu0 0.0
    %4866 = vmatprep.subr.mxu0 0.0
    %4867 = vmatpush1.msra.mxu0 0.0
    %4868 = vmatprep.subr.mxu0 0.0
    %4869 = vmatpush1.msra.mxu0 0.0
    %4870 = vmatprep.subr.mxu0 0.0
    %4871 = vmatpush1.msra.mxu0 0.0
    %4872 = vmatprep.subr.mxu0 0.0
    %4873 = vmatpush1.msra.mxu0 0.0
    %4874 = vmatprep.subr.mxu0 0.0
    %4875 = vmatpush1.msra.mxu0 0.0
    %4876 = vmatprep.subr.mxu0 0.0
    %4877 = vmatpush1.msra.mxu0 0.0
    %4878 = vmatprep.subr.mxu0 0.0
    %4879 = vmatpush1.msra.mxu0 0.0
    %4880 = vmatprep.subr.mxu0 0.0
    %4881 = vmatpush1.msra.mxu0 0.0
    %4882 = vmatprep.subr.mxu0 0.0
    %4883 = vmatpush1.msra.mxu0 0.0
    %4884 = vmatprep.subr.mxu0 0.0
    %4885 = vmatpush1.msra.mxu0 0.0
    %4886 = vmatprep.subr.mxu0 0.0
    %4887 = vmatpush1.msra.mxu0 0.0
    %4888 = vmatprep.subr.mxu0 %v4782
    %4889 = vmatpush1.msra.mxu0 %v4783
    %4890 = vmatprep.subr.mxu0 0.0
    %4891 = vmatpush2.msra.mxu0 0.0
    %4892 = vmatprep.subr.mxu0 0.0
    %4893 = vmatpush2.msra.mxu0 0.0
    %4894 = vmatprep.subr.mxu0 0.0
    %4895 = vmatpush2.msra.mxu0 0.0
    %4896 = vmatprep.subr.mxu0 0.0
    %4897 = vmatpush2.msra.mxu0 0.0
    %4898 = vmatprep.subr.mxu0 0.0
    %4899 = vmatpush2.msra.mxu0 0.0
    %4900 = vmatprep.subr.mxu0 0.0
    %4901 = vmatpush2.msra.mxu0 0.0
    %4902 = vmatprep.subr.mxu0 0.0
    %4903 = vmatpush2.msra.mxu0 0.0
    %4904 = vmatprep.subr.mxu0 0.0
    %4905 = vmatpush2.msra.mxu0 0.0
    %4906 = vmatprep.subr.mxu0 0.0
    %4907 = vmatpush2.msra.mxu0 0.0
    %4908 = vmatprep.subr.mxu0 0.0
    %4909 = vmatpush2.msra.mxu0 0.0
    %4910 = vmatprep.subr.mxu0 0.0
    %4911 = vmatpush2.msra.mxu0 0.0
    %4912 = vmatprep.subr.mxu0 0.0
    %4913 = vmatpush2.msra.mxu0 0.0
    %4914 = vmatprep.subr.mxu0 0.0
    %4915 = vmatpush2.msra.mxu0 0.0
    %4916 = vmatprep.subr.mxu0 0.0
    %4917 = vmatpush2.msra.mxu0 0.0
    %4918 = vmatprep.subr.mxu0 0.0
    %4919 = vmatpush2.msra.mxu0 0.0
    %4920 = vmatprep.subr.mxu0 0.0
    %4921 = vmatpush2.msra.mxu0 0.0
    %4922 = vmatprep.mubr.f32.mxu0 0.0
    %4923 = vmatmul.mubr.f32.gmra.mxu0 %v4787
    %v4924 = vpop.f32.mrf.mxu0
    %v4925 = vadd.f32 0.0, %v4924
    %v4926 = vpop.f32.mrf.mxu0
    %v4927 = vadd.f32 0.0, %v4926
    %4928 = vmatprep.mubr.f32.mxu0 0.0
    %4929 = vmatmul.mubr.f32.gmra.mxu0 %v4790
    %v4930 = vpop.f32.mrf.mxu0
    %v4931 = vadd.f32 0.0, %v4930
    %v4932 = vpop.f32.mrf.mxu0
    %v4933 = vadd.f32 0.0, %v4932
    %4934 = vmatprep.mubr.f32.mxu0 0.0
    %4935 = vmatmul.mubr.f32.gmra.mxu0 %v4793
    %v4936 = vpop.f32.mrf.mxu0
    %v4937 = vadd.f32 0.0, %v4936
    %v4938 = vpop.f32.mrf.mxu0
    %v4939 = vadd.f32 0.0, %v4938
    %4940 = vmatprep.mubr.f32.mxu0 0.0
    %4941 = vmatmul.mubr.f32.gmra.mxu0 %v4796
    %v4942 = vpop.f32.mrf.mxu0
    %v4943 = vadd.f32 0.0, %v4942
    %v4944 = vpop.f32.mrf.mxu0
    %v4945 = vadd.f32 0.0, %v4944
    %4946 = vmatprep.mubr.f32.mxu0 0.0
    %4947 = vmatmul.mubr.f32.gmra.mxu0 %v4799
    %v4948 = vpop.f32.mrf.mxu0
    %v4949 = vadd.f32 0.0, %v4948
    %v4950 = vpop.f32.mrf.mxu0
    %v4951 = vadd.f32 0.0, %v4950
    %4952 = vmatprep.mubr.f32.mxu0 0.0
    %4953 = vmatmul.mubr.f32.gmra.mxu0 %v4802
    %v4954 = vpop.f32.mrf.mxu0
    %v4955 = vadd.f32 0.0, %v4954
    %v4956 = vpop.f32.mrf.mxu0
    %v4957 = vadd.f32 0.0, %v4956
    %4958 = vmatprep.mubr.f32.mxu0 0.0
    %4959 = vmatmul.mubr.f32.gmra.mxu0 %v4805
    %v4960 = vpop.f32.mrf.mxu0
    %v4961 = vadd.f32 0.0, %v4960
    %v4962 = vpop.f32.mrf.mxu0
    %v4963 = vadd.f32 0.0, %v4962
    %4964 = vmatprep.mubr.f32.mxu0 0.0
    %4965 = vmatmul.mubr.f32.gmra.mxu0 %v4808
    %v4966 = vpop.f32.mrf.mxu0
    %v4967 = vadd.f32 0.0, %v4966
    %v4968 = vpop.f32.mrf.mxu0
    %v4969 = vadd.f32 0.0, %v4968
    %4970 = vmatprep.mubr.f32.mxu0 0.0
    %4971 = vmatmul.mubr.f32.gmra.mxu0 %v4811
    %v4972 = vpop.f32.mrf.mxu0
    %v4973 = vadd.f32 0.0, %v4972
    %v4974 = vpop.f32.mrf.mxu0
    %v4975 = vadd.f32 0.0, %v4974
    %4976 = vmatprep.mubr.f32.mxu0 0.0
    %4977 = vmatmul.mubr.f32.gmra.mxu0 %v4814
    %v4978 = vpop.f32.mrf.mxu0
    %v4979 = vadd.f32 0.0, %v4978
    %v4980 = vpop.f32.mrf.mxu0
    %v4981 = vadd.f32 0.0, %v4980
    %4982 = vmatprep.mubr.f32.mxu0 0.0
    %4983 = vmatmul.mubr.f32.gmra.mxu0 %v4817
    %v4984 = vpop.f32.mrf.mxu0
    %v4985 = vadd.f32 0.0, %v4984
    %v4986 = vpop.f32.mrf.mxu0
    %v4987 = vadd.f32 0.0, %v4986
    %4988 = vmatprep.mubr.f32.mxu0 0.0
    %4989 = vmatmul.mubr.f32.gmra.mxu0 %v4820
    %v4990 = vpop.f32.mrf.mxu0
    %v4991 = vadd.f32 0.0, %v4990
    %v4992 = vpop.f32.mrf.mxu0
    %v4993 = vadd.f32 0.0, %v4992
    %4994 = vmatprep.mubr.f32.mxu0 0.0
    %4995 = vmatmul.mubr.f32.gmra.mxu0 %v4823
    %v4996 = vpop.f32.mrf.mxu0
    %v4997 = vadd.f32 0.0, %v4996
    %v4998 = vpop.f32.mrf.mxu0
    %v4999 = vadd.f32 0.0, %v4998
    %5000 = vmatprep.mubr.f32.mxu0 0.0
    %5001 = vmatmul.mubr.f32.gmra.mxu0 %v4826
    %v5002 = vpop.f32.mrf.mxu0
    %v5003 = vadd.f32 0.0, %v5002
    %v5004 = vpop.f32.mrf.mxu0
    %v5005 = vadd.f32 0.0, %v5004
    %5006 = vmatprep.mubr.f32.mxu0 0.0
    %5007 = vmatmul.mubr.f32.gmra.mxu0 %v4829
    %v5008 = vpop.f32.mrf.mxu0
    %v5009 = vadd.f32 0.0, %v5008
    %v5010 = vpop.f32.mrf.mxu0
    %v5011 = vadd.f32 0.0, %v5010
    %5012 = vmatprep.mubr.f32.mxu0 0.0
    %5013 = vmatmul.mubr.f32.gmra.mxu0 %v4832
    %v5014 = vpop.f32.mrf.mxu0
    %v5015 = vadd.f32 0.0, %v5014
    %v5016 = vpop.f32.mrf.mxu0
    %v5017 = vadd.f32 0.0, %v5016
    %5018 = vmatprep.mubr.f32.mxu0 0.0
    %5019 = vmatmul.mubr.f32.gmra.mxu0 %v4835
    %v5020 = vpop.f32.mrf.mxu0
    %v5021 = vadd.f32 0.0, %v5020
    %v5022 = vpop.f32.mrf.mxu0
    %v5023 = vadd.f32 0.0, %v5022
    %5024 = vmatprep.mubr.f32.mxu0 0.0
    %5025 = vmatmul.mubr.f32.gmra.mxu0 %v4838
    %v5026 = vpop.f32.mrf.mxu0
    %v5027 = vadd.f32 0.0, %v5026
    %v5028 = vpop.f32.mrf.mxu0
    %v5029 = vadd.f32 0.0, %v5028
    %5030 = vmatprep.mubr.f32.mxu0 0.0
    %5031 = vmatmul.mubr.f32.gmra.mxu0 %v4841
    %v5032 = vpop.f32.mrf.mxu0
    %v5033 = vadd.f32 0.0, %v5032
    %v5034 = vpop.f32.mrf.mxu0
    %v5035 = vadd.f32 0.0, %v5034
    %5036 = vmatprep.mubr.f32.mxu0 0.0
    %5037 = vmatmul.mubr.f32.gmra.mxu0 %v4844
    %v5038 = vpop.f32.mrf.mxu0
    %v5039 = vadd.f32 0.0, %v5038
    %v5040 = vpop.f32.mrf.mxu0
    %v5041 = vadd.f32 0.0, %v5040
    %5042 = vmatprep.mubr.f32.mxu0 0.0
    %5043 = vmatmul.mubr.f32.gmra.mxu0 %v4847
    %v5044 = vpop.f32.mrf.mxu0
    %v5045 = vadd.f32 0.0, %v5044
    %v5046 = vpop.f32.mrf.mxu0
    %v5047 = vadd.f32 0.0, %v5046
    %5048 = vmatprep.mubr.f32.mxu0 0.0
    %5049 = vmatmul.mubr.f32.gmra.mxu0 %v4850
    %v5050 = vpop.f32.mrf.mxu0
    %v5051 = vadd.f32 0.0, %v5050
    %v5052 = vpop.f32.mrf.mxu0
    %v5053 = vadd.f32 0.0, %v5052
    %5054 = vmatprep.mubr.f32.mxu0 0.0
    %5055 = vmatmul.mubr.f32.gmra.mxu0 %v4853
    %v5056 = vpop.f32.mrf.mxu0
    %v5057 = vadd.f32 0.0, %v5056
    %v5058 = vpop.f32.mrf.mxu0
    %v5059 = vadd.f32 0.0, %v5058
    %5060 = vmatprep.mubr.f32.mxu0 0.0
    %5061 = vmatmul.mubr.f32.gmra.mxu0 %v4856
    %v5062 = vpop.f32.mrf.mxu0
    %v5063 = vadd.f32 0.0, %v5062
    %v5064 = vpop.f32.mrf.mxu0
    %v5065 = vadd.f32 0.0, %v5064
    %5066 = vdwg.mxu0
    %v5067 = vmul.f32 %v4925, %v129
    %v5068 = vmul.f32 %v4927, %v130
    %v5069 = vmul.f32 %v4931, %v131
    %v5070 = vmul.f32 %v4933, %v132
    %v5071 = vmul.f32 %v4937, %v133
    %v5072 = vmul.f32 %v4939, %v134
    %v5073 = vmul.f32 %v4943, %v135
    %v5074 = vmul.f32 %v4945, %v136
    %v5075 = vmul.f32 %v4949, %v137
    %v5076 = vmul.f32 %v4951, %v138
    %v5077 = vmul.f32 %v4955, %v139
    %v5078 = vmul.f32 %v4957, %v140
    %v5079 = vmul.f32 %v4961, %v141
    %v5080 = vmul.f32 %v4963, %v142
    %v5081 = vmul.f32 %v4967, %v143
    %v5082 = vmul.f32 %v4969, %v144
    %v5083 = vmul.f32 %v4973, %v145
    %v5084 = vmul.f32 %v4975, %v146
    %v5085 = vmul.f32 %v4979, %v147
    %v5086 = vmul.f32 %v4981, %v148
    %v5087 = vmul.f32 %v4985, %v149
    %v5088 = vmul.f32 %v4987, %v150
    %v5089 = vmul.f32 %v4991, %v151
    %v5090 = vmul.f32 %v4993, %v152
    %v5091 = vmul.f32 %v4997, %v153
    %v5092 = vmul.f32 %v4999, %v154
    %v5093 = vmul.f32 %v5003, %v155
    %v5094 = vmul.f32 %v5005, %v156
    %v5095 = vmul.f32 %v5009, %v157
    %v5096 = vmul.f32 %v5011, %v158
    %v5097 = vmul.f32 %v5015, %v159
    %v5098 = vmul.f32 %v5017, %v160
    %v5099 = vmul.f32 %v5021, %v161
    %v5100 = vmul.f32 %v5023, %v162
    %v5101 = vmul.f32 %v5027, %v163
    %v5102 = vmul.f32 %v5029, %v164
    %v5103 = vmul.f32 %v5033, %v165
    %v5104 = vmul.f32 %v5035, %v166
    %v5105 = vmul.f32 %v5039, %v167
    %v5106 = vmul.f32 %v5041, %v168
    %v5107 = vmul.f32 %v5045, %v169
    %v5108 = vmul.f32 %v5047, %v170
    %v5109 = vmul.f32 %v5051, %v171
    %v5110 = vmul.f32 %v5053, %v172
    %v5111 = vmul.f32 %v5057, %v173
    %v5112 = vmul.f32 %v5059, %v174
    %v5113 = vmul.f32 %v5063, %v175
    %v5114 = vmul.f32 %v5065, %v176
    %5115 = vmatprep.subr.mxu0 %v5098
    %5116 = vmatpush1.msra.mxu0 %v5097
    %5117 = vmatprep.subr.mxu0 %v5096
    %5118 = vmatpush1.msra.mxu0 %v5095
    %5119 = vmatprep.subr.mxu0 %v5094
    %5120 = vmatpush1.msra.mxu0 %v5093
    %5121 = vmatprep.subr.mxu0 %v5092
    %5122 = vmatpush1.msra.mxu0 %v5091
    %5123 = vmatprep.subr.mxu0 %v5090
    %5124 = vmatpush1.msra.mxu0 %v5089
    %5125 = vmatprep.subr.mxu0 %v5088
    %5126 = vmatpush1.msra.mxu0 %v5087
    %5127 = vmatprep.subr.mxu0 %v5086
    %5128 = vmatpush1.msra.mxu0 %v5085
    %5129 = vmatprep.subr.mxu0 %v5084
    %5130 = vmatpush1.msra.mxu0 %v5083
    %5131 = vmatprep.subr.mxu0 %v5082
    %5132 = vmatpush1.msra.mxu0 %v5081
    %5133 = vmatprep.subr.mxu0 %v5080
    %5134 = vmatpush1.msra.mxu0 %v5079
    %5135 = vmatprep.subr.mxu0 %v5078
    %5136 = vmatpush1.msra.mxu0 %v5077
    %5137 = vmatprep.subr.mxu0 %v5076
    %5138 = vmatpush1.msra.mxu0 %v5075
    %5139 = vmatprep.subr.mxu0 %v5074
    %5140 = vmatpush1.msra.mxu0 %v5073
    %5141 = vmatprep.subr.mxu0 %v5072
    %5142 = vmatpush1.msra.mxu0 %v5071
    %5143 = vmatprep.subr.mxu0 %v5070
    %5144 = vmatpush1.msra.mxu0 %v5069
    %5145 = vmatprep.subr.mxu0 %v5068
    %5146 = vmatpush1.msra.mxu0 %v5067
    %5147 = vmatprep.subr.mxu0 0.0
    %5148 = vmatpush2.msra.mxu0 0.0
    %5149 = vmatprep.subr.mxu0 0.0
    %5150 = vmatpush2.msra.mxu0 0.0
    %5151 = vmatprep.subr.mxu0 0.0
    %5152 = vmatpush2.msra.mxu0 0.0
    %5153 = vmatprep.subr.mxu0 0.0
    %5154 = vmatpush2.msra.mxu0 0.0
    %5155 = vmatprep.subr.mxu0 0.0
    %5156 = vmatpush2.msra.mxu0 0.0
    %5157 = vmatprep.subr.mxu0 0.0
    %5158 = vmatpush2.msra.mxu0 0.0
    %5159 = vmatprep.subr.mxu0 0.0
    %5160 = vmatpush2.msra.mxu0 0.0
    %5161 = vmatprep.subr.mxu0 0.0
    %5162 = vmatpush2.msra.mxu0 0.0
    %5163 = vmatprep.subr.mxu0 %v5114
    %5164 = vmatpush2.msra.mxu0 %v5113
    %5165 = vmatprep.subr.mxu0 %v5112
    %5166 = vmatpush2.msra.mxu0 %v5111
    %5167 = vmatprep.subr.mxu0 %v5110
    %5168 = vmatpush2.msra.mxu0 %v5109
    %5169 = vmatprep.subr.mxu0 %v5108
    %5170 = vmatpush2.msra.mxu0 %v5107
    %5171 = vmatprep.subr.mxu0 %v5106
    %5172 = vmatpush2.msra.mxu0 %v5105
    %5173 = vmatprep.subr.mxu0 %v5104
    %5174 = vmatpush2.msra.mxu0 %v5103
    %5175 = vmatprep.subr.mxu0 %v5102
    %5176 = vmatpush2.msra.mxu0 %v5101
    %5177 = vmatprep.subr.mxu0 %v5100
    %5178 = vmatpush2.msra.mxu0 %v5099
    %5179 = vmatprep.mubr.f32.mxu0 %v1098
    %5180 = vmatmul.mubr.f32.gmra.mxu0 %v127
    %v5181 = vpop.f32.mrf.mxu0
    %v5182 = vadd.f32 0.0, %v5181
    %v5183 = vpop.f32.mrf.mxu0
    %v5184 = vadd.f32 0.0, %v5183
    %5185 = vdwg.mxu0
    %v5187 = vsel %vm563, %v5184, 0
    %5189 = vmatprep.subr.mxu0 0.0
    %5190 = vmatpush1.xpose.msra.mxu0 0.0
    %5191 = vmatprep.subr.mxu0 0.0
    %5192 = vmatpush1.xpose.msra.mxu0 0.0
    %5193 = vmatprep.subr.mxu0 0.0
    %5194 = vmatpush1.xpose.msra.mxu0 0.0
    %5195 = vmatprep.subr.mxu0 0.0
    %5196 = vmatpush1.xpose.msra.mxu0 0.0
    %5197 = vmatprep.subr.mxu0 0.0
    %5198 = vmatpush1.xpose.msra.mxu0 0.0
    %5199 = vmatprep.subr.mxu0 0.0
    %5200 = vmatpush1.xpose.msra.mxu0 0.0
    %5201 = vmatprep.subr.mxu0 0.0
    %5202 = vmatpush1.xpose.msra.mxu0 0.0
    %5203 = vmatprep.subr.mxu0 0.0
    %5204 = vmatpush1.xpose.msra.mxu0 0.0
    %5205 = vmatprep.subr.mxu0 0.0
    %5206 = vmatpush1.xpose.msra.mxu0 0.0
    %5207 = vmatprep.subr.mxu0 0.0
    %5208 = vmatpush1.xpose.msra.mxu0 0.0
    %5209 = vmatprep.subr.mxu0 0.0
    %5210 = vmatpush1.xpose.msra.mxu0 0.0
    %5211 = vmatprep.subr.mxu0 0.0
    %5212 = vmatpush1.xpose.msra.mxu0 0.0
    %5213 = vmatprep.subr.mxu0 0.0
    %5214 = vmatpush1.xpose.msra.mxu0 0.0
    %5215 = vmatprep.subr.mxu0 0.0
    %5216 = vmatpush1.xpose.msra.mxu0 0.0
    %5217 = vmatprep.subr.mxu0 0.0
    %5218 = vmatpush1.xpose.msra.mxu0 0.0
    %5219 = vmatprep.subr.mxu0 %v1098
    %5220 = vmatpush1.xpose.msra.mxu0 %v127
    %5221 = vmatprep.subr.mxu0 0.0
    %5222 = vmatpush2.xpose.msra.mxu0 0.0
    %5223 = vmatprep.subr.mxu0 0.0
    %5224 = vmatpush2.xpose.msra.mxu0 0.0
    %5225 = vmatprep.subr.mxu0 0.0
    %5226 = vmatpush2.xpose.msra.mxu0 0.0
    %5227 = vmatprep.subr.mxu0 0.0
    %5228 = vmatpush2.xpose.msra.mxu0 0.0
    %5229 = vmatprep.subr.mxu0 0.0
    %5230 = vmatpush2.xpose.msra.mxu0 0.0
    %5231 = vmatprep.subr.mxu0 0.0
    %5232 = vmatpush2.xpose.msra.mxu0 0.0
    %5233 = vmatprep.subr.mxu0 0.0
    %5234 = vmatpush2.xpose.msra.mxu0 0.0
    %5235 = vmatprep.subr.mxu0 0.0
    %5236 = vmatpush2.xpose.msra.mxu0 0.0
    %5237 = vmatprep.subr.mxu0 0.0
    %5238 = vmatpush2.xpose.msra.mxu0 0.0
    %5239 = vmatprep.subr.mxu0 0.0
    %5240 = vmatpush2.xpose.msra.mxu0 0.0
    %5241 = vmatprep.subr.mxu0 0.0
    %5242 = vmatpush2.xpose.msra.mxu0 0.0
    %5243 = vmatprep.subr.mxu0 0.0
    %5244 = vmatpush2.xpose.msra.mxu0 0.0
    %5245 = vmatprep.subr.mxu0 0.0
    %5246 = vmatpush2.xpose.msra.mxu0 0.0
    %5247 = vmatprep.subr.mxu0 0.0
    %5248 = vmatpush2.xpose.msra.mxu0 0.0
    %5249 = vmatprep.subr.mxu0 0.0
    %5250 = vmatpush2.xpose.msra.mxu0 0.0
    %5251 = vmatprep.subr.mxu0 0.0
    %5252 = vmatpush2.xpose.msra.mxu0 0.0
    %5253 = vmatprep.mubr.f32.mxu0 %v5187
    %5254 = vmatmul.mubr.f32.gmra.mxu0 %v5182
    %v5255 = vpop.f32.mrf.mxu0
    %v5256 = vadd.f32 0.0, %v5255
    %v5257 = vpop.f32.mrf.mxu0
    %5258 = vdwg.mxu0
    %v5259 = vsel %vm767, %v5256, -inf
    %5260 = vmax.xlane.f32.xlu0 %v5259
    %v5261 = vpop.xlane.xlu0 %5260
    %v5262 = vsub.f32 %v5256, %v5261
    %v5263 = vmul.f32 %v5262, 1.442695
    %v5264 = vpow.pop %v5263
    %v5265 = vsel %vm767, %v5264, 0.0
    %5266 = vadd.xlane.f32.xlu0 %v5265
    %v5267 = vpop.xlane.xlu0 %5266
    %v5268 = vrcp.pop %v5267
    %v5269 = vmul.f32 %v5264, %v5268
    %v5271 = vsel %vm767, %v5269, 0
    %5273 = vmatprep.subr.mxu0 0.0
    %5274 = vmatpush1.msra.mxu0 0.0
    %5275 = vmatprep.subr.mxu0 0.0
    %5276 = vmatpush1.msra.mxu0 0.0
    %5277 = vmatprep.subr.mxu0 0.0
    %5278 = vmatpush1.msra.mxu0 0.0
    %5279 = vmatprep.subr.mxu0 0.0
    %5280 = vmatpush1.msra.mxu0 0.0
    %5281 = vmatprep.subr.mxu0 0.0
    %5282 = vmatpush1.msra.mxu0 0.0
    %5283 = vmatprep.subr.mxu0 0.0
    %5284 = vmatpush1.msra.mxu0 0.0
    %5285 = vmatprep.subr.mxu0 0.0
    %5286 = vmatpush1.msra.mxu0 0.0
    %5287 = vmatprep.subr.mxu0 0.0
    %5288 = vmatpush1.msra.mxu0 0.0
    %5289 = vmatprep.subr.mxu0 0.0
    %5290 = vmatpush1.msra.mxu0 0.0
    %5291 = vmatprep.subr.mxu0 0.0
    %5292 = vmatpush1.msra.mxu0 0.0
    %5293 = vmatprep.subr.mxu0 0.0
    %5294 = vmatpush1.msra.mxu0 0.0
    %5295 = vmatprep.subr.mxu0 0.0
    %5296 = vmatpush1.msra.mxu0 0.0
    %5297 = vmatprep.subr.mxu0 0.0
    %5298 = vmatpush1.msra.mxu0 0.0
    %5299 = vmatprep.subr.mxu0 0.0
    %5300 = vmatpush1.msra.mxu0 0.0
    %5301 = vmatprep.subr.mxu0 0.0
    %5302 = vmatpush1.msra.mxu0 0.0
    %5303 = vmatprep.subr.mxu0 %v128
    %5304 = vmatpush1.msra.mxu0 %v127
    %5305 = vmatprep.subr.mxu0 0.0
    %5306 = vmatpush2.msra.mxu0 0.0
    %5307 = vmatprep.subr.mxu0 0.0
    %5308 = vmatpush2.msra.mxu0 0.0
    %5309 = vmatprep.subr.mxu0 0.0
    %5310 = vmatpush2.msra.mxu0 0.0
    %5311 = vmatprep.subr.mxu0 0.0
    %5312 = vmatpush2.msra.mxu0 0.0
    %5313 = vmatprep.subr.mxu0 0.0
    %5314 = vmatpush2.msra.mxu0 0.0
    %5315 = vmatprep.subr.mxu0 0.0
    %5316 = vmatpush2.msra.mxu0 0.0
    %5317 = vmatprep.subr.mxu0 0.0
    %5318 = vmatpush2.msra.mxu0 0.0
    %5319 = vmatprep.subr.mxu0 0.0
    %5320 = vmatpush2.msra.mxu0 0.0
    %5321 = vmatprep.subr.mxu0 0.0
    %5322 = vmatpush2.msra.mxu0 0.0
    %5323 = vmatprep.subr.mxu0 0.0
    %5324 = vmatpush2.msra.mxu0 0.0
    %5325 = vmatprep.subr.mxu0 0.0
    %5326 = vmatpush2.msra.mxu0 0.0
    %5327 = vmatprep.subr.mxu0 0.0
    %5328 = vmatpush2.msra.mxu0 0.0
    %5329 = vmatprep.subr.mxu0 0.0
    %5330 = vmatpush2.msra.mxu0 0.0
    %5331 = vmatprep.subr.mxu0 0.0
    %5332 = vmatpush2.msra.mxu0 0.0
    %5333 = vmatprep.subr.mxu0 0.0
    %5334 = vmatpush2.msra.mxu0 0.0
    %5335 = vmatprep.subr.mxu0 0.0
    %5336 = vmatpush2.msra.mxu0 0.0
    %5337 = vmatprep.mubr.f32.mxu0 0.0
    %5338 = vmatmul.mubr.f32.gmra.mxu0 %v5271
    %v5339 = vpop.f32.mrf.mxu0
    %v5340 = vadd.f32 0.0, %v5339
    %v5341 = vpop.f32.mrf.mxu0
    %v5342 = vadd.f32 0.0, %v5341
    %5343 = vdwg.mxu0
    %5344 = vxpose.xlu0.b32.start [1/16] %v3572, 128
    %5345 = vxpose.xlu0.b32.cont [2/16] 0.0, 128
    %5346 = vxpose.xlu0.b32.cont [3/16] 0.0, 128
    %5347 = vxpose.xlu0.b32.cont [4/16] 0.0, 128
    %5348 = vxpose.xlu0.b32.cont [5/16] 0.0, 128
    %5349 = vxpose.xlu0.b32.cont [6/16] 0.0, 128
    %5350 = vxpose.xlu0.b32.cont [7/16] 0.0, 128
    %5351 = vxpose.xlu0.b32.cont [8/16] 0.0, 128
    %5352 = vxpose.xlu0.b32.cont [9/16] 0.0, 128
    %5353 = vxpose.xlu0.b32.cont [10/16] 0.0, 128
    %5354 = vxpose.xlu0.b32.cont [11/16] 0.0, 128
    %5355 = vxpose.xlu0.b32.cont [12/16] 0.0, 128
    %5356 = vxpose.xlu0.b32.cont [13/16] 0.0, 128
    %5357 = vxpose.xlu0.b32.cont [14/16] 0.0, 128
    %5358 = vxpose.xlu0.b32.cont [15/16] 0.0, 128
    %5359 = vxpose.xlu0.b32.end [16/16] 0.0, 128
    %v5360 = vpop.trf.xlu0
    %v5361 = vpop.trf.xlu0
    %v5362 = vpop.trf.xlu0
    %v5363 = vpop.trf.xlu0
    %v5364 = vpop.trf.xlu0
    %v5365 = vpop.trf.xlu0
    %v5366 = vpop.trf.xlu0
    %v5367 = vpop.trf.xlu0
    %v5368 = vpop.trf.xlu0
    %v5369 = vpop.trf.xlu0
    %v5370 = vpop.trf.xlu0
    %v5371 = vpop.trf.xlu0
    %v5372 = vpop.trf.xlu0
    %v5373 = vpop.trf.xlu0
    %v5374 = vpop.trf.xlu0
    %v5375 = vpop.trf.xlu0
    %5376 = vxpose.xlu0.b32.start [1/16] %v3612, 128
    %5377 = vxpose.xlu0.b32.cont [2/16] 0.0, 128
    %5378 = vxpose.xlu0.b32.cont [3/16] 0.0, 128
    %5379 = vxpose.xlu0.b32.cont [4/16] 0.0, 128
    %5380 = vxpose.xlu0.b32.cont [5/16] 0.0, 128
    %5381 = vxpose.xlu0.b32.cont [6/16] 0.0, 128
    %5382 = vxpose.xlu0.b32.cont [7/16] 0.0, 128
    %5383 = vxpose.xlu0.b32.cont [8/16] 0.0, 128
    %5384 = vxpose.xlu0.b32.cont [9/16] 0.0, 128
    %5385 = vxpose.xlu0.b32.cont [10/16] 0.0, 128
    %5386 = vxpose.xlu0.b32.cont [11/16] 0.0, 128
    %5387 = vxpose.xlu0.b32.cont [12/16] 0.0, 128
    %5388 = vxpose.xlu0.b32.cont [13/16] 0.0, 128
    %5389 = vxpose.xlu0.b32.cont [14/16] 0.0, 128
    %5390 = vxpose.xlu0.b32.cont [15/16] 0.0, 128
    %5391 = vxpose.xlu0.b32.end [16/16] 0.0, 128
    %v5392 = vpop.trf.xlu0
    %v5393 = vpop.trf.xlu0
    %v5394 = vpop.trf.xlu0
    %v5395 = vpop.trf.xlu0
    %v5396 = vpop.trf.xlu0
    %v5397 = vpop.trf.xlu0
    %v5398 = vpop.trf.xlu0
    %v5399 = vpop.trf.xlu0
    %v5400 = vpop.trf.xlu0
    %v5401 = vpop.trf.xlu0
    %v5402 = vpop.trf.xlu0
    %v5403 = vpop.trf.xlu0
    %v5404 = vpop.trf.xlu0
    %v5405 = vpop.trf.xlu0
    %v5406 = vpop.trf.xlu0
    %v5407 = vpop.trf.xlu0
    %v5409 = vsel %vm767, %v5360, 0
    %v5412 = vsel %vm767, %v5361, 0
    %v5415 = vsel %vm767, %v5362, 0
    %v5418 = vsel %vm767, %v5363, 0
    %v5421 = vsel %vm767, %v5364, 0
    %v5424 = vsel %vm767, %v5365, 0
    %v5427 = vsel %vm767, %v5366, 0
    %v5430 = vsel %vm767, %v5367, 0
    %v5433 = vsel %vm767, %v5368, 0
    %v5436 = vsel %vm767, %v5369, 0
    %v5439 = vsel %vm767, %v5370, 0
    %v5442 = vsel %vm767, %v5371, 0
    %v5445 = vsel %vm767, %v5372, 0
    %v5448 = vsel %vm767, %v5373, 0
    %v5451 = vsel %vm767, %v5374, 0
    %v5454 = vsel %vm767, %v5375, 0
    %v5457 = vsel %vm767, %v5392, 0
    %v5460 = vsel %vm767, %v5393, 0
    %v5463 = vsel %vm767, %v5394, 0
    %v5466 = vsel %vm767, %v5395, 0
    %v5469 = vsel %vm767, %v5396, 0
    %v5472 = vsel %vm767, %v5397, 0
    %v5475 = vsel %vm767, %v5398, 0
    %v5478 = vsel %vm767, %v5399, 0
    %5480 = vmatprep.subr.mxu0 0.0
    %5481 = vmatpush1.msra.mxu0 0.0
    %5482 = vmatprep.subr.mxu0 0.0
    %5483 = vmatpush1.msra.mxu0 0.0
    %5484 = vmatprep.subr.mxu0 0.0
    %5485 = vmatpush1.msra.mxu0 0.0
    %5486 = vmatprep.subr.mxu0 0.0
    %5487 = vmatpush1.msra.mxu0 0.0
    %5488 = vmatprep.subr.mxu0 0.0
    %5489 = vmatpush1.msra.mxu0 0.0
    %5490 = vmatprep.subr.mxu0 0.0
    %5491 = vmatpush1.msra.mxu0 0.0
    %5492 = vmatprep.subr.mxu0 0.0
    %5493 = vmatpush1.msra.mxu0 0.0
    %5494 = vmatprep.subr.mxu0 0.0
    %5495 = vmatpush1.msra.mxu0 0.0
    %5496 = vmatprep.subr.mxu0 0.0
    %5497 = vmatpush1.msra.mxu0 0.0
    %5498 = vmatprep.subr.mxu0 0.0
    %5499 = vmatpush1.msra.mxu0 0.0
    %5500 = vmatprep.subr.mxu0 0.0
    %5501 = vmatpush1.msra.mxu0 0.0
    %5502 = vmatprep.subr.mxu0 0.0
    %5503 = vmatpush1.msra.mxu0 0.0
    %5504 = vmatprep.subr.mxu0 0.0
    %5505 = vmatpush1.msra.mxu0 0.0
    %5506 = vmatprep.subr.mxu0 0.0
    %5507 = vmatpush1.msra.mxu0 0.0
    %5508 = vmatprep.subr.mxu0 0.0
    %5509 = vmatpush1.msra.mxu0 0.0
    %5510 = vmatprep.subr.mxu0 %v128
    %5511 = vmatpush1.msra.mxu0 %v127
    %5512 = vmatprep.subr.mxu0 0.0
    %5513 = vmatpush2.msra.mxu0 0.0
    %5514 = vmatprep.subr.mxu0 0.0
    %5515 = vmatpush2.msra.mxu0 0.0
    %5516 = vmatprep.subr.mxu0 0.0
    %5517 = vmatpush2.msra.mxu0 0.0
    %5518 = vmatprep.subr.mxu0 0.0
    %5519 = vmatpush2.msra.mxu0 0.0
    %5520 = vmatprep.subr.mxu0 0.0
    %5521 = vmatpush2.msra.mxu0 0.0
    %5522 = vmatprep.subr.mxu0 0.0
    %5523 = vmatpush2.msra.mxu0 0.0
    %5524 = vmatprep.subr.mxu0 0.0
    %5525 = vmatpush2.msra.mxu0 0.0
    %5526 = vmatprep.subr.mxu0 0.0
    %5527 = vmatpush2.msra.mxu0 0.0
    %5528 = vmatprep.subr.mxu0 0.0
    %5529 = vmatpush2.msra.mxu0 0.0
    %5530 = vmatprep.subr.mxu0 0.0
    %5531 = vmatpush2.msra.mxu0 0.0
    %5532 = vmatprep.subr.mxu0 0.0
    %5533 = vmatpush2.msra.mxu0 0.0
    %5534 = vmatprep.subr.mxu0 0.0
    %5535 = vmatpush2.msra.mxu0 0.0
    %5536 = vmatprep.subr.mxu0 0.0
    %5537 = vmatpush2.msra.mxu0 0.0
    %5538 = vmatprep.subr.mxu0 0.0
    %5539 = vmatpush2.msra.mxu0 0.0
    %5540 = vmatprep.subr.mxu0 0.0
    %5541 = vmatpush2.msra.mxu0 0.0
    %5542 = vmatprep.subr.mxu0 0.0
    %5543 = vmatpush2.msra.mxu0 0.0
    %5544 = vmatprep.mubr.f32.mxu0 0.0
    %5545 = vmatmul.mubr.f32.gmra.mxu0 %v5409
    %v5546 = vpop.f32.mrf.mxu0
    %v5547 = vadd.f32 0.0, %v5546
    %v5548 = vpop.f32.mrf.mxu0
    %v5549 = vadd.f32 0.0, %v5548
    %5550 = vmatprep.mubr.f32.mxu0 0.0
    %5551 = vmatmul.mubr.f32.gmra.mxu0 %v5412
    %v5552 = vpop.f32.mrf.mxu0
    %v5553 = vadd.f32 0.0, %v5552
    %v5554 = vpop.f32.mrf.mxu0
    %v5555 = vadd.f32 0.0, %v5554
    %5556 = vmatprep.mubr.f32.mxu0 0.0
    %5557 = vmatmul.mubr.f32.gmra.mxu0 %v5415
    %v5558 = vpop.f32.mrf.mxu0
    %v5559 = vadd.f32 0.0, %v5558
    %v5560 = vpop.f32.mrf.mxu0
    %v5561 = vadd.f32 0.0, %v5560
    %5562 = vmatprep.mubr.f32.mxu0 0.0
    %5563 = vmatmul.mubr.f32.gmra.mxu0 %v5418
    %v5564 = vpop.f32.mrf.mxu0
    %v5565 = vadd.f32 0.0, %v5564
    %v5566 = vpop.f32.mrf.mxu0
    %v5567 = vadd.f32 0.0, %v5566
    %5568 = vmatprep.mubr.f32.mxu0 0.0
    %5569 = vmatmul.mubr.f32.gmra.mxu0 %v5421
    %v5570 = vpop.f32.mrf.mxu0
    %v5571 = vadd.f32 0.0, %v5570
    %v5572 = vpop.f32.mrf.mxu0
    %v5573 = vadd.f32 0.0, %v5572
    %5574 = vmatprep.mubr.f32.mxu0 0.0
    %5575 = vmatmul.mubr.f32.gmra.mxu0 %v5424
    %v5576 = vpop.f32.mrf.mxu0
    %v5577 = vadd.f32 0.0, %v5576
    %v5578 = vpop.f32.mrf.mxu0
    %v5579 = vadd.f32 0.0, %v5578
    %5580 = vmatprep.mubr.f32.mxu0 0.0
    %5581 = vmatmul.mubr.f32.gmra.mxu0 %v5427
    %v5582 = vpop.f32.mrf.mxu0
    %v5583 = vadd.f32 0.0, %v5582
    %v5584 = vpop.f32.mrf.mxu0
    %v5585 = vadd.f32 0.0, %v5584
    %5586 = vmatprep.mubr.f32.mxu0 0.0
    %5587 = vmatmul.mubr.f32.gmra.mxu0 %v5430
    %v5588 = vpop.f32.mrf.mxu0
    %v5589 = vadd.f32 0.0, %v5588
    %v5590 = vpop.f32.mrf.mxu0
    %v5591 = vadd.f32 0.0, %v5590
    %5592 = vmatprep.mubr.f32.mxu0 0.0
    %5593 = vmatmul.mubr.f32.gmra.mxu0 %v5433
    %v5594 = vpop.f32.mrf.mxu0
    %v5595 = vadd.f32 0.0, %v5594
    %v5596 = vpop.f32.mrf.mxu0
    %v5597 = vadd.f32 0.0, %v5596
    %5598 = vmatprep.mubr.f32.mxu0 0.0
    %5599 = vmatmul.mubr.f32.gmra.mxu0 %v5436
    %v5600 = vpop.f32.mrf.mxu0
    %v5601 = vadd.f32 0.0, %v5600
    %v5602 = vpop.f32.mrf.mxu0
    %v5603 = vadd.f32 0.0, %v5602
    %5604 = vmatprep.mubr.f32.mxu0 0.0
    %5605 = vmatmul.mubr.f32.gmra.mxu0 %v5439
    %v5606 = vpop.f32.mrf.mxu0
    %v5607 = vadd.f32 0.0, %v5606
    %v5608 = vpop.f32.mrf.mxu0
    %v5609 = vadd.f32 0.0, %v5608
    %5610 = vmatprep.mubr.f32.mxu0 0.0
    %5611 = vmatmul.mubr.f32.gmra.mxu0 %v5442
    %v5612 = vpop.f32.mrf.mxu0
    %v5613 = vadd.f32 0.0, %v5612
    %v5614 = vpop.f32.mrf.mxu0
    %v5615 = vadd.f32 0.0, %v5614
    %5616 = vmatprep.mubr.f32.mxu0 0.0
    %5617 = vmatmul.mubr.f32.gmra.mxu0 %v5445
    %v5618 = vpop.f32.mrf.mxu0
    %v5619 = vadd.f32 0.0, %v5618
    %v5620 = vpop.f32.mrf.mxu0
    %v5621 = vadd.f32 0.0, %v5620
    %5622 = vmatprep.mubr.f32.mxu0 0.0
    %5623 = vmatmul.mubr.f32.gmra.mxu0 %v5448
    %v5624 = vpop.f32.mrf.mxu0
    %v5625 = vadd.f32 0.0, %v5624
    %v5626 = vpop.f32.mrf.mxu0
    %v5627 = vadd.f32 0.0, %v5626
    %5628 = vmatprep.mubr.f32.mxu0 0.0
    %5629 = vmatmul.mubr.f32.gmra.mxu0 %v5451
    %v5630 = vpop.f32.mrf.mxu0
    %v5631 = vadd.f32 0.0, %v5630
    %v5632 = vpop.f32.mrf.mxu0
    %v5633 = vadd.f32 0.0, %v5632
    %5634 = vmatprep.mubr.f32.mxu0 0.0
    %5635 = vmatmul.mubr.f32.gmra.mxu0 %v5454
    %v5636 = vpop.f32.mrf.mxu0
    %v5637 = vadd.f32 0.0, %v5636
    %v5638 = vpop.f32.mrf.mxu0
    %v5639 = vadd.f32 0.0, %v5638
    %5640 = vmatprep.mubr.f32.mxu0 0.0
    %5641 = vmatmul.mubr.f32.gmra.mxu0 %v5457
    %v5642 = vpop.f32.mrf.mxu0
    %v5643 = vadd.f32 0.0, %v5642
    %v5644 = vpop.f32.mrf.mxu0
    %v5645 = vadd.f32 0.0, %v5644
    %5646 = vmatprep.mubr.f32.mxu0 0.0
    %5647 = vmatmul.mubr.f32.gmra.mxu0 %v5460
    %v5648 = vpop.f32.mrf.mxu0
    %v5649 = vadd.f32 0.0, %v5648
    %v5650 = vpop.f32.mrf.mxu0
    %v5651 = vadd.f32 0.0, %v5650
    %5652 = vmatprep.mubr.f32.mxu0 0.0
    %5653 = vmatmul.mubr.f32.gmra.mxu0 %v5463
    %v5654 = vpop.f32.mrf.mxu0
    %v5655 = vadd.f32 0.0, %v5654
    %v5656 = vpop.f32.mrf.mxu0
    %v5657 = vadd.f32 0.0, %v5656
    %5658 = vmatprep.mubr.f32.mxu0 0.0
    %5659 = vmatmul.mubr.f32.gmra.mxu0 %v5466
    %v5660 = vpop.f32.mrf.mxu0
    %v5661 = vadd.f32 0.0, %v5660
    %v5662 = vpop.f32.mrf.mxu0
    %v5663 = vadd.f32 0.0, %v5662
    %5664 = vmatprep.mubr.f32.mxu0 0.0
    %5665 = vmatmul.mubr.f32.gmra.mxu0 %v5469
    %v5666 = vpop.f32.mrf.mxu0
    %v5667 = vadd.f32 0.0, %v5666
    %v5668 = vpop.f32.mrf.mxu0
    %v5669 = vadd.f32 0.0, %v5668
    %5670 = vmatprep.mubr.f32.mxu0 0.0
    %5671 = vmatmul.mubr.f32.gmra.mxu0 %v5472
    %v5672 = vpop.f32.mrf.mxu0
    %v5673 = vadd.f32 0.0, %v5672
    %v5674 = vpop.f32.mrf.mxu0
    %v5675 = vadd.f32 0.0, %v5674
    %5676 = vmatprep.mubr.f32.mxu0 0.0
    %5677 = vmatmul.mubr.f32.gmra.mxu0 %v5475
    %v5678 = vpop.f32.mrf.mxu0
    %v5679 = vadd.f32 0.0, %v5678
    %v5680 = vpop.f32.mrf.mxu0
    %v5681 = vadd.f32 0.0, %v5680
    %5682 = vmatprep.mubr.f32.mxu0 0.0
    %5683 = vmatmul.mubr.f32.gmra.mxu0 %v5478
    %v5684 = vpop.f32.mrf.mxu0
    %v5685 = vadd.f32 0.0, %v5684
    %v5686 = vpop.f32.mrf.mxu0
    %v5687 = vadd.f32 0.0, %v5686
    %5688 = vdwg.mxu0
    %v5689 = vmul.f32 %v5547, %v129
    %v5690 = vmul.f32 %v5549, %v130
    %v5691 = vmul.f32 %v5553, %v131
    %v5692 = vmul.f32 %v5555, %v132
    %v5693 = vmul.f32 %v5559, %v133
    %v5694 = vmul.f32 %v5561, %v134
    %v5695 = vmul.f32 %v5565, %v135
    %v5696 = vmul.f32 %v5567, %v136
    %v5697 = vmul.f32 %v5571, %v137
    %v5698 = vmul.f32 %v5573, %v138
    %v5699 = vmul.f32 %v5577, %v139
    %v5700 = vmul.f32 %v5579, %v140
    %v5701 = vmul.f32 %v5583, %v141
    %v5702 = vmul.f32 %v5585, %v142
    %v5703 = vmul.f32 %v5589, %v143
    %v5704 = vmul.f32 %v5591, %v144
    %v5705 = vmul.f32 %v5595, %v145
    %v5706 = vmul.f32 %v5597, %v146
    %v5707 = vmul.f32 %v5601, %v147
    %v5708 = vmul.f32 %v5603, %v148
    %v5709 = vmul.f32 %v5607, %v149
    %v5710 = vmul.f32 %v5609, %v150
    %v5711 = vmul.f32 %v5613, %v151
    %v5712 = vmul.f32 %v5615, %v152
    %v5713 = vmul.f32 %v5619, %v153
    %v5714 = vmul.f32 %v5621, %v154
    %v5715 = vmul.f32 %v5625, %v155
    %v5716 = vmul.f32 %v5627, %v156
    %v5717 = vmul.f32 %v5631, %v157
    %v5718 = vmul.f32 %v5633, %v158
    %v5719 = vmul.f32 %v5637, %v159
    %v5720 = vmul.f32 %v5639, %v160
    %v5721 = vmul.f32 %v5643, %v161
    %v5722 = vmul.f32 %v5645, %v162
    %v5723 = vmul.f32 %v5649, %v163
    %v5724 = vmul.f32 %v5651, %v164
    %v5725 = vmul.f32 %v5655, %v165
    %v5726 = vmul.f32 %v5657, %v166
    %v5727 = vmul.f32 %v5661, %v167
    %v5728 = vmul.f32 %v5663, %v168
    %v5729 = vmul.f32 %v5667, %v169
    %v5730 = vmul.f32 %v5669, %v170
    %v5731 = vmul.f32 %v5673, %v171
    %v5732 = vmul.f32 %v5675, %v172
    %v5733 = vmul.f32 %v5679, %v173
    %v5734 = vmul.f32 %v5681, %v174
    %v5735 = vmul.f32 %v5685, %v175
    %v5736 = vmul.f32 %v5687, %v176
    %v5738 = vsel %vm563, %v5342, 0
    %5740 = vmatprep.subr.mxu0 %v5720
    %5741 = vmatpush1.msra.mxu0 %v5719
    %5742 = vmatprep.subr.mxu0 %v5718
    %5743 = vmatpush1.msra.mxu0 %v5717
    %5744 = vmatprep.subr.mxu0 %v5716
    %5745 = vmatpush1.msra.mxu0 %v5715
    %5746 = vmatprep.subr.mxu0 %v5714
    %5747 = vmatpush1.msra.mxu0 %v5713
    %5748 = vmatprep.subr.mxu0 %v5712
    %5749 = vmatpush1.msra.mxu0 %v5711
    %5750 = vmatprep.subr.mxu0 %v5710
    %5751 = vmatpush1.msra.mxu0 %v5709
    %5752 = vmatprep.subr.mxu0 %v5708
    %5753 = vmatpush1.msra.mxu0 %v5707
    %5754 = vmatprep.subr.mxu0 %v5706
    %5755 = vmatpush1.msra.mxu0 %v5705
    %5756 = vmatprep.subr.mxu0 %v5704
    %5757 = vmatpush1.msra.mxu0 %v5703
    %5758 = vmatprep.subr.mxu0 %v5702
    %5759 = vmatpush1.msra.mxu0 %v5701
    %5760 = vmatprep.subr.mxu0 %v5700
    %5761 = vmatpush1.msra.mxu0 %v5699
    %5762 = vmatprep.subr.mxu0 %v5698
    %5763 = vmatpush1.msra.mxu0 %v5697
    %5764 = vmatprep.subr.mxu0 %v5696
    %5765 = vmatpush1.msra.mxu0 %v5695
    %5766 = vmatprep.subr.mxu0 %v5694
    %5767 = vmatpush1.msra.mxu0 %v5693
    %5768 = vmatprep.subr.mxu0 %v5692
    %5769 = vmatpush1.msra.mxu0 %v5691
    %5770 = vmatprep.subr.mxu0 %v5690
    %5771 = vmatpush1.msra.mxu0 %v5689
    %5772 = vmatprep.subr.mxu0 0.0
    %5773 = vmatpush2.msra.mxu0 0.0
    %5774 = vmatprep.subr.mxu0 0.0
    %5775 = vmatpush2.msra.mxu0 0.0
    %5776 = vmatprep.subr.mxu0 0.0
    %5777 = vmatpush2.msra.mxu0 0.0
    %5778 = vmatprep.subr.mxu0 0.0
    %5779 = vmatpush2.msra.mxu0 0.0
    %5780 = vmatprep.subr.mxu0 0.0
    %5781 = vmatpush2.msra.mxu0 0.0
    %5782 = vmatprep.subr.mxu0 0.0
    %5783 = vmatpush2.msra.mxu0 0.0
    %5784 = vmatprep.subr.mxu0 0.0
    %5785 = vmatpush2.msra.mxu0 0.0
    %5786 = vmatprep.subr.mxu0 0.0
    %5787 = vmatpush2.msra.mxu0 0.0
    %5788 = vmatprep.subr.mxu0 %v5736
    %5789 = vmatpush2.msra.mxu0 %v5735
    %5790 = vmatprep.subr.mxu0 %v5734
    %5791 = vmatpush2.msra.mxu0 %v5733
    %5792 = vmatprep.subr.mxu0 %v5732
    %5793 = vmatpush2.msra.mxu0 %v5731
    %5794 = vmatprep.subr.mxu0 %v5730
    %5795 = vmatpush2.msra.mxu0 %v5729
    %5796 = vmatprep.subr.mxu0 %v5728
    %5797 = vmatpush2.msra.mxu0 %v5727
    %5798 = vmatprep.subr.mxu0 %v5726
    %5799 = vmatpush2.msra.mxu0 %v5725
    %5800 = vmatprep.subr.mxu0 %v5724
    %5801 = vmatpush2.msra.mxu0 %v5723
    %5802 = vmatprep.subr.mxu0 %v5722
    %5803 = vmatpush2.msra.mxu0 %v5721
    %5804 = vmatprep.mubr.f32.mxu0 %v5738
    %5805 = vmatmul.mubr.f32.gmra.mxu0 %v5340
    %v5806 = vpop.f32.mrf.mxu0
    %v5807 = vadd.f32 0.0, %v5806
    %v5808 = vpop.f32.mrf.mxu0
    %v5809 = vadd.f32 0.0, %v5808
    %5810 = vdwg.mxu0
    %v5811 = vpack.c.bf16 %v5807, %v4709
    %v5812 = vpack.c.bf16 %v5809, %v4711
    %s5813 = scalar_lea.vmem [#allocation6], 192
    %v5814 = vld [vmem:[%s5813] sm:$0xff]
    %v5815 = vld [vmem:[%s5813 + $0x8] sm:$0xff]
    %v5816 = vld [vmem:[%s5813 + $0x10] sm:$0xff]
    %v5817 = vld [vmem:[%s5813 + $0x18] sm:$0xff]
    %v5818 = vld [vmem:[%s5813 + $0x20] sm:$0xff]
    %v5819 = vld [vmem:[%s5813 + $0x28] sm:$0xff]
    %v5820 = vld [vmem:[%s5813 + $0x30] sm:$0xff]
    %v5821 = vld [vmem:[%s5813 + $0x38] sm:$0xff]
    %v5822 = vld [vmem:[%s5813 + $0x40] sm:$0xff]
    %v5823 = vld [vmem:[%s5813 + $0x48] sm:$0xff]
    %v5824 = vld [vmem:[%s5813 + $0x50] sm:$0xff]
    %v5825 = vld [vmem:[%s5813 + $0x58] sm:$0xff]
    %v5826 = vld [vmem:[%s5813 + $0x60] sm:$0xff]
    %v5827 = vld [vmem:[%s5813 + $0x68] sm:$0xff]
    %v5828 = vld [vmem:[%s5813 + $0x70] sm:$0xff]
    %v5829 = vld [vmem:[%s5813 + $0x78] sm:$0xff]
    %v5830 = vld [vmem:[%s5813 + $0x80] sm:$0xff]
    %v5831 = vld [vmem:[%s5813 + $0x88] sm:$0xff]
    %v5832 = vld [vmem:[%s5813 + $0x90] sm:$0xff]
    %v5833 = vld [vmem:[%s5813 + $0x98] sm:$0xff]
    %v5834 = vld [vmem:[%s5813 + $0xa0] sm:$0xff]
    %v5835 = vld [vmem:[%s5813 + $0xa8] sm:$0xff]
    %v5836 = vld [vmem:[%s5813 + $0xb0] sm:$0xff]
    %v5837 = vld [vmem:[%s5813 + $0xb8] sm:$0xff]
    %s5838 = scalar_lea.vmem [#allocation7], 2
    %v5839 = vld [vmem:[%s5838] sm:$0x3]
    %v5841 = vlaneseq
    %v5842 = vshrl.u32 %v5841, 7
    %v5843 = vsub.s32 0, %v5842
    %v5844 = vrot.slane %v5839, %v5843
    %v5845 = vlaneseq
    %v5846 = vshrl.u32 %v5845, 7
    %v5847 = vsub.s32 1, %v5846
    %v5848 = vrot.slane %v5839, %v5847
    %v5875 = vunpack.c.l.b16 %v5814
    %v5876 = vunpack.c.h.b16 %v5814
    %v5877 = vunpack.c.l.b16 %v5815
    %v5878 = vunpack.c.h.b16 %v5815
    %v5879 = vunpack.c.l.b16 %v5816
    %v5880 = vunpack.c.h.b16 %v5816
    %v5881 = vunpack.c.l.b16 %v5817
    %v5882 = vunpack.c.h.b16 %v5817
    %v5883 = vunpack.c.l.b16 %v5818
    %v5884 = vunpack.c.h.b16 %v5818
    %v5885 = vunpack.c.l.b16 %v5819
    %v5886 = vunpack.c.h.b16 %v5819
    %v5887 = vunpack.c.l.b16 %v5820
    %v5888 = vunpack.c.h.b16 %v5820
    %v5889 = vunpack.c.l.b16 %v5821
    %v5890 = vunpack.c.h.b16 %v5821
    %v5891 = vunpack.c.l.b16 %v5822
    %v5892 = vunpack.c.h.b16 %v5822
    %v5893 = vunpack.c.l.b16 %v5823
    %v5894 = vunpack.c.h.b16 %v5823
    %v5895 = vunpack.c.l.b16 %v5824
    %v5896 = vunpack.c.h.b16 %v5824
    %v5897 = vunpack.c.l.b16 %v5825
    %v5898 = vunpack.c.h.b16 %v5825
    %v5899 = vunpack.c.l.b16 %v5826
    %v5900 = vunpack.c.h.b16 %v5826
    %v5901 = vunpack.c.l.b16 %v5827
    %v5902 = vunpack.c.h.b16 %v5827
    %v5903 = vunpack.c.l.b16 %v5828
    %v5904 = vunpack.c.h.b16 %v5828
    %v5905 = vunpack.c.l.b16 %v5829
    %v5906 = vunpack.c.h.b16 %v5829
    %v5907 = vunpack.c.l.b16 %v5830
    %v5908 = vunpack.c.h.b16 %v5830
    %v5909 = vunpack.c.l.b16 %v5831
    %v5910 = vunpack.c.h.b16 %v5831
    %v5911 = vunpack.c.l.b16 %v5832
    %v5912 = vunpack.c.h.b16 %v5832
    %v5913 = vunpack.c.l.b16 %v5833
    %v5914 = vunpack.c.h.b16 %v5833
    %v5915 = vunpack.c.l.b16 %v5834
    %v5916 = vunpack.c.h.b16 %v5834
    %v5917 = vunpack.c.l.b16 %v5835
    %v5918 = vunpack.c.h.b16 %v5835
    %v5919 = vunpack.c.l.b16 %v5836
    %v5920 = vunpack.c.h.b16 %v5836
    %v5921 = vunpack.c.l.b16 %v5837
    %v5922 = vunpack.c.h.b16 %v5837
    %v5923 = vpack.c.b16 %v5877, %v5875
    %v5924 = vpack.c.b16 %v5878, %v5876
    %v5925 = vpack.c.b16 %v5881, %v5879
    %v5926 = vpack.c.b16 %v5882, %v5880
    %v5927 = vpack.c.b16 %v5885, %v5883
    %v5928 = vpack.c.b16 %v5886, %v5884
    %v5929 = vpack.c.b16 %v5889, %v5887
    %v5930 = vpack.c.b16 %v5890, %v5888
    %v5931 = vpack.c.b16 %v5893, %v5891
    %v5932 = vpack.c.b16 %v5894, %v5892
    %v5933 = vpack.c.b16 %v5897, %v5895
    %v5934 = vpack.c.b16 %v5898, %v5896
    %v5935 = vpack.c.b16 %v5901, %v5899
    %v5936 = vpack.c.b16 %v5902, %v5900
    %v5937 = vpack.c.b16 %v5905, %v5903
    %v5938 = vpack.c.b16 %v5906, %v5904
    %v5939 = vpack.c.b16 %v5909, %v5907
    %v5940 = vpack.c.b16 %v5910, %v5908
    %v5941 = vpack.c.b16 %v5913, %v5911
    %v5942 = vpack.c.b16 %v5914, %v5912
    %v5943 = vpack.c.b16 %v5917, %v5915
    %v5944 = vpack.c.b16 %v5918, %v5916
    %v5945 = vpack.c.b16 %v5921, %v5919
    %v5946 = vpack.c.b16 %v5922, %v5920
    %v5972 = vsel %vm563, %v5812, 0
    %5974 = vmatprep.subr.bf16.mxu0 %v5938
    %5975 = vmatpush1.bf16.msra.mxu0 %v5937
    %5976 = vmatprep.subr.bf16.mxu0 %v5936
    %5977 = vmatpush1.bf16.msra.mxu0 %v5935
    %5978 = vmatprep.subr.bf16.mxu0 %v5934
    %5979 = vmatpush1.bf16.msra.mxu0 %v5933
    %5980 = vmatprep.subr.bf16.mxu0 %v5932
    %5981 = vmatpush1.bf16.msra.mxu0 %v5931
    %5982 = vmatprep.subr.bf16.mxu0 %v5930
    %5983 = vmatpush1.bf16.msra.mxu0 %v5929
    %5984 = vmatprep.subr.bf16.mxu0 %v5928
    %5985 = vmatpush1.bf16.msra.mxu0 %v5927
    %5986 = vmatprep.subr.bf16.mxu0 %v5926
    %5987 = vmatpush1.bf16.msra.mxu0 %v5925
    %5988 = vmatprep.subr.bf16.mxu0 %v5924
    %5989 = vmatpush1.bf16.msra.mxu0 %v5923
    %5990 = vmatprep.subr.bf16.mxu0 0
    %5991 = vmatpush2.bf16.msra.mxu0 0
    %5992 = vmatprep.subr.bf16.mxu0 0
    %5993 = vmatpush2.bf16.msra.mxu0 0
    %5994 = vmatprep.subr.bf16.mxu0 0
    %5995 = vmatpush2.bf16.msra.mxu0 0
    %5996 = vmatprep.subr.bf16.mxu0 0
    %5997 = vmatpush2.bf16.msra.mxu0 0
    %5998 = vmatprep.subr.bf16.mxu0 %v5946
    %5999 = vmatpush2.bf16.msra.mxu0 %v5945
    %6000 = vmatprep.subr.bf16.mxu0 %v5944
    %6001 = vmatpush2.bf16.msra.mxu0 %v5943
    %6002 = vmatprep.subr.bf16.mxu0 %v5942
    %6003 = vmatpush2.bf16.msra.mxu0 %v5941
    %6004 = vmatprep.subr.bf16.mxu0 %v5940
    %6005 = vmatpush2.bf16.msra.mxu0 %v5939
    %6006 = vmatprep.mubr.bf16.mxu0 %v5972
    %6007 = vmatmul.mubr.bf16.gmra.mxu0 %v5811
    %v6008 = vpop.f32.mrf.mxu0
    %v6009 = vadd.f32 %v5844, %v6008
    %v6010 = vpop.f32.mrf.mxu0
    %v6011 = vadd.f32 %v5848, %v6010
    %v6012 = vpop.f32.mrf.mxu0
    %v6013 = vadd.f32 %v5844, %v6012
    %v6014 = vpop.f32.mrf.mxu0
    %v6015 = vadd.f32 %v5848, %v6014
    %6016 = vdwg.mxu0
    %v6017 = vpack.c.bf16 %v6013, %v6009
    %v6018 = vpack.c.bf16 %v6015, %v6011
    %s6019 = scalar_lea.vmem [#allocation4], 960
    %v6020 = vld [vmem:[%s6019] sm:$0xff]
    %v6021 = vld [vmem:[%s6019 + $0x8] sm:$0xff]
    %v6022 = vld [vmem:[%s6019 + $0x10] sm:$0xf]
    %v6023 = vld [vmem:[%s6019 + $0x14] sm:$0xff]
    %v6024 = vld [vmem:[%s6019 + $0x1c] sm:$0xff]
    %v6025 = vld [vmem:[%s6019 + $0x24] sm:$0xf]
    %v6026 = vld [vmem:[%s6019 + $0x28] sm:$0xff]
    %v6027 = vld [vmem:[%s6019 + $0x30] sm:$0xff]
    %v6028 = vld [vmem:[%s6019 + $0x38] sm:$0xf]
    %v6029 = vld [vmem:[%s6019 + $0x3c] sm:$0xff]
    %v6030 = vld [vmem:[%s6019 + $0x44] sm:$0xff]
    %v6031 = vld [vmem:[%s6019 + $0x4c] sm:$0xf]
    %v6032 = vld [vmem:[%s6019 + $0x50] sm:$0xff]
    %v6033 = vld [vmem:[%s6019 + $0x58] sm:$0xff]
    %v6034 = vld [vmem:[%s6019 + $0x60] sm:$0xf]
    %v6035 = vld [vmem:[%s6019 + $0x64] sm:$0xff]
    %v6036 = vld [vmem:[%s6019 + $0x6c] sm:$0xff]
    %v6037 = vld [vmem:[%s6019 + $0x74] sm:$0xf]
    %v6038 = vld [vmem:[%s6019 + $0x78] sm:$0xff]
    %v6039 = vld [vmem:[%s6019 + $0x80] sm:$0xff]
    %v6040 = vld [vmem:[%s6019 + $0x88] sm:$0xf]
    %v6041 = vld [vmem:[%s6019 + $0x8c] sm:$0xff]
    %v6042 = vld [vmem:[%s6019 + $0x94] sm:$0xff]
    %v6043 = vld [vmem:[%s6019 + $0x9c] sm:$0xf]
    %v6044 = vld [vmem:[%s6019 + $0xa0] sm:$0xff]
    %v6045 = vld [vmem:[%s6019 + $0xa8] sm:$0xff]
    %v6046 = vld [vmem:[%s6019 + $0xb0] sm:$0xf]
    %v6047 = vld [vmem:[%s6019 + $0xb4] sm:$0xff]
    %v6048 = vld [vmem:[%s6019 + $0xbc] sm:$0xff]
    %v6049 = vld [vmem:[%s6019 + $0xc4] sm:$0xf]
    %v6050 = vld [vmem:[%s6019 + $0xc8] sm:$0xff]
    %v6051 = vld [vmem:[%s6019 + $0xd0] sm:$0xff]
    %v6052 = vld [vmem:[%s6019 + $0xd8] sm:$0xf]
    %v6053 = vld [vmem:[%s6019 + $0xdc] sm:$0xff]
    %v6054 = vld [vmem:[%s6019 + $0xe4] sm:$0xff]
    %v6055 = vld [vmem:[%s6019 + $0xec] sm:$0xf]
    %v6056 = vld [vmem:[%s6019 + $0xf0] sm:$0xff]
    %v6057 = vld [vmem:[%s6019 + $0xf8] sm:$0xff]
    %v6058 = vld [vmem:[%s6019 + $0x100] sm:$0xf]
    %v6059 = vld [vmem:[%s6019 + $0x104] sm:$0xff]
    %v6060 = vld [vmem:[%s6019 + $0x10c] sm:$0xff]
    %v6061 = vld [vmem:[%s6019 + $0x114] sm:$0xf]
    %v6062 = vld [vmem:[%s6019 + $0x118] sm:$0xff]
    %v6063 = vld [vmem:[%s6019 + $0x120] sm:$0xff]
    %v6064 = vld [vmem:[%s6019 + $0x128] sm:$0xf]
    %v6065 = vld [vmem:[%s6019 + $0x12c] sm:$0xff]
    %v6066 = vld [vmem:[%s6019 + $0x134] sm:$0xff]
    %v6067 = vld [vmem:[%s6019 + $0x13c] sm:$0xf]
    %v6068 = vld [vmem:[%s6019 + $0x140] sm:$0xff]
    %v6069 = vld [vmem:[%s6019 + $0x148] sm:$0xff]
    %v6070 = vld [vmem:[%s6019 + $0x150] sm:$0xf]
    %v6071 = vld [vmem:[%s6019 + $0x154] sm:$0xff]
    %v6072 = vld [vmem:[%s6019 + $0x15c] sm:$0xff]
    %v6073 = vld [vmem:[%s6019 + $0x164] sm:$0xf]
    %v6074 = vld [vmem:[%s6019 + $0x168] sm:$0xff]
    %v6075 = vld [vmem:[%s6019 + $0x170] sm:$0xff]
    %v6076 = vld [vmem:[%s6019 + $0x178] sm:$0xf]
    %v6077 = vld [vmem:[%s6019 + $0x17c] sm:$0xff]
    %v6078 = vld [vmem:[%s6019 + $0x184] sm:$0xff]
    %v6079 = vld [vmem:[%s6019 + $0x18c] sm:$0xf]
    %v6080 = vld [vmem:[%s6019 + $0x190] sm:$0xff]
    %v6081 = vld [vmem:[%s6019 + $0x198] sm:$0xff]
    %v6082 = vld [vmem:[%s6019 + $0x1a0] sm:$0xf]
    %v6083 = vld [vmem:[%s6019 + $0x1a4] sm:$0xff]
    %v6084 = vld [vmem:[%s6019 + $0x1ac] sm:$0xff]
    %v6085 = vld [vmem:[%s6019 + $0x1b4] sm:$0xf]
    %v6086 = vld [vmem:[%s6019 + $0x1b8] sm:$0xff]
    %v6087 = vld [vmem:[%s6019 + $0x1c0] sm:$0xff]
    %v6088 = vld [vmem:[%s6019 + $0x1c8] sm:$0xf]
    %v6089 = vld [vmem:[%s6019 + $0x1cc] sm:$0xff]
    %v6090 = vld [vmem:[%s6019 + $0x1d4] sm:$0xff]
    %v6091 = vld [vmem:[%s6019 + $0x1dc] sm:$0xf]
    %v6164 = vunpack.c.l.b16 %v6020
    %v6165 = vunpack.c.h.b16 %v6020
    %v6166 = vunpack.c.l.b16 %v6021
    %v6167 = vunpack.c.h.b16 %v6021
    %v6168 = vunpack.c.l.b16 %v6022
    %v6169 = vunpack.c.l.b16 %v6023
    %v6170 = vunpack.c.h.b16 %v6023
    %v6171 = vunpack.c.l.b16 %v6024
    %v6172 = vunpack.c.h.b16 %v6024
    %v6173 = vunpack.c.l.b16 %v6025
    %v6174 = vunpack.c.l.b16 %v6026
    %v6175 = vunpack.c.h.b16 %v6026
    %v6176 = vunpack.c.l.b16 %v6027
    %v6177 = vunpack.c.h.b16 %v6027
    %v6178 = vunpack.c.l.b16 %v6028
    %v6179 = vunpack.c.l.b16 %v6029
    %v6180 = vunpack.c.h.b16 %v6029
    %v6181 = vunpack.c.l.b16 %v6030
    %v6182 = vunpack.c.h.b16 %v6030
    %v6183 = vunpack.c.l.b16 %v6031
    %v6184 = vunpack.c.l.b16 %v6032
    %v6185 = vunpack.c.h.b16 %v6032
    %v6186 = vunpack.c.l.b16 %v6033
    %v6187 = vunpack.c.h.b16 %v6033
    %v6188 = vunpack.c.l.b16 %v6034
    %v6189 = vunpack.c.l.b16 %v6035
    %v6190 = vunpack.c.h.b16 %v6035
    %v6191 = vunpack.c.l.b16 %v6036
    %v6192 = vunpack.c.h.b16 %v6036
    %v6193 = vunpack.c.l.b16 %v6037
    %v6194 = vunpack.c.l.b16 %v6038
    %v6195 = vunpack.c.h.b16 %v6038
    %v6196 = vunpack.c.l.b16 %v6039
    %v6197 = vunpack.c.h.b16 %v6039
    %v6198 = vunpack.c.l.b16 %v6040
    %v6199 = vunpack.c.l.b16 %v6041
    %v6200 = vunpack.c.h.b16 %v6041
    %v6201 = vunpack.c.l.b16 %v6042
    %v6202 = vunpack.c.h.b16 %v6042
    %v6203 = vunpack.c.l.b16 %v6043
    %v6204 = vunpack.c.l.b16 %v6044
    %v6205 = vunpack.c.h.b16 %v6044
    %v6206 = vunpack.c.l.b16 %v6045
    %v6207 = vunpack.c.h.b16 %v6045
    %v6208 = vunpack.c.l.b16 %v6046
    %v6209 = vunpack.c.l.b16 %v6047
    %v6210 = vunpack.c.h.b16 %v6047
    %v6211 = vunpack.c.l.b16 %v6048
    %v6212 = vunpack.c.h.b16 %v6048
    %v6213 = vunpack.c.l.b16 %v6049
    %v6214 = vunpack.c.l.b16 %v6050
    %v6215 = vunpack.c.h.b16 %v6050
    %v6216 = vunpack.c.l.b16 %v6051
    %v6217 = vunpack.c.h.b16 %v6051
    %v6218 = vunpack.c.l.b16 %v6052
    %v6219 = vunpack.c.l.b16 %v6053
    %v6220 = vunpack.c.h.b16 %v6053
    %v6221 = vunpack.c.l.b16 %v6054
    %v6222 = vunpack.c.h.b16 %v6054
    %v6223 = vunpack.c.l.b16 %v6055
    %v6224 = vunpack.c.l.b16 %v6056
    %v6225 = vunpack.c.h.b16 %v6056
    %v6226 = vunpack.c.l.b16 %v6057
    %v6227 = vunpack.c.h.b16 %v6057
    %v6228 = vunpack.c.l.b16 %v6058
    %v6229 = vunpack.c.l.b16 %v6059
    %v6230 = vunpack.c.h.b16 %v6059
    %v6231 = vunpack.c.l.b16 %v6060
    %v6232 = vunpack.c.h.b16 %v6060
    %v6233 = vunpack.c.l.b16 %v6061
    %v6234 = vunpack.c.l.b16 %v6062
    %v6235 = vunpack.c.h.b16 %v6062
    %v6236 = vunpack.c.l.b16 %v6063
    %v6237 = vunpack.c.h.b16 %v6063
    %v6238 = vunpack.c.l.b16 %v6064
    %v6239 = vunpack.c.l.b16 %v6065
    %v6240 = vunpack.c.h.b16 %v6065
    %v6241 = vunpack.c.l.b16 %v6066
    %v6242 = vunpack.c.h.b16 %v6066
    %v6243 = vunpack.c.l.b16 %v6067
    %v6244 = vunpack.c.l.b16 %v6068
    %v6245 = vunpack.c.h.b16 %v6068
    %v6246 = vunpack.c.l.b16 %v6069
    %v6247 = vunpack.c.h.b16 %v6069
    %v6248 = vunpack.c.l.b16 %v6070
    %v6249 = vunpack.c.l.b16 %v6071
    %v6250 = vunpack.c.h.b16 %v6071
    %v6251 = vunpack.c.l.b16 %v6072
    %v6252 = vunpack.c.h.b16 %v6072
    %v6253 = vunpack.c.l.b16 %v6073
    %v6254 = vunpack.c.l.b16 %v6074
    %v6255 = vunpack.c.h.b16 %v6074
    %v6256 = vunpack.c.l.b16 %v6075
    %v6257 = vunpack.c.h.b16 %v6075
    %v6258 = vunpack.c.l.b16 %v6076
    %v6259 = vunpack.c.l.b16 %v6077
    %v6260 = vunpack.c.h.b16 %v6077
    %v6261 = vunpack.c.l.b16 %v6078
    %v6262 = vunpack.c.h.b16 %v6078
    %v6263 = vunpack.c.l.b16 %v6079
    %v6264 = vunpack.c.l.b16 %v6080
    %v6265 = vunpack.c.h.b16 %v6080
    %v6266 = vunpack.c.l.b16 %v6081
    %v6267 = vunpack.c.h.b16 %v6081
    %v6268 = vunpack.c.l.b16 %v6082
    %v6269 = vunpack.c.l.b16 %v6083
    %v6270 = vunpack.c.h.b16 %v6083
    %v6271 = vunpack.c.l.b16 %v6084
    %v6272 = vunpack.c.h.b16 %v6084
    %v6273 = vunpack.c.l.b16 %v6085
    %v6274 = vunpack.c.l.b16 %v6086
    %v6275 = vunpack.c.h.b16 %v6086
    %v6276 = vunpack.c.l.b16 %v6087
    %v6277 = vunpack.c.h.b16 %v6087
    %v6278 = vunpack.c.l.b16 %v6088
    %v6279 = vunpack.c.l.b16 %v6089
    %v6280 = vunpack.c.h.b16 %v6089
    %v6281 = vunpack.c.l.b16 %v6090
    %v6282 = vunpack.c.h.b16 %v6090
    %v6283 = vunpack.c.l.b16 %v6091
    %v6284 = vpack.c.b16 %v6169, %v6164
    %v6285 = vpack.c.b16 %v6170, %v6165
    %v6286 = vpack.c.b16 %v6171, %v6166
    %v6287 = vpack.c.b16 %v6172, %v6167
    %v6288 = vpack.c.b16 %v6173, %v6168
    %v6289 = vpack.c.b16 %v6179, %v6174
    %v6290 = vpack.c.b16 %v6180, %v6175
    %v6291 = vpack.c.b16 %v6181, %v6176
    %v6292 = vpack.c.b16 %v6182, %v6177
    %v6293 = vpack.c.b16 %v6183, %v6178
    %v6294 = vpack.c.b16 %v6189, %v6184
    %v6295 = vpack.c.b16 %v6190, %v6185
    %v6296 = vpack.c.b16 %v6191, %v6186
    %v6297 = vpack.c.b16 %v6192, %v6187
    %v6298 = vpack.c.b16 %v6193, %v6188
    %v6299 = vpack.c.b16 %v6199, %v6194
    %v6300 = vpack.c.b16 %v6200, %v6195
    %v6301 = vpack.c.b16 %v6201, %v6196
    %v6302 = vpack.c.b16 %v6202, %v6197
    %v6303 = vpack.c.b16 %v6203, %v6198
    %v6304 = vpack.c.b16 %v6209, %v6204
    %v6305 = vpack.c.b16 %v6210, %v6205
    %v6306 = vpack.c.b16 %v6211, %v6206
    %v6307 = vpack.c.b16 %v6212, %v6207
    %v6308 = vpack.c.b16 %v6213, %v6208
    %v6309 = vpack.c.b16 %v6219, %v6214
    %v6310 = vpack.c.b16 %v6220, %v6215
    %v6311 = vpack.c.b16 %v6221, %v6216
    %v6312 = vpack.c.b16 %v6222, %v6217
    %v6313 = vpack.c.b16 %v6223, %v6218
    %v6314 = vpack.c.b16 %v6229, %v6224
    %v6315 = vpack.c.b16 %v6230, %v6225
    %v6316 = vpack.c.b16 %v6231, %v6226
    %v6317 = vpack.c.b16 %v6232, %v6227
    %v6318 = vpack.c.b16 %v6233, %v6228
    %v6319 = vpack.c.b16 %v6239, %v6234
    %v6320 = vpack.c.b16 %v6240, %v6235
    %v6321 = vpack.c.b16 %v6241, %v6236
    %v6322 = vpack.c.b16 %v6242, %v6237
    %v6323 = vpack.c.b16 %v6243, %v6238
    %v6324 = vpack.c.b16 %v6249, %v6244
    %v6325 = vpack.c.b16 %v6250, %v6245
    %v6326 = vpack.c.b16 %v6251, %v6246
    %v6327 = vpack.c.b16 %v6252, %v6247
    %v6328 = vpack.c.b16 %v6253, %v6248
    %v6329 = vpack.c.b16 %v6259, %v6254
    %v6330 = vpack.c.b16 %v6260, %v6255
    %v6331 = vpack.c.b16 %v6261, %v6256
    %v6332 = vpack.c.b16 %v6262, %v6257
    %v6333 = vpack.c.b16 %v6263, %v6258
    %v6334 = vpack.c.b16 %v6269, %v6264
    %v6335 = vpack.c.b16 %v6270, %v6265
    %v6336 = vpack.c.b16 %v6271, %v6266
    %v6337 = vpack.c.b16 %v6272, %v6267
    %v6338 = vpack.c.b16 %v6273, %v6268
    %v6339 = vpack.c.b16 %v6279, %v6274
    %v6340 = vpack.c.b16 %v6280, %v6275
    %v6341 = vpack.c.b16 %v6281, %v6276
    %v6342 = vpack.c.b16 %v6282, %v6277
    %v6343 = vpack.c.b16 %v6283, %v6278
    %v6405 = vsel %vm563, %v6018, 0
    %6407 = vmatprep.subr.bf16.mxu0 %v6320
    %6408 = vmatpush1.bf16.msra.mxu0 %v6319
    %6409 = vmatprep.subr.bf16.mxu0 %v6315
    %6410 = vmatpush1.bf16.msra.mxu0 %v6314
    %6411 = vmatprep.subr.bf16.mxu0 %v6310
    %6412 = vmatpush1.bf16.msra.mxu0 %v6309
    %6413 = vmatprep.subr.bf16.mxu0 %v6305
    %6414 = vmatpush1.bf16.msra.mxu0 %v6304
    %6415 = vmatprep.subr.bf16.mxu0 %v6300
    %6416 = vmatpush1.bf16.msra.mxu0 %v6299
    %6417 = vmatprep.subr.bf16.mxu0 %v6295
    %6418 = vmatpush1.bf16.msra.mxu0 %v6294
    %6419 = vmatprep.subr.bf16.mxu0 %v6290
    %6420 = vmatpush1.bf16.msra.mxu0 %v6289
    %6421 = vmatprep.subr.bf16.mxu0 %v6285
    %6422 = vmatpush1.bf16.msra.mxu0 %v6284
    %6423 = vmatprep.subr.bf16.mxu0 0
    %6424 = vmatpush2.bf16.msra.mxu0 0
    %6425 = vmatprep.subr.bf16.mxu0 0
    %6426 = vmatpush2.bf16.msra.mxu0 0
    %6427 = vmatprep.subr.bf16.mxu0 0
    %6428 = vmatpush2.bf16.msra.mxu0 0
    %6429 = vmatprep.subr.bf16.mxu0 0
    %6430 = vmatpush2.bf16.msra.mxu0 0
    %6431 = vmatprep.subr.bf16.mxu0 %v6340
    %6432 = vmatpush2.bf16.msra.mxu0 %v6339
    %6433 = vmatprep.subr.bf16.mxu0 %v6335
    %6434 = vmatpush2.bf16.msra.mxu0 %v6334
    %6435 = vmatprep.subr.bf16.mxu0 %v6330
    %6436 = vmatpush2.bf16.msra.mxu0 %v6329
    %6437 = vmatprep.subr.bf16.mxu0 %v6325
    %6438 = vmatpush2.bf16.msra.mxu0 %v6324
    %6439 = vmatprep.mubr.bf16.mxu0 %v6405
    %6440 = vmatmul.mubr.bf16.gmra.mxu0 %v6017
    %v6441 = vpop.f32.mrf.mxu0
    %v6442 = vadd.f32 0.0, %v6441
    %v6443 = vpop.f32.mrf.mxu0
    %v6444 = vadd.f32 0.0, %v6443
    %v6445 = vpop.f32.mrf.mxu0
    %v6446 = vadd.f32 0.0, %v6445
    %v6447 = vpop.f32.mrf.mxu0
    %v6448 = vadd.f32 0.0, %v6447
    %6449 = vdwg.mxu0
    %6450 = vmatprep.subr.bf16.mxu0 %v6322
    %6451 = vmatpush1.bf16.msra.mxu0 %v6321
    %6452 = vmatprep.subr.bf16.mxu0 %v6317
    %6453 = vmatpush1.bf16.msra.mxu0 %v6316
    %6454 = vmatprep.subr.bf16.mxu0 %v6312
    %6455 = vmatpush1.bf16.msra.mxu0 %v6311
    %6456 = vmatprep.subr.bf16.mxu0 %v6307
    %6457 = vmatpush1.bf16.msra.mxu0 %v6306
    %6458 = vmatprep.subr.bf16.mxu0 %v6302
    %6459 = vmatpush1.bf16.msra.mxu0 %v6301
    %6460 = vmatprep.subr.bf16.mxu0 %v6297
    %6461 = vmatpush1.bf16.msra.mxu0 %v6296
    %6462 = vmatprep.subr.bf16.mxu0 %v6292
    %6463 = vmatpush1.bf16.msra.mxu0 %v6291
    %6464 = vmatprep.subr.bf16.mxu0 %v6287
    %6465 = vmatpush1.bf16.msra.mxu0 %v6286
    %6466 = vmatprep.subr.bf16.mxu0 0
    %6467 = vmatpush2.bf16.msra.mxu0 0
    %6468 = vmatprep.subr.bf16.mxu0 0
    %6469 = vmatpush2.bf16.msra.mxu0 0
    %6470 = vmatprep.subr.bf16.mxu0 0
    %6471 = vmatpush2.bf16.msra.mxu0 0
    %6472 = vmatprep.subr.bf16.mxu0 0
    %6473 = vmatpush2.bf16.msra.mxu0 0
    %6474 = vmatprep.subr.bf16.mxu0 %v6342
    %6475 = vmatpush2.bf16.msra.mxu0 %v6341
    %6476 = vmatprep.subr.bf16.mxu0 %v6337
    %6477 = vmatpush2.bf16.msra.mxu0 %v6336
    %6478 = vmatprep.subr.bf16.mxu0 %v6332
    %6479 = vmatpush2.bf16.msra.mxu0 %v6331
    %6480 = vmatprep.subr.bf16.mxu0 %v6327
    %6481 = vmatpush2.bf16.msra.mxu0 %v6326
    %6482 = vmatprep.mubr.bf16.mxu0 %v6405
    %6483 = vmatmul.mubr.bf16.gmra.mxu0 %v6017
    %v6484 = vpop.f32.mrf.mxu0
    %v6485 = vadd.f32 0.0, %v6484
    %v6486 = vpop.f32.mrf.mxu0
    %v6487 = vadd.f32 0.0, %v6486
    %v6488 = vpop.f32.mrf.mxu0
    %v6489 = vadd.f32 0.0, %v6488
    %v6490 = vpop.f32.mrf.mxu0
    %v6491 = vadd.f32 0.0, %v6490
    %6492 = vdwg.mxu0
    %6493 = vmatprep.subr.bf16.mxu0 0
    %6494 = vmatpush1.bf16.msra.mxu0 %v6323
    %6495 = vmatprep.subr.bf16.mxu0 0
    %6496 = vmatpush1.bf16.msra.mxu0 %v6318
    %6497 = vmatprep.subr.bf16.mxu0 0
    %6498 = vmatpush1.bf16.msra.mxu0 %v6313
    %6499 = vmatprep.subr.bf16.mxu0 0
    %6500 = vmatpush1.bf16.msra.mxu0 %v6308
    %6501 = vmatprep.subr.bf16.mxu0 0
    %6502 = vmatpush1.bf16.msra.mxu0 %v6303
    %6503 = vmatprep.subr.bf16.mxu0 0
    %6504 = vmatpush1.bf16.msra.mxu0 %v6298
    %6505 = vmatprep.subr.bf16.mxu0 0
    %6506 = vmatpush1.bf16.msra.mxu0 %v6293
    %6507 = vmatprep.subr.bf16.mxu0 0
    %6508 = vmatpush1.bf16.msra.mxu0 %v6288
    %6509 = vmatprep.subr.bf16.mxu0 0
    %6510 = vmatpush2.bf16.msra.mxu0 0
    %6511 = vmatprep.subr.bf16.mxu0 0
    %6512 = vmatpush2.bf16.msra.mxu0 0
    %6513 = vmatprep.subr.bf16.mxu0 0
    %6514 = vmatpush2.bf16.msra.mxu0 0
    %6515 = vmatprep.subr.bf16.mxu0 0
    %6516 = vmatpush2.bf16.msra.mxu0 0
    %6517 = vmatprep.subr.bf16.mxu0 0
    %6518 = vmatpush2.bf16.msra.mxu0 %v6343
    %6519 = vmatprep.subr.bf16.mxu0 0
    %6520 = vmatpush2.bf16.msra.mxu0 %v6338
    %6521 = vmatprep.subr.bf16.mxu0 0
    %6522 = vmatpush2.bf16.msra.mxu0 %v6333
    %6523 = vmatprep.subr.bf16.mxu0 0
    %6524 = vmatpush2.bf16.msra.mxu0 %v6328
    %6525 = vmatprep.mubr.bf16.mxu0 %v6405
    %6526 = vmatmul.mubr.bf16.gmra.mxu0 %v6017
    %v6527 = vpop.f32.mrf.mxu0
    %v6528 = vadd.f32 0.0, %v6527
    %v6529 = vpop.f32.mrf.mxu0
    %v6530 = vpop.f32.mrf.mxu0
    %v6531 = vadd.f32 0.0, %v6530
    %v6532 = vpop.f32.mrf.mxu0
    %6533 = vdwg.mxu0
    %6534 = vxpose.xlu0.b32.start [1/16] %v6442, 128
    %6535 = vxpose.xlu0.b32.cont [2/16] 0.0, 128
    %6536 = vxpose.xlu0.b32.cont [3/16] 0.0, 128
    %6537 = vxpose.xlu0.b32.cont [4/16] 0.0, 128
    %6538 = vxpose.xlu0.b32.cont [5/16] 0.0, 128
    %6539 = vxpose.xlu0.b32.cont [6/16] 0.0, 128
    %6540 = vxpose.xlu0.b32.cont [7/16] 0.0, 128
    %6541 = vxpose.xlu0.b32.cont [8/16] 0.0, 128
    %6542 = vxpose.xlu0.b32.cont [9/16] 0.0, 128
    %6543 = vxpose.xlu0.b32.cont [10/16] 0.0, 128
    %6544 = vxpose.xlu0.b32.cont [11/16] 0.0, 128
    %6545 = vxpose.xlu0.b32.cont [12/16] 0.0, 128
    %6546 = vxpose.xlu0.b32.cont [13/16] 0.0, 128
    %6547 = vxpose.xlu0.b32.cont [14/16] 0.0, 128
    %6548 = vxpose.xlu0.b32.cont [15/16] 0.0, 128
    %6549 = vxpose.xlu0.b32.end [16/16] 0.0, 128
    %v6550 = vpop.trf.xlu0
    %v6551 = vpop.trf.xlu0
    %v6552 = vpop.trf.xlu0
    %v6553 = vpop.trf.xlu0
    %v6554 = vpop.trf.xlu0
    %v6555 = vpop.trf.xlu0
    %v6556 = vpop.trf.xlu0
    %v6557 = vpop.trf.xlu0
    %v6558 = vpop.trf.xlu0
    %v6559 = vpop.trf.xlu0
    %v6560 = vpop.trf.xlu0
    %v6561 = vpop.trf.xlu0
    %v6562 = vpop.trf.xlu0
    %v6563 = vpop.trf.xlu0
    %v6564 = vpop.trf.xlu0
    %v6565 = vpop.trf.xlu0
    %6566 = vxpose.xlu0.b32.start [1/16] %v6444, 128
    %6567 = vxpose.xlu0.b32.cont [2/16] 0.0, 128
    %6568 = vxpose.xlu0.b32.cont [3/16] 0.0, 128
    %6569 = vxpose.xlu0.b32.cont [4/16] 0.0, 128
    %6570 = vxpose.xlu0.b32.cont [5/16] 0.0, 128
    %6571 = vxpose.xlu0.b32.cont [6/16] 0.0, 128
    %6572 = vxpose.xlu0.b32.cont [7/16] 0.0, 128
    %6573 = vxpose.xlu0.b32.cont [8/16] 0.0, 128
    %6574 = vxpose.xlu0.b32.cont [9/16] 0.0, 128
    %6575 = vxpose.xlu0.b32.cont [10/16] 0.0, 128
    %6576 = vxpose.xlu0.b32.cont [11/16] 0.0, 128
    %6577 = vxpose.xlu0.b32.cont [12/16] 0.0, 128
    %6578 = vxpose.xlu0.b32.cont [13/16] 0.0, 128
    %6579 = vxpose.xlu0.b32.cont [14/16] 0.0, 128
    %6580 = vxpose.xlu0.b32.cont [15/16] 0.0, 128
    %6581 = vxpose.xlu0.b32.end [16/16] 0.0, 128
    %v6582 = vpop.trf.xlu0
    %v6583 = vpop.trf.xlu0
    %v6584 = vpop.trf.xlu0
    %v6585 = vpop.trf.xlu0
    %v6586 = vpop.trf.xlu0
    %v6587 = vpop.trf.xlu0
    %v6588 = vpop.trf.xlu0
    %v6589 = vpop.trf.xlu0
    %v6590 = vpop.trf.xlu0
    %v6591 = vpop.trf.xlu0
    %v6592 = vpop.trf.xlu0
    %v6593 = vpop.trf.xlu0
    %v6594 = vpop.trf.xlu0
    %v6595 = vpop.trf.xlu0
    %v6596 = vpop.trf.xlu0
    %v6597 = vpop.trf.xlu0
    %6600 = vrot.lane.b32.xlu0 %v6444, 64
    %v6601 = vpop.permute.xlu0 %6600
    %6602 = vrot.lane.b32.xlu0 %v6485, 64
    %v6603 = vpop.permute.xlu0 %6602
    %v6604 = vsel %vm563, %v6601, %v6603
    %v6608 = vsel %vm767, %v6550, 0
    %v6611 = vsel %vm767, %v6551, 0
    %v6614 = vsel %vm767, %v6552, 0
    %v6617 = vsel %vm767, %v6553, 0
    %v6620 = vsel %vm767, %v6554, 0
    %v6623 = vsel %vm767, %v6555, 0
    %v6626 = vsel %vm767, %v6556, 0
    %v6629 = vsel %vm767, %v6557, 0
    %v6632 = vsel %vm767, %v6558, 0
    %v6635 = vsel %vm767, %v6559, 0
    %v6638 = vsel %vm767, %v6560, 0
    %v6641 = vsel %vm767, %v6561, 0
    %v6644 = vsel %vm767, %v6562, 0
    %v6647 = vsel %vm767, %v6563, 0
    %v6650 = vsel %vm767, %v6564, 0
    %v6653 = vsel %vm767, %v6565, 0
    %v6656 = vsel %vm767, %v6582, 0
    %v6659 = vsel %vm767, %v6583, 0
    %v6662 = vsel %vm767, %v6584, 0
    %v6665 = vsel %vm767, %v6585, 0
    %v6668 = vsel %vm767, %v6586, 0
    %v6671 = vsel %vm767, %v6587, 0
    %v6674 = vsel %vm767, %v6588, 0
    %v6677 = vsel %vm767, %v6589, 0
    %6679 = vmatprep.subr.mxu0 0.0
    %6680 = vmatpush1.msra.mxu0 0.0
    %6681 = vmatprep.subr.mxu0 0.0
    %6682 = vmatpush1.msra.mxu0 0.0
    %6683 = vmatprep.subr.mxu0 0.0
    %6684 = vmatpush1.msra.mxu0 0.0
    %6685 = vmatprep.subr.mxu0 0.0
    %6686 = vmatpush1.msra.mxu0 0.0
    %6687 = vmatprep.subr.mxu0 0.0
    %6688 = vmatpush1.msra.mxu0 0.0
    %6689 = vmatprep.subr.mxu0 0.0
    %6690 = vmatpush1.msra.mxu0 0.0
    %6691 = vmatprep.subr.mxu0 0.0
    %6692 = vmatpush1.msra.mxu0 0.0
    %6693 = vmatprep.subr.mxu0 0.0
    %6694 = vmatpush1.msra.mxu0 0.0
    %6695 = vmatprep.subr.mxu0 0.0
    %6696 = vmatpush1.msra.mxu0 0.0
    %6697 = vmatprep.subr.mxu0 0.0
    %6698 = vmatpush1.msra.mxu0 0.0
    %6699 = vmatprep.subr.mxu0 0.0
    %6700 = vmatpush1.msra.mxu0 0.0
    %6701 = vmatprep.subr.mxu0 0.0
    %6702 = vmatpush1.msra.mxu0 0.0
    %6703 = vmatprep.subr.mxu0 0.0
    %6704 = vmatpush1.msra.mxu0 0.0
    %6705 = vmatprep.subr.mxu0 0.0
    %6706 = vmatpush1.msra.mxu0 0.0
    %6707 = vmatprep.subr.mxu0 0.0
    %6708 = vmatpush1.msra.mxu0 0.0
    %6709 = vmatprep.subr.mxu0 %v6603
    %6710 = vmatpush1.msra.mxu0 %v6604
    %6711 = vmatprep.subr.mxu0 0.0
    %6712 = vmatpush2.msra.mxu0 0.0
    %6713 = vmatprep.subr.mxu0 0.0
    %6714 = vmatpush2.msra.mxu0 0.0
    %6715 = vmatprep.subr.mxu0 0.0
    %6716 = vmatpush2.msra.mxu0 0.0
    %6717 = vmatprep.subr.mxu0 0.0
    %6718 = vmatpush2.msra.mxu0 0.0
    %6719 = vmatprep.subr.mxu0 0.0
    %6720 = vmatpush2.msra.mxu0 0.0
    %6721 = vmatprep.subr.mxu0 0.0
    %6722 = vmatpush2.msra.mxu0 0.0
    %6723 = vmatprep.subr.mxu0 0.0
    %6724 = vmatpush2.msra.mxu0 0.0
    %6725 = vmatprep.subr.mxu0 0.0
    %6726 = vmatpush2.msra.mxu0 0.0
    %6727 = vmatprep.subr.mxu0 0.0
    %6728 = vmatpush2.msra.mxu0 0.0
    %6729 = vmatprep.subr.mxu0 0.0
    %6730 = vmatpush2.msra.mxu0 0.0
    %6731 = vmatprep.subr.mxu0 0.0
    %6732 = vmatpush2.msra.mxu0 0.0
    %6733 = vmatprep.subr.mxu0 0.0
    %6734 = vmatpush2.msra.mxu0 0.0
    %6735 = vmatprep.subr.mxu0 0.0
    %6736 = vmatpush2.msra.mxu0 0.0
    %6737 = vmatprep.subr.mxu0 0.0
    %6738 = vmatpush2.msra.mxu0 0.0
    %6739 = vmatprep.subr.mxu0 0.0
    %6740 = vmatpush2.msra.mxu0 0.0
    %6741 = vmatprep.subr.mxu0 0.0
    %6742 = vmatpush2.msra.mxu0 0.0
    %6743 = vmatprep.mubr.f32.mxu0 0.0
    %6744 = vmatmul.mubr.f32.gmra.mxu0 %v6608
    %v6745 = vpop.f32.mrf.mxu0
    %v6746 = vadd.f32 0.0, %v6745
    %v6747 = vpop.f32.mrf.mxu0
    %v6748 = vadd.f32 0.0, %v6747
    %6749 = vmatprep.mubr.f32.mxu0 0.0
    %6750 = vmatmul.mubr.f32.gmra.mxu0 %v6611
    %v6751 = vpop.f32.mrf.mxu0
    %v6752 = vadd.f32 0.0, %v6751
    %v6753 = vpop.f32.mrf.mxu0
    %v6754 = vadd.f32 0.0, %v6753
    %6755 = vmatprep.mubr.f32.mxu0 0.0
    %6756 = vmatmul.mubr.f32.gmra.mxu0 %v6614
    %v6757 = vpop.f32.mrf.mxu0
    %v6758 = vadd.f32 0.0, %v6757
    %v6759 = vpop.f32.mrf.mxu0
    %v6760 = vadd.f32 0.0, %v6759
    %6761 = vmatprep.mubr.f32.mxu0 0.0
    %6762 = vmatmul.mubr.f32.gmra.mxu0 %v6617
    %v6763 = vpop.f32.mrf.mxu0
    %v6764 = vadd.f32 0.0, %v6763
    %v6765 = vpop.f32.mrf.mxu0
    %v6766 = vadd.f32 0.0, %v6765
    %6767 = vmatprep.mubr.f32.mxu0 0.0
    %6768 = vmatmul.mubr.f32.gmra.mxu0 %v6620
    %v6769 = vpop.f32.mrf.mxu0
    %v6770 = vadd.f32 0.0, %v6769
    %v6771 = vpop.f32.mrf.mxu0
    %v6772 = vadd.f32 0.0, %v6771
    %6773 = vmatprep.mubr.f32.mxu0 0.0
    %6774 = vmatmul.mubr.f32.gmra.mxu0 %v6623
    %v6775 = vpop.f32.mrf.mxu0
    %v6776 = vadd.f32 0.0, %v6775
    %v6777 = vpop.f32.mrf.mxu0
    %v6778 = vadd.f32 0.0, %v6777
    %6779 = vmatprep.mubr.f32.mxu0 0.0
    %6780 = vmatmul.mubr.f32.gmra.mxu0 %v6626
    %v6781 = vpop.f32.mrf.mxu0
    %v6782 = vadd.f32 0.0, %v6781
    %v6783 = vpop.f32.mrf.mxu0
    %v6784 = vadd.f32 0.0, %v6783
    %6785 = vmatprep.mubr.f32.mxu0 0.0
    %6786 = vmatmul.mubr.f32.gmra.mxu0 %v6629
    %v6787 = vpop.f32.mrf.mxu0
    %v6788 = vadd.f32 0.0, %v6787
    %v6789 = vpop.f32.mrf.mxu0
    %v6790 = vadd.f32 0.0, %v6789
    %6791 = vmatprep.mubr.f32.mxu0 0.0
    %6792 = vmatmul.mubr.f32.gmra.mxu0 %v6632
    %v6793 = vpop.f32.mrf.mxu0
    %v6794 = vadd.f32 0.0, %v6793
    %v6795 = vpop.f32.mrf.mxu0
    %v6796 = vadd.f32 0.0, %v6795
    %6797 = vmatprep.mubr.f32.mxu0 0.0
    %6798 = vmatmul.mubr.f32.gmra.mxu0 %v6635
    %v6799 = vpop.f32.mrf.mxu0
    %v6800 = vadd.f32 0.0, %v6799
    %v6801 = vpop.f32.mrf.mxu0
    %v6802 = vadd.f32 0.0, %v6801
    %6803 = vmatprep.mubr.f32.mxu0 0.0
    %6804 = vmatmul.mubr.f32.gmra.mxu0 %v6638
    %v6805 = vpop.f32.mrf.mxu0
    %v6806 = vadd.f32 0.0, %v6805
    %v6807 = vpop.f32.mrf.mxu0
    %v6808 = vadd.f32 0.0, %v6807
    %6809 = vmatprep.mubr.f32.mxu0 0.0
    %6810 = vmatmul.mubr.f32.gmra.mxu0 %v6641
    %v6811 = vpop.f32.mrf.mxu0
    %v6812 = vadd.f32 0.0, %v6811
    %v6813 = vpop.f32.mrf.mxu0
    %v6814 = vadd.f32 0.0, %v6813
    %6815 = vmatprep.mubr.f32.mxu0 0.0
    %6816 = vmatmul.mubr.f32.gmra.mxu0 %v6644
    %v6817 = vpop.f32.mrf.mxu0
    %v6818 = vadd.f32 0.0, %v6817
    %v6819 = vpop.f32.mrf.mxu0
    %v6820 = vadd.f32 0.0, %v6819
    %6821 = vmatprep.mubr.f32.mxu0 0.0
    %6822 = vmatmul.mubr.f32.gmra.mxu0 %v6647
    %v6823 = vpop.f32.mrf.mxu0
    %v6824 = vadd.f32 0.0, %v6823
    %v6825 = vpop.f32.mrf.mxu0
    %v6826 = vadd.f32 0.0, %v6825
    %6827 = vmatprep.mubr.f32.mxu0 0.0
    %6828 = vmatmul.mubr.f32.gmra.mxu0 %v6650
    %v6829 = vpop.f32.mrf.mxu0
    %v6830 = vadd.f32 0.0, %v6829
    %v6831 = vpop.f32.mrf.mxu0
    %v6832 = vadd.f32 0.0, %v6831
    %6833 = vmatprep.mubr.f32.mxu0 0.0
    %6834 = vmatmul.mubr.f32.gmra.mxu0 %v6653
    %v6835 = vpop.f32.mrf.mxu0
    %v6836 = vadd.f32 0.0, %v6835
    %v6837 = vpop.f32.mrf.mxu0
    %v6838 = vadd.f32 0.0, %v6837
    %6839 = vmatprep.mubr.f32.mxu0 0.0
    %6840 = vmatmul.mubr.f32.gmra.mxu0 %v6656
    %v6841 = vpop.f32.mrf.mxu0
    %v6842 = vadd.f32 0.0, %v6841
    %v6843 = vpop.f32.mrf.mxu0
    %v6844 = vadd.f32 0.0, %v6843
    %6845 = vmatprep.mubr.f32.mxu0 0.0
    %6846 = vmatmul.mubr.f32.gmra.mxu0 %v6659
    %v6847 = vpop.f32.mrf.mxu0
    %v6848 = vadd.f32 0.0, %v6847
    %v6849 = vpop.f32.mrf.mxu0
    %v6850 = vadd.f32 0.0, %v6849
    %6851 = vmatprep.mubr.f32.mxu0 0.0
    %6852 = vmatmul.mubr.f32.gmra.mxu0 %v6662
    %v6853 = vpop.f32.mrf.mxu0
    %v6854 = vadd.f32 0.0, %v6853
    %v6855 = vpop.f32.mrf.mxu0
    %v6856 = vadd.f32 0.0, %v6855
    %6857 = vmatprep.mubr.f32.mxu0 0.0
    %6858 = vmatmul.mubr.f32.gmra.mxu0 %v6665
    %v6859 = vpop.f32.mrf.mxu0
    %v6860 = vadd.f32 0.0, %v6859
    %v6861 = vpop.f32.mrf.mxu0
    %v6862 = vadd.f32 0.0, %v6861
    %6863 = vmatprep.mubr.f32.mxu0 0.0
    %6864 = vmatmul.mubr.f32.gmra.mxu0 %v6668
    %v6865 = vpop.f32.mrf.mxu0
    %v6866 = vadd.f32 0.0, %v6865
    %v6867 = vpop.f32.mrf.mxu0
    %v6868 = vadd.f32 0.0, %v6867
    %6869 = vmatprep.mubr.f32.mxu0 0.0
    %6870 = vmatmul.mubr.f32.gmra.mxu0 %v6671
    %v6871 = vpop.f32.mrf.mxu0
    %v6872 = vadd.f32 0.0, %v6871
    %v6873 = vpop.f32.mrf.mxu0
    %v6874 = vadd.f32 0.0, %v6873
    %6875 = vmatprep.mubr.f32.mxu0 0.0
    %6876 = vmatmul.mubr.f32.gmra.mxu0 %v6674
    %v6877 = vpop.f32.mrf.mxu0
    %v6878 = vadd.f32 0.0, %v6877
    %v6879 = vpop.f32.mrf.mxu0
    %v6880 = vadd.f32 0.0, %v6879
    %6881 = vmatprep.mubr.f32.mxu0 0.0
    %6882 = vmatmul.mubr.f32.gmra.mxu0 %v6677
    %v6883 = vpop.f32.mrf.mxu0
    %v6884 = vadd.f32 0.0, %v6883
    %v6885 = vpop.f32.mrf.mxu0
    %v6886 = vadd.f32 0.0, %v6885
    %6887 = vdwg.mxu0
    %v6888 = vmul.f32 %v6746, %v129
    %v6889 = vmul.f32 %v6748, %v130
    %v6890 = vmul.f32 %v6752, %v131
    %v6891 = vmul.f32 %v6754, %v132
    %v6892 = vmul.f32 %v6758, %v133
    %v6893 = vmul.f32 %v6760, %v134
    %v6894 = vmul.f32 %v6764, %v135
    %v6895 = vmul.f32 %v6766, %v136
    %v6896 = vmul.f32 %v6770, %v137
    %v6897 = vmul.f32 %v6772, %v138
    %v6898 = vmul.f32 %v6776, %v139
    %v6899 = vmul.f32 %v6778, %v140
    %v6900 = vmul.f32 %v6782, %v141
    %v6901 = vmul.f32 %v6784, %v142
    %v6902 = vmul.f32 %v6788, %v143
    %v6903 = vmul.f32 %v6790, %v144
    %v6904 = vmul.f32 %v6794, %v145
    %v6905 = vmul.f32 %v6796, %v146
    %v6906 = vmul.f32 %v6800, %v147
    %v6907 = vmul.f32 %v6802, %v148
    %v6908 = vmul.f32 %v6806, %v149
    %v6909 = vmul.f32 %v6808, %v150
    %v6910 = vmul.f32 %v6812, %v151
    %v6911 = vmul.f32 %v6814, %v152
    %v6912 = vmul.f32 %v6818, %v153
    %v6913 = vmul.f32 %v6820, %v154
    %v6914 = vmul.f32 %v6824, %v155
    %v6915 = vmul.f32 %v6826, %v156
    %v6916 = vmul.f32 %v6830, %v157
    %v6917 = vmul.f32 %v6832, %v158
    %v6918 = vmul.f32 %v6836, %v159
    %v6919 = vmul.f32 %v6838, %v160
    %v6920 = vmul.f32 %v6842, %v161
    %v6921 = vmul.f32 %v6844, %v162
    %v6922 = vmul.f32 %v6848, %v163
    %v6923 = vmul.f32 %v6850, %v164
    %v6924 = vmul.f32 %v6854, %v165
    %v6925 = vmul.f32 %v6856, %v166
    %v6926 = vmul.f32 %v6860, %v167
    %v6927 = vmul.f32 %v6862, %v168
    %v6928 = vmul.f32 %v6866, %v169
    %v6929 = vmul.f32 %v6868, %v170
    %v6930 = vmul.f32 %v6872, %v171
    %v6931 = vmul.f32 %v6874, %v172
    %v6932 = vmul.f32 %v6878, %v173
    %v6933 = vmul.f32 %v6880, %v174
    %v6934 = vmul.f32 %v6884, %v175
    %v6935 = vmul.f32 %v6886, %v176
    %6936 = vmatprep.subr.mxu0 %v6919
    %6937 = vmatpush1.msra.mxu0 %v6918
    %6938 = vmatprep.subr.mxu0 %v6917
    %6939 = vmatpush1.msra.mxu0 %v6916
    %6940 = vmatprep.subr.mxu0 %v6915
    %6941 = vmatpush1.msra.mxu0 %v6914
    %6942 = vmatprep.subr.mxu0 %v6913
    %6943 = vmatpush1.msra.mxu0 %v6912
    %6944 = vmatprep.subr.mxu0 %v6911
    %6945 = vmatpush1.msra.mxu0 %v6910
    %6946 = vmatprep.subr.mxu0 %v6909
    %6947 = vmatpush1.msra.mxu0 %v6908
    %6948 = vmatprep.subr.mxu0 %v6907
    %6949 = vmatpush1.msra.mxu0 %v6906
    %6950 = vmatprep.subr.mxu0 %v6905
    %6951 = vmatpush1.msra.mxu0 %v6904
    %6952 = vmatprep.subr.mxu0 %v6903
    %6953 = vmatpush1.msra.mxu0 %v6902
    %6954 = vmatprep.subr.mxu0 %v6901
    %6955 = vmatpush1.msra.mxu0 %v6900
    %6956 = vmatprep.subr.mxu0 %v6899
    %6957 = vmatpush1.msra.mxu0 %v6898
    %6958 = vmatprep.subr.mxu0 %v6897
    %6959 = vmatpush1.msra.mxu0 %v6896
    %6960 = vmatprep.subr.mxu0 %v6895
    %6961 = vmatpush1.msra.mxu0 %v6894
    %6962 = vmatprep.subr.mxu0 %v6893
    %6963 = vmatpush1.msra.mxu0 %v6892
    %6964 = vmatprep.subr.mxu0 %v6891
    %6965 = vmatpush1.msra.mxu0 %v6890
    %6966 = vmatprep.subr.mxu0 %v6889
    %6967 = vmatpush1.msra.mxu0 %v6888
    %6968 = vmatprep.subr.mxu0 0.0
    %6969 = vmatpush2.msra.mxu0 0.0
    %6970 = vmatprep.subr.mxu0 0.0
    %6971 = vmatpush2.msra.mxu0 0.0
    %6972 = vmatprep.subr.mxu0 0.0
    %6973 = vmatpush2.msra.mxu0 0.0
    %6974 = vmatprep.subr.mxu0 0.0
    %6975 = vmatpush2.msra.mxu0 0.0
    %6976 = vmatprep.subr.mxu0 0.0
    %6977 = vmatpush2.msra.mxu0 0.0
    %6978 = vmatprep.subr.mxu0 0.0
    %6979 = vmatpush2.msra.mxu0 0.0
    %6980 = vmatprep.subr.mxu0 0.0
    %6981 = vmatpush2.msra.mxu0 0.0
    %6982 = vmatprep.subr.mxu0 0.0
    %6983 = vmatpush2.msra.mxu0 0.0
    %6984 = vmatprep.subr.mxu0 %v6935
    %6985 = vmatpush2.msra.mxu0 %v6934
    %6986 = vmatprep.subr.mxu0 %v6933
    %6987 = vmatpush2.msra.mxu0 %v6932
    %6988 = vmatprep.subr.mxu0 %v6931
    %6989 = vmatpush2.msra.mxu0 %v6930
    %6990 = vmatprep.subr.mxu0 %v6929
    %6991 = vmatpush2.msra.mxu0 %v6928
    %6992 = vmatprep.subr.mxu0 %v6927
    %6993 = vmatpush2.msra.mxu0 %v6926
    %6994 = vmatprep.subr.mxu0 %v6925
    %6995 = vmatpush2.msra.mxu0 %v6924
    %6996 = vmatprep.subr.mxu0 %v6923
    %6997 = vmatpush2.msra.mxu0 %v6922
    %6998 = vmatprep.subr.mxu0 %v6921
    %6999 = vmatpush2.msra.mxu0 %v6920
    %7000 = vmatprep.mubr.f32.mxu0 %v1098
    %7001 = vmatmul.mubr.f32.gmra.mxu0 %v127
    %v7002 = vpop.f32.mrf.mxu0
    %v7003 = vadd.f32 0.0, %v7002
    %v7004 = vpop.f32.mrf.mxu0
    %v7005 = vadd.f32 0.0, %v7004
    %7006 = vdwg.mxu0
    %v7008 = vsel %vm563, %v7005, 0
    %7010 = vmatprep.subr.mxu0 0.0
    %7011 = vmatpush1.xpose.msra.mxu0 0.0
    %7012 = vmatprep.subr.mxu0 0.0
    %7013 = vmatpush1.xpose.msra.mxu0 0.0
    %7014 = vmatprep.subr.mxu0 0.0
    %7015 = vmatpush1.xpose.msra.mxu0 0.0
    %7016 = vmatprep.subr.mxu0 0.0
    %7017 = vmatpush1.xpose.msra.mxu0 0.0
    %7018 = vmatprep.subr.mxu0 0.0
    %7019 = vmatpush1.xpose.msra.mxu0 0.0
    %7020 = vmatprep.subr.mxu0 0.0
    %7021 = vmatpush1.xpose.msra.mxu0 0.0
    %7022 = vmatprep.subr.mxu0 0.0
    %7023 = vmatpush1.xpose.msra.mxu0 0.0
    %7024 = vmatprep.subr.mxu0 0.0
    %7025 = vmatpush1.xpose.msra.mxu0 0.0
    %7026 = vmatprep.subr.mxu0 0.0
    %7027 = vmatpush1.xpose.msra.mxu0 0.0
    %7028 = vmatprep.subr.mxu0 0.0
    %7029 = vmatpush1.xpose.msra.mxu0 0.0
    %7030 = vmatprep.subr.mxu0 0.0
    %7031 = vmatpush1.xpose.msra.mxu0 0.0
    %7032 = vmatprep.subr.mxu0 0.0
    %7033 = vmatpush1.xpose.msra.mxu0 0.0
    %7034 = vmatprep.subr.mxu0 0.0
    %7035 = vmatpush1.xpose.msra.mxu0 0.0
    %7036 = vmatprep.subr.mxu0 0.0
    %7037 = vmatpush1.xpose.msra.mxu0 0.0
    %7038 = vmatprep.subr.mxu0 0.0
    %7039 = vmatpush1.xpose.msra.mxu0 0.0
    %7040 = vmatprep.subr.mxu0 %v1098
    %7041 = vmatpush1.xpose.msra.mxu0 %v127
    %7042 = vmatprep.subr.mxu0 0.0
    %7043 = vmatpush2.xpose.msra.mxu0 0.0
    %7044 = vmatprep.subr.mxu0 0.0
    %7045 = vmatpush2.xpose.msra.mxu0 0.0
    %7046 = vmatprep.subr.mxu0 0.0
    %7047 = vmatpush2.xpose.msra.mxu0 0.0
    %7048 = vmatprep.subr.mxu0 0.0
    %7049 = vmatpush2.xpose.msra.mxu0 0.0
    %7050 = vmatprep.subr.mxu0 0.0
    %7051 = vmatpush2.xpose.msra.mxu0 0.0
    %7052 = vmatprep.subr.mxu0 0.0
    %7053 = vmatpush2.xpose.msra.mxu0 0.0
    %7054 = vmatprep.subr.mxu0 0.0
    %7055 = vmatpush2.xpose.msra.mxu0 0.0
    %7056 = vmatprep.subr.mxu0 0.0
    %7057 = vmatpush2.xpose.msra.mxu0 0.0
    %7058 = vmatprep.subr.mxu0 0.0
    %7059 = vmatpush2.xpose.msra.mxu0 0.0
    %7060 = vmatprep.subr.mxu0 0.0
    %7061 = vmatpush2.xpose.msra.mxu0 0.0
    %7062 = vmatprep.subr.mxu0 0.0
    %7063 = vmatpush2.xpose.msra.mxu0 0.0
    %7064 = vmatprep.subr.mxu0 0.0
    %7065 = vmatpush2.xpose.msra.mxu0 0.0
    %7066 = vmatprep.subr.mxu0 0.0
    %7067 = vmatpush2.xpose.msra.mxu0 0.0
    %7068 = vmatprep.subr.mxu0 0.0
    %7069 = vmatpush2.xpose.msra.mxu0 0.0
    %7070 = vmatprep.subr.mxu0 0.0
    %7071 = vmatpush2.xpose.msra.mxu0 0.0
    %7072 = vmatprep.subr.mxu0 0.0
    %7073 = vmatpush2.xpose.msra.mxu0 0.0
    %7074 = vmatprep.mubr.f32.mxu0 %v7008
    %7075 = vmatmul.mubr.f32.gmra.mxu0 %v7003
    %v7076 = vpop.f32.mrf.mxu0
    %v7077 = vadd.f32 0.0, %v7076
    %v7078 = vpop.f32.mrf.mxu0
    %7079 = vdwg.mxu0
    %v7080 = vsel %vm767, %v7077, -inf
    %7081 = vmax.xlane.f32.xlu0 %v7080
    %v7082 = vpop.xlane.xlu0 %7081
    %v7083 = vsub.f32 %v7077, %v7082
    %v7084 = vmul.f32 %v7083, 1.442695
    %v7085 = vpow.pop %v7084
    %v7086 = vsel %vm767, %v7085, 0.0
    %7087 = vadd.xlane.f32.xlu0 %v7086
    %v7088 = vpop.xlane.xlu0 %7087
    %v7089 = vrcp.pop %v7088
    %v7090 = vmul.f32 %v7085, %v7089
    %v7092 = vsel %vm767, %v7090, 0
    %7094 = vmatprep.subr.mxu0 0.0
    %7095 = vmatpush1.msra.mxu0 0.0
    %7096 = vmatprep.subr.mxu0 0.0
    %7097 = vmatpush1.msra.mxu0 0.0
    %7098 = vmatprep.subr.mxu0 0.0
    %7099 = vmatpush1.msra.mxu0 0.0
    %7100 = vmatprep.subr.mxu0 0.0
    %7101 = vmatpush1.msra.mxu0 0.0
    %7102 = vmatprep.subr.mxu0 0.0
    %7103 = vmatpush1.msra.mxu0 0.0
    %7104 = vmatprep.subr.mxu0 0.0
    %7105 = vmatpush1.msra.mxu0 0.0
    %7106 = vmatprep.subr.mxu0 0.0
    %7107 = vmatpush1.msra.mxu0 0.0
    %7108 = vmatprep.subr.mxu0 0.0
    %7109 = vmatpush1.msra.mxu0 0.0
    %7110 = vmatprep.subr.mxu0 0.0
    %7111 = vmatpush1.msra.mxu0 0.0
    %7112 = vmatprep.subr.mxu0 0.0
    %7113 = vmatpush1.msra.mxu0 0.0
    %7114 = vmatprep.subr.mxu0 0.0
    %7115 = vmatpush1.msra.mxu0 0.0
    %7116 = vmatprep.subr.mxu0 0.0
    %7117 = vmatpush1.msra.mxu0 0.0
    %7118 = vmatprep.subr.mxu0 0.0
    %7119 = vmatpush1.msra.mxu0 0.0
    %7120 = vmatprep.subr.mxu0 0.0
    %7121 = vmatpush1.msra.mxu0 0.0
    %7122 = vmatprep.subr.mxu0 0.0
    %7123 = vmatpush1.msra.mxu0 0.0
    %7124 = vmatprep.subr.mxu0 %v128
    %7125 = vmatpush1.msra.mxu0 %v127
    %7126 = vmatprep.subr.mxu0 0.0
    %7127 = vmatpush2.msra.mxu0 0.0
    %7128 = vmatprep.subr.mxu0 0.0
    %7129 = vmatpush2.msra.mxu0 0.0
    %7130 = vmatprep.subr.mxu0 0.0
    %7131 = vmatpush2.msra.mxu0 0.0
    %7132 = vmatprep.subr.mxu0 0.0
    %7133 = vmatpush2.msra.mxu0 0.0
    %7134 = vmatprep.subr.mxu0 0.0
    %7135 = vmatpush2.msra.mxu0 0.0
    %7136 = vmatprep.subr.mxu0 0.0
    %7137 = vmatpush2.msra.mxu0 0.0
    %7138 = vmatprep.subr.mxu0 0.0
    %7139 = vmatpush2.msra.mxu0 0.0
    %7140 = vmatprep.subr.mxu0 0.0
    %7141 = vmatpush2.msra.mxu0 0.0
    %7142 = vmatprep.subr.mxu0 0.0
    %7143 = vmatpush2.msra.mxu0 0.0
    %7144 = vmatprep.subr.mxu0 0.0
    %7145 = vmatpush2.msra.mxu0 0.0
    %7146 = vmatprep.subr.mxu0 0.0
    %7147 = vmatpush2.msra.mxu0 0.0
    %7148 = vmatprep.subr.mxu0 0.0
    %7149 = vmatpush2.msra.mxu0 0.0
    %7150 = vmatprep.subr.mxu0 0.0
    %7151 = vmatpush2.msra.mxu0 0.0
    %7152 = vmatprep.subr.mxu0 0.0
    %7153 = vmatpush2.msra.mxu0 0.0
    %7154 = vmatprep.subr.mxu0 0.0
    %7155 = vmatpush2.msra.mxu0 0.0
    %7156 = vmatprep.subr.mxu0 0.0
    %7157 = vmatpush2.msra.mxu0 0.0
    %7158 = vmatprep.mubr.f32.mxu0 0.0
    %7159 = vmatmul.mubr.f32.gmra.mxu0 %v7092
    %v7160 = vpop.f32.mrf.mxu0
    %v7161 = vadd.f32 0.0, %v7160
    %v7162 = vpop.f32.mrf.mxu0
    %v7163 = vadd.f32 0.0, %v7162
    %7164 = vdwg.mxu0
    %7165 = vxpose.xlu0.b32.start [1/16] %v6487, 128
    %7166 = vxpose.xlu0.b32.cont [2/16] 0.0, 128
    %7167 = vxpose.xlu0.b32.cont [3/16] 0.0, 128
    %7168 = vxpose.xlu0.b32.cont [4/16] 0.0, 128
    %7169 = vxpose.xlu0.b32.cont [5/16] 0.0, 128
    %7170 = vxpose.xlu0.b32.cont [6/16] 0.0, 128
    %7171 = vxpose.xlu0.b32.cont [7/16] 0.0, 128
    %7172 = vxpose.xlu0.b32.cont [8/16] 0.0, 128
    %7173 = vxpose.xlu0.b32.cont [9/16] 0.0, 128
    %7174 = vxpose.xlu0.b32.cont [10/16] 0.0, 128
    %7175 = vxpose.xlu0.b32.cont [11/16] 0.0, 128
    %7176 = vxpose.xlu0.b32.cont [12/16] 0.0, 128
    %7177 = vxpose.xlu0.b32.cont [13/16] 0.0, 128
    %7178 = vxpose.xlu0.b32.cont [14/16] 0.0, 128
    %7179 = vxpose.xlu0.b32.cont [15/16] 0.0, 128
    %7180 = vxpose.xlu0.b32.end [16/16] 0.0, 128
    %v7181 = vpop.trf.xlu0
    %v7182 = vpop.trf.xlu0
    %v7183 = vpop.trf.xlu0
    %v7184 = vpop.trf.xlu0
    %v7185 = vpop.trf.xlu0
    %v7186 = vpop.trf.xlu0
    %v7187 = vpop.trf.xlu0
    %v7188 = vpop.trf.xlu0
    %v7189 = vpop.trf.xlu0
    %v7190 = vpop.trf.xlu0
    %v7191 = vpop.trf.xlu0
    %v7192 = vpop.trf.xlu0
    %v7193 = vpop.trf.xlu0
    %v7194 = vpop.trf.xlu0
    %v7195 = vpop.trf.xlu0
    %v7196 = vpop.trf.xlu0
    %7197 = vxpose.xlu0.b32.start [1/16] %v6528, 128
    %7198 = vxpose.xlu0.b32.cont [2/16] 0.0, 128
    %7199 = vxpose.xlu0.b32.cont [3/16] 0.0, 128
    %7200 = vxpose.xlu0.b32.cont [4/16] 0.0, 128
    %7201 = vxpose.xlu0.b32.cont [5/16] 0.0, 128
    %7202 = vxpose.xlu0.b32.cont [6/16] 0.0, 128
    %7203 = vxpose.xlu0.b32.cont [7/16] 0.0, 128
    %7204 = vxpose.xlu0.b32.cont [8/16] 0.0, 128
    %7205 = vxpose.xlu0.b32.cont [9/16] 0.0, 128
    %7206 = vxpose.xlu0.b32.cont [10/16] 0.0, 128
    %7207 = vxpose.xlu0.b32.cont [11/16] 0.0, 128
    %7208 = vxpose.xlu0.b32.cont [12/16] 0.0, 128
    %7209 = vxpose.xlu0.b32.cont [13/16] 0.0, 128
    %7210 = vxpose.xlu0.b32.cont [14/16] 0.0, 128
    %7211 = vxpose.xlu0.b32.cont [15/16] 0.0, 128
    %7212 = vxpose.xlu0.b32.end [16/16] 0.0, 128
    %v7213 = vpop.trf.xlu0
    %v7214 = vpop.trf.xlu0
    %v7215 = vpop.trf.xlu0
    %v7216 = vpop.trf.xlu0
    %v7217 = vpop.trf.xlu0
    %v7218 = vpop.trf.xlu0
    %v7219 = vpop.trf.xlu0
    %v7220 = vpop.trf.xlu0
    %v7221 = vpop.trf.xlu0
    %v7222 = vpop.trf.xlu0
    %v7223 = vpop.trf.xlu0
    %v7224 = vpop.trf.xlu0
    %v7225 = vpop.trf.xlu0
    %v7226 = vpop.trf.xlu0
    %v7227 = vpop.trf.xlu0
    %v7228 = vpop.trf.xlu0
    %v7230 = vsel %vm767, %v7181, 0
    %v7233 = vsel %vm767, %v7182, 0
    %v7236 = vsel %vm767, %v7183, 0
    %v7239 = vsel %vm767, %v7184, 0
    %v7242 = vsel %vm767, %v7185, 0
    %v7245 = vsel %vm767, %v7186, 0
    %v7248 = vsel %vm767, %v7187, 0
    %v7251 = vsel %vm767, %v7188, 0
    %v7254 = vsel %vm767, %v7189, 0
    %v7257 = vsel %vm767, %v7190, 0
    %v7260 = vsel %vm767, %v7191, 0
    %v7263 = vsel %vm767, %v7192, 0
    %v7266 = vsel %vm767, %v7193, 0
    %v7269 = vsel %vm767, %v7194, 0
    %v7272 = vsel %vm767, %v7195, 0
    %v7275 = vsel %vm767, %v7196, 0
    %v7278 = vsel %vm767, %v7213, 0
    %v7281 = vsel %vm767, %v7214, 0
    %v7284 = vsel %vm767, %v7215, 0
    %v7287 = vsel %vm767, %v7216, 0
    %v7290 = vsel %vm767, %v7217, 0
    %v7293 = vsel %vm767, %v7218, 0
    %v7296 = vsel %vm767, %v7219, 0
    %v7299 = vsel %vm767, %v7220, 0
    %7301 = vmatprep.subr.mxu0 0.0
    %7302 = vmatpush1.msra.mxu0 0.0
    %7303 = vmatprep.subr.mxu0 0.0
    %7304 = vmatpush1.msra.mxu0 0.0
    %7305 = vmatprep.subr.mxu0 0.0
    %7306 = vmatpush1.msra.mxu0 0.0
    %7307 = vmatprep.subr.mxu0 0.0
    %7308 = vmatpush1.msra.mxu0 0.0
    %7309 = vmatprep.subr.mxu0 0.0
    %7310 = vmatpush1.msra.mxu0 0.0
    %7311 = vmatprep.subr.mxu0 0.0
    %7312 = vmatpush1.msra.mxu0 0.0
    %7313 = vmatprep.subr.mxu0 0.0
    %7314 = vmatpush1.msra.mxu0 0.0
    %7315 = vmatprep.subr.mxu0 0.0
    %7316 = vmatpush1.msra.mxu0 0.0
    %7317 = vmatprep.subr.mxu0 0.0
    %7318 = vmatpush1.msra.mxu0 0.0
    %7319 = vmatprep.subr.mxu0 0.0
    %7320 = vmatpush1.msra.mxu0 0.0
    %7321 = vmatprep.subr.mxu0 0.0
    %7322 = vmatpush1.msra.mxu0 0.0
    %7323 = vmatprep.subr.mxu0 0.0
    %7324 = vmatpush1.msra.mxu0 0.0
    %7325 = vmatprep.subr.mxu0 0.0
    %7326 = vmatpush1.msra.mxu0 0.0
    %7327 = vmatprep.subr.mxu0 0.0
    %7328 = vmatpush1.msra.mxu0 0.0
    %7329 = vmatprep.subr.mxu0 0.0
    %7330 = vmatpush1.msra.mxu0 0.0
    %7331 = vmatprep.subr.mxu0 %v128
    %7332 = vmatpush1.msra.mxu0 %v127
    %7333 = vmatprep.subr.mxu0 0.0
    %7334 = vmatpush2.msra.mxu0 0.0
    %7335 = vmatprep.subr.mxu0 0.0
    %7336 = vmatpush2.msra.mxu0 0.0
    %7337 = vmatprep.subr.mxu0 0.0
    %7338 = vmatpush2.msra.mxu0 0.0
    %7339 = vmatprep.subr.mxu0 0.0
    %7340 = vmatpush2.msra.mxu0 0.0
    %7341 = vmatprep.subr.mxu0 0.0
    %7342 = vmatpush2.msra.mxu0 0.0
    %7343 = vmatprep.subr.mxu0 0.0
    %7344 = vmatpush2.msra.mxu0 0.0
    %7345 = vmatprep.subr.mxu0 0.0
    %7346 = vmatpush2.msra.mxu0 0.0
    %7347 = vmatprep.subr.mxu0 0.0
    %7348 = vmatpush2.msra.mxu0 0.0
    %7349 = vmatprep.subr.mxu0 0.0
    %7350 = vmatpush2.msra.mxu0 0.0
    %7351 = vmatprep.subr.mxu0 0.0
    %7352 = vmatpush2.msra.mxu0 0.0
    %7353 = vmatprep.subr.mxu0 0.0
    %7354 = vmatpush2.msra.mxu0 0.0
    %7355 = vmatprep.subr.mxu0 0.0
    %7356 = vmatpush2.msra.mxu0 0.0
    %7357 = vmatprep.subr.mxu0 0.0
    %7358 = vmatpush2.msra.mxu0 0.0
    %7359 = vmatprep.subr.mxu0 0.0
    %7360 = vmatpush2.msra.mxu0 0.0
    %7361 = vmatprep.subr.mxu0 0.0
    %7362 = vmatpush2.msra.mxu0 0.0
    %7363 = vmatprep.subr.mxu0 0.0
    %7364 = vmatpush2.msra.mxu0 0.0
    %7365 = vmatprep.mubr.f32.mxu0 0.0
    %7366 = vmatmul.mubr.f32.gmra.mxu0 %v7230
    %v7367 = vpop.f32.mrf.mxu0
    %v7368 = vadd.f32 0.0, %v7367
    %v7369 = vpop.f32.mrf.mxu0
    %v7370 = vadd.f32 0.0, %v7369
    %7371 = vmatprep.mubr.f32.mxu0 0.0
    %7372 = vmatmul.mubr.f32.gmra.mxu0 %v7233
    %v7373 = vpop.f32.mrf.mxu0
    %v7374 = vadd.f32 0.0, %v7373
    %v7375 = vpop.f32.mrf.mxu0
    %v7376 = vadd.f32 0.0, %v7375
    %7377 = vmatprep.mubr.f32.mxu0 0.0
    %7378 = vmatmul.mubr.f32.gmra.mxu0 %v7236
    %v7379 = vpop.f32.mrf.mxu0
    %v7380 = vadd.f32 0.0, %v7379
    %v7381 = vpop.f32.mrf.mxu0
    %v7382 = vadd.f32 0.0, %v7381
    %7383 = vmatprep.mubr.f32.mxu0 0.0
    %7384 = vmatmul.mubr.f32.gmra.mxu0 %v7239
    %v7385 = vpop.f32.mrf.mxu0
    %v7386 = vadd.f32 0.0, %v7385
    %v7387 = vpop.f32.mrf.mxu0
    %v7388 = vadd.f32 0.0, %v7387
    %7389 = vmatprep.mubr.f32.mxu0 0.0
    %7390 = vmatmul.mubr.f32.gmra.mxu0 %v7242
    %v7391 = vpop.f32.mrf.mxu0
    %v7392 = vadd.f32 0.0, %v7391
    %v7393 = vpop.f32.mrf.mxu0
    %v7394 = vadd.f32 0.0, %v7393
    %7395 = vmatprep.mubr.f32.mxu0 0.0
    %7396 = vmatmul.mubr.f32.gmra.mxu0 %v7245
    %v7397 = vpop.f32.mrf.mxu0
    %v7398 = vadd.f32 0.0, %v7397
    %v7399 = vpop.f32.mrf.mxu0
    %v7400 = vadd.f32 0.0, %v7399
    %7401 = vmatprep.mubr.f32.mxu0 0.0
    %7402 = vmatmul.mubr.f32.gmra.mxu0 %v7248
    %v7403 = vpop.f32.mrf.mxu0
    %v7404 = vadd.f32 0.0, %v7403
    %v7405 = vpop.f32.mrf.mxu0
    %v7406 = vadd.f32 0.0, %v7405
    %7407 = vmatprep.mubr.f32.mxu0 0.0
    %7408 = vmatmul.mubr.f32.gmra.mxu0 %v7251
    %v7409 = vpop.f32.mrf.mxu0
    %v7410 = vadd.f32 0.0, %v7409
    %v7411 = vpop.f32.mrf.mxu0
    %v7412 = vadd.f32 0.0, %v7411
    %7413 = vmatprep.mubr.f32.mxu0 0.0
    %7414 = vmatmul.mubr.f32.gmra.mxu0 %v7254
    %v7415 = vpop.f32.mrf.mxu0
    %v7416 = vadd.f32 0.0, %v7415
    %v7417 = vpop.f32.mrf.mxu0
    %v7418 = vadd.f32 0.0, %v7417
    %7419 = vmatprep.mubr.f32.mxu0 0.0
    %7420 = vmatmul.mubr.f32.gmra.mxu0 %v7257
    %v7421 = vpop.f32.mrf.mxu0
    %v7422 = vadd.f32 0.0, %v7421
    %v7423 = vpop.f32.mrf.mxu0
    %v7424 = vadd.f32 0.0, %v7423
    %7425 = vmatprep.mubr.f32.mxu0 0.0
    %7426 = vmatmul.mubr.f32.gmra.mxu0 %v7260
    %v7427 = vpop.f32.mrf.mxu0
    %v7428 = vadd.f32 0.0, %v7427
    %v7429 = vpop.f32.mrf.mxu0
    %v7430 = vadd.f32 0.0, %v7429
    %7431 = vmatprep.mubr.f32.mxu0 0.0
    %7432 = vmatmul.mubr.f32.gmra.mxu0 %v7263
    %v7433 = vpop.f32.mrf.mxu0
    %v7434 = vadd.f32 0.0, %v7433
    %v7435 = vpop.f32.mrf.mxu0
    %v7436 = vadd.f32 0.0, %v7435
    %7437 = vmatprep.mubr.f32.mxu0 0.0
    %7438 = vmatmul.mubr.f32.gmra.mxu0 %v7266
    %v7439 = vpop.f32.mrf.mxu0
    %v7440 = vadd.f32 0.0, %v7439
    %v7441 = vpop.f32.mrf.mxu0
    %v7442 = vadd.f32 0.0, %v7441
    %7443 = vmatprep.mubr.f32.mxu0 0.0
    %7444 = vmatmul.mubr.f32.gmra.mxu0 %v7269
    %v7445 = vpop.f32.mrf.mxu0
    %v7446 = vadd.f32 0.0, %v7445
    %v7447 = vpop.f32.mrf.mxu0
    %v7448 = vadd.f32 0.0, %v7447
    %7449 = vmatprep.mubr.f32.mxu0 0.0
    %7450 = vmatmul.mubr.f32.gmra.mxu0 %v7272
    %v7451 = vpop.f32.mrf.mxu0
    %v7452 = vadd.f32 0.0, %v7451
    %v7453 = vpop.f32.mrf.mxu0
    %v7454 = vadd.f32 0.0, %v7453
    %7455 = vmatprep.mubr.f32.mxu0 0.0
    %7456 = vmatmul.mubr.f32.gmra.mxu0 %v7275
    %v7457 = vpop.f32.mrf.mxu0
    %v7458 = vadd.f32 0.0, %v7457
    %v7459 = vpop.f32.mrf.mxu0
    %v7460 = vadd.f32 0.0, %v7459
    %7461 = vmatprep.mubr.f32.mxu0 0.0
    %7462 = vmatmul.mubr.f32.gmra.mxu0 %v7278
    %v7463 = vpop.f32.mrf.mxu0
    %v7464 = vadd.f32 0.0, %v7463
    %v7465 = vpop.f32.mrf.mxu0
    %v7466 = vadd.f32 0.0, %v7465
    %7467 = vmatprep.mubr.f32.mxu0 0.0
    %7468 = vmatmul.mubr.f32.gmra.mxu0 %v7281
    %v7469 = vpop.f32.mrf.mxu0
    %v7470 = vadd.f32 0.0, %v7469
    %v7471 = vpop.f32.mrf.mxu0
    %v7472 = vadd.f32 0.0, %v7471
    %7473 = vmatprep.mubr.f32.mxu0 0.0
    %7474 = vmatmul.mubr.f32.gmra.mxu0 %v7284
    %v7475 = vpop.f32.mrf.mxu0
    %v7476 = vadd.f32 0.0, %v7475
    %v7477 = vpop.f32.mrf.mxu0
    %v7478 = vadd.f32 0.0, %v7477
    %7479 = vmatprep.mubr.f32.mxu0 0.0
    %7480 = vmatmul.mubr.f32.gmra.mxu0 %v7287
    %v7481 = vpop.f32.mrf.mxu0
    %v7482 = vadd.f32 0.0, %v7481
    %v7483 = vpop.f32.mrf.mxu0
    %v7484 = vadd.f32 0.0, %v7483
    %7485 = vmatprep.mubr.f32.mxu0 0.0
    %7486 = vmatmul.mubr.f32.gmra.mxu0 %v7290
    %v7487 = vpop.f32.mrf.mxu0
    %v7488 = vadd.f32 0.0, %v7487
    %v7489 = vpop.f32.mrf.mxu0
    %v7490 = vadd.f32 0.0, %v7489
    %7491 = vmatprep.mubr.f32.mxu0 0.0
    %7492 = vmatmul.mubr.f32.gmra.mxu0 %v7293
    %v7493 = vpop.f32.mrf.mxu0
    %v7494 = vadd.f32 0.0, %v7493
    %v7495 = vpop.f32.mrf.mxu0
    %v7496 = vadd.f32 0.0, %v7495
    %7497 = vmatprep.mubr.f32.mxu0 0.0
    %7498 = vmatmul.mubr.f32.gmra.mxu0 %v7296
    %v7499 = vpop.f32.mrf.mxu0
    %v7500 = vadd.f32 0.0, %v7499
    %v7501 = vpop.f32.mrf.mxu0
    %v7502 = vadd.f32 0.0, %v7501
    %7503 = vmatprep.mubr.f32.mxu0 0.0
    %7504 = vmatmul.mubr.f32.gmra.mxu0 %v7299
    %v7505 = vpop.f32.mrf.mxu0
    %v7506 = vadd.f32 0.0, %v7505
    %v7507 = vpop.f32.mrf.mxu0
    %v7508 = vadd.f32 0.0, %v7507
    %7509 = vdwg.mxu0
    %v7510 = vmul.f32 %v7368, %v129
    %v7511 = vmul.f32 %v7370, %v130
    %v7512 = vmul.f32 %v7374, %v131
    %v7513 = vmul.f32 %v7376, %v132
    %v7514 = vmul.f32 %v7380, %v133
    %v7515 = vmul.f32 %v7382, %v134
    %v7516 = vmul.f32 %v7386, %v135
    %v7517 = vmul.f32 %v7388, %v136
    %v7518 = vmul.f32 %v7392, %v137
    %v7519 = vmul.f32 %v7394, %v138
    %v7520 = vmul.f32 %v7398, %v139
    %v7521 = vmul.f32 %v7400, %v140
    %v7522 = vmul.f32 %v7404, %v141
    %v7523 = vmul.f32 %v7406, %v142
    %v7524 = vmul.f32 %v7410, %v143
    %v7525 = vmul.f32 %v7412, %v144
    %v7526 = vmul.f32 %v7416, %v145
    %v7527 = vmul.f32 %v7418, %v146
    %v7528 = vmul.f32 %v7422, %v147
    %v7529 = vmul.f32 %v7424, %v148
    %v7530 = vmul.f32 %v7428, %v149
    %v7531 = vmul.f32 %v7430, %v150
    %v7532 = vmul.f32 %v7434, %v151
    %v7533 = vmul.f32 %v7436, %v152
    %v7534 = vmul.f32 %v7440, %v153
    %v7535 = vmul.f32 %v7442, %v154
    %v7536 = vmul.f32 %v7446, %v155
    %v7537 = vmul.f32 %v7448, %v156
    %v7538 = vmul.f32 %v7452, %v157
    %v7539 = vmul.f32 %v7454, %v158
    %v7540 = vmul.f32 %v7458, %v159
    %v7541 = vmul.f32 %v7460, %v160
    %v7542 = vmul.f32 %v7464, %v161
    %v7543 = vmul.f32 %v7466, %v162
    %v7544 = vmul.f32 %v7470, %v163
    %v7545 = vmul.f32 %v7472, %v164
    %v7546 = vmul.f32 %v7476, %v165
    %v7547 = vmul.f32 %v7478, %v166
    %v7548 = vmul.f32 %v7482, %v167
    %v7549 = vmul.f32 %v7484, %v168
    %v7550 = vmul.f32 %v7488, %v169
    %v7551 = vmul.f32 %v7490, %v170
    %v7552 = vmul.f32 %v7494, %v171
    %v7553 = vmul.f32 %v7496, %v172
    %v7554 = vmul.f32 %v7500, %v173
    %v7555 = vmul.f32 %v7502, %v174
    %v7556 = vmul.f32 %v7506, %v175
    %v7557 = vmul.f32 %v7508, %v176
    %v7559 = vsel %vm563, %v7163, 0
    %7561 = vmatprep.subr.mxu0 %v7541
    %7562 = vmatpush1.msra.mxu0 %v7540
    %7563 = vmatprep.subr.mxu0 %v7539
    %7564 = vmatpush1.msra.mxu0 %v7538
    %7565 = vmatprep.subr.mxu0 %v7537
    %7566 = vmatpush1.msra.mxu0 %v7536
    %7567 = vmatprep.subr.mxu0 %v7535
    %7568 = vmatpush1.msra.mxu0 %v7534
    %7569 = vmatprep.subr.mxu0 %v7533
    %7570 = vmatpush1.msra.mxu0 %v7532
    %7571 = vmatprep.subr.mxu0 %v7531
    %7572 = vmatpush1.msra.mxu0 %v7530
    %7573 = vmatprep.subr.mxu0 %v7529
    %7574 = vmatpush1.msra.mxu0 %v7528
    %7575 = vmatprep.subr.mxu0 %v7527
    %7576 = vmatpush1.msra.mxu0 %v7526
    %7577 = vmatprep.subr.mxu0 %v7525
    %7578 = vmatpush1.msra.mxu0 %v7524
    %7579 = vmatprep.subr.mxu0 %v7523
    %7580 = vmatpush1.msra.mxu0 %v7522
    %7581 = vmatprep.subr.mxu0 %v7521
    %7582 = vmatpush1.msra.mxu0 %v7520
    %7583 = vmatprep.subr.mxu0 %v7519
    %7584 = vmatpush1.msra.mxu0 %v7518
    %7585 = vmatprep.subr.mxu0 %v7517
    %7586 = vmatpush1.msra.mxu0 %v7516
    %7587 = vmatprep.subr.mxu0 %v7515
    %7588 = vmatpush1.msra.mxu0 %v7514
    %7589 = vmatprep.subr.mxu0 %v7513
    %7590 = vmatpush1.msra.mxu0 %v7512
    %7591 = vmatprep.subr.mxu0 %v7511
    %7592 = vmatpush1.msra.mxu0 %v7510
    %7593 = vmatprep.subr.mxu0 0.0
    %7594 = vmatpush2.msra.mxu0 0.0
    %7595 = vmatprep.subr.mxu0 0.0
    %7596 = vmatpush2.msra.mxu0 0.0
    %7597 = vmatprep.subr.mxu0 0.0
    %7598 = vmatpush2.msra.mxu0 0.0
    %7599 = vmatprep.subr.mxu0 0.0
    %7600 = vmatpush2.msra.mxu0 0.0
    %7601 = vmatprep.subr.mxu0 0.0
    %7602 = vmatpush2.msra.mxu0 0.0
    %7603 = vmatprep.subr.mxu0 0.0
    %7604 = vmatpush2.msra.mxu0 0.0
    %7605 = vmatprep.subr.mxu0 0.0
    %7606 = vmatpush2.msra.mxu0 0.0
    %7607 = vmatprep.subr.mxu0 0.0
    %7608 = vmatpush2.msra.mxu0 0.0
    %7609 = vmatprep.subr.mxu0 %v7557
    %7610 = vmatpush2.msra.mxu0 %v7556
    %7611 = vmatprep.subr.mxu0 %v7555
    %7612 = vmatpush2.msra.mxu0 %v7554
    %7613 = vmatprep.subr.mxu0 %v7553
    %7614 = vmatpush2.msra.mxu0 %v7552
    %7615 = vmatprep.subr.mxu0 %v7551
    %7616 = vmatpush2.msra.mxu0 %v7550
    %7617 = vmatprep.subr.mxu0 %v7549
    %7618 = vmatpush2.msra.mxu0 %v7548
    %7619 = vmatprep.subr.mxu0 %v7547
    %7620 = vmatpush2.msra.mxu0 %v7546
    %7621 = vmatprep.subr.mxu0 %v7545
    %7622 = vmatpush2.msra.mxu0 %v7544
    %7623 = vmatprep.subr.mxu0 %v7543
    %7624 = vmatpush2.msra.mxu0 %v7542
    %7625 = vmatprep.mubr.f32.mxu0 %v7559
    %7626 = vmatmul.mubr.f32.gmra.mxu0 %v7161
    %v7627 = vpop.f32.mrf.mxu0
    %v7628 = vadd.f32 0.0, %v7627
    %v7629 = vpop.f32.mrf.mxu0
    %v7630 = vadd.f32 0.0, %v7629
    %7631 = vdwg.mxu0
    %7632 = vxpose.xlu0.b32.start [1/16] %v6446, 128
    %7633 = vxpose.xlu0.b32.cont [2/16] 0.0, 128
    %7634 = vxpose.xlu0.b32.cont [3/16] 0.0, 128
    %7635 = vxpose.xlu0.b32.cont [4/16] 0.0, 128
    %7636 = vxpose.xlu0.b32.cont [5/16] 0.0, 128
    %7637 = vxpose.xlu0.b32.cont [6/16] 0.0, 128
    %7638 = vxpose.xlu0.b32.cont [7/16] 0.0, 128
    %7639 = vxpose.xlu0.b32.cont [8/16] 0.0, 128
    %7640 = vxpose.xlu0.b32.cont [9/16] 0.0, 128
    %7641 = vxpose.xlu0.b32.cont [10/16] 0.0, 128
    %7642 = vxpose.xlu0.b32.cont [11/16] 0.0, 128
    %7643 = vxpose.xlu0.b32.cont [12/16] 0.0, 128
    %7644 = vxpose.xlu0.b32.cont [13/16] 0.0, 128
    %7645 = vxpose.xlu0.b32.cont [14/16] 0.0, 128
    %7646 = vxpose.xlu0.b32.cont [15/16] 0.0, 128
    %7647 = vxpose.xlu0.b32.end [16/16] 0.0, 128
    %v7648 = vpop.trf.xlu0
    %v7649 = vpop.trf.xlu0
    %v7650 = vpop.trf.xlu0
    %v7651 = vpop.trf.xlu0
    %v7652 = vpop.trf.xlu0
    %v7653 = vpop.trf.xlu0
    %v7654 = vpop.trf.xlu0
    %v7655 = vpop.trf.xlu0
    %v7656 = vpop.trf.xlu0
    %v7657 = vpop.trf.xlu0
    %v7658 = vpop.trf.xlu0
    %v7659 = vpop.trf.xlu0
    %v7660 = vpop.trf.xlu0
    %v7661 = vpop.trf.xlu0
    %v7662 = vpop.trf.xlu0
    %v7663 = vpop.trf.xlu0
    %7664 = vxpose.xlu0.b32.start [1/16] %v6448, 128
    %7665 = vxpose.xlu0.b32.cont [2/16] 0.0, 128
    %7666 = vxpose.xlu0.b32.cont [3/16] 0.0, 128
    %7667 = vxpose.xlu0.b32.cont [4/16] 0.0, 128
    %7668 = vxpose.xlu0.b32.cont [5/16] 0.0, 128
    %7669 = vxpose.xlu0.b32.cont [6/16] 0.0, 128
    %7670 = vxpose.xlu0.b32.cont [7/16] 0.0, 128
    %7671 = vxpose.xlu0.b32.cont [8/16] 0.0, 128
    %7672 = vxpose.xlu0.b32.cont [9/16] 0.0, 128
    %7673 = vxpose.xlu0.b32.cont [10/16] 0.0, 128
    %7674 = vxpose.xlu0.b32.cont [11/16] 0.0, 128
    %7675 = vxpose.xlu0.b32.cont [12/16] 0.0, 128
    %7676 = vxpose.xlu0.b32.cont [13/16] 0.0, 128
    %7677 = vxpose.xlu0.b32.cont [14/16] 0.0, 128
    %7678 = vxpose.xlu0.b32.cont [15/16] 0.0, 128
    %7679 = vxpose.xlu0.b32.end [16/16] 0.0, 128
    %v7680 = vpop.trf.xlu0
    %v7681 = vpop.trf.xlu0
    %v7682 = vpop.trf.xlu0
    %v7683 = vpop.trf.xlu0
    %v7684 = vpop.trf.xlu0
    %v7685 = vpop.trf.xlu0
    %v7686 = vpop.trf.xlu0
    %v7687 = vpop.trf.xlu0
    %v7688 = vpop.trf.xlu0
    %v7689 = vpop.trf.xlu0
    %v7690 = vpop.trf.xlu0
    %v7691 = vpop.trf.xlu0
    %v7692 = vpop.trf.xlu0
    %v7693 = vpop.trf.xlu0
    %v7694 = vpop.trf.xlu0
    %v7695 = vpop.trf.xlu0
    %7698 = vrot.lane.b32.xlu0 %v6448, 64
    %v7699 = vpop.permute.xlu0 %7698
    %7700 = vrot.lane.b32.xlu0 %v6489, 64
    %v7701 = vpop.permute.xlu0 %7700
    %v7702 = vsel %vm563, %v7699, %v7701
    %v7706 = vsel %vm767, %v7648, 0
    %v7709 = vsel %vm767, %v7649, 0
    %v7712 = vsel %vm767, %v7650, 0
    %v7715 = vsel %vm767, %v7651, 0
    %v7718 = vsel %vm767, %v7652, 0
    %v7721 = vsel %vm767, %v7653, 0
    %v7724 = vsel %vm767, %v7654, 0
    %v7727 = vsel %vm767, %v7655, 0
    %v7730 = vsel %vm767, %v7656, 0
    %v7733 = vsel %vm767, %v7657, 0
    %v7736 = vsel %vm767, %v7658, 0
    %v7739 = vsel %vm767, %v7659, 0
    %v7742 = vsel %vm767, %v7660, 0
    %v7745 = vsel %vm767, %v7661, 0
    %v7748 = vsel %vm767, %v7662, 0
    %v7751 = vsel %vm767, %v7663, 0
    %v7754 = vsel %vm767, %v7680, 0
    %v7757 = vsel %vm767, %v7681, 0
    %v7760 = vsel %vm767, %v7682, 0
    %v7763 = vsel %vm767, %v7683, 0
    %v7766 = vsel %vm767, %v7684, 0
    %v7769 = vsel %vm767, %v7685, 0
    %v7772 = vsel %vm767, %v7686, 0
    %v7775 = vsel %vm767, %v7687, 0
    %7777 = vmatprep.subr.mxu0 0.0
    %7778 = vmatpush1.msra.mxu0 0.0
    %7779 = vmatprep.subr.mxu0 0.0
    %7780 = vmatpush1.msra.mxu0 0.0
    %7781 = vmatprep.subr.mxu0 0.0
    %7782 = vmatpush1.msra.mxu0 0.0
    %7783 = vmatprep.subr.mxu0 0.0
    %7784 = vmatpush1.msra.mxu0 0.0
    %7785 = vmatprep.subr.mxu0 0.0
    %7786 = vmatpush1.msra.mxu0 0.0
    %7787 = vmatprep.subr.mxu0 0.0
    %7788 = vmatpush1.msra.mxu0 0.0
    %7789 = vmatprep.subr.mxu0 0.0
    %7790 = vmatpush1.msra.mxu0 0.0
    %7791 = vmatprep.subr.mxu0 0.0
    %7792 = vmatpush1.msra.mxu0 0.0
    %7793 = vmatprep.subr.mxu0 0.0
    %7794 = vmatpush1.msra.mxu0 0.0
    %7795 = vmatprep.subr.mxu0 0.0
    %7796 = vmatpush1.msra.mxu0 0.0
    %7797 = vmatprep.subr.mxu0 0.0
    %7798 = vmatpush1.msra.mxu0 0.0
    %7799 = vmatprep.subr.mxu0 0.0
    %7800 = vmatpush1.msra.mxu0 0.0
    %7801 = vmatprep.subr.mxu0 0.0
    %7802 = vmatpush1.msra.mxu0 0.0
    %7803 = vmatprep.subr.mxu0 0.0
    %7804 = vmatpush1.msra.mxu0 0.0
    %7805 = vmatprep.subr.mxu0 0.0
    %7806 = vmatpush1.msra.mxu0 0.0
    %7807 = vmatprep.subr.mxu0 %v7701
    %7808 = vmatpush1.msra.mxu0 %v7702
    %7809 = vmatprep.subr.mxu0 0.0
    %7810 = vmatpush2.msra.mxu0 0.0
    %7811 = vmatprep.subr.mxu0 0.0
    %7812 = vmatpush2.msra.mxu0 0.0
    %7813 = vmatprep.subr.mxu0 0.0
    %7814 = vmatpush2.msra.mxu0 0.0
    %7815 = vmatprep.subr.mxu0 0.0
    %7816 = vmatpush2.msra.mxu0 0.0
    %7817 = vmatprep.subr.mxu0 0.0
    %7818 = vmatpush2.msra.mxu0 0.0
    %7819 = vmatprep.subr.mxu0 0.0
    %7820 = vmatpush2.msra.mxu0 0.0
    %7821 = vmatprep.subr.mxu0 0.0
    %7822 = vmatpush2.msra.mxu0 0.0
    %7823 = vmatprep.subr.mxu0 0.0
    %7824 = vmatpush2.msra.mxu0 0.0
    %7825 = vmatprep.subr.mxu0 0.0
    %7826 = vmatpush2.msra.mxu0 0.0
    %7827 = vmatprep.subr.mxu0 0.0
    %7828 = vmatpush2.msra.mxu0 0.0
    %7829 = vmatprep.subr.mxu0 0.0
    %7830 = vmatpush2.msra.mxu0 0.0
    %7831 = vmatprep.subr.mxu0 0.0
    %7832 = vmatpush2.msra.mxu0 0.0
    %7833 = vmatprep.subr.mxu0 0.0
    %7834 = vmatpush2.msra.mxu0 0.0
    %7835 = vmatprep.subr.mxu0 0.0
    %7836 = vmatpush2.msra.mxu0 0.0
    %7837 = vmatprep.subr.mxu0 0.0
    %7838 = vmatpush2.msra.mxu0 0.0
    %7839 = vmatprep.subr.mxu0 0.0
    %7840 = vmatpush2.msra.mxu0 0.0
    %7841 = vmatprep.mubr.f32.mxu0 0.0
    %7842 = vmatmul.mubr.f32.gmra.mxu0 %v7706
    %v7843 = vpop.f32.mrf.mxu0
    %v7844 = vadd.f32 0.0, %v7843
    %v7845 = vpop.f32.mrf.mxu0
    %v7846 = vadd.f32 0.0, %v7845
    %7847 = vmatprep.mubr.f32.mxu0 0.0
    %7848 = vmatmul.mubr.f32.gmra.mxu0 %v7709
    %v7849 = vpop.f32.mrf.mxu0
    %v7850 = vadd.f32 0.0, %v7849
    %v7851 = vpop.f32.mrf.mxu0
    %v7852 = vadd.f32 0.0, %v7851
    %7853 = vmatprep.mubr.f32.mxu0 0.0
    %7854 = vmatmul.mubr.f32.gmra.mxu0 %v7712
    %v7855 = vpop.f32.mrf.mxu0
    %v7856 = vadd.f32 0.0, %v7855
    %v7857 = vpop.f32.mrf.mxu0
    %v7858 = vadd.f32 0.0, %v7857
    %7859 = vmatprep.mubr.f32.mxu0 0.0
    %7860 = vmatmul.mubr.f32.gmra.mxu0 %v7715
    %v7861 = vpop.f32.mrf.mxu0
    %v7862 = vadd.f32 0.0, %v7861
    %v7863 = vpop.f32.mrf.mxu0
    %v7864 = vadd.f32 0.0, %v7863
    %7865 = vmatprep.mubr.f32.mxu0 0.0
    %7866 = vmatmul.mubr.f32.gmra.mxu0 %v7718
    %v7867 = vpop.f32.mrf.mxu0
    %v7868 = vadd.f32 0.0, %v7867
    %v7869 = vpop.f32.mrf.mxu0
    %v7870 = vadd.f32 0.0, %v7869
    %7871 = vmatprep.mubr.f32.mxu0 0.0
    %7872 = vmatmul.mubr.f32.gmra.mxu0 %v7721
    %v7873 = vpop.f32.mrf.mxu0
    %v7874 = vadd.f32 0.0, %v7873
    %v7875 = vpop.f32.mrf.mxu0
    %v7876 = vadd.f32 0.0, %v7875
    %7877 = vmatprep.mubr.f32.mxu0 0.0
    %7878 = vmatmul.mubr.f32.gmra.mxu0 %v7724
    %v7879 = vpop.f32.mrf.mxu0
    %v7880 = vadd.f32 0.0, %v7879
    %v7881 = vpop.f32.mrf.mxu0
    %v7882 = vadd.f32 0.0, %v7881
    %7883 = vmatprep.mubr.f32.mxu0 0.0
    %7884 = vmatmul.mubr.f32.gmra.mxu0 %v7727
    %v7885 = vpop.f32.mrf.mxu0
    %v7886 = vadd.f32 0.0, %v7885
    %v7887 = vpop.f32.mrf.mxu0
    %v7888 = vadd.f32 0.0, %v7887
    %7889 = vmatprep.mubr.f32.mxu0 0.0
    %7890 = vmatmul.mubr.f32.gmra.mxu0 %v7730
    %v7891 = vpop.f32.mrf.mxu0
    %v7892 = vadd.f32 0.0, %v7891
    %v7893 = vpop.f32.mrf.mxu0
    %v7894 = vadd.f32 0.0, %v7893
    %7895 = vmatprep.mubr.f32.mxu0 0.0
    %7896 = vmatmul.mubr.f32.gmra.mxu0 %v7733
    %v7897 = vpop.f32.mrf.mxu0
    %v7898 = vadd.f32 0.0, %v7897
    %v7899 = vpop.f32.mrf.mxu0
    %v7900 = vadd.f32 0.0, %v7899
    %7901 = vmatprep.mubr.f32.mxu0 0.0
    %7902 = vmatmul.mubr.f32.gmra.mxu0 %v7736
    %v7903 = vpop.f32.mrf.mxu0
    %v7904 = vadd.f32 0.0, %v7903
    %v7905 = vpop.f32.mrf.mxu0
    %v7906 = vadd.f32 0.0, %v7905
    %7907 = vmatprep.mubr.f32.mxu0 0.0
    %7908 = vmatmul.mubr.f32.gmra.mxu0 %v7739
    %v7909 = vpop.f32.mrf.mxu0
    %v7910 = vadd.f32 0.0, %v7909
    %v7911 = vpop.f32.mrf.mxu0
    %v7912 = vadd.f32 0.0, %v7911
    %7913 = vmatprep.mubr.f32.mxu0 0.0
    %7914 = vmatmul.mubr.f32.gmra.mxu0 %v7742
    %v7915 = vpop.f32.mrf.mxu0
    %v7916 = vadd.f32 0.0, %v7915
    %v7917 = vpop.f32.mrf.mxu0
    %v7918 = vadd.f32 0.0, %v7917
    %7919 = vmatprep.mubr.f32.mxu0 0.0
    %7920 = vmatmul.mubr.f32.gmra.mxu0 %v7745
    %v7921 = vpop.f32.mrf.mxu0
    %v7922 = vadd.f32 0.0, %v7921
    %v7923 = vpop.f32.mrf.mxu0
    %v7924 = vadd.f32 0.0, %v7923
    %7925 = vmatprep.mubr.f32.mxu0 0.0
    %7926 = vmatmul.mubr.f32.gmra.mxu0 %v7748
    %v7927 = vpop.f32.mrf.mxu0
    %v7928 = vadd.f32 0.0, %v7927
    %v7929 = vpop.f32.mrf.mxu0
    %v7930 = vadd.f32 0.0, %v7929
    %7931 = vmatprep.mubr.f32.mxu0 0.0
    %7932 = vmatmul.mubr.f32.gmra.mxu0 %v7751
    %v7933 = vpop.f32.mrf.mxu0
    %v7934 = vadd.f32 0.0, %v7933
    %v7935 = vpop.f32.mrf.mxu0
    %v7936 = vadd.f32 0.0, %v7935
    %7937 = vmatprep.mubr.f32.mxu0 0.0
    %7938 = vmatmul.mubr.f32.gmra.mxu0 %v7754
    %v7939 = vpop.f32.mrf.mxu0
    %v7940 = vadd.f32 0.0, %v7939
    %v7941 = vpop.f32.mrf.mxu0
    %v7942 = vadd.f32 0.0, %v7941
    %7943 = vmatprep.mubr.f32.mxu0 0.0
    %7944 = vmatmul.mubr.f32.gmra.mxu0 %v7757
    %v7945 = vpop.f32.mrf.mxu0
    %v7946 = vadd.f32 0.0, %v7945
    %v7947 = vpop.f32.mrf.mxu0
    %v7948 = vadd.f32 0.0, %v7947
    %7949 = vmatprep.mubr.f32.mxu0 0.0
    %7950 = vmatmul.mubr.f32.gmra.mxu0 %v7760
    %v7951 = vpop.f32.mrf.mxu0
    %v7952 = vadd.f32 0.0, %v7951
    %v7953 = vpop.f32.mrf.mxu0
    %v7954 = vadd.f32 0.0, %v7953
    %7955 = vmatprep.mubr.f32.mxu0 0.0
    %7956 = vmatmul.mubr.f32.gmra.mxu0 %v7763
    %v7957 = vpop.f32.mrf.mxu0
    %v7958 = vadd.f32 0.0, %v7957
    %v7959 = vpop.f32.mrf.mxu0
    %v7960 = vadd.f32 0.0, %v7959
    %7961 = vmatprep.mubr.f32.mxu0 0.0
    %7962 = vmatmul.mubr.f32.gmra.mxu0 %v7766
    %v7963 = vpop.f32.mrf.mxu0
    %v7964 = vadd.f32 0.0, %v7963
    %v7965 = vpop.f32.mrf.mxu0
    %v7966 = vadd.f32 0.0, %v7965
    %7967 = vmatprep.mubr.f32.mxu0 0.0
    %7968 = vmatmul.mubr.f32.gmra.mxu0 %v7769
    %v7969 = vpop.f32.mrf.mxu0
    %v7970 = vadd.f32 0.0, %v7969
    %v7971 = vpop.f32.mrf.mxu0
    %v7972 = vadd.f32 0.0, %v7971
    %7973 = vmatprep.mubr.f32.mxu0 0.0
    %7974 = vmatmul.mubr.f32.gmra.mxu0 %v7772
    %v7975 = vpop.f32.mrf.mxu0
    %v7976 = vadd.f32 0.0, %v7975
    %v7977 = vpop.f32.mrf.mxu0
    %v7978 = vadd.f32 0.0, %v7977
    %7979 = vmatprep.mubr.f32.mxu0 0.0
    %7980 = vmatmul.mubr.f32.gmra.mxu0 %v7775
    %v7981 = vpop.f32.mrf.mxu0
    %v7982 = vadd.f32 0.0, %v7981
    %v7983 = vpop.f32.mrf.mxu0
    %v7984 = vadd.f32 0.0, %v7983
    %7985 = vdwg.mxu0
    %v7986 = vmul.f32 %v7844, %v129
    %v7987 = vmul.f32 %v7846, %v130
    %v7988 = vmul.f32 %v7850, %v131
    %v7989 = vmul.f32 %v7852, %v132
    %v7990 = vmul.f32 %v7856, %v133
    %v7991 = vmul.f32 %v7858, %v134
    %v7992 = vmul.f32 %v7862, %v135
    %v7993 = vmul.f32 %v7864, %v136
    %v7994 = vmul.f32 %v7868, %v137
    %v7995 = vmul.f32 %v7870, %v138
    %v7996 = vmul.f32 %v7874, %v139
    %v7997 = vmul.f32 %v7876, %v140
    %v7998 = vmul.f32 %v7880, %v141
    %v7999 = vmul.f32 %v7882, %v142
    %v8000 = vmul.f32 %v7886, %v143
    %v8001 = vmul.f32 %v7888, %v144
    %v8002 = vmul.f32 %v7892, %v145
    %v8003 = vmul.f32 %v7894, %v146
    %v8004 = vmul.f32 %v7898, %v147
    %v8005 = vmul.f32 %v7900, %v148
    %v8006 = vmul.f32 %v7904, %v149
    %v8007 = vmul.f32 %v7906, %v150
    %v8008 = vmul.f32 %v7910, %v151
    %v8009 = vmul.f32 %v7912, %v152
    %v8010 = vmul.f32 %v7916, %v153
    %v8011 = vmul.f32 %v7918, %v154
    %v8012 = vmul.f32 %v7922, %v155
    %v8013 = vmul.f32 %v7924, %v156
    %v8014 = vmul.f32 %v7928, %v157
    %v8015 = vmul.f32 %v7930, %v158
    %v8016 = vmul.f32 %v7934, %v159
    %v8017 = vmul.f32 %v7936, %v160
    %v8018 = vmul.f32 %v7940, %v161
    %v8019 = vmul.f32 %v7942, %v162
    %v8020 = vmul.f32 %v7946, %v163
    %v8021 = vmul.f32 %v7948, %v164
    %v8022 = vmul.f32 %v7952, %v165
    %v8023 = vmul.f32 %v7954, %v166
    %v8024 = vmul.f32 %v7958, %v167
    %v8025 = vmul.f32 %v7960, %v168
    %v8026 = vmul.f32 %v7964, %v169
    %v8027 = vmul.f32 %v7966, %v170
    %v8028 = vmul.f32 %v7970, %v171
    %v8029 = vmul.f32 %v7972, %v172
    %v8030 = vmul.f32 %v7976, %v173
    %v8031 = vmul.f32 %v7978, %v174
    %v8032 = vmul.f32 %v7982, %v175
    %v8033 = vmul.f32 %v7984, %v176
    %8034 = vmatprep.subr.mxu0 %v8017
    %8035 = vmatpush1.msra.mxu0 %v8016
    %8036 = vmatprep.subr.mxu0 %v8015
    %8037 = vmatpush1.msra.mxu0 %v8014
    %8038 = vmatprep.subr.mxu0 %v8013
    %8039 = vmatpush1.msra.mxu0 %v8012
    %8040 = vmatprep.subr.mxu0 %v8011
    %8041 = vmatpush1.msra.mxu0 %v8010
    %8042 = vmatprep.subr.mxu0 %v8009
    %8043 = vmatpush1.msra.mxu0 %v8008
    %8044 = vmatprep.subr.mxu0 %v8007
    %8045 = vmatpush1.msra.mxu0 %v8006
    %8046 = vmatprep.subr.mxu0 %v8005
    %8047 = vmatpush1.msra.mxu0 %v8004
    %8048 = vmatprep.subr.mxu0 %v8003
    %8049 = vmatpush1.msra.mxu0 %v8002
    %8050 = vmatprep.subr.mxu0 %v8001
    %8051 = vmatpush1.msra.mxu0 %v8000
    %8052 = vmatprep.subr.mxu0 %v7999
    %8053 = vmatpush1.msra.mxu0 %v7998
    %8054 = vmatprep.subr.mxu0 %v7997
    %8055 = vmatpush1.msra.mxu0 %v7996
    %8056 = vmatprep.subr.mxu0 %v7995
    %8057 = vmatpush1.msra.mxu0 %v7994
    %8058 = vmatprep.subr.mxu0 %v7993
    %8059 = vmatpush1.msra.mxu0 %v7992
    %8060 = vmatprep.subr.mxu0 %v7991
    %8061 = vmatpush1.msra.mxu0 %v7990
    %8062 = vmatprep.subr.mxu0 %v7989
    %8063 = vmatpush1.msra.mxu0 %v7988
    %8064 = vmatprep.subr.mxu0 %v7987
    %8065 = vmatpush1.msra.mxu0 %v7986
    %8066 = vmatprep.subr.mxu0 0.0
    %8067 = vmatpush2.msra.mxu0 0.0
    %8068 = vmatprep.subr.mxu0 0.0
    %8069 = vmatpush2.msra.mxu0 0.0
    %8070 = vmatprep.subr.mxu0 0.0
    %8071 = vmatpush2.msra.mxu0 0.0
    %8072 = vmatprep.subr.mxu0 0.0
    %8073 = vmatpush2.msra.mxu0 0.0
    %8074 = vmatprep.subr.mxu0 0.0
    %8075 = vmatpush2.msra.mxu0 0.0
    %8076 = vmatprep.subr.mxu0 0.0
    %8077 = vmatpush2.msra.mxu0 0.0
    %8078 = vmatprep.subr.mxu0 0.0
    %8079 = vmatpush2.msra.mxu0 0.0
    %8080 = vmatprep.subr.mxu0 0.0
    %8081 = vmatpush2.msra.mxu0 0.0
    %8082 = vmatprep.subr.mxu0 %v8033
    %8083 = vmatpush2.msra.mxu0 %v8032
    %8084 = vmatprep.subr.mxu0 %v8031
    %8085 = vmatpush2.msra.mxu0 %v8030
    %8086 = vmatprep.subr.mxu0 %v8029
    %8087 = vmatpush2.msra.mxu0 %v8028
    %8088 = vmatprep.subr.mxu0 %v8027
    %8089 = vmatpush2.msra.mxu0 %v8026
    %8090 = vmatprep.subr.mxu0 %v8025
    %8091 = vmatpush2.msra.mxu0 %v8024
    %8092 = vmatprep.subr.mxu0 %v8023
    %8093 = vmatpush2.msra.mxu0 %v8022
    %8094 = vmatprep.subr.mxu0 %v8021
    %8095 = vmatpush2.msra.mxu0 %v8020
    %8096 = vmatprep.subr.mxu0 %v8019
    %8097 = vmatpush2.msra.mxu0 %v8018
    %8098 = vmatprep.mubr.f32.mxu0 %v1098
    %8099 = vmatmul.mubr.f32.gmra.mxu0 %v127
    %v8100 = vpop.f32.mrf.mxu0
    %v8101 = vadd.f32 0.0, %v8100
    %v8102 = vpop.f32.mrf.mxu0
    %v8103 = vadd.f32 0.0, %v8102
    %8104 = vdwg.mxu0
    %v8106 = vsel %vm563, %v8103, 0
    %8108 = vmatprep.subr.mxu0 0.0
    %8109 = vmatpush1.xpose.msra.mxu0 0.0
    %8110 = vmatprep.subr.mxu0 0.0
    %8111 = vmatpush1.xpose.msra.mxu0 0.0
    %8112 = vmatprep.subr.mxu0 0.0
    %8113 = vmatpush1.xpose.msra.mxu0 0.0
    %8114 = vmatprep.subr.mxu0 0.0
    %8115 = vmatpush1.xpose.msra.mxu0 0.0
    %8116 = vmatprep.subr.mxu0 0.0
    %8117 = vmatpush1.xpose.msra.mxu0 0.0
    %8118 = vmatprep.subr.mxu0 0.0
    %8119 = vmatpush1.xpose.msra.mxu0 0.0
    %8120 = vmatprep.subr.mxu0 0.0
    %8121 = vmatpush1.xpose.msra.mxu0 0.0
    %8122 = vmatprep.subr.mxu0 0.0
    %8123 = vmatpush1.xpose.msra.mxu0 0.0
    %8124 = vmatprep.subr.mxu0 0.0
    %8125 = vmatpush1.xpose.msra.mxu0 0.0
    %8126 = vmatprep.subr.mxu0 0.0
    %8127 = vmatpush1.xpose.msra.mxu0 0.0
    %8128 = vmatprep.subr.mxu0 0.0
    %8129 = vmatpush1.xpose.msra.mxu0 0.0
    %8130 = vmatprep.subr.mxu0 0.0
    %8131 = vmatpush1.xpose.msra.mxu0 0.0
    %8132 = vmatprep.subr.mxu0 0.0
    %8133 = vmatpush1.xpose.msra.mxu0 0.0
    %8134 = vmatprep.subr.mxu0 0.0
    %8135 = vmatpush1.xpose.msra.mxu0 0.0
    %8136 = vmatprep.subr.mxu0 0.0
    %8137 = vmatpush1.xpose.msra.mxu0 0.0
    %8138 = vmatprep.subr.mxu0 %v1098
    %8139 = vmatpush1.xpose.msra.mxu0 %v127
    %8140 = vmatprep.subr.mxu0 0.0
    %8141 = vmatpush2.xpose.msra.mxu0 0.0
    %8142 = vmatprep.subr.mxu0 0.0
    %8143 = vmatpush2.xpose.msra.mxu0 0.0
    %8144 = vmatprep.subr.mxu0 0.0
    %8145 = vmatpush2.xpose.msra.mxu0 0.0
    %8146 = vmatprep.subr.mxu0 0.0
    %8147 = vmatpush2.xpose.msra.mxu0 0.0
    %8148 = vmatprep.subr.mxu0 0.0
    %8149 = vmatpush2.xpose.msra.mxu0 0.0
    %8150 = vmatprep.subr.mxu0 0.0
    %8151 = vmatpush2.xpose.msra.mxu0 0.0
    %8152 = vmatprep.subr.mxu0 0.0
    %8153 = vmatpush2.xpose.msra.mxu0 0.0
    %8154 = vmatprep.subr.mxu0 0.0
    %8155 = vmatpush2.xpose.msra.mxu0 0.0
    %8156 = vmatprep.subr.mxu0 0.0
    %8157 = vmatpush2.xpose.msra.mxu0 0.0
    %8158 = vmatprep.subr.mxu0 0.0
    %8159 = vmatpush2.xpose.msra.mxu0 0.0
    %8160 = vmatprep.subr.mxu0 0.0
    %8161 = vmatpush2.xpose.msra.mxu0 0.0
    %8162 = vmatprep.subr.mxu0 0.0
    %8163 = vmatpush2.xpose.msra.mxu0 0.0
    %8164 = vmatprep.subr.mxu0 0.0
    %8165 = vmatpush2.xpose.msra.mxu0 0.0
    %8166 = vmatprep.subr.mxu0 0.0
    %8167 = vmatpush2.xpose.msra.mxu0 0.0
    %8168 = vmatprep.subr.mxu0 0.0
    %8169 = vmatpush2.xpose.msra.mxu0 0.0
    %8170 = vmatprep.subr.mxu0 0.0
    %8171 = vmatpush2.xpose.msra.mxu0 0.0
    %8172 = vmatprep.mubr.f32.mxu0 %v8106
    %8173 = vmatmul.mubr.f32.gmra.mxu0 %v8101
    %v8174 = vpop.f32.mrf.mxu0
    %v8175 = vadd.f32 0.0, %v8174
    %v8176 = vpop.f32.mrf.mxu0
    %8177 = vdwg.mxu0
    %v8178 = vsel %vm767, %v8175, -inf
    %8179 = vmax.xlane.f32.xlu0 %v8178
    %v8180 = vpop.xlane.xlu0 %8179
    %v8181 = vsub.f32 %v8175, %v8180
    %v8182 = vmul.f32 %v8181, 1.442695
    %v8183 = vpow.pop %v8182
    %v8184 = vsel %vm767, %v8183, 0.0
    %8185 = vadd.xlane.f32.xlu0 %v8184
    %v8186 = vpop.xlane.xlu0 %8185
    %v8187 = vrcp.pop %v8186
    %v8188 = vmul.f32 %v8183, %v8187
    %v8190 = vsel %vm767, %v8188, 0
    %8192 = vmatprep.subr.mxu0 0.0
    %8193 = vmatpush1.msra.mxu0 0.0
    %8194 = vmatprep.subr.mxu0 0.0
    %8195 = vmatpush1.msra.mxu0 0.0
    %8196 = vmatprep.subr.mxu0 0.0
    %8197 = vmatpush1.msra.mxu0 0.0
    %8198 = vmatprep.subr.mxu0 0.0
    %8199 = vmatpush1.msra.mxu0 0.0
    %8200 = vmatprep.subr.mxu0 0.0
    %8201 = vmatpush1.msra.mxu0 0.0
    %8202 = vmatprep.subr.mxu0 0.0
    %8203 = vmatpush1.msra.mxu0 0.0
    %8204 = vmatprep.subr.mxu0 0.0
    %8205 = vmatpush1.msra.mxu0 0.0
    %8206 = vmatprep.subr.mxu0 0.0
    %8207 = vmatpush1.msra.mxu0 0.0
    %8208 = vmatprep.subr.mxu0 0.0
    %8209 = vmatpush1.msra.mxu0 0.0
    %8210 = vmatprep.subr.mxu0 0.0
    %8211 = vmatpush1.msra.mxu0 0.0
    %8212 = vmatprep.subr.mxu0 0.0
    %8213 = vmatpush1.msra.mxu0 0.0
    %8214 = vmatprep.subr.mxu0 0.0
    %8215 = vmatpush1.msra.mxu0 0.0
    %8216 = vmatprep.subr.mxu0 0.0
    %8217 = vmatpush1.msra.mxu0 0.0
    %8218 = vmatprep.subr.mxu0 0.0
    %8219 = vmatpush1.msra.mxu0 0.0
    %8220 = vmatprep.subr.mxu0 0.0
    %8221 = vmatpush1.msra.mxu0 0.0
    %8222 = vmatprep.subr.mxu0 %v128
    %8223 = vmatpush1.msra.mxu0 %v127
    %8224 = vmatprep.subr.mxu0 0.0
    %8225 = vmatpush2.msra.mxu0 0.0
    %8226 = vmatprep.subr.mxu0 0.0
    %8227 = vmatpush2.msra.mxu0 0.0
    %8228 = vmatprep.subr.mxu0 0.0
    %8229 = vmatpush2.msra.mxu0 0.0
    %8230 = vmatprep.subr.mxu0 0.0
    %8231 = vmatpush2.msra.mxu0 0.0
    %8232 = vmatprep.subr.mxu0 0.0
    %8233 = vmatpush2.msra.mxu0 0.0
    %8234 = vmatprep.subr.mxu0 0.0
    %8235 = vmatpush2.msra.mxu0 0.0
    %8236 = vmatprep.subr.mxu0 0.0
    %8237 = vmatpush2.msra.mxu0 0.0
    %8238 = vmatprep.subr.mxu0 0.0
    %8239 = vmatpush2.msra.mxu0 0.0
    %8240 = vmatprep.subr.mxu0 0.0
    %8241 = vmatpush2.msra.mxu0 0.0
    %8242 = vmatprep.subr.mxu0 0.0
    %8243 = vmatpush2.msra.mxu0 0.0
    %8244 = vmatprep.subr.mxu0 0.0
    %8245 = vmatpush2.msra.mxu0 0.0
    %8246 = vmatprep.subr.mxu0 0.0
    %8247 = vmatpush2.msra.mxu0 0.0
    %8248 = vmatprep.subr.mxu0 0.0
    %8249 = vmatpush2.msra.mxu0 0.0
    %8250 = vmatprep.subr.mxu0 0.0
    %8251 = vmatpush2.msra.mxu0 0.0
    %8252 = vmatprep.subr.mxu0 0.0
    %8253 = vmatpush2.msra.mxu0 0.0
    %8254 = vmatprep.subr.mxu0 0.0
    %8255 = vmatpush2.msra.mxu0 0.0
    %8256 = vmatprep.mubr.f32.mxu0 0.0
    %8257 = vmatmul.mubr.f32.gmra.mxu0 %v8190
    %v8258 = vpop.f32.mrf.mxu0
    %v8259 = vadd.f32 0.0, %v8258
    %v8260 = vpop.f32.mrf.mxu0
    %v8261 = vadd.f32 0.0, %v8260
    %8262 = vdwg.mxu0
    %8263 = vxpose.xlu0.b32.start [1/16] %v6491, 128
    %8264 = vxpose.xlu0.b32.cont [2/16] 0.0, 128
    %8265 = vxpose.xlu0.b32.cont [3/16] 0.0, 128
    %8266 = vxpose.xlu0.b32.cont [4/16] 0.0, 128
    %8267 = vxpose.xlu0.b32.cont [5/16] 0.0, 128
    %8268 = vxpose.xlu0.b32.cont [6/16] 0.0, 128
    %8269 = vxpose.xlu0.b32.cont [7/16] 0.0, 128
    %8270 = vxpose.xlu0.b32.cont [8/16] 0.0, 128
    %8271 = vxpose.xlu0.b32.cont [9/16] 0.0, 128
    %8272 = vxpose.xlu0.b32.cont [10/16] 0.0, 128
    %8273 = vxpose.xlu0.b32.cont [11/16] 0.0, 128
    %8274 = vxpose.xlu0.b32.cont [12/16] 0.0, 128
    %8275 = vxpose.xlu0.b32.cont [13/16] 0.0, 128
    %8276 = vxpose.xlu0.b32.cont [14/16] 0.0, 128
    %8277 = vxpose.xlu0.b32.cont [15/16] 0.0, 128
    %8278 = vxpose.xlu0.b32.end [16/16] 0.0, 128
    %v8279 = vpop.trf.xlu0
    %v8280 = vpop.trf.xlu0
    %v8281 = vpop.trf.xlu0
    %v8282 = vpop.trf.xlu0
    %v8283 = vpop.trf.xlu0
    %v8284 = vpop.trf.xlu0
    %v8285 = vpop.trf.xlu0
    %v8286 = vpop.trf.xlu0
    %v8287 = vpop.trf.xlu0
    %v8288 = vpop.trf.xlu0
    %v8289 = vpop.trf.xlu0
    %v8290 = vpop.trf.xlu0
    %v8291 = vpop.trf.xlu0
    %v8292 = vpop.trf.xlu0
    %v8293 = vpop.trf.xlu0
    %v8294 = vpop.trf.xlu0
    %8295 = vxpose.xlu0.b32.start [1/16] %v6531, 128
    %8296 = vxpose.xlu0.b32.cont [2/16] 0.0, 128
    %8297 = vxpose.xlu0.b32.cont [3/16] 0.0, 128
    %8298 = vxpose.xlu0.b32.cont [4/16] 0.0, 128
    %8299 = vxpose.xlu0.b32.cont [5/16] 0.0, 128
    %8300 = vxpose.xlu0.b32.cont [6/16] 0.0, 128
    %8301 = vxpose.xlu0.b32.cont [7/16] 0.0, 128
    %8302 = vxpose.xlu0.b32.cont [8/16] 0.0, 128
    %8303 = vxpose.xlu0.b32.cont [9/16] 0.0, 128
    %8304 = vxpose.xlu0.b32.cont [10/16] 0.0, 128
    %8305 = vxpose.xlu0.b32.cont [11/16] 0.0, 128
    %8306 = vxpose.xlu0.b32.cont [12/16] 0.0, 128
    %8307 = vxpose.xlu0.b32.cont [13/16] 0.0, 128
    %8308 = vxpose.xlu0.b32.cont [14/16] 0.0, 128
    %8309 = vxpose.xlu0.b32.cont [15/16] 0.0, 128
    %8310 = vxpose.xlu0.b32.end [16/16] 0.0, 128
    %v8311 = vpop.trf.xlu0
    %v8312 = vpop.trf.xlu0
    %v8313 = vpop.trf.xlu0
    %v8314 = vpop.trf.xlu0
    %v8315 = vpop.trf.xlu0
    %v8316 = vpop.trf.xlu0
    %v8317 = vpop.trf.xlu0
    %v8318 = vpop.trf.xlu0
    %v8319 = vpop.trf.xlu0
    %v8320 = vpop.trf.xlu0
    %v8321 = vpop.trf.xlu0
    %v8322 = vpop.trf.xlu0
    %v8323 = vpop.trf.xlu0
    %v8324 = vpop.trf.xlu0
    %v8325 = vpop.trf.xlu0
    %v8326 = vpop.trf.xlu0
    %v8328 = vsel %vm767, %v8279, 0
    %v8331 = vsel %vm767, %v8280, 0
    %v8334 = vsel %vm767, %v8281, 0
    %v8337 = vsel %vm767, %v8282, 0
    %v8340 = vsel %vm767, %v8283, 0
    %v8343 = vsel %vm767, %v8284, 0
    %v8346 = vsel %vm767, %v8285, 0
    %v8349 = vsel %vm767, %v8286, 0
    %v8352 = vsel %vm767, %v8287, 0
    %v8355 = vsel %vm767, %v8288, 0
    %v8358 = vsel %vm767, %v8289, 0
    %v8361 = vsel %vm767, %v8290, 0
    %v8364 = vsel %vm767, %v8291, 0
    %v8367 = vsel %vm767, %v8292, 0
    %v8370 = vsel %vm767, %v8293, 0
    %v8373 = vsel %vm767, %v8294, 0
    %v8376 = vsel %vm767, %v8311, 0
    %v8379 = vsel %vm767, %v8312, 0
    %v8382 = vsel %vm767, %v8313, 0
    %v8385 = vsel %vm767, %v8314, 0
    %v8388 = vsel %vm767, %v8315, 0
    %v8391 = vsel %vm767, %v8316, 0
    %v8394 = vsel %vm767, %v8317, 0
    %v8397 = vsel %vm767, %v8318, 0
    %8399 = vmatprep.subr.mxu0 0.0
    %8400 = vmatpush1.msra.mxu0 0.0
    %8401 = vmatprep.subr.mxu0 0.0
    %8402 = vmatpush1.msra.mxu0 0.0
    %8403 = vmatprep.subr.mxu0 0.0
    %8404 = vmatpush1.msra.mxu0 0.0
    %8405 = vmatprep.subr.mxu0 0.0
    %8406 = vmatpush1.msra.mxu0 0.0
    %8407 = vmatprep.subr.mxu0 0.0
    %8408 = vmatpush1.msra.mxu0 0.0
    %8409 = vmatprep.subr.mxu0 0.0
    %8410 = vmatpush1.msra.mxu0 0.0
    %8411 = vmatprep.subr.mxu0 0.0
    %8412 = vmatpush1.msra.mxu0 0.0
    %8413 = vmatprep.subr.mxu0 0.0
    %8414 = vmatpush1.msra.mxu0 0.0
    %8415 = vmatprep.subr.mxu0 0.0
    %8416 = vmatpush1.msra.mxu0 0.0
    %8417 = vmatprep.subr.mxu0 0.0
    %8418 = vmatpush1.msra.mxu0 0.0
    %8419 = vmatprep.subr.mxu0 0.0
    %8420 = vmatpush1.msra.mxu0 0.0
    %8421 = vmatprep.subr.mxu0 0.0
    %8422 = vmatpush1.msra.mxu0 0.0
    %8423 = vmatprep.subr.mxu0 0.0
    %8424 = vmatpush1.msra.mxu0 0.0
    %8425 = vmatprep.subr.mxu0 0.0
    %8426 = vmatpush1.msra.mxu0 0.0
    %8427 = vmatprep.subr.mxu0 0.0
    %8428 = vmatpush1.msra.mxu0 0.0
    %8429 = vmatprep.subr.mxu0 %v128
    %8430 = vmatpush1.msra.mxu0 %v127
    %8431 = vmatprep.subr.mxu0 0.0
    %8432 = vmatpush2.msra.mxu0 0.0
    %8433 = vmatprep.subr.mxu0 0.0
    %8434 = vmatpush2.msra.mxu0 0.0
    %8435 = vmatprep.subr.mxu0 0.0
    %8436 = vmatpush2.msra.mxu0 0.0
    %8437 = vmatprep.subr.mxu0 0.0
    %8438 = vmatpush2.msra.mxu0 0.0
    %8439 = vmatprep.subr.mxu0 0.0
    %8440 = vmatpush2.msra.mxu0 0.0
    %8441 = vmatprep.subr.mxu0 0.0
    %8442 = vmatpush2.msra.mxu0 0.0
    %8443 = vmatprep.subr.mxu0 0.0
    %8444 = vmatpush2.msra.mxu0 0.0
    %8445 = vmatprep.subr.mxu0 0.0
    %8446 = vmatpush2.msra.mxu0 0.0
    %8447 = vmatprep.subr.mxu0 0.0
    %8448 = vmatpush2.msra.mxu0 0.0
    %8449 = vmatprep.subr.mxu0 0.0
    %8450 = vmatpush2.msra.mxu0 0.0
    %8451 = vmatprep.subr.mxu0 0.0
    %8452 = vmatpush2.msra.mxu0 0.0
    %8453 = vmatprep.subr.mxu0 0.0
    %8454 = vmatpush2.msra.mxu0 0.0
    %8455 = vmatprep.subr.mxu0 0.0
    %8456 = vmatpush2.msra.mxu0 0.0
    %8457 = vmatprep.subr.mxu0 0.0
    %8458 = vmatpush2.msra.mxu0 0.0
    %8459 = vmatprep.subr.mxu0 0.0
    %8460 = vmatpush2.msra.mxu0 0.0
    %8461 = vmatprep.subr.mxu0 0.0
    %8462 = vmatpush2.msra.mxu0 0.0
    %8463 = vmatprep.mubr.f32.mxu0 0.0
    %8464 = vmatmul.mubr.f32.gmra.mxu0 %v8328
    %v8465 = vpop.f32.mrf.mxu0
    %v8466 = vadd.f32 0.0, %v8465
    %v8467 = vpop.f32.mrf.mxu0
    %v8468 = vadd.f32 0.0, %v8467
    %8469 = vmatprep.mubr.f32.mxu0 0.0
    %8470 = vmatmul.mubr.f32.gmra.mxu0 %v8331
    %v8471 = vpop.f32.mrf.mxu0
    %v8472 = vadd.f32 0.0, %v8471
    %v8473 = vpop.f32.mrf.mxu0
    %v8474 = vadd.f32 0.0, %v8473
    %8475 = vmatprep.mubr.f32.mxu0 0.0
    %8476 = vmatmul.mubr.f32.gmra.mxu0 %v8334
    %v8477 = vpop.f32.mrf.mxu0
    %v8478 = vadd.f32 0.0, %v8477
    %v8479 = vpop.f32.mrf.mxu0
    %v8480 = vadd.f32 0.0, %v8479
    %8481 = vmatprep.mubr.f32.mxu0 0.0
    %8482 = vmatmul.mubr.f32.gmra.mxu0 %v8337
    %v8483 = vpop.f32.mrf.mxu0
    %v8484 = vadd.f32 0.0, %v8483
    %v8485 = vpop.f32.mrf.mxu0
    %v8486 = vadd.f32 0.0, %v8485
    %8487 = vmatprep.mubr.f32.mxu0 0.0
    %8488 = vmatmul.mubr.f32.gmra.mxu0 %v8340
    %v8489 = vpop.f32.mrf.mxu0
    %v8490 = vadd.f32 0.0, %v8489
    %v8491 = vpop.f32.mrf.mxu0
    %v8492 = vadd.f32 0.0, %v8491
    %8493 = vmatprep.mubr.f32.mxu0 0.0
    %8494 = vmatmul.mubr.f32.gmra.mxu0 %v8343
    %v8495 = vpop.f32.mrf.mxu0
    %v8496 = vadd.f32 0.0, %v8495
    %v8497 = vpop.f32.mrf.mxu0
    %v8498 = vadd.f32 0.0, %v8497
    %8499 = vmatprep.mubr.f32.mxu0 0.0
    %8500 = vmatmul.mubr.f32.gmra.mxu0 %v8346
    %v8501 = vpop.f32.mrf.mxu0
    %v8502 = vadd.f32 0.0, %v8501
    %v8503 = vpop.f32.mrf.mxu0
    %v8504 = vadd.f32 0.0, %v8503
    %8505 = vmatprep.mubr.f32.mxu0 0.0
    %8506 = vmatmul.mubr.f32.gmra.mxu0 %v8349
    %v8507 = vpop.f32.mrf.mxu0
    %v8508 = vadd.f32 0.0, %v8507
    %v8509 = vpop.f32.mrf.mxu0
    %v8510 = vadd.f32 0.0, %v8509
    %8511 = vmatprep.mubr.f32.mxu0 0.0
    %8512 = vmatmul.mubr.f32.gmra.mxu0 %v8352
    %v8513 = vpop.f32.mrf.mxu0
    %v8514 = vadd.f32 0.0, %v8513
    %v8515 = vpop.f32.mrf.mxu0
    %v8516 = vadd.f32 0.0, %v8515
    %8517 = vmatprep.mubr.f32.mxu0 0.0
    %8518 = vmatmul.mubr.f32.gmra.mxu0 %v8355
    %v8519 = vpop.f32.mrf.mxu0
    %v8520 = vadd.f32 0.0, %v8519
    %v8521 = vpop.f32.mrf.mxu0
    %v8522 = vadd.f32 0.0, %v8521
    %8523 = vmatprep.mubr.f32.mxu0 0.0
    %8524 = vmatmul.mubr.f32.gmra.mxu0 %v8358
    %v8525 = vpop.f32.mrf.mxu0
    %v8526 = vadd.f32 0.0, %v8525
    %v8527 = vpop.f32.mrf.mxu0
    %v8528 = vadd.f32 0.0, %v8527
    %8529 = vmatprep.mubr.f32.mxu0 0.0
    %8530 = vmatmul.mubr.f32.gmra.mxu0 %v8361
    %v8531 = vpop.f32.mrf.mxu0
    %v8532 = vadd.f32 0.0, %v8531
    %v8533 = vpop.f32.mrf.mxu0
    %v8534 = vadd.f32 0.0, %v8533
    %8535 = vmatprep.mubr.f32.mxu0 0.0
    %8536 = vmatmul.mubr.f32.gmra.mxu0 %v8364
    %v8537 = vpop.f32.mrf.mxu0
    %v8538 = vadd.f32 0.0, %v8537
    %v8539 = vpop.f32.mrf.mxu0
    %v8540 = vadd.f32 0.0, %v8539
    %8541 = vmatprep.mubr.f32.mxu0 0.0
    %8542 = vmatmul.mubr.f32.gmra.mxu0 %v8367
    %v8543 = vpop.f32.mrf.mxu0
    %v8544 = vadd.f32 0.0, %v8543
    %v8545 = vpop.f32.mrf.mxu0
    %v8546 = vadd.f32 0.0, %v8545
    %8547 = vmatprep.mubr.f32.mxu0 0.0
    %8548 = vmatmul.mubr.f32.gmra.mxu0 %v8370
    %v8549 = vpop.f32.mrf.mxu0
    %v8550 = vadd.f32 0.0, %v8549
    %v8551 = vpop.f32.mrf.mxu0
    %v8552 = vadd.f32 0.0, %v8551
    %8553 = vmatprep.mubr.f32.mxu0 0.0
    %8554 = vmatmul.mubr.f32.gmra.mxu0 %v8373
    %v8555 = vpop.f32.mrf.mxu0
    %v8556 = vadd.f32 0.0, %v8555
    %v8557 = vpop.f32.mrf.mxu0
    %v8558 = vadd.f32 0.0, %v8557
    %8559 = vmatprep.mubr.f32.mxu0 0.0
    %8560 = vmatmul.mubr.f32.gmra.mxu0 %v8376
    %v8561 = vpop.f32.mrf.mxu0
    %v8562 = vadd.f32 0.0, %v8561
    %v8563 = vpop.f32.mrf.mxu0
    %v8564 = vadd.f32 0.0, %v8563
    %8565 = vmatprep.mubr.f32.mxu0 0.0
    %8566 = vmatmul.mubr.f32.gmra.mxu0 %v8379
    %v8567 = vpop.f32.mrf.mxu0
    %v8568 = vadd.f32 0.0, %v8567
    %v8569 = vpop.f32.mrf.mxu0
    %v8570 = vadd.f32 0.0, %v8569
    %8571 = vmatprep.mubr.f32.mxu0 0.0
    %8572 = vmatmul.mubr.f32.gmra.mxu0 %v8382
    %v8573 = vpop.f32.mrf.mxu0
    %v8574 = vadd.f32 0.0, %v8573
    %v8575 = vpop.f32.mrf.mxu0
    %v8576 = vadd.f32 0.0, %v8575
    %8577 = vmatprep.mubr.f32.mxu0 0.0
    %8578 = vmatmul.mubr.f32.gmra.mxu0 %v8385
    %v8579 = vpop.f32.mrf.mxu0
    %v8580 = vadd.f32 0.0, %v8579
    %v8581 = vpop.f32.mrf.mxu0
    %v8582 = vadd.f32 0.0, %v8581
    %8583 = vmatprep.mubr.f32.mxu0 0.0
    %8584 = vmatmul.mubr.f32.gmra.mxu0 %v8388
    %v8585 = vpop.f32.mrf.mxu0
    %v8586 = vadd.f32 0.0, %v8585
    %v8587 = vpop.f32.mrf.mxu0
    %v8588 = vadd.f32 0.0, %v8587
    %8589 = vmatprep.mubr.f32.mxu0 0.0
    %8590 = vmatmul.mubr.f32.gmra.mxu0 %v8391
    %v8591 = vpop.f32.mrf.mxu0
    %v8592 = vadd.f32 0.0, %v8591
    %v8593 = vpop.f32.mrf.mxu0
    %v8594 = vadd.f32 0.0, %v8593
    %8595 = vmatprep.mubr.f32.mxu0 0.0
    %8596 = vmatmul.mubr.f32.gmra.mxu0 %v8394
    %v8597 = vpop.f32.mrf.mxu0
    %v8598 = vadd.f32 0.0, %v8597
    %v8599 = vpop.f32.mrf.mxu0
    %v8600 = vadd.f32 0.0, %v8599
    %8601 = vmatprep.mubr.f32.mxu0 0.0
    %8602 = vmatmul.mubr.f32.gmra.mxu0 %v8397
    %v8603 = vpop.f32.mrf.mxu0
    %v8604 = vadd.f32 0.0, %v8603
    %v8605 = vpop.f32.mrf.mxu0
    %v8606 = vadd.f32 0.0, %v8605
    %8607 = vdwg.mxu0
    %v8608 = vmul.f32 %v8466, %v129
    %v8609 = vmul.f32 %v8468, %v130
    %v8610 = vmul.f32 %v8472, %v131
    %v8611 = vmul.f32 %v8474, %v132
    %v8612 = vmul.f32 %v8478, %v133
    %v8613 = vmul.f32 %v8480, %v134
    %v8614 = vmul.f32 %v8484, %v135
    %v8615 = vmul.f32 %v8486, %v136
    %v8616 = vmul.f32 %v8490, %v137
    %v8617 = vmul.f32 %v8492, %v138
    %v8618 = vmul.f32 %v8496, %v139
    %v8619 = vmul.f32 %v8498, %v140
    %v8620 = vmul.f32 %v8502, %v141
    %v8621 = vmul.f32 %v8504, %v142
    %v8622 = vmul.f32 %v8508, %v143
    %v8623 = vmul.f32 %v8510, %v144
    %v8624 = vmul.f32 %v8514, %v145
    %v8625 = vmul.f32 %v8516, %v146
    %v8626 = vmul.f32 %v8520, %v147
    %v8627 = vmul.f32 %v8522, %v148
    %v8628 = vmul.f32 %v8526, %v149
    %v8629 = vmul.f32 %v8528, %v150
    %v8630 = vmul.f32 %v8532, %v151
    %v8631 = vmul.f32 %v8534, %v152
    %v8632 = vmul.f32 %v8538, %v153
    %v8633 = vmul.f32 %v8540, %v154
    %v8634 = vmul.f32 %v8544, %v155
    %v8635 = vmul.f32 %v8546, %v156
    %v8636 = vmul.f32 %v8550, %v157
    %v8637 = vmul.f32 %v8552, %v158
    %v8638 = vmul.f32 %v8556, %v159
    %v8639 = vmul.f32 %v8558, %v160
    %v8640 = vmul.f32 %v8562, %v161
    %v8641 = vmul.f32 %v8564, %v162
    %v8642 = vmul.f32 %v8568, %v163
    %v8643 = vmul.f32 %v8570, %v164
    %v8644 = vmul.f32 %v8574, %v165
    %v8645 = vmul.f32 %v8576, %v166
    %v8646 = vmul.f32 %v8580, %v167
    %v8647 = vmul.f32 %v8582, %v168
    %v8648 = vmul.f32 %v8586, %v169
    %v8649 = vmul.f32 %v8588, %v170
    %v8650 = vmul.f32 %v8592, %v171
    %v8651 = vmul.f32 %v8594, %v172
    %v8652 = vmul.f32 %v8598, %v173
    %v8653 = vmul.f32 %v8600, %v174
    %v8654 = vmul.f32 %v8604, %v175
    %v8655 = vmul.f32 %v8606, %v176
    %v8657 = vsel %vm563, %v8261, 0
    %8659 = vmatprep.subr.mxu0 %v8639
    %8660 = vmatpush1.msra.mxu0 %v8638
    %8661 = vmatprep.subr.mxu0 %v8637
    %8662 = vmatpush1.msra.mxu0 %v8636
    %8663 = vmatprep.subr.mxu0 %v8635
    %8664 = vmatpush1.msra.mxu0 %v8634
    %8665 = vmatprep.subr.mxu0 %v8633
    %8666 = vmatpush1.msra.mxu0 %v8632
    %8667 = vmatprep.subr.mxu0 %v8631
    %8668 = vmatpush1.msra.mxu0 %v8630
    %8669 = vmatprep.subr.mxu0 %v8629
    %8670 = vmatpush1.msra.mxu0 %v8628
    %8671 = vmatprep.subr.mxu0 %v8627
    %8672 = vmatpush1.msra.mxu0 %v8626
    %8673 = vmatprep.subr.mxu0 %v8625
    %8674 = vmatpush1.msra.mxu0 %v8624
    %8675 = vmatprep.subr.mxu0 %v8623
    %8676 = vmatpush1.msra.mxu0 %v8622
    %8677 = vmatprep.subr.mxu0 %v8621
    %8678 = vmatpush1.msra.mxu0 %v8620
    %8679 = vmatprep.subr.mxu0 %v8619
    %8680 = vmatpush1.msra.mxu0 %v8618
    %8681 = vmatprep.subr.mxu0 %v8617
    %8682 = vmatpush1.msra.mxu0 %v8616
    %8683 = vmatprep.subr.mxu0 %v8615
    %8684 = vmatpush1.msra.mxu0 %v8614
    %8685 = vmatprep.subr.mxu0 %v8613
    %8686 = vmatpush1.msra.mxu0 %v8612
    %8687 = vmatprep.subr.mxu0 %v8611
    %8688 = vmatpush1.msra.mxu0 %v8610
    %8689 = vmatprep.subr.mxu0 %v8609
    %8690 = vmatpush1.msra.mxu0 %v8608
    %8691 = vmatprep.subr.mxu0 0.0
    %8692 = vmatpush2.msra.mxu0 0.0
    %8693 = vmatprep.subr.mxu0 0.0
    %8694 = vmatpush2.msra.mxu0 0.0
    %8695 = vmatprep.subr.mxu0 0.0
    %8696 = vmatpush2.msra.mxu0 0.0
    %8697 = vmatprep.subr.mxu0 0.0
    %8698 = vmatpush2.msra.mxu0 0.0
    %8699 = vmatprep.subr.mxu0 0.0
    %8700 = vmatpush2.msra.mxu0 0.0
    %8701 = vmatprep.subr.mxu0 0.0
    %8702 = vmatpush2.msra.mxu0 0.0
    %8703 = vmatprep.subr.mxu0 0.0
    %8704 = vmatpush2.msra.mxu0 0.0
    %8705 = vmatprep.subr.mxu0 0.0
    %8706 = vmatpush2.msra.mxu0 0.0
    %8707 = vmatprep.subr.mxu0 %v8655
    %8708 = vmatpush2.msra.mxu0 %v8654
    %8709 = vmatprep.subr.mxu0 %v8653
    %8710 = vmatpush2.msra.mxu0 %v8652
    %8711 = vmatprep.subr.mxu0 %v8651
    %8712 = vmatpush2.msra.mxu0 %v8650
    %8713 = vmatprep.subr.mxu0 %v8649
    %8714 = vmatpush2.msra.mxu0 %v8648
    %8715 = vmatprep.subr.mxu0 %v8647
    %8716 = vmatpush2.msra.mxu0 %v8646
    %8717 = vmatprep.subr.mxu0 %v8645
    %8718 = vmatpush2.msra.mxu0 %v8644
    %8719 = vmatprep.subr.mxu0 %v8643
    %8720 = vmatpush2.msra.mxu0 %v8642
    %8721 = vmatprep.subr.mxu0 %v8641
    %8722 = vmatpush2.msra.mxu0 %v8640
    %8723 = vmatprep.mubr.f32.mxu0 %v8657
    %8724 = vmatmul.mubr.f32.gmra.mxu0 %v8259
    %v8725 = vpop.f32.mrf.mxu0
    %v8726 = vadd.f32 0.0, %v8725
    %v8727 = vpop.f32.mrf.mxu0
    %v8728 = vadd.f32 0.0, %v8727
    %8729 = vdwg.mxu0
    %v8730 = vpack.c.bf16 %v8726, %v7628
    %v8731 = vpack.c.bf16 %v8728, %v7630
    %s8732 = scalar_lea.vmem [#allocation6], 384
    %v8733 = vld [vmem:[%s8732] sm:$0xff]
    %v8734 = vld [vmem:[%s8732 + $0x8] sm:$0xff]
    %v8735 = vld [vmem:[%s8732 + $0x10] sm:$0xff]
    %v8736 = vld [vmem:[%s8732 + $0x18] sm:$0xff]
    %v8737 = vld [vmem:[%s8732 + $0x20] sm:$0xff]
    %v8738 = vld [vmem:[%s8732 + $0x28] sm:$0xff]
    %v8739 = vld [vmem:[%s8732 + $0x30] sm:$0xff]
    %v8740 = vld [vmem:[%s8732 + $0x38] sm:$0xff]
    %v8741 = vld [vmem:[%s8732 + $0x40] sm:$0xff]
    %v8742 = vld [vmem:[%s8732 + $0x48] sm:$0xff]
    %v8743 = vld [vmem:[%s8732 + $0x50] sm:$0xff]
    %v8744 = vld [vmem:[%s8732 + $0x58] sm:$0xff]
    %v8745 = vld [vmem:[%s8732 + $0x60] sm:$0xff]
    %v8746 = vld [vmem:[%s8732 + $0x68] sm:$0xff]
    %v8747 = vld [vmem:[%s8732 + $0x70] sm:$0xff]
    %v8748 = vld [vmem:[%s8732 + $0x78] sm:$0xff]
    %v8749 = vld [vmem:[%s8732 + $0x80] sm:$0xff]
    %v8750 = vld [vmem:[%s8732 + $0x88] sm:$0xff]
    %v8751 = vld [vmem:[%s8732 + $0x90] sm:$0xff]
    %v8752 = vld [vmem:[%s8732 + $0x98] sm:$0xff]
    %v8753 = vld [vmem:[%s8732 + $0xa0] sm:$0xff]
    %v8754 = vld [vmem:[%s8732 + $0xa8] sm:$0xff]
    %v8755 = vld [vmem:[%s8732 + $0xb0] sm:$0xff]
    %v8756 = vld [vmem:[%s8732 + $0xb8] sm:$0xff]
    %s8757 = scalar_lea.vmem [#allocation7], 4
    %v8758 = vld [vmem:[%s8757] sm:$0x3]
    %v8760 = vlaneseq
    %v8761 = vshrl.u32 %v8760, 7
    %v8762 = vsub.s32 0, %v8761
    %v8763 = vrot.slane %v8758, %v8762
    %v8764 = vlaneseq
    %v8765 = vshrl.u32 %v8764, 7
    %v8766 = vsub.s32 1, %v8765
    %v8767 = vrot.slane %v8758, %v8766
    %v8794 = vunpack.c.l.b16 %v8733
    %v8795 = vunpack.c.h.b16 %v8733
    %v8796 = vunpack.c.l.b16 %v8734
    %v8797 = vunpack.c.h.b16 %v8734
    %v8798 = vunpack.c.l.b16 %v8735
    %v8799 = vunpack.c.h.b16 %v8735
    %v8800 = vunpack.c.l.b16 %v8736
    %v8801 = vunpack.c.h.b16 %v8736
    %v8802 = vunpack.c.l.b16 %v8737
    %v8803 = vunpack.c.h.b16 %v8737
    %v8804 = vunpack.c.l.b16 %v8738
    %v8805 = vunpack.c.h.b16 %v8738
    %v8806 = vunpack.c.l.b16 %v8739
    %v8807 = vunpack.c.h.b16 %v8739
    %v8808 = vunpack.c.l.b16 %v8740
    %v8809 = vunpack.c.h.b16 %v8740
    %v8810 = vunpack.c.l.b16 %v8741
    %v8811 = vunpack.c.h.b16 %v8741
    %v8812 = vunpack.c.l.b16 %v8742
    %v8813 = vunpack.c.h.b16 %v8742
    %v8814 = vunpack.c.l.b16 %v8743
    %v8815 = vunpack.c.h.b16 %v8743
    %v8816 = vunpack.c.l.b16 %v8744
    %v8817 = vunpack.c.h.b16 %v8744
    %v8818 = vunpack.c.l.b16 %v8745
    %v8819 = vunpack.c.h.b16 %v8745
    %v8820 = vunpack.c.l.b16 %v8746
    %v8821 = vunpack.c.h.b16 %v8746
    %v8822 = vunpack.c.l.b16 %v8747
    %v8823 = vunpack.c.h.b16 %v8747
    %v8824 = vunpack.c.l.b16 %v8748
    %v8825 = vunpack.c.h.b16 %v8748
    %v8826 = vunpack.c.l.b16 %v8749
    %v8827 = vunpack.c.h.b16 %v8749
    %v8828 = vunpack.c.l.b16 %v8750
    %v8829 = vunpack.c.h.b16 %v8750
    %v8830 = vunpack.c.l.b16 %v8751
    %v8831 = vunpack.c.h.b16 %v8751
    %v8832 = vunpack.c.l.b16 %v8752
    %v8833 = vunpack.c.h.b16 %v8752
    %v8834 = vunpack.c.l.b16 %v8753
    %v8835 = vunpack.c.h.b16 %v8753
    %v8836 = vunpack.c.l.b16 %v8754
    %v8837 = vunpack.c.h.b16 %v8754
    %v8838 = vunpack.c.l.b16 %v8755
    %v8839 = vunpack.c.h.b16 %v8755
    %v8840 = vunpack.c.l.b16 %v8756
    %v8841 = vunpack.c.h.b16 %v8756
    %v8842 = vpack.c.b16 %v8796, %v8794
    %v8843 = vpack.c.b16 %v8797, %v8795
    %v8844 = vpack.c.b16 %v8800, %v8798
    %v8845 = vpack.c.b16 %v8801, %v8799
    %v8846 = vpack.c.b16 %v8804, %v8802
    %v8847 = vpack.c.b16 %v8805, %v8803
    %v8848 = vpack.c.b16 %v8808, %v8806
    %v8849 = vpack.c.b16 %v8809, %v8807
    %v8850 = vpack.c.b16 %v8812, %v8810
    %v8851 = vpack.c.b16 %v8813, %v8811
    %v8852 = vpack.c.b16 %v8816, %v8814
    %v8853 = vpack.c.b16 %v8817, %v8815
    %v8854 = vpack.c.b16 %v8820, %v8818
    %v8855 = vpack.c.b16 %v8821, %v8819
    %v8856 = vpack.c.b16 %v8824, %v8822
    %v8857 = vpack.c.b16 %v8825, %v8823
    %v8858 = vpack.c.b16 %v8828, %v8826
    %v8859 = vpack.c.b16 %v8829, %v8827
    %v8860 = vpack.c.b16 %v8832, %v8830
    %v8861 = vpack.c.b16 %v8833, %v8831
    %v8862 = vpack.c.b16 %v8836, %v8834
    %v8863 = vpack.c.b16 %v8837, %v8835
    %v8864 = vpack.c.b16 %v8840, %v8838
    %v8865 = vpack.c.b16 %v8841, %v8839
    %v8891 = vsel %vm563, %v8731, 0
    %8893 = vmatprep.subr.bf16.mxu0 %v8857
    %8894 = vmatpush1.bf16.msra.mxu0 %v8856
    %8895 = vmatprep.subr.bf16.mxu0 %v8855
    %8896 = vmatpush1.bf16.msra.mxu0 %v8854
    %8897 = vmatprep.subr.bf16.mxu0 %v8853
    %8898 = vmatpush1.bf16.msra.mxu0 %v8852
    %8899 = vmatprep.subr.bf16.mxu0 %v8851
    %8900 = vmatpush1.bf16.msra.mxu0 %v8850
    %8901 = vmatprep.subr.bf16.mxu0 %v8849
    %8902 = vmatpush1.bf16.msra.mxu0 %v8848
    %8903 = vmatprep.subr.bf16.mxu0 %v8847
    %8904 = vmatpush1.bf16.msra.mxu0 %v8846
    %8905 = vmatprep.subr.bf16.mxu0 %v8845
    %8906 = vmatpush1.bf16.msra.mxu0 %v8844
    %8907 = vmatprep.subr.bf16.mxu0 %v8843
    %8908 = vmatpush1.bf16.msra.mxu0 %v8842
    %8909 = vmatprep.subr.bf16.mxu0 0
    %8910 = vmatpush2.bf16.msra.mxu0 0
    %8911 = vmatprep.subr.bf16.mxu0 0
    %8912 = vmatpush2.bf16.msra.mxu0 0
    %8913 = vmatprep.subr.bf16.mxu0 0
    %8914 = vmatpush2.bf16.msra.mxu0 0
    %8915 = vmatprep.subr.bf16.mxu0 0
    %8916 = vmatpush2.bf16.msra.mxu0 0
    %8917 = vmatprep.subr.bf16.mxu0 %v8865
    %8918 = vmatpush2.bf16.msra.mxu0 %v8864
    %8919 = vmatprep.subr.bf16.mxu0 %v8863
    %8920 = vmatpush2.bf16.msra.mxu0 %v8862
    %8921 = vmatprep.subr.bf16.mxu0 %v8861
    %8922 = vmatpush2.bf16.msra.mxu0 %v8860
    %8923 = vmatprep.subr.bf16.mxu0 %v8859
    %8924 = vmatpush2.bf16.msra.mxu0 %v8858
    %8925 = vmatprep.mubr.bf16.mxu0 %v8891
    %8926 = vmatmul.mubr.bf16.gmra.mxu0 %v8730
    %v8927 = vpop.f32.mrf.mxu0
    %v8928 = vadd.f32 %v8763, %v8927
    %v8929 = vpop.f32.mrf.mxu0
    %v8930 = vadd.f32 %v8767, %v8929
    %v8931 = vpop.f32.mrf.mxu0
    %v8932 = vadd.f32 %v8763, %v8931
    %v8933 = vpop.f32.mrf.mxu0
    %v8934 = vadd.f32 %v8767, %v8933
    %8935 = vdwg.mxu0
    %v8936 = vpack.c.bf16 %v8932, %v8928
    %v8937 = vpack.c.bf16 %v8934, %v8930
    %v8938 = vld [vmem:[#allocation9] sm:$0xf]
    %v8939 = vld [vmem:[#allocation9 + $0x4] sm:$0xf]
    %v8940 = vld [vmem:[#allocation9 + $0x8] sm:$0xf]
    %v8941 = vld [vmem:[#allocation9 + $0xc] sm:$0xf]
    %v8942 = vld [vmem:[#allocation9 + $0x10] sm:$0xf]
    %v8943 = vld [vmem:[#allocation9 + $0x14] sm:$0xf]
    %v8944 = vld [vmem:[#allocation9 + $0x18] sm:$0xf]
    %v8945 = vld [vmem:[#allocation9 + $0x1c] sm:$0xf]
    %v8946 = vld [vmem:[#allocation9 + $0x20] sm:$0xf]
    %v8947 = vld [vmem:[#allocation9 + $0x24] sm:$0xf]
    %v8948 = vld [vmem:[#allocation9 + $0x28] sm:$0xf]
    %v8949 = vld [vmem:[#allocation9 + $0x2c] sm:$0xf]
    %v8950 = vld [vmem:[#allocation9 + $0x30] sm:$0xf]
    %v8951 = vld [vmem:[#allocation9 + $0x34] sm:$0xf]
    %v8952 = vld [vmem:[#allocation9 + $0x38] sm:$0xf]
    %v8953 = vld [vmem:[#allocation9 + $0x3c] sm:$0xf]
    %v8954 = vld [vmem:[#allocation9 + $0x40] sm:$0xf]
    %v8955 = vld [vmem:[#allocation9 + $0x44] sm:$0xf]
    %v8956 = vld [vmem:[#allocation9 + $0x48] sm:$0xf]
    %v8957 = vld [vmem:[#allocation9 + $0x4c] sm:$0xf]
    %v8958 = vld [vmem:[#allocation9 + $0x50] sm:$0xf]
    %v8959 = vld [vmem:[#allocation9 + $0x54] sm:$0xf]
    %v8960 = vld [vmem:[#allocation9 + $0x58] sm:$0xf]
    %v8961 = vld [vmem:[#allocation9 + $0x5c] sm:$0xf]
    %v8962 = vld [vmem:[%s5] sm:$0x1]
    %v8964 = vlaneseq
    %v8965 = vshrl.u32 %v8964, 7
    %v8966 = vsub.s32 0, %v8965
    %v8967 = vrot.slane %v8962, %v8966
    %v8993 = vunpack.c.l.b16 %v8938
    %v8994 = vunpack.c.l.b16 %v8939
    %v8995 = vunpack.c.l.b16 %v8940
    %v8996 = vunpack.c.l.b16 %v8941
    %v8997 = vunpack.c.l.b16 %v8942
    %v8998 = vunpack.c.l.b16 %v8943
    %v8999 = vunpack.c.l.b16 %v8944
    %v9000 = vunpack.c.l.b16 %v8945
    %v9001 = vunpack.c.l.b16 %v8946
    %v9002 = vunpack.c.l.b16 %v8947
    %v9003 = vunpack.c.l.b16 %v8948
    %v9004 = vunpack.c.l.b16 %v8949
    %v9005 = vunpack.c.l.b16 %v8950
    %v9006 = vunpack.c.l.b16 %v8951
    %v9007 = vunpack.c.l.b16 %v8952
    %v9008 = vunpack.c.l.b16 %v8953
    %v9009 = vunpack.c.l.b16 %v8954
    %v9010 = vunpack.c.l.b16 %v8955
    %v9011 = vunpack.c.l.b16 %v8956
    %v9012 = vunpack.c.l.b16 %v8957
    %v9013 = vunpack.c.l.b16 %v8958
    %v9014 = vunpack.c.l.b16 %v8959
    %v9015 = vunpack.c.l.b16 %v8960
    %v9016 = vunpack.c.l.b16 %v8961
    %v9017 = vpack.c.b16 %v8994, %v8993
    %v9018 = vpack.c.b16 %v8996, %v8995
    %v9019 = vpack.c.b16 %v8998, %v8997
    %v9020 = vpack.c.b16 %v9000, %v8999
    %v9021 = vpack.c.b16 %v9002, %v9001
    %v9022 = vpack.c.b16 %v9004, %v9003
    %v9023 = vpack.c.b16 %v9006, %v9005
    %v9024 = vpack.c.b16 %v9008, %v9007
    %v9025 = vpack.c.b16 %v9010, %v9009
    %v9026 = vpack.c.b16 %v9012, %v9011
    %v9027 = vpack.c.b16 %v9014, %v9013
    %v9028 = vpack.c.b16 %v9016, %v9015
    %v9042 = vsel %vm563, %v8937, 0
    %9044 = vmatprep.subr.bf16.mxu0 0
    %9045 = vmatpush1.bf16.msra.mxu0 %v9024
    %9046 = vmatprep.subr.bf16.mxu0 0
    %9047 = vmatpush1.bf16.msra.mxu0 %v9023
    %9048 = vmatprep.subr.bf16.mxu0 0
    %9049 = vmatpush1.bf16.msra.mxu0 %v9022
    %9050 = vmatprep.subr.bf16.mxu0 0
    %9051 = vmatpush1.bf16.msra.mxu0 %v9021
    %9052 = vmatprep.subr.bf16.mxu0 0
    %9053 = vmatpush1.bf16.msra.mxu0 %v9020
    %9054 = vmatprep.subr.bf16.mxu0 0
    %9055 = vmatpush1.bf16.msra.mxu0 %v9019
    %9056 = vmatprep.subr.bf16.mxu0 0
    %9057 = vmatpush1.bf16.msra.mxu0 %v9018
    %9058 = vmatprep.subr.bf16.mxu0 0
    %9059 = vmatpush1.bf16.msra.mxu0 %v9017
    %9060 = vmatprep.subr.bf16.mxu0 0
    %9061 = vmatpush2.bf16.msra.mxu0 0
    %9062 = vmatprep.subr.bf16.mxu0 0
    %9063 = vmatpush2.bf16.msra.mxu0 0
    %9064 = vmatprep.subr.bf16.mxu0 0
    %9065 = vmatpush2.bf16.msra.mxu0 0
    %9066 = vmatprep.subr.bf16.mxu0 0
    %9067 = vmatpush2.bf16.msra.mxu0 0
    %9068 = vmatprep.subr.bf16.mxu0 0
    %9069 = vmatpush2.bf16.msra.mxu0 %v9028
    %9070 = vmatprep.subr.bf16.mxu0 0
    %9071 = vmatpush2.bf16.msra.mxu0 %v9027
    %9072 = vmatprep.subr.bf16.mxu0 0
    %9073 = vmatpush2.bf16.msra.mxu0 %v9026
    %9074 = vmatprep.subr.bf16.mxu0 0
    %9075 = vmatpush2.bf16.msra.mxu0 %v9025
    %9076 = vmatprep.mubr.bf16.mxu0 %v9042
    %9077 = vmatmul.mubr.bf16.gmra.mxu0 %v8936
    %v9078 = vpop.f32.mrf.mxu0
    %v9079 = vadd.f32 %v8967, %v9078
    %v9080 = vpop.f32.mrf.mxu0
    %v9081 = vpop.f32.mrf.mxu0
    %v9082 = vadd.f32 %v8967, %v9081
    %v9083 = vpop.f32.mrf.mxu0
    %9084 = vdwg.mxu0
    %9085 = vst [vmem:[%s8] sm:$0xff] %v9079
    %9086 = vst [vmem:[%s8 + $0x8] sm:$0xff] %v9082
    // Predicated region
    $region62: #{transformer_forward_pallas.1} parent=1 // pred_check
      _
    $region63: #{transformer_forward_pallas.1} parent=1 // pred_check_branch
      %9088 = sbr.rel (0) target = $region65
    $region64: #{transformer_forward_pallas.1} parent=1 // pred_region
      _
    $region65: #{transformer_forward_pallas.1} parent=1 // pred_fallthru
      _
    // Predicated region
    $region66: #{transformer_forward_pallas.1} parent=1 // pred_check
      _
    $region67: #{transformer_forward_pallas.1} parent=1 // pred_check_branch
      %9090 = sbr.rel (0) target = $region69
    $region68: #{transformer_forward_pallas.1} parent=1 // pred_region
      _
    $region69: #{transformer_forward_pallas.1} parent=1 // pred_fallthru
      _
    %9091 = vsyncpa [#allocation3], 1
    %9092 = vsyncpa [#allocation5], 1
    %9093 = vsyncpa [#allocation8], 1
    %9094 = vsyncpa [#allocation11], 1

</llo_original>
